<compile_context>
chip_gen: v7x
topology: tpu7x:2x2x1
jax: 0.10.0
libtpu: 0.0.40
codegen_flags: <defaults>
</compile_context>

<pallas_src>
import jax
import jax.numpy as jnp
import numpy as np
from jax import lax
from jax.experimental import pallas as pl
from jax.experimental.pallas import tpu as pltpu

ASPP_CH = 256   # fixed by the module (ASPP out_channels)
LL_CH = 48      # fixed by the module (low-level projection width)
BN_EPS = 1e-5


def _full(shape):
    """BlockSpec for a grid-invariant (whole-array) operand."""
    nd = len(shape)
    return pl.BlockSpec(shape, lambda b, _nd=nd: (0,) * _nd)


# ---------------------------------------------------------------------------
# Bilinear interpolation helpers (PyTorch align_corners=False semantics)
# ---------------------------------------------------------------------------
def _bilinear_1d(out_size, in_size):
    if in_size == 1:
        z = np.zeros((out_size,), np.int32)
        return z, z, np.zeros((out_size,), np.float32)
    scale = in_size / out_size
    src = np.maximum((np.arange(out_size) + 0.5) * scale - 0.5, 0.0)
    i0 = np.minimum(np.floor(src).astype(np.int32), in_size - 1)
    i1 = np.minimum(i0 + 1, in_size - 1)
    frac = (src - i0).astype(np.float32)
    return i0, i1, frac


def _bilinear_matrix(out_size, in_size):
    i0, i1, f = _bilinear_1d(out_size, in_size)
    mat = np.zeros((out_size, in_size), np.float32)
    mat[np.arange(out_size), i0] += 1.0 - f
    mat[np.arange(out_size), i1] += f
    return mat


# ---------------------------------------------------------------------------
# Kernel A: ASPP (1x1 + three dilated 3x3 + global-pool branches + projection)
# ---------------------------------------------------------------------------
def _make_aspp_kernel(h, w, cin, dilations):
    m = max(dilations)
    hpad, wpad = h + 2 * m, w + 2 * m
    hw = h * w

    def kernel(x_ref, w0_ref, wd_ref, wpool_ref, wproj_ref, bias_ref,
               out_ref, padx_ref, patch_ref):
        x = x_ref[0]                                        # (h, w, cin) f32
        x_flat = x.reshape(hw, cin)

        # padded copy of x for the dilated branches: only the zero border strips
        # are rewritten, the interior is fully overwritten every step.
        padx_ref[0:m, :, :] = jnp.zeros((m, wpad, cin), jnp.float32)
        padx_ref[m + h:, :, :] = jnp.zeros((m, wpad, cin), jnp.float32)
        padx_ref[:, 0:m, :] = jnp.zeros((hpad, m, cin), jnp.float32)
        padx_ref[:, m + w:, :] = jnp.zeros((hpad, m, cin), jnp.float32)
        padx_ref[m:m + h, m:m + w, :] = x

        # branch 0: 1x1 conv + BN + ReLU
        b0 = jnp.dot(x_flat.astype(jnp.bfloat16), w0_ref[...],
                     preferred_element_type=jnp.float32)
        b0 = jnp.maximum(b0 + bias_ref[0:1, :], 0.0)
        # The ASPP projection (1x1 over the 5*256 concat) is applied branch by
        # branch by splitting its weight along input channels -> no concat tensor.
        proj = jnp.dot(b0.astype(jnp.bfloat16), wproj_ref[0],
                       preferred_element_type=jnp.float32)

        # branches 1..3: dilated 3x3 conv + BN + ReLU via im2col (single matmul)
        for i, d in enumerate(dilations):
            for k in range(9):
                dy, dx = k // 3, k % 3
                r0 = m + (dy - 1) * d
                c0 = m + (dx - 1) * d
                patch_ref[:, k * cin:(k + 1) * cin] = (
                    padx_ref[r0:r0 + h, c0:c0 + w, :].reshape(hw, cin))
            bi = jnp.dot(patch_ref[...].astype(jnp.bfloat16), wd_ref[i],
                         preferred_element_type=jnp.float32)
            bi = jnp.maximum(bi + bias_ref[i + 1:i + 2, :], 0.0)
            proj += jnp.dot(bi.astype(jnp.bfloat16), wproj_ref[i + 1],
                            preferred_element_type=jnp.float32)

        # branch 4: global average pooling + 1x1 conv + BN + ReLU
        gap = jnp.mean(x_flat, axis=0, keepdims=True)               # (1, cin)
        gap8 = jnp.broadcast_to(gap, (8, cin))                      # sublane pad for MXU
        pb = jnp.dot(gap8.astype(jnp.bfloat16), wpool_ref[...],
                     preferred_element_type=jnp.float32)
        pb = jnp.maximum(pb + bias_ref[4:5, :], 0.0)                # (8, 256) identical rows
        # bilinear resize of a 1x1 map == broadcast; project first, then broadcast-add.
        proj += jnp.dot(pb.astype(jnp.bfloat16), wproj_ref[4],
                        preferred_element_type=jnp.float32)[0:1, :]

        # projection BN + ReLU (Dropout(0.1) is identity in eval mode)
        out_ref[0] = jnp.maximum(proj + bias_ref[5:6, :], 0.0)

    return kernel, (hpad, wpad)


def aspp_forward(x, p, dilations):
    """x: (B, h, w, Cin) f32 NHWC -> ASPP output (B, h*w, 256) f32."""
    B, h, w, cin = x.shape
    kernel, (hpad, wpad) = _make_aspp_kernel(h, w, cin, dilations)

    grid_spec = pltpu.PrefetchScalarGridSpec(
        num_scalar_prefetch=0,
        grid=(B,),
        in_specs=[
            pl.BlockSpec((1, h, w, cin), lambda b: (b, 0, 0, 0)),
            _full(p["aspp_w0"].shape),
            _full(p["aspp_wd"].shape),
            _full(p["aspp_wpool"].shape),
            _full(p["aspp_wproj"].shape),
            _full(p["aspp_bias"].shape),
        ],
        out_specs=pl.BlockSpec((1, h * w, ASPP_CH), lambda b: (b, 0, 0)),
        scratch_shapes=[
            pltpu.VMEM((hpad, wpad, cin), jnp.float32),     # zero-padded input
            pltpu.VMEM((h * w, 9 * cin), jnp.float32),      # im2col patch buffer
        ],
    )
    return pl.pallas_call(
        kernel,
        out_shape=jax.ShapeDtypeStruct((B, h * w, ASPP_CH), jnp.float32),
        grid_spec=grid_spec,
        compiler_params=pltpu.CompilerParams(dimension_semantics=("parallel",)),
    )(x, p["aspp_w0"], p["aspp_wd"], p["aspp_wpool"], p["aspp_wproj"],
      p["aspp_bias"])


# ---------------------------------------------------------------------------
# Kernel B: decoder (low-level 1x1 projection + bilinear upsample + classifier)
# ---------------------------------------------------------------------------
def _make_decoder_kernel(H, W, cll, nc):
    hw_lo = H * W
    Hp, Wp = H + 2, W + 2

    def kernel(ll_ref, aspp_ref, m_ref, wll_ref, bll_ref, w3ll_ref, w3up_ref,
               b3_ref, w4_ref, b4_ref, out_ref, padll_ref, padup_ref, patch_ref):
        # low-level projection: 1x1 conv + BN + ReLU
        x_ll = ll_ref[0].reshape(hw_lo, cll)
        ll = jnp.dot(x_ll.astype(jnp.bfloat16), wll_ref[...],
                     preferred_element_type=jnp.float32)
        ll = jnp.maximum(ll + bll_ref[...], 0.0)                    # (H*W, 48)

        # bilinear upsample (align_corners=False) of the ASPP output as one matmul
        up = jnp.dot(m_ref[...], aspp_ref[0],
                     preferred_element_type=jnp.float32)            # (H*W, 256)

        # zero-padded copies in VMEM scratch (border strips only, interior rewritten)
        padll_ref[0:1, :, :] = jnp.zeros((1, Wp, LL_CH), jnp.float32)
        padll_ref[H + 1:, :, :] = jnp.zeros((1, Wp, LL_CH), jnp.float32)
        padll_ref[:, 0:1, :] = jnp.zeros((Hp, 1, LL_CH), jnp.float32)
        padll_ref[:, W + 1:, :] = jnp.zeros((Hp, 1, LL_CH), jnp.float32)
        padll_ref[1:1 + H, 1:1 + W, :] = ll.reshape(H, W, LL_CH)

        padup_ref[0:1, :, :] = jnp.zeros((1, Wp, ASPP_CH), jnp.float32)
        padup_ref[H + 1:, :, :] = jnp.zeros((1, Wp, ASPP_CH), jnp.float32)
        padup_ref[:, 0:1, :] = jnp.zeros((Hp, 1, ASPP_CH), jnp.float32)
        padup_ref[:, W + 1:, :] = jnp.zeros((Hp, 1, ASPP_CH), jnp.float32)
        padup_ref[1:1 + H, 1:1 + W, :] = up.reshape(H, W, ASPP_CH)

        # classifier 3x3 conv over cat([ll, up]) via input-channel split:
        #   256-ch upsampled part -> im2col, single K = 9*256 matmul
        for k in range(9):
            dy, dx = k // 3, k % 3
            patch_ref[:, k * ASPP_CH:(k + 1) * ASPP_CH] = (
                padup_ref[dy:dy + H, dx:dx + W, :].reshape(hw_lo, ASPP_CH))
        acc = jnp.dot(patch_ref[...].astype(jnp.bfloat16), w3up_ref[...],
                      preferred_element_type=jnp.float32)           # (H*W, 256)
        #   48-ch low-level part -> 9 shifted matmuls (48 is not 128-lane aligned,
        #   so an im2col buffer would need misaligned channel writes)
        for k in range(9):
            dy, dx = k // 3, k % 3
            patch = padll_ref[dy:dy + H, dx:dx + W, :].reshape(hw_lo, LL_CH)
            acc += jnp.dot(patch.astype(jnp.bfloat16), w3ll_ref[k],
                           preferred_element_type=jnp.float32)
        a = jnp.maximum(acc + b3_ref[...], 0.0)                     # (H*W, 256)

        # final 1x1 conv with bias; lane-dense (H, W*nc) store
        logits = jnp.dot(a.astype(jnp.bfloat16), w4_ref[...],
                         preferred_element_type=jnp.float32) + b4_ref[...]
        out_ref[0] = logits.reshape(H, W * nc)

    return kernel


def decoder_forward(low_level, aspp_out, interp, p):
    """low_level: (B,H,W,Cll) f32; aspp_out: (B,h*w,256) f32 -> (B,H,W,num_classes)."""
    B, H, W, cll = low_level.shape
    _, hw_hi, _ = aspp_out.shape
    nc = p["dec_w4"].shape[-1]
    Hp, Wp = H + 2, W + 2
    kernel = _make_decoder_kernel(H, W, cll, nc)

    grid_spec = pltpu.PrefetchScalarGridSpec(
        num_scalar_prefetch=0,
        grid=(B,),
        in_specs=[
            pl.BlockSpec((1, H, W, cll), lambda b: (b, 0, 0, 0)),
            pl.BlockSpec((1, hw_hi, ASPP_CH), lambda b: (b, 0, 0)),
            _full(interp.shape),
            _full(p["dec_wll"].shape), _full(p["dec_bll"].shape),
            _full(p["dec_w3ll"].shape), _full(p["dec_w3up"].shape),
            _full(p["dec_b3"].shape),
            _full(p["dec_w4"].shape), _full(p["dec_b4"].shape),
        ],
        out_specs=pl.BlockSpec((1, H, W * nc), lambda b: (b, 0, 0)),
        scratch_shapes=[
            pltpu.VMEM((Hp, Wp, LL_CH), jnp.float32),       # padded low-level proj
            pltpu.VMEM((Hp, Wp, ASPP_CH), jnp.float32),     # padded upsampled ASPP
            pltpu.VMEM((H * W, 9 * ASPP_CH), jnp.float32),  # im2col patch buffer
        ],
    )
    out = pl.pallas_call(
        kernel,
        out_shape=jax.ShapeDtypeStruct((B, H, W * nc), jnp.float32),
        grid_spec=grid_spec,
        compiler_params=pltpu.CompilerParams(dimension_semantics=("parallel",)),
    )(low_level, aspp_out, interp, p["dec_wll"], p["dec_bll"],
      p["dec_w3ll"], p["dec_w3up"], p["dec_b3"], p["dec_w4"], p["dec_b4"])
    return out.reshape(B, H, W, nc)


def segmentation_deeplabv3_forward(low_level, x, p, dilations):
    """low_level = features[2] (B,H,W,Cll), x = features[5] (B,h,w,Cin); NHWC f32."""
    _, H, W, _ = low_level.shape
    _, h, w, _ = x.shape
    aspp_out = aspp_forward(x, p, dilations)
    interp = jnp.asarray(np.kron(_bilinear_matrix(H, h), _bilinear_matrix(W, w)))
    return decoder_forward(low_level, aspp_out, interp, p)


# ---------------------------------------------------------------------------
# Parameters
# ---------------------------------------------------------------------------
def make_module_params(key, in_channels, low_level_channels, num_classes, dilations):
    """Raw, PyTorch-like parameters (f32 HWIO conv weights + BN (scale, bias))."""
    keys = iter(jax.random.split(key, 16))

    def kaiming(k, shape):
        fan_in = int(np.prod(shape[:-1]))
        return jax.random.normal(k, shape, jnp.float32) * np.float32(np.sqrt(2.0 / fan_in))

    def bn(c):  # eval-mode BN, default buffers: scale = 1/sqrt(1+eps), bias = 0
        scale = jnp.full((c,), 1.0 / np.sqrt(1.0 + BN_EPS), jnp.float32)
        return jnp.stack([scale, jnp.zeros((c,), jnp.float32)], axis=0)

    return {
        "proj_w": kaiming(next(keys), (low_level_channels, LL_CH)),
        "proj_bn": bn(LL_CH),
        "aspp0_w": kaiming(next(keys), (in_channels, ASPP_CH)),
        "aspp0_bn": bn(ASPP_CH),
        "asppd_w": [kaiming(next(keys), (3, 3, in_channels, ASPP_CH)) for _ in dilations],
        "asppd_bn": [bn(ASPP_CH) for _ in dilations],
        "aspp_pool_w": kaiming(next(keys), (in_channels, ASPP_CH)),
        "aspp_pool_bn": bn(ASPP_CH),
        "aspp_proj_w": kaiming(next(keys), (5 * ASPP_CH, ASPP_CH)),
        "aspp_proj_bn": bn(ASPP_CH),
        "cls3_w": kaiming(next(keys), (3, 3, LL_CH + ASPP_CH, ASPP_CH)),
        "cls3_bn": bn(ASPP_CH),
        "cls1_w": kaiming(next(keys), (ASPP_CH, num_classes)),
        "cls1_b": jax.random.uniform(next(keys), (num_classes,), jnp.float32,
                                     -1.0 / np.sqrt(ASPP_CH), 1.0 / np.sqrt(ASPP_CH)),
    }


def prepare_kernel_params(raw):
    """Fold BN scales into conv weights, reshape to im2col form, cast MXU weights to bf16."""
    def fold(wgt, bn_):
        return (wgt * bn_[0]).astype(jnp.bfloat16)

    cin = raw["aspp0_w"].shape[0]
    wd = jnp.stack([fold(wgt, b).reshape(9 * cin, ASPP_CH)
                    for wgt, b in zip(raw["asppd_w"], raw["asppd_bn"])], axis=0)
    wproj = fold(raw["aspp_proj_w"], raw["aspp_proj_bn"]).reshape(5, ASPP_CH, ASPP_CH)
    aspp_bias = jnp.stack(
        [raw["aspp0_bn"][1]] + [b[1] for b in raw["asppd_bn"]]
        + [raw["aspp_pool_bn"][1], raw["aspp_proj_bn"][1]], axis=0)       # (6, 256)

    cls3 = raw["cls3_w"] * raw["cls3_bn"][0]
    w3ll = cls3[:, :, :LL_CH, :].reshape(9, LL_CH, ASPP_CH).astype(jnp.bfloat16)
    w3up = cls3[:, :, LL_CH:, :].reshape(9 * ASPP_CH, ASPP_CH).astype(jnp.bfloat16)

    return {
        "aspp_w0": fold(raw["aspp0_w"], raw["aspp0_bn"]),
        "aspp_wd": wd,
        "aspp_wpool": fold(raw["aspp_pool_w"], raw["aspp_pool_bn"]),
        "aspp_wproj": wproj,
        "aspp_bias": aspp_bias,
        "dec_wll": fold(raw["proj_w"], raw["proj_bn"]),
        "dec_bll": raw["proj_bn"][1][None, :],
        "dec_w3ll": w3ll,
        "dec_w3up": w3up,
        "dec_b3": raw["cls3_bn"][1][None, :],
        "dec_w4": raw["cls1_w"].astype(jnp.bfloat16),
        "dec_b4": raw["cls1_b"][None, :],
    }


# ---------------------------------------------------------------------------
# Pure-JAX f32 reference of the PyTorch forward (NHWC, eval-mode BN/Dropout)
# ---------------------------------------------------------------------------
def _resize_bilinear(t, H, W):
    _, h, w, _ = t.shape
    y0, y1, fy = _bilinear_1d(H, h)
    x0, x1, fx = _bilinear_1d(W, w)
    fy = fy[None, :, None, None]
    fx = fx[None, None, :, None]
    ry = t[:, y0, :, :] * (1.0 - fy) + t[:, y1, :, :] * fy
    return ry[:, :, x0, :] * (1.0 - fx) + ry[:, :, x1, :] * fx


def reference_forward(low_level, x, raw, dilations):
    hp = lax.Precision.HIGHEST

    def bnrelu(t, bn_):
        return jnp.maximum(t * bn_[0] + bn_[1], 0.0)

    def conv1x1(t, wgt):
        return jnp.einsum("bhwc,cd->bhwd", t, wgt, precision=hp)

    def conv3x3(t, w_hwio, d):
        return lax.conv_general_dilated(
            t, w_hwio, (1, 1), [(d, d), (d, d)], rhs_dilation=(d, d),
            dimension_numbers=("NHWC", "HWIO", "NHWC"), precision=hp)

    ll = bnrelu(conv1x1(low_level, raw["proj_w"]), raw["proj_bn"])

    branches = [bnrelu(conv1x1(x, raw["aspp0_w"]), raw["aspp0_bn"])]
    for i, d in enumerate(dilations):
        branches.append(bnrelu(conv3x3(x, raw["asppd_w"][i], d), raw["asppd_bn"][i]))
    gap = jnp.mean(x, axis=(1, 2), keepdims=True)
    pool = bnrelu(conv1x1(gap, raw["aspp_pool_w"]), raw["aspp_pool_bn"])
    branches.append(jnp.broadcast_to(pool, branches[0].shape))
    aspp = bnrelu(conv1x1(jnp.concatenate(branches, axis=-1), raw["aspp_proj_w"]),
                  raw["aspp_proj_bn"])

    up = _resize_bilinear(aspp, low_level.shape[1], low_level.shape[2])
    cat2 = jnp.concatenate([ll, up], axis=-1)
    a = bnrelu(conv3x3(cat2, raw["cls3_w"], 1), raw["cls3_bn"])
    return conv1x1(a, raw["cls1_w"]) + raw["cls1_b"]


if __name__ == "__main__":
    key = jax.random.PRNGKey(0)
    k_ll, k_x, k_p = jax.random.split(key, 3)

    # Small test shapes.  In PyTorch NCHW this corresponds to
    # features[2] = [2, 64, 16, 16] and features[5] = [2, 128, 8, 8]; the module
    # itself fixes the internal widths (48 / 256 / 304 -> 256 -> num_classes).
    B = 2
    in_channels = 128           # channels of features[5]
    low_level_channels = 64     # channels of features[2]
    num_classes = 8
    H = W = 16                  # low-level / output spatial size
    h = w = 8                   # high-level (ASPP) spatial size
    dilations = (1, 2, 3)       # module default (12, 24, 36) also works, but at
                                # 8x8 those taps fall entirely in the zero pad.

    low_level = jax.random.normal(k_ll, (B, H, W, low_level_channels), jnp.float32)
    x = jax.random.normal(k_x, (B, h, w, in_channels), jnp.float32)

    raw = make_module_params(k_p, in_channels, low_level_channels, num_classes, dilations)
    kp = prepare_kernel_params(raw)

    out = segmentation_deeplabv3_forward(low_level, x, kp, dilations)
    out = jax.block_until_ready(out)

    ref = reference_forward(low_level, x, raw, dilations)
    # Tolerance sized for bf16 MXU operands (f32 accumulation) vs an f32 reference.
    np.testing.assert_allclose(np.asarray(out), np.asarray(ref), rtol=5e-2, atol=5e-2)

    print("KERNEL_OK")
</pallas_src>

<mosaic_0001>
module attributes {stable_mosaic.version = 11 : i64} {
  func.func @kernel(%arg0: i32, %arg1: memref<1x8x8x128xf32, #tpu.memory_space<vmem>>, %arg2: memref<128x256xbf16, #tpu.memory_space<vmem>>, %arg3: memref<3x1152x256xbf16, #tpu.memory_space<vmem>>, %arg4: memref<128x256xbf16, #tpu.memory_space<vmem>>, %arg5: memref<5x256x256xbf16, #tpu.memory_space<vmem>>, %arg6: memref<6x256xf32, #tpu.memory_space<vmem>>, %arg7: memref<1x64x256xf32, #tpu.memory_space<vmem>>, %arg8: memref<14x14x128xf32, #tpu.memory_space<vmem>>, %arg9: memref<64x1152xf32, #tpu.memory_space<vmem>>) attributes {dimension_semantics = [#tpu.dimension_semantics<parallel>], iteration_bounds = array<i64: 2>, scalar_prefetch = 0 : i64, scratch_operands = 2 : i64, tpu.core_type = #tpu.core_type<tc>, window_params = [{transform_indices = @transform_0, window_bounds = array<i64: 1, 8, 8, 128>}, {pipeline_mode = #tpu.pipeline_mode<synchronous>, transform_indices = @transform_1, window_bounds = array<i64: 128, 256>}, {pipeline_mode = #tpu.pipeline_mode<synchronous>, transform_indices = @transform_2, window_bounds = array<i64: 3, 1152, 256>}, {pipeline_mode = #tpu.pipeline_mode<synchronous>, transform_indices = @transform_3, window_bounds = array<i64: 128, 256>}, {pipeline_mode = #tpu.pipeline_mode<synchronous>, transform_indices = @transform_4, window_bounds = array<i64: 5, 256, 256>}, {pipeline_mode = #tpu.pipeline_mode<synchronous>, transform_indices = @transform_5, window_bounds = array<i64: 6, 256>}, {transform_indices = @transform_6, window_bounds = array<i64: 1, 64, 256>}]} {
    %c0 = arith.constant 0 : index
    %c0_0 = arith.constant 0 : index
    %c0_1 = arith.constant 0 : index
    %c0_2 = arith.constant 0 : index
    %0 = vector.load %arg1[%c0, %c0_0, %c0_1, %c0_2] : memref<1x8x8x128xf32, #tpu.memory_space<vmem>>, vector<1x8x8x128xf32>
    %1 = vector.shape_cast %0 : vector<1x8x8x128xf32> to vector<8x8x128xf32>
    %2 = vector.shape_cast %1 : vector<8x8x128xf32> to vector<64x128xf32>
    %cst = arith.constant 0.000000e+00 : f32
    %3 = vector.broadcast %cst : f32 to vector<3x14x128xf32>
    %c0_3 = arith.constant 0 : index
    %c0_4 = arith.constant 0 : index
    %c0_5 = arith.constant 0 : index
    %4 = vector.load %arg8[%c0_3, %c0_4, %c0_5] : memref<14x14x128xf32, #tpu.memory_space<vmem>>, vector<3x14x128xf32>
    tpu.vector_store %arg8[%c0_3, %c0_4, %c0_5], %3 {strides = array<i32>} : memref<14x14x128xf32, #tpu.memory_space<vmem>>, vector<3x14x128xf32>,
    %cst_6 = arith.constant 0.000000e+00 : f32
    %5 = vector.broadcast %cst_6 : f32 to vector<3x14x128xf32>
    %c11 = arith.constant 11 : index
    %c0_7 = arith.constant 0 : index
    %c0_8 = arith.constant 0 : index
    %6 = vector.load %arg8[%c11, %c0_7, %c0_8] : memref<14x14x128xf32, #tpu.memory_space<vmem>>, vector<3x14x128xf32>
    tpu.vector_store %arg8[%c11, %c0_7, %c0_8], %5 {strides = array<i32>} : memref<14x14x128xf32, #tpu.memory_space<vmem>>, vector<3x14x128xf32>,
    %cst_9 = arith.constant 0.000000e+00 : f32
    %7 = vector.broadcast %cst_9 : f32 to vector<14x3x128xf32>
    %c0_10 = arith.constant 0 : index
    %c0_11 = arith.constant 0 : index
    %c0_12 = arith.constant 0 : index
    %8 = vector.load %arg8[%c0_10, %c0_11, %c0_12] : memref<14x14x128xf32, #tpu.memory_space<vmem>>, vector<14x3x128xf32>
    tpu.vector_store %arg8[%c0_10, %c0_11, %c0_12], %7 {strides = array<i32>} : memref<14x14x128xf32, #tpu.memory_space<vmem>>, vector<14x3x128xf32>,
    %cst_13 = arith.constant 0.000000e+00 : f32
    %9 = vector.broadcast %cst_13 : f32 to vector<14x3x128xf32>
    %c0_14 = arith.constant 0 : index
    %c11_15 = arith.constant 11 : index
    %c0_16 = arith.constant 0 : index
    %10 = vector.load %arg8[%c0_14, %c11_15, %c0_16] : memref<14x14x128xf32, #tpu.memory_space<vmem>>, vector<14x3x128xf32>
    tpu.vector_store %arg8[%c0_14, %c11_15, %c0_16], %9 {strides = array<i32>} : memref<14x14x128xf32, #tpu.memory_space<vmem>>, vector<14x3x128xf32>,
    %c3 = arith.constant 3 : index
    %c3_17 = arith.constant 3 : index
    %c0_18 = arith.constant 0 : index
    %11 = vector.load %arg8[%c3, %c3_17, %c0_18] : memref<14x14x128xf32, #tpu.memory_space<vmem>>, vector<8x8x128xf32>
    tpu.vector_store %arg8[%c3, %c3_17, %c0_18], %1 {strides = array<i32>} : memref<14x14x128xf32, #tpu.memory_space<vmem>>, vector<8x8x128xf32>,
    %12 = arith.truncf %2 : vector<64x128xf32> to vector<64x128xbf16>
    %c0_19 = arith.constant 0 : index
    %c0_20 = arith.constant 0 : index
    %13 = vector.load %arg2[%c0_19, %c0_20] : memref<128x256xbf16, #tpu.memory_space<vmem>>, vector<128x256xbf16>
    %cst_21 = arith.constant dense<0.000000e+00> : vector<64x256xf32>
    %14 = tpu.matmul %12, %13, %cst_21 {dimension_numbers = #tpu.dot_dimension_numbers<[1], [0], [0], [1], [0, 0, 1, 1], [], []>} : vector<64x128xbf16>, vector<128x256xbf16>, vector<64x256xf32> -> vector<64x256xf32>
    %c0_22 = arith.constant 0 : index
    %c0_23 = arith.constant 0 : index
    %15 = vector.load %arg6[%c0_22, %c0_23] : memref<6x256xf32, #tpu.memory_space<vmem>>, vector<1x256xf32>
    %16 = vector.broadcast %15 : vector<1x256xf32> to vector<64x256xf32>
    %17 = arith.addf %14, %16 : vector<64x256xf32>
    %cst_24 = arith.constant 0.000000e+00 : f32
    %18 = vector.broadcast %cst_24 : f32 to vector<64x256xf32>
    %19 = arith.maximumf %17, %18 : vector<64x256xf32>
    %20 = arith.truncf %19 : vector<64x256xf32> to vector<64x256xbf16>
    %c0_25 = arith.constant 0 : index
    %c0_26 = arith.constant 0 : index
    %c0_27 = arith.constant 0 : index
    %21 = vector.load %arg5[%c0_25, %c0_26, %c0_27] : memref<5x256x256xbf16, #tpu.memory_space<vmem>>, vector<1x256x256xbf16>
    %22 = vector.shape_cast %21 : vector<1x256x256xbf16> to vector<256x256xbf16>
    %cst_28 = arith.constant dense<0.000000e+00> : vector<64x256xf32>
    %23 = tpu.matmul %20, %22, %cst_28 {dimension_numbers = #tpu.dot_dimension_numbers<[1], [0], [0], [1], [0, 0, 1, 1], [], []>} : vector<64x256xbf16>, vector<256x256xbf16>, vector<64x256xf32> -> vector<64x256xf32>
    %c2 = arith.constant 2 : index
    %c2_29 = arith.constant 2 : index
    %c0_30 = arith.constant 0 : index
    %24 = vector.load %arg8[%c2, %c2_29, %c0_30] : memref<14x14x128xf32, #tpu.memory_space<vmem>>, vector<8x8x128xf32>
    %25 = vector.shape_cast %24 : vector<8x8x128xf32> to vector<64x128xf32>
    %c0_31 = arith.constant 0 : index
    %c0_32 = arith.constant 0 : index
    %26 = vector.load %arg9[%c0_31, %c0_32] : memref<64x1152xf32, #tpu.memory_space<vmem>>, vector<64x128xf32>
    tpu.vector_store %arg9[%c0_31, %c0_32], %25 {strides = array<i32>} : memref<64x1152xf32, #tpu.memory_space<vmem>>, vector<64x128xf32>,
    %c2_33 = arith.constant 2 : index
    %c3_34 = arith.constant 3 : index
    %c0_35 = arith.constant 0 : index
    %27 = vector.load %arg8[%c2_33, %c3_34, %c0_35] : memref<14x14x128xf32, #tpu.memory_space<vmem>>, vector<8x8x128xf32>
    %28 = vector.shape_cast %27 : vector<8x8x128xf32> to vector<64x128xf32>
    %c0_36 = arith.constant 0 : index
    %c128 = arith.constant 128 : index
    %29 = vector.load %arg9[%c0_36, %c128] : memref<64x1152xf32, #tpu.memory_space<vmem>>, vector<64x128xf32>
    tpu.vector_store %arg9[%c0_36, %c128], %28 {strides = array<i32>} : memref<64x1152xf32, #tpu.memory_space<vmem>>, vector<64x128xf32>,
    %c2_37 = arith.constant 2 : index
    %c4 = arith.constant 4 : index
    %c0_38 = arith.constant 0 : index
    %30 = vector.load %arg8[%c2_37, %c4, %c0_38] : memref<14x14x128xf32, #tpu.memory_space<vmem>>, vector<8x8x128xf32>
    %31 = vector.shape_cast %30 : vector<8x8x128xf32> to vector<64x128xf32>
    %c0_39 = arith.constant 0 : index
    %c256 = arith.constant 256 : index
    %32 = vector.load %arg9[%c0_39, %c256] : memref<64x1152xf32, #tpu.memory_space<vmem>>, vector<64x128xf32>
    tpu.vector_store %arg9[%c0_39, %c256], %31 {strides = array<i32>} : memref<64x1152xf32, #tpu.memory_space<vmem>>, vector<64x128xf32>,
    %c3_40 = arith.constant 3 : index
    %c2_41 = arith.constant 2 : index
    %c0_42 = arith.constant 0 : index
    %33 = vector.load %arg8[%c3_40, %c2_41, %c0_42] : memref<14x14x128xf32, #tpu.memory_space<vmem>>, vector<8x8x128xf32>
    %34 = vector.shape_cast %33 : vector<8x8x128xf32> to vector<64x128xf32>
    %c0_43 = arith.constant 0 : index
    %c384 = arith.constant 384 : index
    %35 = vector.load %arg9[%c0_43, %c384] : memref<64x1152xf32, #tpu.memory_space<vmem>>, vector<64x128xf32>
    tpu.vector_store %arg9[%c0_43, %c384], %34 {strides = array<i32>} : memref<64x1152xf32, #tpu.memory_space<vmem>>, vector<64x128xf32>,
    %c3_44 = arith.constant 3 : index
    %c3_45 = arith.constant 3 : index
    %c0_46 = arith.constant 0 : index
    %36 = vector.load %arg8[%c3_44, %c3_45, %c0_46] : memref<14x14x128xf32, #tpu.memory_space<vmem>>, vector<8x8x128xf32>
    %37 = vector.shape_cast %36 : vector<8x8x128xf32> to vector<64x128xf32>
    %c0_47 = arith.constant 0 : index
    %c512 = arith.constant 512 : index
    %38 = vector.load %arg9[%c0_47, %c512] : memref<64x1152xf32, #tpu.memory_space<vmem>>, vector<64x128xf32>
    tpu.vector_store %arg9[%c0_47, %c512], %37 {strides = array<i32>} : memref<64x1152xf32, #tpu.memory_space<vmem>>, vector<64x128xf32>,
    %c3_48 = arith.constant 3 : index
    %c4_49 = arith.constant 4 : index
    %c0_50 = arith.constant 0 : index
    %39 = vector.load %arg8[%c3_48, %c4_49, %c0_50] : memref<14x14x128xf32, #tpu.memory_space<vmem>>, vector<8x8x128xf32>
    %40 = vector.shape_cast %39 : vector<8x8x128xf32> to vector<64x128xf32>
    %c0_51 = arith.constant 0 : index
    %c640 = arith.constant 640 : index
    %41 = vector.load %arg9[%c0_51, %c640] : memref<64x1152xf32, #tpu.memory_space<vmem>>, vector<64x128xf32>
    tpu.vector_store %arg9[%c0_51, %c640], %40 {strides = array<i32>} : memref<64x1152xf32, #tpu.memory_space<vmem>>, vector<64x128xf32>,
    %c4_52 = arith.constant 4 : index
    %c2_53 = arith.constant 2 : index
    %c0_54 = arith.constant 0 : index
    %42 = vector.load %arg8[%c4_52, %c2_53, %c0_54] : memref<14x14x128xf32, #tpu.memory_space<vmem>>, vector<8x8x128xf32>
    %43 = vector.shape_cast %42 : vector<8x8x128xf32> to vector<64x128xf32>
    %c0_55 = arith.constant 0 : index
    %c768 = arith.constant 768 : index
    %44 = vector.load %arg9[%c0_55, %c768] : memref<64x1152xf32, #tpu.memory_space<vmem>>, vector<64x128xf32>
    tpu.vector_store %arg9[%c0_55, %c768], %43 {strides = array<i32>} : memref<64x1152xf32, #tpu.memory_space<vmem>>, vector<64x128xf32>,
    %c4_56 = arith.constant 4 : index
    %c3_57 = arith.constant 3 : index
    %c0_58 = arith.constant 0 : index
    %45 = vector.load %arg8[%c4_56, %c3_57, %c0_58] : memref<14x14x128xf32, #tpu.memory_space<vmem>>, vector<8x8x128xf32>
    %46 = vector.shape_cast %45 : vector<8x8x128xf32> to vector<64x128xf32>
    %c0_59 = arith.constant 0 : index
    %c896 = arith.constant 896 : index
    %47 = vector.load %arg9[%c0_59, %c896] : memref<64x1152xf32, #tpu.memory_space<vmem>>, vector<64x128xf32>
    tpu.vector_store %arg9[%c0_59, %c896], %46 {strides = array<i32>} : memref<64x1152xf32, #tpu.memory_space<vmem>>, vector<64x128xf32>,
    %c4_60 = arith.constant 4 : index
    %c4_61 = arith.constant 4 : index
    %c0_62 = arith.constant 0 : index
    %48 = vector.load %arg8[%c4_60, %c4_61, %c0_62] : memref<14x14x128xf32, #tpu.memory_space<vmem>>, vector<8x8x128xf32>
    %49 = vector.shape_cast %48 : vector<8x8x128xf32> to vector<64x128xf32>
    %c0_63 = arith.constant 0 : index
    %c1024 = arith.constant 1024 : index
    %50 = vector.load %arg9[%c0_63, %c1024] : memref<64x1152xf32, #tpu.memory_space<vmem>>, vector<64x128xf32>
    tpu.vector_store %arg9[%c0_63, %c1024], %49 {strides = array<i32>} : memref<64x1152xf32, #tpu.memory_space<vmem>>, vector<64x128xf32>,
    %c0_64 = arith.constant 0 : index
    %c0_65 = arith.constant 0 : index
    %51 = vector.load %arg9[%c0_64, %c0_65] : memref<64x1152xf32, #tpu.memory_space<vmem>>, vector<64x1152xf32>
    %52 = arith.truncf %51 : vector<64x1152xf32> to vector<64x1152xbf16>
    %c0_66 = arith.constant 0 : index
    %c0_67 = arith.constant 0 : index
    %c0_68 = arith.constant 0 : index
    %53 = vector.load %arg3[%c0_66, %c0_67, %c0_68] : memref<3x1152x256xbf16, #tpu.memory_space<vmem>>, vector<1x1152x256xbf16>
    %54 = vector.shape_cast %53 : vector<1x1152x256xbf16> to vector<1152x256xbf16>
    %cst_69 = arith.constant dense<0.000000e+00> : vector<64x256xf32>
    %55 = tpu.matmul %52, %54, %cst_69 {dimension_numbers = #tpu.dot_dimension_numbers<[1], [0], [0], [1], [0, 0, 1, 1], [], []>} : vector<64x1152xbf16>, vector<1152x256xbf16>, vector<64x256xf32> -> vector<64x256xf32>
    %c1 = arith.constant 1 : index
    %c0_70 = arith.constant 0 : index
    %56 = vector.load %arg6[%c1, %c0_70] : memref<6x256xf32, #tpu.memory_space<vmem>>, vector<1x256xf32>
    %57 = vector.broadcast %56 : vector<1x256xf32> to vector<64x256xf32>
    %58 = arith.addf %55, %57 : vector<64x256xf32>
    %cst_71 = arith.constant 0.000000e+00 : f32
    %59 = vector.broadcast %cst_71 : f32 to vector<64x256xf32>
    %60 = arith.maximumf %58, %59 : vector<64x256xf32>
    %61 = arith.truncf %60 : vector<64x256xf32> to vector<64x256xbf16>
    %c1_72 = arith.constant 1 : index
    %c0_73 = arith.constant 0 : index
    %c0_74 = arith.constant 0 : index
    %62 = vector.load %arg5[%c1_72, %c0_73, %c0_74] : memref<5x256x256xbf16, #tpu.memory_space<vmem>>, vector<1x256x256xbf16>
    %63 = vector.shape_cast %62 : vector<1x256x256xbf16> to vector<256x256xbf16>
    %cst_75 = arith.constant dense<0.000000e+00> : vector<64x256xf32>
    %64 = tpu.matmul %61, %63, %cst_75 {dimension_numbers = #tpu.dot_dimension_numbers<[1], [0], [0], [1], [0, 0, 1, 1], [], []>} : vector<64x256xbf16>, vector<256x256xbf16>, vector<64x256xf32> -> vector<64x256xf32>
    %65 = arith.addf %23, %64 : vector<64x256xf32>
    %c1_76 = arith.constant 1 : index
    %c1_77 = arith.constant 1 : index
    %c0_78 = arith.constant 0 : index
    %66 = vector.load %arg8[%c1_76, %c1_77, %c0_78] : memref<14x14x128xf32, #tpu.memory_space<vmem>>, vector<8x8x128xf32>
    %67 = vector.shape_cast %66 : vector<8x8x128xf32> to vector<64x128xf32>
    %c0_79 = arith.constant 0 : index
    %c0_80 = arith.constant 0 : index
    %68 = vector.load %arg9[%c0_79, %c0_80] : memref<64x1152xf32, #tpu.memory_space<vmem>>, vector<64x128xf32>
    tpu.vector_store %arg9[%c0_79, %c0_80], %67 {strides = array<i32>} : memref<64x1152xf32, #tpu.memory_space<vmem>>, vector<64x128xf32>,
    %c1_81 = arith.constant 1 : index
    %c3_82 = arith.constant 3 : index
    %c0_83 = arith.constant 0 : index
    %69 = vector.load %arg8[%c1_81, %c3_82, %c0_83] : memref<14x14x128xf32, #tpu.memory_space<vmem>>, vector<8x8x128xf32>
    %70 = vector.shape_cast %69 : vector<8x8x128xf32> to vector<64x128xf32>
    %c0_84 = arith.constant 0 : index
    %c128_85 = arith.constant 128 : index
    %71 = vector.load %arg9[%c0_84, %c128_85] : memref<64x1152xf32, #tpu.memory_space<vmem>>, vector<64x128xf32>
    tpu.vector_store %arg9[%c0_84, %c128_85], %70 {strides = array<i32>} : memref<64x1152xf32, #tpu.memory_space<vmem>>, vector<64x128xf32>,
    %c1_86 = arith.constant 1 : index
    %c5 = arith.constant 5 : index
    %c0_87 = arith.constant 0 : index
    %72 = vector.load %arg8[%c1_86, %c5, %c0_87] : memref<14x14x128xf32, #tpu.memory_space<vmem>>, vector<8x8x128xf32>
    %73 = vector.shape_cast %72 : vector<8x8x128xf32> to vector<64x128xf32>
    %c0_88 = arith.constant 0 : index
    %c256_89 = arith.constant 256 : index
    %74 = vector.load %arg9[%c0_88, %c256_89] : memref<64x1152xf32, #tpu.memory_space<vmem>>, vector<64x128xf32>
    tpu.vector_store %arg9[%c0_88, %c256_89], %73 {strides = array<i32>} : memref<64x1152xf32, #tpu.memory_space<vmem>>, vector<64x128xf32>,
    %c3_90 = arith.constant 3 : index
    %c1_91 = arith.constant 1 : index
    %c0_92 = arith.constant 0 : index
    %75 = vector.load %arg8[%c3_90, %c1_91, %c0_92] : memref<14x14x128xf32, #tpu.memory_space<vmem>>, vector<8x8x128xf32>
    %76 = vector.shape_cast %75 : vector<8x8x128xf32> to vector<64x128xf32>
    %c0_93 = arith.constant 0 : index
    %c384_94 = arith.constant 384 : index
    %77 = vector.load %arg9[%c0_93, %c384_94] : memref<64x1152xf32, #tpu.memory_space<vmem>>, vector<64x128xf32>
    tpu.vector_store %arg9[%c0_93, %c384_94], %76 {strides = array<i32>} : memref<64x1152xf32, #tpu.memory_space<vmem>>, vector<64x128xf32>,
    %c3_95 = arith.constant 3 : index
    %c3_96 = arith.constant 3 : index
    %c0_97 = arith.constant 0 : index
    %78 = vector.load %arg8[%c3_95, %c3_96, %c0_97] : memref<14x14x128xf32, #tpu.memory_space<vmem>>, vector<8x8x128xf32>
    %79 = vector.shape_cast %78 : vector<8x8x128xf32> to vector<64x128xf32>
    %c0_98 = arith.constant 0 : index
    %c512_99 = arith.constant 512 : index
    %80 = vector.load %arg9[%c0_98, %c512_99] : memref<64x1152xf32, #tpu.memory_space<vmem>>, vector<64x128xf32>
    tpu.vector_store %arg9[%c0_98, %c512_99], %79 {strides = array<i32>} : memref<64x1152xf32, #tpu.memory_space<vmem>>, vector<64x128xf32>,
    %c3_100 = arith.constant 3 : index
    %c5_101 = arith.constant 5 : index
    %c0_102 = arith.constant 0 : index
    %81 = vector.load %arg8[%c3_100, %c5_101, %c0_102] : memref<14x14x128xf32, #tpu.memory_space<vmem>>, vector<8x8x128xf32>
    %82 = vector.shape_cast %81 : vector<8x8x128xf32> to vector<64x128xf32>
    %c0_103 = arith.constant 0 : index
    %c640_104 = arith.constant 640 : index
    %83 = vector.load %arg9[%c0_103, %c640_104] : memref<64x1152xf32, #tpu.memory_space<vmem>>, vector<64x128xf32>
    tpu.vector_store %arg9[%c0_103, %c640_104], %82 {strides = array<i32>} : memref<64x1152xf32, #tpu.memory_space<vmem>>, vector<64x128xf32>,
    %c5_105 = arith.constant 5 : index
    %c1_106 = arith.constant 1 : index
    %c0_107 = arith.constant 0 : index
    %84 = vector.load %arg8[%c5_105, %c1_106, %c0_107] : memref<14x14x128xf32, #tpu.memory_space<vmem>>, vector<8x8x128xf32>
    %85 = vector.shape_cast %84 : vector<8x8x128xf32> to vector<64x128xf32>
    %c0_108 = arith.constant 0 : index
    %c768_109 = arith.constant 768 : index
    %86 = vector.load %arg9[%c0_108, %c768_109] : memref<64x1152xf32, #tpu.memory_space<vmem>>, vector<64x128xf32>
    tpu.vector_store %arg9[%c0_108, %c768_109], %85 {strides = array<i32>} : memref<64x1152xf32, #tpu.memory_space<vmem>>, vector<64x128xf32>,
    %c5_110 = arith.constant 5 : index
    %c3_111 = arith.constant 3 : index
    %c0_112 = arith.constant 0 : index
    %87 = vector.load %arg8[%c5_110, %c3_111, %c0_112] : memref<14x14x128xf32, #tpu.memory_space<vmem>>, vector<8x8x128xf32>
    %88 = vector.shape_cast %87 : vector<8x8x128xf32> to vector<64x128xf32>
    %c0_113 = arith.constant 0 : index
    %c896_114 = arith.constant 896 : index
    %89 = vector.load %arg9[%c0_113, %c896_114] : memref<64x1152xf32, #tpu.memory_space<vmem>>, vector<64x128xf32>
    tpu.vector_store %arg9[%c0_113, %c896_114], %88 {strides = array<i32>} : memref<64x1152xf32, #tpu.memory_space<vmem>>, vector<64x128xf32>,
    %c5_115 = arith.constant 5 : index
    %c5_116 = arith.constant 5 : index
    %c0_117 = arith.constant 0 : index
    %90 = vector.load %arg8[%c5_115, %c5_116, %c0_117] : memref<14x14x128xf32, #tpu.memory_space<vmem>>, vector<8x8x128xf32>
    %91 = vector.shape_cast %90 : vector<8x8x128xf32> to vector<64x128xf32>
    %c0_118 = arith.constant 0 : index
    %c1024_119 = arith.constant 1024 : index
    %92 = vector.load %arg9[%c0_118, %c1024_119] : memref<64x1152xf32, #tpu.memory_space<vmem>>, vector<64x128xf32>
    tpu.vector_store %arg9[%c0_118, %c1024_119], %91 {strides = array<i32>} : memref<64x1152xf32, #tpu.memory_space<vmem>>, vector<64x128xf32>,
    %c0_120 = arith.constant 0 : index
    %c0_121 = arith.constant 0 : index
    %93 = vector.load %arg9[%c0_120, %c0_121] : memref<64x1152xf32, #tpu.memory_space<vmem>>, vector<64x1152xf32>
    %94 = arith.truncf %93 : vector<64x1152xf32> to vector<64x1152xbf16>
    %c1_122 = arith.constant 1 : index
    %c0_123 = arith.constant 0 : index
    %c0_124 = arith.constant 0 : index
    %95 = vector.load %arg3[%c1_122, %c0_123, %c0_124] : memref<3x1152x256xbf16, #tpu.memory_space<vmem>>, vector<1x1152x256xbf16>
    %96 = vector.shape_cast %95 : vector<1x1152x256xbf16> to vector<1152x256xbf16>
    %cst_125 = arith.constant dense<0.000000e+00> : vector<64x256xf32>
    %97 = tpu.matmul %94, %96, %cst_125 {dimension_numbers = #tpu.dot_dimension_numbers<[1], [0], [0], [1], [0, 0, 1, 1], [], []>} : vector<64x1152xbf16>, vector<1152x256xbf16>, vector<64x256xf32> -> vector<64x256xf32>
    %c2_126 = arith.constant 2 : index
    %c0_127 = arith.constant 0 : index
    %98 = vector.load %arg6[%c2_126, %c0_127] : memref<6x256xf32, #tpu.memory_space<vmem>>, vector<1x256xf32>
    %99 = vector.broadcast %98 : vector<1x256xf32> to vector<64x256xf32>
    %100 = arith.addf %97, %99 : vector<64x256xf32>
    %cst_128 = arith.constant 0.000000e+00 : f32
    %101 = vector.broadcast %cst_128 : f32 to vector<64x256xf32>
    %102 = arith.maximumf %100, %101 : vector<64x256xf32>
    %103 = arith.truncf %102 : vector<64x256xf32> to vector<64x256xbf16>
    %c2_129 = arith.constant 2 : index
    %c0_130 = arith.constant 0 : index
    %c0_131 = arith.constant 0 : index
    %104 = vector.load %arg5[%c2_129, %c0_130, %c0_131] : memref<5x256x256xbf16, #tpu.memory_space<vmem>>, vector<1x256x256xbf16>
    %105 = vector.shape_cast %104 : vector<1x256x256xbf16> to vector<256x256xbf16>
    %cst_132 = arith.constant dense<0.000000e+00> : vector<64x256xf32>
    %106 = tpu.matmul %103, %105, %cst_132 {dimension_numbers = #tpu.dot_dimension_numbers<[1], [0], [0], [1], [0, 0, 1, 1], [], []>} : vector<64x256xbf16>, vector<256x256xbf16>, vector<64x256xf32> -> vector<64x256xf32>
    %107 = arith.addf %65, %106 : vector<64x256xf32>
    %c0_133 = arith.constant 0 : index
    %c0_134 = arith.constant 0 : index
    %c0_135 = arith.constant 0 : index
    %108 = vector.load %arg8[%c0_133, %c0_134, %c0_135] : memref<14x14x128xf32, #tpu.memory_space<vmem>>, vector<8x8x128xf32>
    %109 = vector.shape_cast %108 : vector<8x8x128xf32> to vector<64x128xf32>
    %c0_136 = arith.constant 0 : index
    %c0_137 = arith.constant 0 : index
    %110 = vector.load %arg9[%c0_136, %c0_137] : memref<64x1152xf32, #tpu.memory_space<vmem>>, vector<64x128xf32>
    tpu.vector_store %arg9[%c0_136, %c0_137], %109 {strides = array<i32>} : memref<64x1152xf32, #tpu.memory_space<vmem>>, vector<64x128xf32>,
    %c0_138 = arith.constant 0 : index
    %c3_139 = arith.constant 3 : index
    %c0_140 = arith.constant 0 : index
    %111 = vector.load %arg8[%c0_138, %c3_139, %c0_140] : memref<14x14x128xf32, #tpu.memory_space<vmem>>, vector<8x8x128xf32>
    %112 = vector.shape_cast %111 : vector<8x8x128xf32> to vector<64x128xf32>
    %c0_141 = arith.constant 0 : index
    %c128_142 = arith.constant 128 : index
    %113 = vector.load %arg9[%c0_141, %c128_142] : memref<64x1152xf32, #tpu.memory_space<vmem>>, vector<64x128xf32>
    tpu.vector_store %arg9[%c0_141, %c128_142], %112 {strides = array<i32>} : memref<64x1152xf32, #tpu.memory_space<vmem>>, vector<64x128xf32>,
    %c0_143 = arith.constant 0 : index
    %c6 = arith.constant 6 : index
    %c0_144 = arith.constant 0 : index
    %114 = vector.load %arg8[%c0_143, %c6, %c0_144] : memref<14x14x128xf32, #tpu.memory_space<vmem>>, vector<8x8x128xf32>
    %115 = vector.shape_cast %114 : vector<8x8x128xf32> to vector<64x128xf32>
    %c0_145 = arith.constant 0 : index
    %c256_146 = arith.constant 256 : index
    %116 = vector.load %arg9[%c0_145, %c256_146] : memref<64x1152xf32, #tpu.memory_space<vmem>>, vector<64x128xf32>
    tpu.vector_store %arg9[%c0_145, %c256_146], %115 {strides = array<i32>} : memref<64x1152xf32, #tpu.memory_space<vmem>>, vector<64x128xf32>,
    %c3_147 = arith.constant 3 : index
    %c0_148 = arith.constant 0 : index
    %c0_149 = arith.constant 0 : index
    %117 = vector.load %arg8[%c3_147, %c0_148, %c0_149] : memref<14x14x128xf32, #tpu.memory_space<vmem>>, vector<8x8x128xf32>
    %118 = vector.shape_cast %117 : vector<8x8x128xf32> to vector<64x128xf32>
    %c0_150 = arith.constant 0 : index
    %c384_151 = arith.constant 384 : index
    %119 = vector.load %arg9[%c0_150, %c384_151] : memref<64x1152xf32, #tpu.memory_space<vmem>>, vector<64x128xf32>
    tpu.vector_store %arg9[%c0_150, %c384_151], %118 {strides = array<i32>} : memref<64x1152xf32, #tpu.memory_space<vmem>>, vector<64x128xf32>,
    %c3_152 = arith.constant 3 : index
    %c3_153 = arith.constant 3 : index
    %c0_154 = arith.constant 0 : index
    %120 = vector.load %arg8[%c3_152, %c3_153, %c0_154] : memref<14x14x128xf32, #tpu.memory_space<vmem>>, vector<8x8x128xf32>
    %121 = vector.shape_cast %120 : vector<8x8x128xf32> to vector<64x128xf32>
    %c0_155 = arith.constant 0 : index
    %c512_156 = arith.constant 512 : index
    %122 = vector.load %arg9[%c0_155, %c512_156] : memref<64x1152xf32, #tpu.memory_space<vmem>>, vector<64x128xf32>
    tpu.vector_store %arg9[%c0_155, %c512_156], %121 {strides = array<i32>} : memref<64x1152xf32, #tpu.memory_space<vmem>>, vector<64x128xf32>,
    %c3_157 = arith.constant 3 : index
    %c6_158 = arith.constant 6 : index
    %c0_159 = arith.constant 0 : index
    %123 = vector.load %arg8[%c3_157, %c6_158, %c0_159] : memref<14x14x128xf32, #tpu.memory_space<vmem>>, vector<8x8x128xf32>
    %124 = vector.shape_cast %123 : vector<8x8x128xf32> to vector<64x128xf32>
    %c0_160 = arith.constant 0 : index
    %c640_161 = arith.constant 640 : index
    %125 = vector.load %arg9[%c0_160, %c640_161] : memref<64x1152xf32, #tpu.memory_space<vmem>>, vector<64x128xf32>
    tpu.vector_store %arg9[%c0_160, %c640_161], %124 {strides = array<i32>} : memref<64x1152xf32, #tpu.memory_space<vmem>>, vector<64x128xf32>,
    %c6_162 = arith.constant 6 : index
    %c0_163 = arith.constant 0 : index
    %c0_164 = arith.constant 0 : index
    %126 = vector.load %arg8[%c6_162, %c0_163, %c0_164] : memref<14x14x128xf32, #tpu.memory_space<vmem>>, vector<8x8x128xf32>
    %127 = vector.shape_cast %126 : vector<8x8x128xf32> to vector<64x128xf32>
    %c0_165 = arith.constant 0 : index
    %c768_166 = arith.constant 768 : index
    %128 = vector.load %arg9[%c0_165, %c768_166] : memref<64x1152xf32, #tpu.memory_space<vmem>>, vector<64x128xf32>
    tpu.vector_store %arg9[%c0_165, %c768_166], %127 {strides = array<i32>} : memref<64x1152xf32, #tpu.memory_space<vmem>>, vector<64x128xf32>,
    %c6_167 = arith.constant 6 : index
    %c3_168 = arith.constant 3 : index
    %c0_169 = arith.constant 0 : index
    %129 = vector.load %arg8[%c6_167, %c3_168, %c0_169] : memref<14x14x128xf32, #tpu.memory_space<vmem>>, vector<8x8x128xf32>
    %130 = vector.shape_cast %129 : vector<8x8x128xf32> to vector<64x128xf32>
    %c0_170 = arith.constant 0 : index
    %c896_171 = arith.constant 896 : index
    %131 = vector.load %arg9[%c0_170, %c896_171] : memref<64x1152xf32, #tpu.memory_space<vmem>>, vector<64x128xf32>
    tpu.vector_store %arg9[%c0_170, %c896_171], %130 {strides = array<i32>} : memref<64x1152xf32, #tpu.memory_space<vmem>>, vector<64x128xf32>,
    %c6_172 = arith.constant 6 : index
    %c6_173 = arith.constant 6 : index
    %c0_174 = arith.constant 0 : index
    %132 = vector.load %arg8[%c6_172, %c6_173, %c0_174] : memref<14x14x128xf32, #tpu.memory_space<vmem>>, vector<8x8x128xf32>
    %133 = vector.shape_cast %132 : vector<8x8x128xf32> to vector<64x128xf32>
    %c0_175 = arith.constant 0 : index
    %c1024_176 = arith.constant 1024 : index
    %134 = vector.load %arg9[%c0_175, %c1024_176] : memref<64x1152xf32, #tpu.memory_space<vmem>>, vector<64x128xf32>
    tpu.vector_store %arg9[%c0_175, %c1024_176], %133 {strides = array<i32>} : memref<64x1152xf32, #tpu.memory_space<vmem>>, vector<64x128xf32>,
    %c0_177 = arith.constant 0 : index
    %c0_178 = arith.constant 0 : index
    %135 = vector.load %arg9[%c0_177, %c0_178] : memref<64x1152xf32, #tpu.memory_space<vmem>>, vector<64x1152xf32>
    %136 = arith.truncf %135 : vector<64x1152xf32> to vector<64x1152xbf16>
    %c2_179 = arith.constant 2 : index
    %c0_180 = arith.constant 0 : index
    %c0_181 = arith.constant 0 : index
    %137 = vector.load %arg3[%c2_179, %c0_180, %c0_181] : memref<3x1152x256xbf16, #tpu.memory_space<vmem>>, vector<1x1152x256xbf16>
    %138 = vector.shape_cast %137 : vector<1x1152x256xbf16> to vector<1152x256xbf16>
    %cst_182 = arith.constant dense<0.000000e+00> : vector<64x256xf32>
    %139 = tpu.matmul %136, %138, %cst_182 {dimension_numbers = #tpu.dot_dimension_numbers<[1], [0], [0], [1], [0, 0, 1, 1], [], []>} : vector<64x1152xbf16>, vector<1152x256xbf16>, vector<64x256xf32> -> vector<64x256xf32>
    %c3_183 = arith.constant 3 : index
    %c0_184 = arith.constant 0 : index
    %140 = vector.load %arg6[%c3_183, %c0_184] : memref<6x256xf32, #tpu.memory_space<vmem>>, vector<1x256xf32>
    %141 = vector.broadcast %140 : vector<1x256xf32> to vector<64x256xf32>
    %142 = arith.addf %139, %141 : vector<64x256xf32>
    %cst_185 = arith.constant 0.000000e+00 : f32
    %143 = vector.broadcast %cst_185 : f32 to vector<64x256xf32>
    %144 = arith.maximumf %142, %143 : vector<64x256xf32>
    %145 = arith.truncf %144 : vector<64x256xf32> to vector<64x256xbf16>
    %c3_186 = arith.constant 3 : index
    %c0_187 = arith.constant 0 : index
    %c0_188 = arith.constant 0 : index
    %146 = vector.load %arg5[%c3_186, %c0_187, %c0_188] : memref<5x256x256xbf16, #tpu.memory_space<vmem>>, vector<1x256x256xbf16>
    %147 = vector.shape_cast %146 : vector<1x256x256xbf16> to vector<256x256xbf16>
    %cst_189 = arith.constant dense<0.000000e+00> : vector<64x256xf32>
    %148 = tpu.matmul %145, %147, %cst_189 {dimension_numbers = #tpu.dot_dimension_numbers<[1], [0], [0], [1], [0, 0, 1, 1], [], []>} : vector<64x256xbf16>, vector<256x256xbf16>, vector<64x256xf32> -> vector<64x256xf32>
    %149 = arith.addf %107, %148 : vector<64x256xf32>
    %cst_190 = arith.constant dense<0.000000e+00> : vector<128xf32>
    %150 = vector.multi_reduction <add>, %2, %cst_190 [0] : vector<64x128xf32> to vector<128xf32>
    %151 = vector.shape_cast %150 : vector<128xf32> to vector<1x128xf32>
    %cst_191 = arith.constant 6.400000e+01 : f32
    %152 = vector.broadcast %cst_191 : f32 to vector<1x128xf32>
    %153 = arith.divf %151, %152 : vector<1x128xf32>
    %154 = vector.shape_cast %153 : vector<1x128xf32> to vector<1x128xf32>
    %155 = vector.broadcast %154 : vector<1x128xf32> to vector<8x128xf32>
    %156 = arith.truncf %155 : vector<8x128xf32> to vector<8x128xbf16>
    %c0_192 = arith.constant 0 : index
    %c0_193 = arith.constant 0 : index
    %157 = vector.load %arg4[%c0_192, %c0_193] : memref<128x256xbf16, #tpu.memory_space<vmem>>, vector<128x256xbf16>
    %cst_194 = arith.constant dense<0.000000e+00> : vector<8x256xf32>
    %158 = tpu.matmul %156, %157, %cst_194 {dimension_numbers = #tpu.dot_dimension_numbers<[1], [0], [0], [1], [0, 0, 1, 1], [], []>} : vector<8x128xbf16>, vector<128x256xbf16>, vector<8x256xf32> -> vector<8x256xf32>
    %c4_195 = arith.constant 4 : index
    %c0_196 = arith.constant 0 : index
    %159 = vector.load %arg6[%c4_195, %c0_196] : memref<6x256xf32, #tpu.memory_space<vmem>>, vector<1x256xf32>
    %160 = vector.broadcast %159 : vector<1x256xf32> to vector<8x256xf32>
    %161 = arith.addf %158, %160 : vector<8x256xf32>
    %cst_197 = arith.constant 0.000000e+00 : f32
    %162 = vector.broadcast %cst_197 : f32 to vector<8x256xf32>
    %163 = arith.maximumf %161, %162 : vector<8x256xf32>
    %164 = arith.truncf %163 : vector<8x256xf32> to vector<8x256xbf16>
    %c4_198 = arith.constant 4 : index
    %c0_199 = arith.constant 0 : index
    %c0_200 = arith.constant 0 : index
    %165 = vector.load %arg5[%c4_198, %c0_199, %c0_200] : memref<5x256x256xbf16, #tpu.memory_space<vmem>>, vector<1x256x256xbf16>
    %166 = vector.shape_cast %165 : vector<1x256x256xbf16> to vector<256x256xbf16>
    %cst_201 = arith.constant dense<0.000000e+00> : vector<8x256xf32>
    %167 = tpu.matmul %164, %166, %cst_201 {dimension_numbers = #tpu.dot_dimension_numbers<[1], [0], [0], [1], [0, 0, 1, 1], [], []>} : vector<8x256xbf16>, vector<256x256xbf16>, vector<8x256xf32> -> vector<8x256xf32>
    %168 = vector.extract_strided_slice %167 {offsets = [0, 0], sizes = [1, 256], strides = [1, 1]} : vector<8x256xf32> to vector<1x256xf32>
    %169 = vector.broadcast %168 : vector<1x256xf32> to vector<64x256xf32>
    %170 = arith.addf %149, %169 : vector<64x256xf32>
    %c5_202 = arith.constant 5 : index
    %c0_203 = arith.constant 0 : index
    %171 = vector.load %arg6[%c5_202, %c0_203] : memref<6x256xf32, #tpu.memory_space<vmem>>, vector<1x256xf32>
    %172 = vector.broadcast %171 : vector<1x256xf32> to vector<64x256xf32>
    %173 = arith.addf %170, %172 : vector<64x256xf32>
    %cst_204 = arith.constant 0.000000e+00 : f32
    %174 = vector.broadcast %cst_204 : f32 to vector<64x256xf32>
    %175 = arith.maximumf %173, %174 : vector<64x256xf32>
    %c0_205 = arith.constant 0 : index
    %c0_206 = arith.constant 0 : index
    %c0_207 = arith.constant 0 : index
    %176 = vector.load %arg7[%c0_205, %c0_206, %c0_207] : memref<1x64x256xf32, #tpu.memory_space<vmem>>, vector<1x64x256xf32>
    %177 = vector.shape_cast %176 : vector<1x64x256xf32> to vector<64x256xf32>
    %178 = vector.shape_cast %175 : vector<64x256xf32> to vector<1x64x256xf32>
    tpu.vector_store %arg7[%c0_205, %c0_206, %c0_207], %178 {strides = array<i32>} : memref<1x64x256xf32, #tpu.memory_space<vmem>>, vector<1x64x256xf32>,
    return
  }
  func.func @transform_0(%arg0: i32) -> (i32, i32, i32, i32) {
    %c0_i32 = arith.constant 0 : i32
    %c0_i32_0 = arith.constant 0 : i32
    %c0_i32_1 = arith.constant 0 : i32
    %c0_i32_2 = arith.constant 0 : i32
    return %arg0, %c0_i32, %c0_i32_0, %c0_i32_1 : i32, i32, i32, i32
  }
  func.func @transform_1(%arg0: i32) -> (i32, i32) {
    %c0_i32 = arith.constant 0 : i32
    %c0_i32_0 = arith.constant 0 : i32
    %c0_i32_1 = arith.constant 0 : i32
    return %c0_i32, %c0_i32_0 : i32, i32
  }
  func.func @transform_2(%arg0: i32) -> (i32, i32, i32) {
    %c0_i32 = arith.constant 0 : i32
    %c0_i32_0 = arith.constant 0 : i32
    %c0_i32_1 = arith.constant 0 : i32
    %c0_i32_2 = arith.constant 0 : i32
    return %c0_i32, %c0_i32_0, %c0_i32_1 : i32, i32, i32
  }
  func.func @transform_3(%arg0: i32) -> (i32, i32) {
    %c0_i32 = arith.constant 0 : i32
    %c0_i32_0 = arith.constant 0 : i32
    %c0_i32_1 = arith.constant 0 : i32
    return %c0_i32, %c0_i32_0 : i32, i32
  }
  func.func @transform_4(%arg0: i32) -> (i32, i32, i32) {
    %c0_i32 = arith.constant 0 : i32
    %c0_i32_0 = arith.constant 0 : i32
    %c0_i32_1 = arith.constant 0 : i32
    %c0_i32_2 = arith.constant 0 : i32
    return %c0_i32, %c0_i32_0, %c0_i32_1 : i32, i32, i32
  }
  func.func @transform_5(%arg0: i32) -> (i32, i32) {
    %c0_i32 = arith.constant 0 : i32
    %c0_i32_0 = arith.constant 0 : i32
    %c0_i32_1 = arith.constant 0 : i32
    return %c0_i32, %c0_i32_0 : i32, i32
  }
  func.func @transform_6(%arg0: i32) -> (i32, i32, i32) {
    %c0_i32 = arith.constant 0 : i32
    %c0_i32_0 = arith.constant 0 : i32
    %c0_i32_1 = arith.constant 0 : i32
    return %arg0, %c0_i32, %c0_i32_0 : i32, i32, i32
  }
}

</mosaic_0001>

<llo_original>
// kernel: tpu_custom_call.1
$region0: #{tpu_custom_call.1}
  #allocation0 [shape = 'u32[]', space=smem, size = 0x4, offset = 0x4, fixed_abs, tag = 'smem constant byte address 0x4 - core index']
  #allocation1 [shape = 'u32[144,128]{1,0:T(1,128)}', space=vmem, size = 0x12000, scoped, tag = 'internal scratch']
  #allocation2 [shape = 'f32[14,14,128]{2,1,0:T(8,128)}', space=vmem, size = 0x1c000, scoped, tag = 'scratch operand']
  #allocation3 [shape = 'f32[64,1152]{1,0:T(8,128)}', space=vmem, size = 0x48000, scoped, tag = 'scratch operand']
  %s0 = inlined_call_operand.hbm [shape: f32[2,8,8,128], index: 0, kind: input, shape index: {}]
  %s1 = inlined_call_operand.hbm [shape: bf16[128,256], index: 1, kind: input, shape index: {}]
  %s2 = inlined_call_operand.hbm [shape: bf16[3,1152,256], index: 2, kind: input, shape index: {}]
  %s3 = inlined_call_operand.hbm [shape: bf16[128,256], index: 3, kind: input, shape index: {}]
  %s4 = inlined_call_operand.hbm [shape: bf16[5,256,256], index: 4, kind: input, shape index: {}]
  %s5 = inlined_call_operand.hbm [shape: f32[6,256], index: 5, kind: input, shape index: {}]
  %s6 = inlined_call_operand.hbm [shape: f32[2,64,256], index: 6, kind: output, shape index: {}]
  %s7 = sld [smem:[#allocation0]]
  $region81: #{tpu_custom_call.1} parent=0
    _
  %s9 = ssub.s32 1, %s7
  %s10 = scalar_select 0, %s9, %s7
  $region1: #{tpu_custom_call.1} parent=0
    #allocation4 [shape = 'u8[65536]{0}', space=vmem, size = 0x10000, scoped, tag = 'input window, operand 0']
    #allocation5 [shape = 's32[2]{0}', space=sflag, size = 0x8, scoped, tag = 'scoped memory for tpu_custom_call.1']
    #allocation6 [shape = 's32[2]{0}', space=sflag, size = 0x8, scoped, tag = 'scoped memory for tpu_custom_call.1']
    #allocation7 [shape = 'u8[65536]{0}', space=vmem, size = 0x10000, scoped, tag = 'input window, operand 1, single buffered']
    #allocation8 [shape = 's32[1]{0}', space=sflag, size = 0x4, scoped, tag = 'scoped memory for tpu_custom_call.1']
    #allocation9 [shape = 'u8[1769472]{0}', space=vmem, size = 0x1b0000, scoped, tag = 'input window, operand 2, single buffered']
    #allocation10 [shape = 'u8[65536]{0}', space=vmem, size = 0x10000, scoped, tag = 'input window, operand 3, single buffered']
    #allocation11 [shape = 's32[1]{0}', space=sflag, size = 0x4, scoped, tag = 'scoped memory for tpu_custom_call.1']
    #allocation12 [shape = 'u8[655360]{0}', space=vmem, size = 0xa0000, scoped, tag = 'input window, operand 4, single buffered']
    #allocation13 [shape = 'u8[8192]{0}', space=vmem, size = 0x2000, scoped, tag = 'input window, operand 5, single buffered']
    #allocation14 [shape = 's32[1]{0}', space=sflag, size = 0x4, scoped, tag = 'scoped memory for tpu_custom_call.1']
    #allocation15 [shape = 'u8[131072]{0}', space=vmem, size = 0x20000, scoped, tag = 'output window, operand 0']
    %11 = vsyncpa [#allocation5], 0
    %s12 = scalar_lea.sflag [#allocation5], 1
    %13 = vsyncpa %s12, 0
    %14 = vsyncpa [#allocation8], 0
    %15 = vsyncpa [#allocation11], 0
    %16 = vsyncpa [#allocation14], 0
    %17 = vsyncpa [#allocation6], 0
    %s18 = scalar_lea.sflag [#allocation6], 1
    %19 = vsyncpa %s18, 0
    loop: start=0, step=1, limit=4
    $region2: #{tpu_custom_call.1} parent=1 // loop_pre_header
      _
    $region3: #{tpu_custom_call.1} parent=1 // loop_header
      %s21 = sphi 0, %s25
      %p22 = scmp.ge.s32.totalorder %s21, 4
      %s31 = sphi 0, %s33
      %s34 = sphi 0, %s31
      %s35 = sphi 0, %s34
      %s51 = sphi 0, %s35
      %s55 = sphi 0, %s55
      %s57 = sphi 0, %s55
      %s58 = sphi 0, %s57
      %s72 = sphi 0, %s58
      %s76 = sphi 0, %s76
      %s78 = sphi 0, %s76
      %s79 = sphi 0, %s78
      %s93 = sphi 0, %s79
      %s97 = sphi 0, %s97
      %s99 = sphi 0, %s97
      %s100 = sphi 0, %s99
      %s114 = sphi 0, %s100
      %s118 = sphi 0, %s118
      %s120 = sphi 0, %s118
      %s121 = sphi 0, %s120
      %s135 = sphi 0, %s121
      %s139 = sphi 0, %s139
      %s141 = sphi 0, %s139
      %s142 = sphi 0, %s141
      %s156 = sphi 0, %s142
      %s162 = sphi 0, %s164
      %s165 = sphi 0, %s162
      %s166 = sphi 0, %s165
      %s182 = sphi 0, %s166
    $region4: #{tpu_custom_call.1} parent=1 // loop_header_branch
      %24 = sbr.rel (%p22) target = $region8
    $region5: #{tpu_custom_call.1} parent=1 // loop_body
      %s26 = ssub.s32 %s21, 1
      %s27 = ssub.s32 %s21, 2
      %s28 = sadd.s32 %s21, 1
      %s29 = ssub.s32 %s21, %s28
      %p30 = scmp.eq.s32.totalorder %s29, 0
      %s32 = sadd.s32 %s31, 1
      %s33 = scalar_select %p30, %s31, %s32
      %p36 = pneg %p30
      %p37 = scmp.eq.s32.totalorder %s21, 1
      %p38 = por %p36, %p37
      %p39 = scmp.ne.s32.totalorder %s31, %s34
      %p40 = scmp.eq.s32.totalorder %s21, 0
      %p41 = por %p39, %p40
      %p42 = scmp.ne.s32.totalorder %s31, %s34
      %p43 = scmp.eq.s32.totalorder %s26, 1
      %p44 = por %p42, %p43
      %p45 = scmp.ne.s32.totalorder %s34, %s35
      %p46 = scmp.eq.s32.totalorder %s26, 0
      %p47 = por %p45, %p46
      %p48 = scmp.ne.s32.totalorder %s34, %s35
      %p49 = scmp.eq.s32.totalorder %s27, 1
      %p50 = por %p48, %p49
      %p52 = scmp.ne.s32.totalorder %s35, %s51
      %p53 = scmp.eq.s32.totalorder %s27, 0
      %p54 = por %p52, %p53
      %s56 = sadd.s32 %s55, 1
      %p59 = scmp.eq.s32.totalorder %s21, 1
      %p60 = scmp.ne.s32.totalorder %s55, %s57
      %p61 = scmp.eq.s32.totalorder %s21, 0
      %p62 = por %p60, %p61
      %p63 = scmp.ne.s32.totalorder %s55, %s57
      %p64 = scmp.eq.s32.totalorder %s26, 1
      %p65 = por %p63, %p64
      %p66 = scmp.ne.s32.totalorder %s57, %s58
      %p67 = scmp.eq.s32.totalorder %s26, 0
      %p68 = por %p66, %p67
      %p69 = scmp.ne.s32.totalorder %s57, %s58
      %p70 = scmp.eq.s32.totalorder %s27, 1
      %p71 = por %p69, %p70
      %p73 = scmp.ne.s32.totalorder %s58, %s72
      %p74 = scmp.eq.s32.totalorder %s27, 0
      %p75 = por %p73, %p74
      %s77 = sadd.s32 %s76, 1
      %p80 = scmp.eq.s32.totalorder %s21, 1
      %p81 = scmp.ne.s32.totalorder %s76, %s78
      %p82 = scmp.eq.s32.totalorder %s21, 0
      %p83 = por %p81, %p82
      %p84 = scmp.ne.s32.totalorder %s76, %s78
      %p85 = scmp.eq.s32.totalorder %s26, 1
      %p86 = por %p84, %p85
      %p87 = scmp.ne.s32.totalorder %s78, %s79
      %p88 = scmp.eq.s32.totalorder %s26, 0
      %p89 = por %p87, %p88
      %p90 = scmp.ne.s32.totalorder %s78, %s79
      %p91 = scmp.eq.s32.totalorder %s27, 1
      %p92 = por %p90, %p91
      %p94 = scmp.ne.s32.totalorder %s79, %s93
      %p95 = scmp.eq.s32.totalorder %s27, 0
      %p96 = por %p94, %p95
      %s98 = sadd.s32 %s97, 1
      %p101 = scmp.eq.s32.totalorder %s21, 1
      %p102 = scmp.ne.s32.totalorder %s97, %s99
      %p103 = scmp.eq.s32.totalorder %s21, 0
      %p104 = por %p102, %p103
      %p105 = scmp.ne.s32.totalorder %s97, %s99
      %p106 = scmp.eq.s32.totalorder %s26, 1
      %p107 = por %p105, %p106
      %p108 = scmp.ne.s32.totalorder %s99, %s100
      %p109 = scmp.eq.s32.totalorder %s26, 0
      %p110 = por %p108, %p109
      %p111 = scmp.ne.s32.totalorder %s99, %s100
      %p112 = scmp.eq.s32.totalorder %s27, 1
      %p113 = por %p111, %p112
      %p115 = scmp.ne.s32.totalorder %s100, %s114
      %p116 = scmp.eq.s32.totalorder %s27, 0
      %p117 = por %p115, %p116
      %s119 = sadd.s32 %s118, 1
      %p122 = scmp.eq.s32.totalorder %s21, 1
      %p123 = scmp.ne.s32.totalorder %s118, %s120
      %p124 = scmp.eq.s32.totalorder %s21, 0
      %p125 = por %p123, %p124
      %p126 = scmp.ne.s32.totalorder %s118, %s120
      %p127 = scmp.eq.s32.totalorder %s26, 1
      %p128 = por %p126, %p127
      %p129 = scmp.ne.s32.totalorder %s120, %s121
      %p130 = scmp.eq.s32.totalorder %s26, 0
      %p131 = por %p129, %p130
      %p132 = scmp.ne.s32.totalorder %s120, %s121
      %p133 = scmp.eq.s32.totalorder %s27, 1
      %p134 = por %p132, %p133
      %p136 = scmp.ne.s32.totalorder %s121, %s135
      %p137 = scmp.eq.s32.totalorder %s27, 0
      %p138 = por %p136, %p137
      %s140 = sadd.s32 %s139, 1
      %p143 = scmp.eq.s32.totalorder %s21, 1
      %p144 = scmp.ne.s32.totalorder %s139, %s141
      %p145 = scmp.eq.s32.totalorder %s21, 0
      %p146 = por %p144, %p145
      %p147 = scmp.ne.s32.totalorder %s139, %s141
      %p148 = scmp.eq.s32.totalorder %s26, 1
      %p149 = por %p147, %p148
      %p150 = scmp.ne.s32.totalorder %s141, %s142
      %p151 = scmp.eq.s32.totalorder %s26, 0
      %p152 = por %p150, %p151
      %p153 = scmp.ne.s32.totalorder %s141, %s142
      %p154 = scmp.eq.s32.totalorder %s27, 1
      %p155 = por %p153, %p154
      %p157 = scmp.ne.s32.totalorder %s142, %s156
      %p158 = scmp.eq.s32.totalorder %s27, 0
      %p159 = por %p157, %p158
      %s160 = ssub.s32 %s21, %s28
      %p161 = scmp.eq.s32.totalorder %s160, 0
      %s163 = sadd.s32 %s162, 1
      %s164 = scalar_select %p161, %s162, %s163
      %p167 = pneg %p161
      %p168 = scmp.eq.s32.totalorder %s21, 1
      %p169 = por %p167, %p168
      %p170 = scmp.ne.s32.totalorder %s162, %s165
      %p171 = scmp.eq.s32.totalorder %s21, 0
      %p172 = por %p170, %p171
      %p173 = scmp.ne.s32.totalorder %s162, %s165
      %p174 = scmp.eq.s32.totalorder %s26, 1
      %p175 = por %p173, %p174
      %p176 = scmp.ne.s32.totalorder %s165, %s166
      %p177 = scmp.eq.s32.totalorder %s26, 0
      %p178 = por %p176, %p177
      %p179 = scmp.ne.s32.totalorder %s165, %s166
      %p180 = scmp.eq.s32.totalorder %s27, 1
      %p181 = por %p179, %p180
      %p183 = scmp.ne.s32.totalorder %s166, %s182
      %p184 = scmp.eq.s32.totalorder %s27, 0
      %p185 = por %p183, %p184
      %p186 = scmp.le.s32.totalorder 1, %s21
      %p187 = scmp.lt.s32.totalorder %s21, 3
      %p188 = pnand %p186, %p187
      %p189 = pneg %p188
      // Predicated region
      $region9: #{tpu_custom_call.1} parent=5 // pred_check
        _
      $region10: #{tpu_custom_call.1} parent=5 // pred_check_branch
        %191 = sbr.rel (%p188) target = $region12
      $region11: #{tpu_custom_call.1} parent=5 // pred_region
        %s192 = ssub.s32 %s21, 1
        // Predicated region
        $region13: #{tpu_custom_call.1} parent=11 // pred_check
          %p193 = pneg %p68
        $region14: #{tpu_custom_call.1} parent=11 // pred_check_branch
          %195 = sbr.rel (%p193) target = $region16
        $region15: #{tpu_custom_call.1} parent=11 // pred_region
          %s197 = ssub.s32 2048, 2048
          %198 = vsyncadd [#allocation8], %s197
          %s199 = sshll.u32 [#allocation7], 4
          %s200 = int_to_ptr.vmem [resolvable:$true] %s199
          %205 = dma.hbm_to_vmem [thread:$0]  %s1, 2048, %s200, [#allocation8], 128, 128, 8
        $region16: #{tpu_custom_call.1} parent=11 // pred_fallthru
          _
        // Predicated region
        $region17: #{tpu_custom_call.1} parent=11 // pred_check
          %p206 = pneg %p89
        $region18: #{tpu_custom_call.1} parent=11 // pred_check_branch
          %208 = sbr.rel (%p206) target = $region20
        $region19: #{tpu_custom_call.1} parent=11 // pred_region
          %s210 = ssub.s32 55296, 55296
          %211 = vsyncadd [#allocation8], %s210
          %s212 = sshll.u32 [#allocation9], 4
          %s213 = int_to_ptr.vmem [resolvable:$true] %s212
          %218 = dma.hbm_to_vmem [thread:$0]  %s2, 55296, %s213, [#allocation8], 128, 128, 8
        $region20: #{tpu_custom_call.1} parent=11 // pred_fallthru
          _
        // Predicated region
        $region21: #{tpu_custom_call.1} parent=11 // pred_check
          %p219 = pneg %p110
        $region22: #{tpu_custom_call.1} parent=11 // pred_check_branch
          %221 = sbr.rel (%p219) target = $region24
        $region23: #{tpu_custom_call.1} parent=11 // pred_region
          %s223 = ssub.s32 2048, 2048
          %224 = vsyncadd [#allocation11], %s223
          %s225 = sshll.u32 [#allocation10], 4
          %s226 = int_to_ptr.vmem [resolvable:$true] %s225
          %231 = dma.hbm_to_vmem [thread:$0]  %s3, 2048, %s226, [#allocation11], 128, 128, 8
        $region24: #{tpu_custom_call.1} parent=11 // pred_fallthru
          _
        // Predicated region
        $region25: #{tpu_custom_call.1} parent=11 // pred_check
          %p232 = pneg %p131
        $region26: #{tpu_custom_call.1} parent=11 // pred_check_branch
          %234 = sbr.rel (%p232) target = $region28
        $region27: #{tpu_custom_call.1} parent=11 // pred_region
          %s236 = ssub.s32 20480, 20480
          %237 = vsyncadd [#allocation11], %s236
          %s238 = sshll.u32 [#allocation12], 4
          %s239 = int_to_ptr.vmem [resolvable:$true] %s238
          %244 = dma.hbm_to_vmem [thread:$0]  %s4, 20480, %s239, [#allocation11], 128, 128, 8
        $region28: #{tpu_custom_call.1} parent=11 // pred_fallthru
          _
        // Predicated region
        $region29: #{tpu_custom_call.1} parent=11 // pred_check
          %p245 = pneg %p152
        $region30: #{tpu_custom_call.1} parent=11 // pred_check_branch
          %247 = sbr.rel (%p245) target = $region32
        $region31: #{tpu_custom_call.1} parent=11 // pred_region
          %s249 = ssub.s32 256, 256
          %250 = vsyncadd [#allocation14], %s249
          %s252 = sshll.u32 [#allocation13], 4
          %s253 = int_to_ptr.vmem [resolvable:$true] %s252
          %255 = dma.hbm_to_vmem [thread:$0]  %s5, 256, %s253, [#allocation14]
        $region32: #{tpu_custom_call.1} parent=11 // pred_fallthru
          _
      $region12: #{tpu_custom_call.1} parent=5 // pred_fallthru
        _
      %p256 = scmp.lt.s32.totalorder %s21, 2
      // Predicated region
      $region33: #{tpu_custom_call.1} parent=5 // pred_check
        %p257 = pneg %p256
      $region34: #{tpu_custom_call.1} parent=5 // pred_check_branch
        %259 = sbr.rel (%p257) target = $region36
      $region35: #{tpu_custom_call.1} parent=5 // pred_region
        // Predicated region
        $region37: #{tpu_custom_call.1} parent=35 // pred_check
          %p260 = pneg %p41
        $region38: #{tpu_custom_call.1} parent=35 // pred_check_branch
          %262 = sbr.rel (%p260) target = $region40
        $region39: #{tpu_custom_call.1} parent=35 // pred_region
          %s263 = sand.u32 %s31, 1
          %s264 = scalar_lea.sflag [#allocation5], %s263
          %s265 = sand.u32 %s31, 1
          %s266 = smul.addr %s265, 64
          %s267 = scalar_lea.vmem [#allocation4], %s266
          %s269 = ssub.s32 1024, 1024
          %270 = vsyncadd %s264, %s269
          %s271 = smul.addr %s21, 8
          %s272 = smul.addr %s271, 128
          %s273 = scalar_lea.hbm %s0, %s272
          %s274 = sshll.u32 %s267, 4
          %s275 = int_to_ptr.vmem [resolvable:$true] %s274
          %280 = dma.hbm_to_vmem [thread:$0]  %s273, 1024, %s275, %s264, 128, 128, 8
        $region40: #{tpu_custom_call.1} parent=35 // pred_fallthru
          _
      $region36: #{tpu_custom_call.1} parent=5 // pred_fallthru
        _
      %p281 = scmp.le.s32.totalorder 1, %s21
      %p282 = scmp.lt.s32.totalorder %s21, 3
      %p283 = pnand %p281, %p282
      %p284 = pneg %p283
      // Predicated region
      $region41: #{tpu_custom_call.1} parent=5 // pred_check
        _
      $region42: #{tpu_custom_call.1} parent=5 // pred_check_branch
        %286 = sbr.rel (%p283) target = $region44
      $region43: #{tpu_custom_call.1} parent=5 // pred_region
        %s287 = ssub.s32 %s21, 1
        %s288 = sand.u32 %s34, 1
        %s289 = scalar_lea.sflag [#allocation5], %s288
        %s290 = sand.u32 %s34, 1
        %s291 = smul.addr %s290, 64
        %s292 = scalar_lea.vmem [#allocation4], %s291
        // Predicated region
        $region45: #{tpu_custom_call.1} parent=43 // pred_check
          %p293 = pneg %p47
        $region46: #{tpu_custom_call.1} parent=43 // pred_check_branch
          %295 = sbr.rel (%p293) target = $region48
        $region47: #{tpu_custom_call.1} parent=43 // pred_region
          %296 = dma.done %s289, 1024
        $region48: #{tpu_custom_call.1} parent=43 // pred_fallthru
          _
        // Predicated region
        $region49: #{tpu_custom_call.1} parent=43 // pred_check
          %p297 = pneg %p68
        $region50: #{tpu_custom_call.1} parent=43 // pred_check_branch
          %299 = sbr.rel (%p297) target = $region52
        $region51: #{tpu_custom_call.1} parent=43 // pred_region
          %300 = dma.done [#allocation8], 2048
        $region52: #{tpu_custom_call.1} parent=43 // pred_fallthru
          _
        // Predicated region
        $region53: #{tpu_custom_call.1} parent=43 // pred_check
          %p301 = pneg %p89
        $region54: #{tpu_custom_call.1} parent=43 // pred_check_branch
          %303 = sbr.rel (%p301) target = $region56
        $region55: #{tpu_custom_call.1} parent=43 // pred_region
          %304 = dma.done [#allocation8], 55296
        $region56: #{tpu_custom_call.1} parent=43 // pred_fallthru
          _
        // Predicated region
        $region57: #{tpu_custom_call.1} parent=43 // pred_check
          %p305 = pneg %p110
        $region58: #{tpu_custom_call.1} parent=43 // pred_check_branch
          %307 = sbr.rel (%p305) target = $region60
        $region59: #{tpu_custom_call.1} parent=43 // pred_region
          %308 = dma.done [#allocation11], 2048
        $region60: #{tpu_custom_call.1} parent=43 // pred_fallthru
          _
        // Predicated region
        $region61: #{tpu_custom_call.1} parent=43 // pred_check
          %p309 = pneg %p131
        $region62: #{tpu_custom_call.1} parent=43 // pred_check_branch
          %311 = sbr.rel (%p309) target = $region64
        $region63: #{tpu_custom_call.1} parent=43 // pred_region
          %312 = dma.done [#allocation11], 20480
        $region64: #{tpu_custom_call.1} parent=43 // pred_fallthru
          _
        // Predicated region
        $region65: #{tpu_custom_call.1} parent=43 // pred_check
          %p313 = pneg %p152
        $region66: #{tpu_custom_call.1} parent=43 // pred_check_branch
          %315 = sbr.rel (%p313) target = $region68
        $region67: #{tpu_custom_call.1} parent=43 // pred_region
          %316 = dma.done [#allocation14], 256
        $region68: #{tpu_custom_call.1} parent=43 // pred_fallthru
          _
        %s317 = sand.u32 %s34, 1
        %s318 = scalar_lea.sflag [#allocation5], %s317
        %s319 = sand.u32 %s34, 1
        %s320 = smul.addr %s319, 64
        %s321 = scalar_lea.vmem [#allocation4], %s320
        %p322 = pneg %p47
        %p323 = pneg %p44
        %p324 = pneg %p68
        %p325 = pneg %p65
        %p326 = pneg %p89
        %p327 = pneg %p86
        %p328 = pneg %p110
        %p329 = pneg %p107
        %p330 = pneg %p131
        %p331 = pneg %p128
        %p332 = pneg %p152
        %p333 = pneg %p149
        %p334 = pneg %p178
        %p335 = pneg %p175
        %s336 = sand.u32 %s165, 1
        %s337 = scalar_lea.sflag [#allocation6], %s336
        %s338 = sand.u32 %s165, 1
        %s339 = smul.addr %s338, 128
        %s340 = scalar_lea.vmem [#allocation15], %s339
        %v342 = vld [vmem:[%s292] sm:$0xff]
        %v343 = vld [vmem:[%s292 + $0x8] sm:$0xff]
        %v344 = vld [vmem:[%s292 + $0x10] sm:$0xff]
        %v345 = vld [vmem:[%s292 + $0x18] sm:$0xff]
        %v346 = vld [vmem:[%s292 + $0x20] sm:$0xff]
        %v347 = vld [vmem:[%s292 + $0x28] sm:$0xff]
        %v348 = vld [vmem:[%s292 + $0x30] sm:$0xff]
        %v349 = vld [vmem:[%s292 + $0x38] sm:$0xff]
        %350 = vst [vmem:[#allocation2] sm:$0xff] 0.0
        %351 = vst [vmem:[#allocation2 + $0x8] sm:$0x3f] 0.0
        %352 = vst [vmem:[#allocation2 + $0x10] sm:$0xff] 0.0
        %353 = vst [vmem:[#allocation2 + $0x18] sm:$0x3f] 0.0
        %354 = vst [vmem:[#allocation2 + $0x20] sm:$0xff] 0.0
        %355 = vst [vmem:[#allocation2 + $0x28] sm:$0x3f] 0.0
        %s356 = scalar_lea.vmem [#allocation2], 176
        %357 = vst [vmem:[%s356] sm:$0xff] 0.0
        %358 = vst [vmem:[%s356 + $0x8] sm:$0x3f] 0.0
        %359 = vst [vmem:[%s356 + $0x10] sm:$0xff] 0.0
        %360 = vst [vmem:[%s356 + $0x18] sm:$0x3f] 0.0
        %361 = vst [vmem:[%s356 + $0x20] sm:$0xff] 0.0
        %362 = vst [vmem:[%s356 + $0x28] sm:$0x3f] 0.0
        %363 = vst [vmem:[#allocation2] sm:$0x7] 0.0
        %364 = vst [vmem:[#allocation2 + $0x10] sm:$0x7] 0.0
        %365 = vst [vmem:[#allocation2 + $0x20] sm:$0x7] 0.0
        %366 = vst [vmem:[#allocation2 + $0x30] sm:$0x7] 0.0
        %367 = vst [vmem:[#allocation2 + $0x40] sm:$0x7] 0.0
        %368 = vst [vmem:[#allocation2 + $0x50] sm:$0x7] 0.0
        %369 = vst [vmem:[#allocation2 + $0x60] sm:$0x7] 0.0
        %370 = vst [vmem:[#allocation2 + $0x70] sm:$0x7] 0.0
        %371 = vst [vmem:[#allocation2 + $0x80] sm:$0x7] 0.0
        %372 = vst [vmem:[#allocation2 + $0x90] sm:$0x7] 0.0
        %373 = vst [vmem:[#allocation2 + $0xa0] sm:$0x7] 0.0
        %374 = vst [vmem:[#allocation2 + $0xb0] sm:$0x7] 0.0
        %375 = vst [vmem:[#allocation2 + $0xc0] sm:$0x7] 0.0
        %376 = vst [vmem:[#allocation2 + $0xd0] sm:$0x7] 0.0
        %377 = vst [vmem:[#allocation2 + $0xb] sm:$0x7] 0.0
        %378 = vst [vmem:[#allocation2 + $0x1b] sm:$0x7] 0.0
        %379 = vst [vmem:[#allocation2 + $0x2b] sm:$0x7] 0.0
        %380 = vst [vmem:[#allocation2 + $0x3b] sm:$0x7] 0.0
        %381 = vst [vmem:[#allocation2 + $0x4b] sm:$0x7] 0.0
        %382 = vst [vmem:[#allocation2 + $0x5b] sm:$0x7] 0.0
        %383 = vst [vmem:[#allocation2 + $0x6b] sm:$0x7] 0.0
        %384 = vst [vmem:[#allocation2 + $0x7b] sm:$0x7] 0.0
        %385 = vst [vmem:[#allocation2 + $0x8b] sm:$0x7] 0.0
        %386 = vst [vmem:[#allocation2 + $0x9b] sm:$0x7] 0.0
        %387 = vst [vmem:[#allocation2 + $0xab] sm:$0x7] 0.0
        %388 = vst [vmem:[#allocation2 + $0xbb] sm:$0x7] 0.0
        %389 = vst [vmem:[#allocation2 + $0xcb] sm:$0x7] 0.0
        %390 = vst [vmem:[#allocation2 + $0xdb] sm:$0x7] 0.0
        %s391 = scalar_lea.vmem [#allocation2], 48
        %392 = vst [vmem:[%s391 + $0x3] sm:$0xff] %v342
        %393 = vst [vmem:[%s391 + $0x13] sm:$0xff] %v343
        %394 = vst [vmem:[%s391 + $0x23] sm:$0xff] %v344
        %395 = vst [vmem:[%s391 + $0x33] sm:$0xff] %v345
        %396 = vst [vmem:[%s391 + $0x43] sm:$0xff] %v346
        %397 = vst [vmem:[%s391 + $0x53] sm:$0xff] %v347
        %398 = vst [vmem:[%s391 + $0x63] sm:$0xff] %v348
        %399 = vst [vmem:[%s391 + $0x73] sm:$0xff] %v349
        %v400 = vpack.c.bf16 %v343, %v342
        %v401 = vpack.c.bf16 %v345, %v344
        %v402 = vpack.c.bf16 %v347, %v346
        %v403 = vpack.c.bf16 %v349, %v348
        %v404 = vld [vmem:[#allocation7] sm:$0xff]
        %v405 = vld [vmem:[#allocation7 + $0x8] sm:$0xff]
        %v406 = vld [vmem:[#allocation7 + $0x10] sm:$0xff]
        %v407 = vld [vmem:[#allocation7 + $0x18] sm:$0xff]
        %v408 = vld [vmem:[#allocation7 + $0x20] sm:$0xff]
        %v409 = vld [vmem:[#allocation7 + $0x28] sm:$0xff]
        %v410 = vld [vmem:[#allocation7 + $0x30] sm:$0xff]
        %v411 = vld [vmem:[#allocation7 + $0x38] sm:$0xff]
        %v412 = vld [vmem:[#allocation7 + $0x40] sm:$0xff]
        %v413 = vld [vmem:[#allocation7 + $0x48] sm:$0xff]
        %v414 = vld [vmem:[#allocation7 + $0x50] sm:$0xff]
        %v415 = vld [vmem:[#allocation7 + $0x58] sm:$0xff]
        %v416 = vld [vmem:[#allocation7 + $0x60] sm:$0xff]
        %v417 = vld [vmem:[#allocation7 + $0x68] sm:$0xff]
        %v418 = vld [vmem:[#allocation7 + $0x70] sm:$0xff]
        %v419 = vld [vmem:[#allocation7 + $0x78] sm:$0xff]
        %v420 = vld [vmem:[#allocation13] ss:$8 sm:$0x3]
        %v422 = vlaneseq
        %v423 = vshrl.u32 %v422, 7
        %v424 = vsub.s32 0, %v423
        %v425 = vrot.slane %v420, %v424
        %v426 = vlaneseq
        %v427 = vshrl.u32 %v426, 7
        %v428 = vsub.s32 1, %v427
        %v429 = vrot.slane %v420, %v428
        %v448 = vunpack.c.l.b16 %v404
        %v449 = vunpack.c.h.b16 %v404
        %v450 = vunpack.c.l.b16 %v405
        %v451 = vunpack.c.h.b16 %v405
        %v452 = vunpack.c.l.b16 %v406
        %v453 = vunpack.c.h.b16 %v406
        %v454 = vunpack.c.l.b16 %v407
        %v455 = vunpack.c.h.b16 %v407
        %v456 = vunpack.c.l.b16 %v408
        %v457 = vunpack.c.h.b16 %v408
        %v458 = vunpack.c.l.b16 %v409
        %v459 = vunpack.c.h.b16 %v409
        %v460 = vunpack.c.l.b16 %v410
        %v461 = vunpack.c.h.b16 %v410
        %v462 = vunpack.c.l.b16 %v411
        %v463 = vunpack.c.h.b16 %v411
        %v464 = vunpack.c.l.b16 %v412
        %v465 = vunpack.c.h.b16 %v412
        %v466 = vunpack.c.l.b16 %v413
        %v467 = vunpack.c.h.b16 %v413
        %v468 = vunpack.c.l.b16 %v414
        %v469 = vunpack.c.h.b16 %v414
        %v470 = vunpack.c.l.b16 %v415
        %v471 = vunpack.c.h.b16 %v415
        %v472 = vunpack.c.l.b16 %v416
        %v473 = vunpack.c.h.b16 %v416
        %v474 = vunpack.c.l.b16 %v417
        %v475 = vunpack.c.h.b16 %v417
        %v476 = vunpack.c.l.b16 %v418
        %v477 = vunpack.c.h.b16 %v418
        %v478 = vunpack.c.l.b16 %v419
        %v479 = vunpack.c.h.b16 %v419
        %v480 = vpack.c.b16 %v450, %v448
        %v481 = vpack.c.b16 %v451, %v449
        %v482 = vpack.c.b16 %v454, %v452
        %v483 = vpack.c.b16 %v455, %v453
        %v484 = vpack.c.b16 %v458, %v456
        %v485 = vpack.c.b16 %v459, %v457
        %v486 = vpack.c.b16 %v462, %v460
        %v487 = vpack.c.b16 %v463, %v461
        %v488 = vpack.c.b16 %v466, %v464
        %v489 = vpack.c.b16 %v467, %v465
        %v490 = vpack.c.b16 %v470, %v468
        %v491 = vpack.c.b16 %v471, %v469
        %v492 = vpack.c.b16 %v474, %v472
        %v493 = vpack.c.b16 %v475, %v473
        %v494 = vpack.c.b16 %v478, %v476
        %v495 = vpack.c.b16 %v479, %v477
        %512 = vmatprep.subr.bf16.mxu0 %v481
        %513 = vmatpush1.bf16.msra.mxu0 %v480
        %514 = vmatprep.subr.bf16.mxu0 %v483
        %515 = vmatpush1.bf16.msra.mxu0 %v482
        %516 = vmatprep.subr.bf16.mxu0 %v485
        %517 = vmatpush1.bf16.msra.mxu0 %v484
        %518 = vmatprep.subr.bf16.mxu0 %v487
        %519 = vmatpush1.bf16.msra.mxu0 %v486
        %520 = vmatprep.subr.bf16.mxu0 %v489
        %521 = vmatpush1.bf16.msra.mxu0 %v488
        %522 = vmatprep.subr.bf16.mxu0 %v491
        %523 = vmatpush1.bf16.msra.mxu0 %v490
        %524 = vmatprep.subr.bf16.mxu0 %v493
        %525 = vmatpush1.bf16.msra.mxu0 %v492
        %526 = vmatprep.subr.bf16.mxu0 %v495
        %527 = vmatpush1.bf16.msra.mxu0 %v494
        %528 = vmatprep.subr.bf16.mxu0 0
        %529 = vmatpush1.bf16.msra.mxu0 0
        %530 = vmatprep.subr.bf16.mxu0 0
        %531 = vmatpush1.bf16.msra.mxu0 0
        %532 = vmatprep.subr.bf16.mxu0 0
        %533 = vmatpush1.bf16.msra.mxu0 0
        %534 = vmatprep.subr.bf16.mxu0 0
        %535 = vmatpush1.bf16.msra.mxu0 0
        %536 = vmatprep.subr.bf16.mxu0 0
        %537 = vmatpush1.bf16.msra.mxu0 0
        %538 = vmatprep.subr.bf16.mxu0 0
        %539 = vmatpush1.bf16.msra.mxu0 0
        %540 = vmatprep.subr.bf16.mxu0 0
        %541 = vmatpush1.bf16.msra.mxu0 0
        %542 = vmatprep.subr.bf16.mxu0 0
        %543 = vmatpush1.bf16.msra.mxu0 0
        %544 = vmatprep.mubr.bf16.mxu0 0
        %545 = vmatmul.mubr.bf16.gmra.mrb[0].mxu0 %v400
        %v546 = vpop.f32.mrb[0].mxu0
        %v547 = vadd.f32 %v425, %v546
        %v548 = vpop.f32.mrb[0].mxu0
        %v549 = vadd.f32 %v429, %v548
        %v550 = vpop.f32.mrb[0].mxu0
        %v551 = vadd.f32 %v425, %v550
        %v552 = vpop.f32.mrb[0].mxu0
        %v553 = vadd.f32 %v429, %v552
        %554 = vmatprep.mubr.bf16.mxu0 0
        %555 = vmatmul.mubr.bf16.gmra.mrb[0].mxu0 %v401
        %v556 = vpop.f32.mrb[0].mxu0
        %v557 = vadd.f32 %v425, %v556
        %v558 = vpop.f32.mrb[0].mxu0
        %v559 = vadd.f32 %v429, %v558
        %v560 = vpop.f32.mrb[0].mxu0
        %v561 = vadd.f32 %v425, %v560
        %v562 = vpop.f32.mrb[0].mxu0
        %v563 = vadd.f32 %v429, %v562
        %564 = vmatprep.mubr.bf16.mxu0 0
        %565 = vmatmul.mubr.bf16.gmra.mrb[0].mxu0 %v402
        %v566 = vpop.f32.mrb[0].mxu0
        %v567 = vadd.f32 %v425, %v566
        %v568 = vpop.f32.mrb[0].mxu0
        %v569 = vadd.f32 %v429, %v568
        %v570 = vpop.f32.mrb[0].mxu0
        %v571 = vadd.f32 %v425, %v570
        %v572 = vpop.f32.mrb[0].mxu0
        %v573 = vadd.f32 %v429, %v572
        %574 = vmatprep.mubr.bf16.mxu0 0
        %575 = vmatmul.mubr.bf16.gmra.mrb[0].mxu0 %v403
        %v576 = vpop.f32.mrb[0].mxu0
        %v577 = vadd.f32 %v425, %v576
        %v578 = vpop.f32.mrb[0].mxu0
        %v579 = vadd.f32 %v429, %v578
        %v580 = vpop.f32.mrb[0].mxu0
        %v581 = vadd.f32 %v425, %v580
        %v582 = vpop.f32.mrb[0].mxu0
        %v583 = vadd.f32 %v429, %v582
        %584 = vdwg.mxu0
        %v585 = vmax.f32 %v547, 0.0
        %v586 = vmax.f32 %v549, 0.0
        %v587 = vmax.f32 %v551, 0.0
        %v588 = vmax.f32 %v553, 0.0
        %v589 = vmax.f32 %v557, 0.0
        %v590 = vmax.f32 %v559, 0.0
        %v591 = vmax.f32 %v561, 0.0
        %v592 = vmax.f32 %v563, 0.0
        %v593 = vmax.f32 %v567, 0.0
        %v594 = vmax.f32 %v569, 0.0
        %v595 = vmax.f32 %v571, 0.0
        %v596 = vmax.f32 %v573, 0.0
        %v597 = vmax.f32 %v577, 0.0
        %v598 = vmax.f32 %v579, 0.0
        %v599 = vmax.f32 %v581, 0.0
        %v600 = vmax.f32 %v583, 0.0
        %v601 = vpack.c.bf16 %v587, %v585
        %v602 = vpack.c.bf16 %v588, %v586
        %v603 = vpack.c.bf16 %v591, %v589
        %v604 = vpack.c.bf16 %v592, %v590
        %v605 = vpack.c.bf16 %v595, %v593
        %v606 = vpack.c.bf16 %v596, %v594
        %v607 = vpack.c.bf16 %v599, %v597
        %v608 = vpack.c.bf16 %v600, %v598
        %v609 = vld [vmem:[#allocation12] sm:$0xff]
        %v610 = vld [vmem:[#allocation12 + $0x8] sm:$0xff]
        %v611 = vld [vmem:[#allocation12 + $0x10] sm:$0xff]
        %v612 = vld [vmem:[#allocation12 + $0x18] sm:$0xff]
        %v613 = vld [vmem:[#allocation12 + $0x20] sm:$0xff]
        %v614 = vld [vmem:[#allocation12 + $0x28] sm:$0xff]
        %v615 = vld [vmem:[#allocation12 + $0x30] sm:$0xff]
        %v616 = vld [vmem:[#allocation12 + $0x38] sm:$0xff]
        %v617 = vld [vmem:[#allocation12 + $0x40] sm:$0xff]
        %v618 = vld [vmem:[#allocation12 + $0x48] sm:$0xff]
        %v619 = vld [vmem:[#allocation12 + $0x50] sm:$0xff]
        %v620 = vld [vmem:[#allocation12 + $0x58] sm:$0xff]
        %v621 = vld [vmem:[#allocation12 + $0x60] sm:$0xff]
        %v622 = vld [vmem:[#allocation12 + $0x68] sm:$0xff]
        %v623 = vld [vmem:[#allocation12 + $0x70] sm:$0xff]
        %v624 = vld [vmem:[#allocation12 + $0x78] sm:$0xff]
        %v625 = vld [vmem:[#allocation12 + $0x80] sm:$0xff]
        %v626 = vld [vmem:[#allocation12 + $0x88] sm:$0xff]
        %v627 = vld [vmem:[#allocation12 + $0x90] sm:$0xff]
        %v628 = vld [vmem:[#allocation12 + $0x98] sm:$0xff]
        %v629 = vld [vmem:[#allocation12 + $0xa0] sm:$0xff]
        %v630 = vld [vmem:[#allocation12 + $0xa8] sm:$0xff]
        %v631 = vld [vmem:[#allocation12 + $0xb0] sm:$0xff]
        %v632 = vld [vmem:[#allocation12 + $0xb8] sm:$0xff]
        %v633 = vld [vmem:[#allocation12 + $0xc0] sm:$0xff]
        %v634 = vld [vmem:[#allocation12 + $0xc8] sm:$0xff]
        %v635 = vld [vmem:[#allocation12 + $0xd0] sm:$0xff]
        %v636 = vld [vmem:[#allocation12 + $0xd8] sm:$0xff]
        %v637 = vld [vmem:[#allocation12 + $0xe0] sm:$0xff]
        %v638 = vld [vmem:[#allocation12 + $0xe8] sm:$0xff]
        %v639 = vld [vmem:[#allocation12 + $0xf0] sm:$0xff]
        %v640 = vld [vmem:[#allocation12 + $0xf8] sm:$0xff]
        %s641 = scalar_lea.vmem [#allocation2], 32
        %v642 = vld [vmem:[%s641 + $0x2] sm:$0xff]
        %v643 = vld [vmem:[%s641 + $0x12] sm:$0xff]
        %v644 = vld [vmem:[%s641 + $0x22] sm:$0xff]
        %v645 = vld [vmem:[%s641 + $0x32] sm:$0xff]
        %v646 = vld [vmem:[%s641 + $0x42] sm:$0xff]
        %v647 = vld [vmem:[%s641 + $0x52] sm:$0xff]
        %v648 = vld [vmem:[%s641 + $0x62] sm:$0xff]
        %v649 = vld [vmem:[%s641 + $0x72] sm:$0xff]
        %650 = vst [vmem:[#allocation3] sm:$0xff] %v642
        %651 = vst [vmem:[#allocation3 + $0x48] sm:$0xff] %v643
        %652 = vst [vmem:[#allocation3 + $0x90] sm:$0xff] %v644
        %653 = vst [vmem:[#allocation3 + $0xd8] sm:$0xff] %v645
        %654 = vst [vmem:[#allocation3 + $0x120] sm:$0xff] %v646
        %655 = vst [vmem:[#allocation3 + $0x168] sm:$0xff] %v647
        %656 = vst [vmem:[#allocation3 + $0x1b0] sm:$0xff] %v648
        %657 = vst [vmem:[#allocation3 + $0x1f8] sm:$0xff] %v649
        %v658 = vld [vmem:[%s641 + $0x3] sm:$0xff]
        %v659 = vld [vmem:[%s641 + $0x13] sm:$0xff]
        %v660 = vld [vmem:[%s641 + $0x23] sm:$0xff]
        %v661 = vld [vmem:[%s641 + $0x33] sm:$0xff]
        %v662 = vld [vmem:[%s641 + $0x43] sm:$0xff]
        %v663 = vld [vmem:[%s641 + $0x53] sm:$0xff]
        %v664 = vld [vmem:[%s641 + $0x63] sm:$0xff]
        %v665 = vld [vmem:[%s641 + $0x73] sm:$0xff]
        %666 = vst [vmem:[#allocation3 + $0x8] sm:$0xff] %v658
        %667 = vst [vmem:[#allocation3 + $0x50] sm:$0xff] %v659
        %668 = vst [vmem:[#allocation3 + $0x98] sm:$0xff] %v660
        %669 = vst [vmem:[#allocation3 + $0xe0] sm:$0xff] %v661
        %670 = vst [vmem:[#allocation3 + $0x128] sm:$0xff] %v662
        %671 = vst [vmem:[#allocation3 + $0x170] sm:$0xff] %v663
        %672 = vst [vmem:[#allocation3 + $0x1b8] sm:$0xff] %v664
        %673 = vst [vmem:[#allocation3 + $0x200] sm:$0xff] %v665
        %v674 = vld [vmem:[%s641 + $0x4] sm:$0xff]
        %v675 = vld [vmem:[%s641 + $0x14] sm:$0xff]
        %v676 = vld [vmem:[%s641 + $0x24] sm:$0xff]
        %v677 = vld [vmem:[%s641 + $0x34] sm:$0xff]
        %v678 = vld [vmem:[%s641 + $0x44] sm:$0xff]
        %v679 = vld [vmem:[%s641 + $0x54] sm:$0xff]
        %v680 = vld [vmem:[%s641 + $0x64] sm:$0xff]
        %v681 = vld [vmem:[%s641 + $0x74] sm:$0xff]
        %682 = vst [vmem:[#allocation3 + $0x10] sm:$0xff] %v674
        %683 = vst [vmem:[#allocation3 + $0x58] sm:$0xff] %v675
        %684 = vst [vmem:[#allocation3 + $0xa0] sm:$0xff] %v676
        %685 = vst [vmem:[#allocation3 + $0xe8] sm:$0xff] %v677
        %686 = vst [vmem:[#allocation3 + $0x130] sm:$0xff] %v678
        %687 = vst [vmem:[#allocation3 + $0x178] sm:$0xff] %v679
        %688 = vst [vmem:[#allocation3 + $0x1c0] sm:$0xff] %v680
        %689 = vst [vmem:[#allocation3 + $0x208] sm:$0xff] %v681
        %v690 = vld [vmem:[%s391 + $0x2] sm:$0xff]
        %v691 = vld [vmem:[%s391 + $0x12] sm:$0xff]
        %v692 = vld [vmem:[%s391 + $0x22] sm:$0xff]
        %v693 = vld [vmem:[%s391 + $0x32] sm:$0xff]
        %v694 = vld [vmem:[%s391 + $0x42] sm:$0xff]
        %v695 = vld [vmem:[%s391 + $0x52] sm:$0xff]
        %v696 = vld [vmem:[%s391 + $0x62] sm:$0xff]
        %v697 = vld [vmem:[%s391 + $0x72] sm:$0xff]
        %698 = vst [vmem:[#allocation3 + $0x18] sm:$0xff] %v690
        %699 = vst [vmem:[#allocation3 + $0x60] sm:$0xff] %v691
        %700 = vst [vmem:[#allocation3 + $0xa8] sm:$0xff] %v692
        %701 = vst [vmem:[#allocation3 + $0xf0] sm:$0xff] %v693
        %702 = vst [vmem:[#allocation3 + $0x138] sm:$0xff] %v694
        %703 = vst [vmem:[#allocation3 + $0x180] sm:$0xff] %v695
        %704 = vst [vmem:[#allocation3 + $0x1c8] sm:$0xff] %v696
        %705 = vst [vmem:[#allocation3 + $0x210] sm:$0xff] %v697
        %v706 = vld [vmem:[%s391 + $0x3] sm:$0xff]
        %v707 = vld [vmem:[%s391 + $0x13] sm:$0xff]
        %v708 = vld [vmem:[%s391 + $0x23] sm:$0xff]
        %v709 = vld [vmem:[%s391 + $0x33] sm:$0xff]
        %v710 = vld [vmem:[%s391 + $0x43] sm:$0xff]
        %v711 = vld [vmem:[%s391 + $0x53] sm:$0xff]
        %v712 = vld [vmem:[%s391 + $0x63] sm:$0xff]
        %v713 = vld [vmem:[%s391 + $0x73] sm:$0xff]
        %714 = vst [vmem:[#allocation3 + $0x20] sm:$0xff] %v706
        %715 = vst [vmem:[#allocation3 + $0x68] sm:$0xff] %v707
        %716 = vst [vmem:[#allocation3 + $0xb0] sm:$0xff] %v708
        %717 = vst [vmem:[#allocation3 + $0xf8] sm:$0xff] %v709
        %718 = vst [vmem:[#allocation3 + $0x140] sm:$0xff] %v710
        %719 = vst [vmem:[#allocation3 + $0x188] sm:$0xff] %v711
        %720 = vst [vmem:[#allocation3 + $0x1d0] sm:$0xff] %v712
        %721 = vst [vmem:[#allocation3 + $0x218] sm:$0xff] %v713
        %v722 = vld [vmem:[%s391 + $0x4] sm:$0xff]
        %v723 = vld [vmem:[%s391 + $0x14] sm:$0xff]
        %v724 = vld [vmem:[%s391 + $0x24] sm:$0xff]
        %v725 = vld [vmem:[%s391 + $0x34] sm:$0xff]
        %v726 = vld [vmem:[%s391 + $0x44] sm:$0xff]
        %v727 = vld [vmem:[%s391 + $0x54] sm:$0xff]
        %v728 = vld [vmem:[%s391 + $0x64] sm:$0xff]
        %v729 = vld [vmem:[%s391 + $0x74] sm:$0xff]
        %730 = vst [vmem:[#allocation3 + $0x28] sm:$0xff] %v722
        %731 = vst [vmem:[#allocation3 + $0x70] sm:$0xff] %v723
        %732 = vst [vmem:[#allocation3 + $0xb8] sm:$0xff] %v724
        %733 = vst [vmem:[#allocation3 + $0x100] sm:$0xff] %v725
        %734 = vst [vmem:[#allocation3 + $0x148] sm:$0xff] %v726
        %735 = vst [vmem:[#allocation3 + $0x190] sm:$0xff] %v727
        %736 = vst [vmem:[#allocation3 + $0x1d8] sm:$0xff] %v728
        %737 = vst [vmem:[#allocation3 + $0x220] sm:$0xff] %v729
        %s738 = scalar_lea.vmem [#allocation2], 64
        %v739 = vld [vmem:[%s738 + $0x2] sm:$0xff]
        %v740 = vld [vmem:[%s738 + $0x12] sm:$0xff]
        %v741 = vld [vmem:[%s738 + $0x22] sm:$0xff]
        %v742 = vld [vmem:[%s738 + $0x32] sm:$0xff]
        %v743 = vld [vmem:[%s738 + $0x42] sm:$0xff]
        %v744 = vld [vmem:[%s738 + $0x52] sm:$0xff]
        %v745 = vld [vmem:[%s738 + $0x62] sm:$0xff]
        %v746 = vld [vmem:[%s738 + $0x72] sm:$0xff]
        %747 = vst [vmem:[#allocation3 + $0x30] sm:$0xff] %v739
        %748 = vst [vmem:[#allocation3 + $0x78] sm:$0xff] %v740
        %749 = vst [vmem:[#allocation3 + $0xc0] sm:$0xff] %v741
        %750 = vst [vmem:[#allocation3 + $0x108] sm:$0xff] %v742
        %751 = vst [vmem:[#allocation3 + $0x150] sm:$0xff] %v743
        %752 = vst [vmem:[#allocation3 + $0x198] sm:$0xff] %v744
        %753 = vst [vmem:[#allocation3 + $0x1e0] sm:$0xff] %v745
        %754 = vst [vmem:[#allocation3 + $0x228] sm:$0xff] %v746
        %v755 = vld [vmem:[%s738 + $0x3] sm:$0xff]
        %v756 = vld [vmem:[%s738 + $0x13] sm:$0xff]
        %v757 = vld [vmem:[%s738 + $0x23] sm:$0xff]
        %v758 = vld [vmem:[%s738 + $0x33] sm:$0xff]
        %v759 = vld [vmem:[%s738 + $0x43] sm:$0xff]
        %v760 = vld [vmem:[%s738 + $0x53] sm:$0xff]
        %v761 = vld [vmem:[%s738 + $0x63] sm:$0xff]
        %v762 = vld [vmem:[%s738 + $0x73] sm:$0xff]
        %763 = vst [vmem:[#allocation3 + $0x38] sm:$0xff] %v755
        %764 = vst [vmem:[#allocation3 + $0x80] sm:$0xff] %v756
        %765 = vst [vmem:[#allocation3 + $0xc8] sm:$0xff] %v757
        %766 = vst [vmem:[#allocation3 + $0x110] sm:$0xff] %v758
        %767 = vst [vmem:[#allocation3 + $0x158] sm:$0xff] %v759
        %768 = vst [vmem:[#allocation3 + $0x1a0] sm:$0xff] %v760
        %769 = vst [vmem:[#allocation3 + $0x1e8] sm:$0xff] %v761
        %770 = vst [vmem:[#allocation3 + $0x230] sm:$0xff] %v762
        %v771 = vld [vmem:[%s738 + $0x4] sm:$0xff]
        %v772 = vld [vmem:[%s738 + $0x14] sm:$0xff]
        %v773 = vld [vmem:[%s738 + $0x24] sm:$0xff]
        %v774 = vld [vmem:[%s738 + $0x34] sm:$0xff]
        %v775 = vld [vmem:[%s738 + $0x44] sm:$0xff]
        %v776 = vld [vmem:[%s738 + $0x54] sm:$0xff]
        %v777 = vld [vmem:[%s738 + $0x64] sm:$0xff]
        %v778 = vld [vmem:[%s738 + $0x74] sm:$0xff]
        %779 = vst [vmem:[#allocation3 + $0x40] sm:$0xff] %v771
        %780 = vst [vmem:[#allocation3 + $0x88] sm:$0xff] %v772
        %781 = vst [vmem:[#allocation3 + $0xd0] sm:$0xff] %v773
        %782 = vst [vmem:[#allocation3 + $0x118] sm:$0xff] %v774
        %783 = vst [vmem:[#allocation3 + $0x160] sm:$0xff] %v775
        %784 = vst [vmem:[#allocation3 + $0x1a8] sm:$0xff] %v776
        %785 = vst [vmem:[#allocation3 + $0x1f0] sm:$0xff] %v777
        %786 = vst [vmem:[#allocation3 + $0x238] sm:$0xff] %v778
        %v787 = vld [vmem:[#allocation3] sm:$0xff]
        %v788 = vld [vmem:[#allocation3 + $0x8] sm:$0xff]
        %v789 = vld [vmem:[#allocation3 + $0x10] sm:$0xff]
        %v790 = vld [vmem:[#allocation3 + $0x18] sm:$0xff]
        %v791 = vld [vmem:[#allocation3 + $0x20] sm:$0xff]
        %v792 = vld [vmem:[#allocation3 + $0x28] sm:$0xff]
        %v793 = vld [vmem:[#allocation3 + $0x30] sm:$0xff]
        %v794 = vld [vmem:[#allocation3 + $0x38] sm:$0xff]
        %v795 = vld [vmem:[#allocation3 + $0x40] sm:$0xff]
        %v796 = vld [vmem:[#allocation3 + $0x48] sm:$0xff]
        %v797 = vld [vmem:[#allocation3 + $0x50] sm:$0xff]
        %v798 = vld [vmem:[#allocation3 + $0x58] sm:$0xff]
        %v799 = vld [vmem:[#allocation3 + $0x60] sm:$0xff]
        %v800 = vld [vmem:[#allocation3 + $0x68] sm:$0xff]
        %v801 = vld [vmem:[#allocation3 + $0x70] sm:$0xff]
        %v802 = vld [vmem:[#allocation3 + $0x78] sm:$0xff]
        %v803 = vld [vmem:[#allocation3 + $0x80] sm:$0xff]
        %v804 = vld [vmem:[#allocation3 + $0x88] sm:$0xff]
        %v805 = vld [vmem:[#allocation3 + $0x90] sm:$0xff]
        %v806 = vld [vmem:[#allocation3 + $0x98] sm:$0xff]
        %v807 = vld [vmem:[#allocation3 + $0xa0] sm:$0xff]
        %v808 = vld [vmem:[#allocation3 + $0xa8] sm:$0xff]
        %v809 = vld [vmem:[#allocation3 + $0xb0] sm:$0xff]
        %v810 = vld [vmem:[#allocation3 + $0xb8] sm:$0xff]
        %v811 = vld [vmem:[#allocation3 + $0xc0] sm:$0xff]
        %v812 = vld [vmem:[#allocation3 + $0xc8] sm:$0xff]
        %v813 = vld [vmem:[#allocation3 + $0xd0] sm:$0xff]
        %v814 = vld [vmem:[#allocation3 + $0xd8] sm:$0xff]
        %v815 = vld [vmem:[#allocation3 + $0xe0] sm:$0xff]
        %v816 = vld [vmem:[#allocation3 + $0xe8] sm:$0xff]
        %v817 = vld [vmem:[#allocation3 + $0xf0] sm:$0xff]
        %v818 = vld [vmem:[#allocation3 + $0xf8] sm:$0xff]
        %v819 = vld [vmem:[#allocation3 + $0x100] sm:$0xff]
        %v820 = vld [vmem:[#allocation3 + $0x108] sm:$0xff]
        %v821 = vld [vmem:[#allocation3 + $0x110] sm:$0xff]
        %v822 = vld [vmem:[#allocation3 + $0x118] sm:$0xff]
        %v823 = vld [vmem:[#allocation3 + $0x120] sm:$0xff]
        %v824 = vld [vmem:[#allocation3 + $0x128] sm:$0xff]
        %v825 = vld [vmem:[#allocation3 + $0x130] sm:$0xff]
        %v826 = vld [vmem:[#allocation3 + $0x138] sm:$0xff]
        %v827 = vld [vmem:[#allocation3 + $0x140] sm:$0xff]
        %v828 = vld [vmem:[#allocation3 + $0x148] sm:$0xff]
        %v829 = vld [vmem:[#allocation3 + $0x150] sm:$0xff]
        %v830 = vld [vmem:[#allocation3 + $0x158] sm:$0xff]
        %v831 = vld [vmem:[#allocation3 + $0x160] sm:$0xff]
        %v832 = vld [vmem:[#allocation3 + $0x168] sm:$0xff]
        %v833 = vld [vmem:[#allocation3 + $0x170] sm:$0xff]
        %v834 = vld [vmem:[#allocation3 + $0x178] sm:$0xff]
        %v835 = vld [vmem:[#allocation3 + $0x180] sm:$0xff]
        %v836 = vld [vmem:[#allocation3 + $0x188] sm:$0xff]
        %v837 = vld [vmem:[#allocation3 + $0x190] sm:$0xff]
        %v838 = vld [vmem:[#allocation3 + $0x198] sm:$0xff]
        %v839 = vld [vmem:[#allocation3 + $0x1a0] sm:$0xff]
        %v840 = vld [vmem:[#allocation3 + $0x1a8] sm:$0xff]
        %v841 = vld [vmem:[#allocation3 + $0x1b0] sm:$0xff]
        %v842 = vld [vmem:[#allocation3 + $0x1b8] sm:$0xff]
        %v843 = vld [vmem:[#allocation3 + $0x1c0] sm:$0xff]
        %v844 = vld [vmem:[#allocation3 + $0x1c8] sm:$0xff]
        %v845 = vld [vmem:[#allocation3 + $0x1d0] sm:$0xff]
        %v846 = vld [vmem:[#allocation3 + $0x1d8] sm:$0xff]
        %v847 = vld [vmem:[#allocation3 + $0x1e0] sm:$0xff]
        %v848 = vld [vmem:[#allocation3 + $0x1e8] sm:$0xff]
        %v849 = vld [vmem:[#allocation3 + $0x1f0] sm:$0xff]
        %v850 = vld [vmem:[#allocation3 + $0x1f8] sm:$0xff]
        %v851 = vld [vmem:[#allocation3 + $0x200] sm:$0xff]
        %v852 = vld [vmem:[#allocation3 + $0x208] sm:$0xff]
        %v853 = vld [vmem:[#allocation3 + $0x210] sm:$0xff]
        %v854 = vld [vmem:[#allocation3 + $0x218] sm:$0xff]
        %v855 = vld [vmem:[#allocation3 + $0x220] sm:$0xff]
        %v856 = vld [vmem:[#allocation3 + $0x228] sm:$0xff]
        %v857 = vld [vmem:[#allocation3 + $0x230] sm:$0xff]
        %v858 = vld [vmem:[#allocation3 + $0x238] sm:$0xff]
        %v859 = vpack.c.bf16 %v796, %v787
        %v860 = vpack.c.bf16 %v797, %v788
        %v861 = vpack.c.bf16 %v798, %v789
        %v862 = vpack.c.bf16 %v799, %v790
        %v863 = vpack.c.bf16 %v800, %v791
        %v864 = vpack.c.bf16 %v801, %v792
        %v865 = vpack.c.bf16 %v802, %v793
        %v866 = vpack.c.bf16 %v803, %v794
        %v867 = vpack.c.bf16 %v804, %v795
        %v868 = vpack.c.bf16 %v814, %v805
        %v869 = vpack.c.bf16 %v815, %v806
        %v870 = vpack.c.bf16 %v816, %v807
        %v871 = vpack.c.bf16 %v817, %v808
        %v872 = vpack.c.bf16 %v818, %v809
        %v873 = vpack.c.bf16 %v819, %v810
        %v874 = vpack.c.bf16 %v820, %v811
        %v875 = vpack.c.bf16 %v821, %v812
        %v876 = vpack.c.bf16 %v822, %v813
        %v877 = vpack.c.bf16 %v832, %v823
        %v878 = vpack.c.bf16 %v833, %v824
        %v879 = vpack.c.bf16 %v834, %v825
        %v880 = vpack.c.bf16 %v835, %v826
        %v881 = vpack.c.bf16 %v836, %v827
        %v882 = vpack.c.bf16 %v837, %v828
        %v883 = vpack.c.bf16 %v838, %v829
        %v884 = vpack.c.bf16 %v839, %v830
        %v885 = vpack.c.bf16 %v840, %v831
        %v886 = vpack.c.bf16 %v850, %v841
        %v887 = vpack.c.bf16 %v851, %v842
        %v888 = vpack.c.bf16 %v852, %v843
        %v889 = vpack.c.bf16 %v853, %v844
        %v890 = vpack.c.bf16 %v854, %v845
        %v891 = vpack.c.bf16 %v855, %v846
        %v892 = vpack.c.bf16 %v856, %v847
        %v893 = vpack.c.bf16 %v857, %v848
        %v894 = vpack.c.bf16 %v858, %v849
        %v895 = vld [vmem:[#allocation9] sm:$0xff]
        %v896 = vld [vmem:[#allocation9 + $0x8] sm:$0xff]
        %v897 = vld [vmem:[#allocation9 + $0x10] sm:$0xff]
        %v898 = vld [vmem:[#allocation9 + $0x18] sm:$0xff]
        %v899 = vld [vmem:[#allocation9 + $0x20] sm:$0xff]
        %v900 = vld [vmem:[#allocation9 + $0x28] sm:$0xff]
        %v901 = vld [vmem:[#allocation9 + $0x30] sm:$0xff]
        %v902 = vld [vmem:[#allocation9 + $0x38] sm:$0xff]
        %v903 = vld [vmem:[#allocation9 + $0x40] sm:$0xff]
        %v904 = vld [vmem:[#allocation9 + $0x48] sm:$0xff]
        %v905 = vld [vmem:[#allocation9 + $0x50] sm:$0xff]
        %v906 = vld [vmem:[#allocation9 + $0x58] sm:$0xff]
        %v907 = vld [vmem:[#allocation9 + $0x60] sm:$0xff]
        %v908 = vld [vmem:[#allocation9 + $0x68] sm:$0xff]
        %v909 = vld [vmem:[#allocation9 + $0x70] sm:$0xff]
        %v910 = vld [vmem:[#allocation9 + $0x78] sm:$0xff]
        %v911 = vld [vmem:[#allocation9 + $0x80] sm:$0xff]
        %v912 = vld [vmem:[#allocation9 + $0x88] sm:$0xff]
        %v913 = vld [vmem:[#allocation9 + $0x90] sm:$0xff]
        %v914 = vld [vmem:[#allocation9 + $0x98] sm:$0xff]
        %v915 = vld [vmem:[#allocation9 + $0xa0] sm:$0xff]
        %v916 = vld [vmem:[#allocation9 + $0xa8] sm:$0xff]
        %v917 = vld [vmem:[#allocation9 + $0xb0] sm:$0xff]
        %v918 = vld [vmem:[#allocation9 + $0xb8] sm:$0xff]
        %v919 = vld [vmem:[#allocation9 + $0xc0] sm:$0xff]
        %v920 = vld [vmem:[#allocation9 + $0xc8] sm:$0xff]
        %v921 = vld [vmem:[#allocation9 + $0xd0] sm:$0xff]
        %v922 = vld [vmem:[#allocation9 + $0xd8] sm:$0xff]
        %v923 = vld [vmem:[#allocation9 + $0xe0] sm:$0xff]
        %v924 = vld [vmem:[#allocation9 + $0xe8] sm:$0xff]
        %v925 = vld [vmem:[#allocation9 + $0xf0] sm:$0xff]
        %v926 = vld [vmem:[#allocation9 + $0xf8] sm:$0xff]
        %v927 = vld [vmem:[#allocation9 + $0x100] sm:$0xff]
        %v928 = vld [vmem:[#allocation9 + $0x108] sm:$0xff]
        %v929 = vld [vmem:[#allocation9 + $0x110] sm:$0xff]
        %v930 = vld [vmem:[#allocation9 + $0x118] sm:$0xff]
        %v931 = vld [vmem:[#allocation9 + $0x120] sm:$0xff]
        %v932 = vld [vmem:[#allocation9 + $0x128] sm:$0xff]
        %v933 = vld [vmem:[#allocation9 + $0x130] sm:$0xff]
        %v934 = vld [vmem:[#allocation9 + $0x138] sm:$0xff]
        %v935 = vld [vmem:[#allocation9 + $0x140] sm:$0xff]
        %v936 = vld [vmem:[#allocation9 + $0x148] sm:$0xff]
        %v937 = vld [vmem:[#allocation9 + $0x150] sm:$0xff]
        %v938 = vld [vmem:[#allocation9 + $0x158] sm:$0xff]
        %v939 = vld [vmem:[#allocation9 + $0x160] sm:$0xff]
        %v940 = vld [vmem:[#allocation9 + $0x168] sm:$0xff]
        %v941 = vld [vmem:[#allocation9 + $0x170] sm:$0xff]
        %v942 = vld [vmem:[#allocation9 + $0x178] sm:$0xff]
        %v943 = vld [vmem:[#allocation9 + $0x180] sm:$0xff]
        %v944 = vld [vmem:[#allocation9 + $0x188] sm:$0xff]
        %v945 = vld [vmem:[#allocation9 + $0x190] sm:$0xff]
        %v946 = vld [vmem:[#allocation9 + $0x198] sm:$0xff]
        %v947 = vld [vmem:[#allocation9 + $0x1a0] sm:$0xff]
        %v948 = vld [vmem:[#allocation9 + $0x1a8] sm:$0xff]
        %v949 = vld [vmem:[#allocation9 + $0x1b0] sm:$0xff]
        %v950 = vld [vmem:[#allocation9 + $0x1b8] sm:$0xff]
        %v951 = vld [vmem:[#allocation9 + $0x1c0] sm:$0xff]
        %v952 = vld [vmem:[#allocation9 + $0x1c8] sm:$0xff]
        %v953 = vld [vmem:[#allocation9 + $0x1d0] sm:$0xff]
        %v954 = vld [vmem:[#allocation9 + $0x1d8] sm:$0xff]
        %v955 = vld [vmem:[#allocation9 + $0x1e0] sm:$0xff]
        %v956 = vld [vmem:[#allocation9 + $0x1e8] sm:$0xff]
        %v957 = vld [vmem:[#allocation9 + $0x1f0] sm:$0xff]
        %v958 = vld [vmem:[#allocation9 + $0x1f8] sm:$0xff]
        %v959 = vld [vmem:[#allocation9 + $0x200] sm:$0xff]
        %v960 = vld [vmem:[#allocation9 + $0x208] sm:$0xff]
        %v961 = vld [vmem:[#allocation9 + $0x210] sm:$0xff]
        %v962 = vld [vmem:[#allocation9 + $0x218] sm:$0xff]
        %v963 = vld [vmem:[#allocation9 + $0x220] sm:$0xff]
        %v964 = vld [vmem:[#allocation9 + $0x228] sm:$0xff]
        %v965 = vld [vmem:[#allocation9 + $0x230] sm:$0xff]
        %v966 = vld [vmem:[#allocation9 + $0x238] sm:$0xff]
        %v967 = vld [vmem:[#allocation9 + $0x240] sm:$0xff]
        %v968 = vld [vmem:[#allocation9 + $0x248] sm:$0xff]
        %v969 = vld [vmem:[#allocation9 + $0x250] sm:$0xff]
        %v970 = vld [vmem:[#allocation9 + $0x258] sm:$0xff]
        %v971 = vld [vmem:[#allocation9 + $0x260] sm:$0xff]
        %v972 = vld [vmem:[#allocation9 + $0x268] sm:$0xff]
        %v973 = vld [vmem:[#allocation9 + $0x270] sm:$0xff]
        %v974 = vld [vmem:[#allocation9 + $0x278] sm:$0xff]
        %v975 = vld [vmem:[#allocation9 + $0x280] sm:$0xff]
        %v976 = vld [vmem:[#allocation9 + $0x288] sm:$0xff]
        %v977 = vld [vmem:[#allocation9 + $0x290] sm:$0xff]
        %v978 = vld [vmem:[#allocation9 + $0x298] sm:$0xff]
        %v979 = vld [vmem:[#allocation9 + $0x2a0] sm:$0xff]
        %v980 = vld [vmem:[#allocation9 + $0x2a8] sm:$0xff]
        %v981 = vld [vmem:[#allocation9 + $0x2b0] sm:$0xff]
        %v982 = vld [vmem:[#allocation9 + $0x2b8] sm:$0xff]
        %v983 = vld [vmem:[#allocation9 + $0x2c0] sm:$0xff]
        %v984 = vld [vmem:[#allocation9 + $0x2c8] sm:$0xff]
        %v985 = vld [vmem:[#allocation9 + $0x2d0] sm:$0xff]
        %v986 = vld [vmem:[#allocation9 + $0x2d8] sm:$0xff]
        %v987 = vld [vmem:[#allocation9 + $0x2e0] sm:$0xff]
        %v988 = vld [vmem:[#allocation9 + $0x2e8] sm:$0xff]
        %v989 = vld [vmem:[#allocation9 + $0x2f0] sm:$0xff]
        %v990 = vld [vmem:[#allocation9 + $0x2f8] sm:$0xff]
        %v991 = vld [vmem:[#allocation9 + $0x300] sm:$0xff]
        %v992 = vld [vmem:[#allocation9 + $0x308] sm:$0xff]
        %v993 = vld [vmem:[#allocation9 + $0x310] sm:$0xff]
        %v994 = vld [vmem:[#allocation9 + $0x318] sm:$0xff]
        %v995 = vld [vmem:[#allocation9 + $0x320] sm:$0xff]
        %v996 = vld [vmem:[#allocation9 + $0x328] sm:$0xff]
        %v997 = vld [vmem:[#allocation9 + $0x330] sm:$0xff]
        %v998 = vld [vmem:[#allocation9 + $0x338] sm:$0xff]
        %v999 = vld [vmem:[#allocation9 + $0x340] sm:$0xff]
        %v1000 = vld [vmem:[#allocation9 + $0x348] sm:$0xff]
        %v1001 = vld [vmem:[#allocation9 + $0x350] sm:$0xff]
        %v1002 = vld [vmem:[#allocation9 + $0x358] sm:$0xff]
        %v1003 = vld [vmem:[#allocation9 + $0x360] sm:$0xff]
        %v1004 = vld [vmem:[#allocation9 + $0x368] sm:$0xff]
        %v1005 = vld [vmem:[#allocation9 + $0x370] sm:$0xff]
        %v1006 = vld [vmem:[#allocation9 + $0x378] sm:$0xff]
        %v1007 = vld [vmem:[#allocation9 + $0x380] sm:$0xff]
        %v1008 = vld [vmem:[#allocation9 + $0x388] sm:$0xff]
        %v1009 = vld [vmem:[#allocation9 + $0x390] sm:$0xff]
        %v1010 = vld [vmem:[#allocation9 + $0x398] sm:$0xff]
        %v1011 = vld [vmem:[#allocation9 + $0x3a0] sm:$0xff]
        %v1012 = vld [vmem:[#allocation9 + $0x3a8] sm:$0xff]
        %v1013 = vld [vmem:[#allocation9 + $0x3b0] sm:$0xff]
        %v1014 = vld [vmem:[#allocation9 + $0x3b8] sm:$0xff]
        %v1015 = vld [vmem:[#allocation9 + $0x3c0] sm:$0xff]
        %v1016 = vld [vmem:[#allocation9 + $0x3c8] sm:$0xff]
        %v1017 = vld [vmem:[#allocation9 + $0x3d0] sm:$0xff]
        %v1018 = vld [vmem:[#allocation9 + $0x3d8] sm:$0xff]
        %v1019 = vld [vmem:[#allocation9 + $0x3e0] sm:$0xff]
        %v1020 = vld [vmem:[#allocation9 + $0x3e8] sm:$0xff]
        %v1021 = vld [vmem:[#allocation9 + $0x3f0] sm:$0xff]
        %v1022 = vld [vmem:[#allocation9 + $0x3f8] sm:$0xff]
        %v1023 = vld [vmem:[#allocation9 + $0x400] sm:$0xff]
        %v1024 = vld [vmem:[#allocation9 + $0x408] sm:$0xff]
        %v1025 = vld [vmem:[#allocation9 + $0x410] sm:$0xff]
        %v1026 = vld [vmem:[#allocation9 + $0x418] sm:$0xff]
        %v1027 = vld [vmem:[#allocation9 + $0x420] sm:$0xff]
        %v1028 = vld [vmem:[#allocation9 + $0x428] sm:$0xff]
        %v1029 = vld [vmem:[#allocation9 + $0x430] sm:$0xff]
        %v1030 = vld [vmem:[#allocation9 + $0x438] sm:$0xff]
        %v1031 = vld [vmem:[#allocation9 + $0x440] sm:$0xff]
        %v1032 = vld [vmem:[#allocation9 + $0x448] sm:$0xff]
        %v1033 = vld [vmem:[#allocation9 + $0x450] sm:$0xff]
        %v1034 = vld [vmem:[#allocation9 + $0x458] sm:$0xff]
        %v1035 = vld [vmem:[#allocation9 + $0x460] sm:$0xff]
        %v1036 = vld [vmem:[#allocation9 + $0x468] sm:$0xff]
        %v1037 = vld [vmem:[#allocation9 + $0x470] sm:$0xff]
        %v1038 = vld [vmem:[#allocation9 + $0x478] sm:$0xff]
        %s1039 = scalar_lea.vmem [#allocation13], 1
        %v1040 = vld [vmem:[%s1039] ss:$8 sm:$0x3]
        %v1042 = vlaneseq
        %v1043 = vshrl.u32 %v1042, 7
        %v1044 = vsub.s32 0, %v1043
        %v1045 = vrot.slane %v1040, %v1044
        %v1046 = vlaneseq
        %v1047 = vshrl.u32 %v1046, 7
        %v1048 = vsub.s32 1, %v1047
        %v1049 = vrot.slane %v1040, %v1048
        %v1196 = vunpack.c.l.b16 %v895
        %v1197 = vunpack.c.h.b16 %v895
        %v1198 = vunpack.c.l.b16 %v896
        %v1199 = vunpack.c.h.b16 %v896
        %v1200 = vunpack.c.l.b16 %v897
        %v1201 = vunpack.c.h.b16 %v897
        %v1202 = vunpack.c.l.b16 %v898
        %v1203 = vunpack.c.h.b16 %v898
        %v1204 = vunpack.c.l.b16 %v899
        %v1205 = vunpack.c.h.b16 %v899
        %v1206 = vunpack.c.l.b16 %v900
        %v1207 = vunpack.c.h.b16 %v900
        %v1208 = vunpack.c.l.b16 %v901
        %v1209 = vunpack.c.h.b16 %v901
        %v1210 = vunpack.c.l.b16 %v902
        %v1211 = vunpack.c.h.b16 %v902
        %v1212 = vunpack.c.l.b16 %v903
        %v1213 = vunpack.c.h.b16 %v903
        %v1214 = vunpack.c.l.b16 %v904
        %v1215 = vunpack.c.h.b16 %v904
        %v1216 = vunpack.c.l.b16 %v905
        %v1217 = vunpack.c.h.b16 %v905
        %v1218 = vunpack.c.l.b16 %v906
        %v1219 = vunpack.c.h.b16 %v906
        %v1220 = vunpack.c.l.b16 %v907
        %v1221 = vunpack.c.h.b16 %v907
        %v1222 = vunpack.c.l.b16 %v908
        %v1223 = vunpack.c.h.b16 %v908
        %v1224 = vunpack.c.l.b16 %v909
        %v1225 = vunpack.c.h.b16 %v909
        %v1226 = vunpack.c.l.b16 %v910
        %v1227 = vunpack.c.h.b16 %v910
        %v1228 = vunpack.c.l.b16 %v911
        %v1229 = vunpack.c.h.b16 %v911
        %v1230 = vunpack.c.l.b16 %v912
        %v1231 = vunpack.c.h.b16 %v912
        %v1232 = vunpack.c.l.b16 %v913
        %v1233 = vunpack.c.h.b16 %v913
        %v1234 = vunpack.c.l.b16 %v914
        %v1235 = vunpack.c.h.b16 %v914
        %v1236 = vunpack.c.l.b16 %v915
        %v1237 = vunpack.c.h.b16 %v915
        %v1238 = vunpack.c.l.b16 %v916
        %v1239 = vunpack.c.h.b16 %v916
        %v1240 = vunpack.c.l.b16 %v917
        %v1241 = vunpack.c.h.b16 %v917
        %v1242 = vunpack.c.l.b16 %v918
        %v1243 = vunpack.c.h.b16 %v918
        %v1244 = vunpack.c.l.b16 %v919
        %v1245 = vunpack.c.h.b16 %v919
        %v1246 = vunpack.c.l.b16 %v920
        %v1247 = vunpack.c.h.b16 %v920
        %v1248 = vunpack.c.l.b16 %v921
        %v1249 = vunpack.c.h.b16 %v921
        %v1250 = vunpack.c.l.b16 %v922
        %v1251 = vunpack.c.h.b16 %v922
        %v1252 = vunpack.c.l.b16 %v923
        %v1253 = vunpack.c.h.b16 %v923
        %v1254 = vunpack.c.l.b16 %v924
        %v1255 = vunpack.c.h.b16 %v924
        %v1256 = vunpack.c.l.b16 %v925
        %v1257 = vunpack.c.h.b16 %v925
        %v1258 = vunpack.c.l.b16 %v926
        %v1259 = vunpack.c.h.b16 %v926
        %v1260 = vunpack.c.l.b16 %v927
        %v1261 = vunpack.c.h.b16 %v927
        %v1262 = vunpack.c.l.b16 %v928
        %v1263 = vunpack.c.h.b16 %v928
        %v1264 = vunpack.c.l.b16 %v929
        %v1265 = vunpack.c.h.b16 %v929
        %v1266 = vunpack.c.l.b16 %v930
        %v1267 = vunpack.c.h.b16 %v930
        %v1268 = vunpack.c.l.b16 %v931
        %v1269 = vunpack.c.h.b16 %v931
        %v1270 = vunpack.c.l.b16 %v932
        %v1271 = vunpack.c.h.b16 %v932
        %v1272 = vunpack.c.l.b16 %v933
        %v1273 = vunpack.c.h.b16 %v933
        %v1274 = vunpack.c.l.b16 %v934
        %v1275 = vunpack.c.h.b16 %v934
        %v1276 = vunpack.c.l.b16 %v935
        %v1277 = vunpack.c.h.b16 %v935
        %v1278 = vunpack.c.l.b16 %v936
        %v1279 = vunpack.c.h.b16 %v936
        %v1280 = vunpack.c.l.b16 %v937
        %v1281 = vunpack.c.h.b16 %v937
        %v1282 = vunpack.c.l.b16 %v938
        %v1283 = vunpack.c.h.b16 %v938
        %v1284 = vunpack.c.l.b16 %v939
        %v1285 = vunpack.c.h.b16 %v939
        %v1286 = vunpack.c.l.b16 %v940
        %v1287 = vunpack.c.h.b16 %v940
        %v1288 = vunpack.c.l.b16 %v941
        %v1289 = vunpack.c.h.b16 %v941
        %v1290 = vunpack.c.l.b16 %v942
        %v1291 = vunpack.c.h.b16 %v942
        %v1292 = vunpack.c.l.b16 %v943
        %v1293 = vunpack.c.h.b16 %v943
        %v1294 = vunpack.c.l.b16 %v944
        %v1295 = vunpack.c.h.b16 %v944
        %v1296 = vunpack.c.l.b16 %v945
        %v1297 = vunpack.c.h.b16 %v945
        %v1298 = vunpack.c.l.b16 %v946
        %v1299 = vunpack.c.h.b16 %v946
        %v1300 = vunpack.c.l.b16 %v947
        %v1301 = vunpack.c.h.b16 %v947
        %v1302 = vunpack.c.l.b16 %v948
        %v1303 = vunpack.c.h.b16 %v948
        %v1304 = vunpack.c.l.b16 %v949
        %v1305 = vunpack.c.h.b16 %v949
        %v1306 = vunpack.c.l.b16 %v950
        %v1307 = vunpack.c.h.b16 %v950
        %v1308 = vunpack.c.l.b16 %v951
        %v1309 = vunpack.c.h.b16 %v951
        %v1310 = vunpack.c.l.b16 %v952
        %v1311 = vunpack.c.h.b16 %v952
        %v1312 = vunpack.c.l.b16 %v953
        %v1313 = vunpack.c.h.b16 %v953
        %v1314 = vunpack.c.l.b16 %v954
        %v1315 = vunpack.c.h.b16 %v954
        %v1316 = vunpack.c.l.b16 %v955
        %v1317 = vunpack.c.h.b16 %v955
        %v1318 = vunpack.c.l.b16 %v956
        %v1319 = vunpack.c.h.b16 %v956
        %v1320 = vunpack.c.l.b16 %v957
        %v1321 = vunpack.c.h.b16 %v957
        %v1322 = vunpack.c.l.b16 %v958
        %v1323 = vunpack.c.h.b16 %v958
        %v1324 = vunpack.c.l.b16 %v959
        %v1325 = vunpack.c.h.b16 %v959
        %v1326 = vunpack.c.l.b16 %v960
        %v1327 = vunpack.c.h.b16 %v960
        %v1328 = vunpack.c.l.b16 %v961
        %v1329 = vunpack.c.h.b16 %v961
        %v1330 = vunpack.c.l.b16 %v962
        %v1331 = vunpack.c.h.b16 %v962
        %v1332 = vunpack.c.l.b16 %v963
        %v1333 = vunpack.c.h.b16 %v963
        %v1334 = vunpack.c.l.b16 %v964
        %v1335 = vunpack.c.h.b16 %v964
        %v1336 = vunpack.c.l.b16 %v965
        %v1337 = vunpack.c.h.b16 %v965
        %v1338 = vunpack.c.l.b16 %v966
        %v1339 = vunpack.c.h.b16 %v966
        %v1340 = vunpack.c.l.b16 %v967
        %v1341 = vunpack.c.h.b16 %v967
        %v1342 = vunpack.c.l.b16 %v968
        %v1343 = vunpack.c.h.b16 %v968
        %v1344 = vunpack.c.l.b16 %v969
        %v1345 = vunpack.c.h.b16 %v969
        %v1346 = vunpack.c.l.b16 %v970
        %v1347 = vunpack.c.h.b16 %v970
        %v1348 = vunpack.c.l.b16 %v971
        %v1349 = vunpack.c.h.b16 %v971
        %v1350 = vunpack.c.l.b16 %v972
        %v1351 = vunpack.c.h.b16 %v972
        %v1352 = vunpack.c.l.b16 %v973
        %v1353 = vunpack.c.h.b16 %v973
        %v1354 = vunpack.c.l.b16 %v974
        %v1355 = vunpack.c.h.b16 %v974
        %v1356 = vunpack.c.l.b16 %v975
        %v1357 = vunpack.c.h.b16 %v975
        %v1358 = vunpack.c.l.b16 %v976
        %v1359 = vunpack.c.h.b16 %v976
        %v1360 = vunpack.c.l.b16 %v977
        %v1361 = vunpack.c.h.b16 %v977
        %v1362 = vunpack.c.l.b16 %v978
        %v1363 = vunpack.c.h.b16 %v978
        %v1364 = vunpack.c.l.b16 %v979
        %v1365 = vunpack.c.h.b16 %v979
        %v1366 = vunpack.c.l.b16 %v980
        %v1367 = vunpack.c.h.b16 %v980
        %v1368 = vunpack.c.l.b16 %v981
        %v1369 = vunpack.c.h.b16 %v981
        %v1370 = vunpack.c.l.b16 %v982
        %v1371 = vunpack.c.h.b16 %v982
        %v1372 = vunpack.c.l.b16 %v983
        %v1373 = vunpack.c.h.b16 %v983
        %v1374 = vunpack.c.l.b16 %v984
        %v1375 = vunpack.c.h.b16 %v984
        %v1376 = vunpack.c.l.b16 %v985
        %v1377 = vunpack.c.h.b16 %v985
        %v1378 = vunpack.c.l.b16 %v986
        %v1379 = vunpack.c.h.b16 %v986
        %v1380 = vunpack.c.l.b16 %v987
        %v1381 = vunpack.c.h.b16 %v987
        %v1382 = vunpack.c.l.b16 %v988
        %v1383 = vunpack.c.h.b16 %v988
        %v1384 = vunpack.c.l.b16 %v989
        %v1385 = vunpack.c.h.b16 %v989
        %v1386 = vunpack.c.l.b16 %v990
        %v1387 = vunpack.c.h.b16 %v990
        %v1388 = vunpack.c.l.b16 %v991
        %v1389 = vunpack.c.h.b16 %v991
        %v1390 = vunpack.c.l.b16 %v992
        %v1391 = vunpack.c.h.b16 %v992
        %v1392 = vunpack.c.l.b16 %v993
        %v1393 = vunpack.c.h.b16 %v993
        %v1394 = vunpack.c.l.b16 %v994
        %v1395 = vunpack.c.h.b16 %v994
        %v1396 = vunpack.c.l.b16 %v995
        %v1397 = vunpack.c.h.b16 %v995
        %v1398 = vunpack.c.l.b16 %v996
        %v1399 = vunpack.c.h.b16 %v996
        %v1400 = vunpack.c.l.b16 %v997
        %v1401 = vunpack.c.h.b16 %v997
        %v1402 = vunpack.c.l.b16 %v998
        %v1403 = vunpack.c.h.b16 %v998
        %v1404 = vunpack.c.l.b16 %v999
        %v1405 = vunpack.c.h.b16 %v999
        %v1406 = vunpack.c.l.b16 %v1000
        %v1407 = vunpack.c.h.b16 %v1000
        %v1408 = vunpack.c.l.b16 %v1001
        %v1409 = vunpack.c.h.b16 %v1001
        %v1410 = vunpack.c.l.b16 %v1002
        %v1411 = vunpack.c.h.b16 %v1002
        %v1412 = vunpack.c.l.b16 %v1003
        %v1413 = vunpack.c.h.b16 %v1003
        %v1414 = vunpack.c.l.b16 %v1004
        %v1415 = vunpack.c.h.b16 %v1004
        %v1416 = vunpack.c.l.b16 %v1005
        %v1417 = vunpack.c.h.b16 %v1005
        %v1418 = vunpack.c.l.b16 %v1006
        %v1419 = vunpack.c.h.b16 %v1006
        %v1420 = vunpack.c.l.b16 %v1007
        %v1421 = vunpack.c.h.b16 %v1007
        %v1422 = vunpack.c.l.b16 %v1008
        %v1423 = vunpack.c.h.b16 %v1008
        %v1424 = vunpack.c.l.b16 %v1009
        %v1425 = vunpack.c.h.b16 %v1009
        %v1426 = vunpack.c.l.b16 %v1010
        %v1427 = vunpack.c.h.b16 %v1010
        %v1428 = vunpack.c.l.b16 %v1011
        %v1429 = vunpack.c.h.b16 %v1011
        %v1430 = vunpack.c.l.b16 %v1012
        %v1431 = vunpack.c.h.b16 %v1012
        %v1432 = vunpack.c.l.b16 %v1013
        %v1433 = vunpack.c.h.b16 %v1013
        %v1434 = vunpack.c.l.b16 %v1014
        %v1435 = vunpack.c.h.b16 %v1014
        %v1436 = vunpack.c.l.b16 %v1015
        %v1437 = vunpack.c.h.b16 %v1015
        %v1438 = vunpack.c.l.b16 %v1016
        %v1439 = vunpack.c.h.b16 %v1016
        %v1440 = vunpack.c.l.b16 %v1017
        %v1441 = vunpack.c.h.b16 %v1017
        %v1442 = vunpack.c.l.b16 %v1018
        %v1443 = vunpack.c.h.b16 %v1018
        %v1444 = vunpack.c.l.b16 %v1019
        %v1445 = vunpack.c.h.b16 %v1019
        %v1446 = vunpack.c.l.b16 %v1020
        %v1447 = vunpack.c.h.b16 %v1020
        %v1448 = vunpack.c.l.b16 %v1021
        %v1449 = vunpack.c.h.b16 %v1021
        %v1450 = vunpack.c.l.b16 %v1022
        %v1451 = vunpack.c.h.b16 %v1022
        %v1452 = vunpack.c.l.b16 %v1023
        %v1453 = vunpack.c.h.b16 %v1023
        %v1454 = vunpack.c.l.b16 %v1024
        %v1455 = vunpack.c.h.b16 %v1024
        %v1456 = vunpack.c.l.b16 %v1025
        %v1457 = vunpack.c.h.b16 %v1025
        %v1458 = vunpack.c.l.b16 %v1026
        %v1459 = vunpack.c.h.b16 %v1026
        %v1460 = vunpack.c.l.b16 %v1027
        %v1461 = vunpack.c.h.b16 %v1027
        %v1462 = vunpack.c.l.b16 %v1028
        %v1463 = vunpack.c.h.b16 %v1028
        %v1464 = vunpack.c.l.b16 %v1029
        %v1465 = vunpack.c.h.b16 %v1029
        %v1466 = vunpack.c.l.b16 %v1030
        %v1467 = vunpack.c.h.b16 %v1030
        %v1468 = vunpack.c.l.b16 %v1031
        %v1469 = vunpack.c.h.b16 %v1031
        %v1470 = vunpack.c.l.b16 %v1032
        %v1471 = vunpack.c.h.b16 %v1032
        %v1472 = vunpack.c.l.b16 %v1033
        %v1473 = vunpack.c.h.b16 %v1033
        %v1474 = vunpack.c.l.b16 %v1034
        %v1475 = vunpack.c.h.b16 %v1034
        %v1476 = vunpack.c.l.b16 %v1035
        %v1477 = vunpack.c.h.b16 %v1035
        %v1478 = vunpack.c.l.b16 %v1036
        %v1479 = vunpack.c.h.b16 %v1036
        %v1480 = vunpack.c.l.b16 %v1037
        %v1481 = vunpack.c.h.b16 %v1037
        %v1482 = vunpack.c.l.b16 %v1038
        %v1483 = vunpack.c.h.b16 %v1038
        %v1484 = vpack.c.b16 %v1198, %v1196
        %v1485 = vpack.c.b16 %v1199, %v1197
        %v1486 = vpack.c.b16 %v1202, %v1200
        %v1487 = vpack.c.b16 %v1203, %v1201
        %v1488 = vpack.c.b16 %v1206, %v1204
        %v1489 = vpack.c.b16 %v1207, %v1205
        %v1490 = vpack.c.b16 %v1210, %v1208
        %v1491 = vpack.c.b16 %v1211, %v1209
        %v1492 = vpack.c.b16 %v1214, %v1212
        %v1493 = vpack.c.b16 %v1215, %v1213
        %v1494 = vpack.c.b16 %v1218, %v1216
        %v1495 = vpack.c.b16 %v1219, %v1217
        %v1496 = vpack.c.b16 %v1222, %v1220
        %v1497 = vpack.c.b16 %v1223, %v1221
        %v1498 = vpack.c.b16 %v1226, %v1224
        %v1499 = vpack.c.b16 %v1227, %v1225
        %v1500 = vpack.c.b16 %v1230, %v1228
        %v1501 = vpack.c.b16 %v1231, %v1229
        %v1502 = vpack.c.b16 %v1234, %v1232
        %v1503 = vpack.c.b16 %v1235, %v1233
        %v1504 = vpack.c.b16 %v1238, %v1236
        %v1505 = vpack.c.b16 %v1239, %v1237
        %v1506 = vpack.c.b16 %v1242, %v1240
        %v1507 = vpack.c.b16 %v1243, %v1241
        %v1508 = vpack.c.b16 %v1246, %v1244
        %v1509 = vpack.c.b16 %v1247, %v1245
        %v1510 = vpack.c.b16 %v1250, %v1248
        %v1511 = vpack.c.b16 %v1251, %v1249
        %v1512 = vpack.c.b16 %v1254, %v1252
        %v1513 = vpack.c.b16 %v1255, %v1253
        %v1514 = vpack.c.b16 %v1258, %v1256
        %v1515 = vpack.c.b16 %v1259, %v1257
        %v1516 = vpack.c.b16 %v1262, %v1260
        %v1517 = vpack.c.b16 %v1263, %v1261
        %v1518 = vpack.c.b16 %v1266, %v1264
        %v1519 = vpack.c.b16 %v1267, %v1265
        %v1520 = vpack.c.b16 %v1270, %v1268
        %v1521 = vpack.c.b16 %v1271, %v1269
        %v1522 = vpack.c.b16 %v1274, %v1272
        %v1523 = vpack.c.b16 %v1275, %v1273
        %v1524 = vpack.c.b16 %v1278, %v1276
        %v1525 = vpack.c.b16 %v1279, %v1277
        %v1526 = vpack.c.b16 %v1282, %v1280
        %v1527 = vpack.c.b16 %v1283, %v1281
        %v1528 = vpack.c.b16 %v1286, %v1284
        %v1529 = vpack.c.b16 %v1287, %v1285
        %v1530 = vpack.c.b16 %v1290, %v1288
        %v1531 = vpack.c.b16 %v1291, %v1289
        %v1532 = vpack.c.b16 %v1294, %v1292
        %v1533 = vpack.c.b16 %v1295, %v1293
        %v1534 = vpack.c.b16 %v1298, %v1296
        %v1535 = vpack.c.b16 %v1299, %v1297
        %v1536 = vpack.c.b16 %v1302, %v1300
        %v1537 = vpack.c.b16 %v1303, %v1301
        %v1538 = vpack.c.b16 %v1306, %v1304
        %v1539 = vpack.c.b16 %v1307, %v1305
        %v1540 = vpack.c.b16 %v1310, %v1308
        %v1541 = vpack.c.b16 %v1311, %v1309
        %v1542 = vpack.c.b16 %v1314, %v1312
        %v1543 = vpack.c.b16 %v1315, %v1313
        %v1544 = vpack.c.b16 %v1318, %v1316
        %v1545 = vpack.c.b16 %v1319, %v1317
        %v1546 = vpack.c.b16 %v1322, %v1320
        %v1547 = vpack.c.b16 %v1323, %v1321
        %v1548 = vpack.c.b16 %v1326, %v1324
        %v1549 = vpack.c.b16 %v1327, %v1325
        %v1550 = vpack.c.b16 %v1330, %v1328
        %v1551 = vpack.c.b16 %v1331, %v1329
        %v1552 = vpack.c.b16 %v1334, %v1332
        %v1553 = vpack.c.b16 %v1335, %v1333
        %v1554 = vpack.c.b16 %v1338, %v1336
        %v1555 = vpack.c.b16 %v1339, %v1337
        %v1556 = vpack.c.b16 %v1342, %v1340
        %v1557 = vpack.c.b16 %v1343, %v1341
        %v1558 = vpack.c.b16 %v1346, %v1344
        %v1559 = vpack.c.b16 %v1347, %v1345
        %v1560 = vpack.c.b16 %v1350, %v1348
        %v1561 = vpack.c.b16 %v1351, %v1349
        %v1562 = vpack.c.b16 %v1354, %v1352
        %v1563 = vpack.c.b16 %v1355, %v1353
        %v1564 = vpack.c.b16 %v1358, %v1356
        %v1565 = vpack.c.b16 %v1359, %v1357
        %v1566 = vpack.c.b16 %v1362, %v1360
        %v1567 = vpack.c.b16 %v1363, %v1361
        %v1568 = vpack.c.b16 %v1366, %v1364
        %v1569 = vpack.c.b16 %v1367, %v1365
        %v1570 = vpack.c.b16 %v1370, %v1368
        %v1571 = vpack.c.b16 %v1371, %v1369
        %v1572 = vpack.c.b16 %v1374, %v1372
        %v1573 = vpack.c.b16 %v1375, %v1373
        %v1574 = vpack.c.b16 %v1378, %v1376
        %v1575 = vpack.c.b16 %v1379, %v1377
        %v1576 = vpack.c.b16 %v1382, %v1380
        %v1577 = vpack.c.b16 %v1383, %v1381
        %v1578 = vpack.c.b16 %v1386, %v1384
        %v1579 = vpack.c.b16 %v1387, %v1385
        %v1580 = vpack.c.b16 %v1390, %v1388
        %v1581 = vpack.c.b16 %v1391, %v1389
        %v1582 = vpack.c.b16 %v1394, %v1392
        %v1583 = vpack.c.b16 %v1395, %v1393
        %v1584 = vpack.c.b16 %v1398, %v1396
        %v1585 = vpack.c.b16 %v1399, %v1397
        %v1586 = vpack.c.b16 %v1402, %v1400
        %v1587 = vpack.c.b16 %v1403, %v1401
        %v1588 = vpack.c.b16 %v1406, %v1404
        %v1589 = vpack.c.b16 %v1407, %v1405
        %v1590 = vpack.c.b16 %v1410, %v1408
        %v1591 = vpack.c.b16 %v1411, %v1409
        %v1592 = vpack.c.b16 %v1414, %v1412
        %v1593 = vpack.c.b16 %v1415, %v1413
        %v1594 = vpack.c.b16 %v1418, %v1416
        %v1595 = vpack.c.b16 %v1419, %v1417
        %v1596 = vpack.c.b16 %v1422, %v1420
        %v1597 = vpack.c.b16 %v1423, %v1421
        %v1598 = vpack.c.b16 %v1426, %v1424
        %v1599 = vpack.c.b16 %v1427, %v1425
        %v1600 = vpack.c.b16 %v1430, %v1428
        %v1601 = vpack.c.b16 %v1431, %v1429
        %v1602 = vpack.c.b16 %v1434, %v1432
        %v1603 = vpack.c.b16 %v1435, %v1433
        %v1604 = vpack.c.b16 %v1438, %v1436
        %v1605 = vpack.c.b16 %v1439, %v1437
        %v1606 = vpack.c.b16 %v1442, %v1440
        %v1607 = vpack.c.b16 %v1443, %v1441
        %v1608 = vpack.c.b16 %v1446, %v1444
        %v1609 = vpack.c.b16 %v1447, %v1445
        %v1610 = vpack.c.b16 %v1450, %v1448
        %v1611 = vpack.c.b16 %v1451, %v1449
        %v1612 = vpack.c.b16 %v1454, %v1452
        %v1613 = vpack.c.b16 %v1455, %v1453
        %v1614 = vpack.c.b16 %v1458, %v1456
        %v1615 = vpack.c.b16 %v1459, %v1457
        %v1616 = vpack.c.b16 %v1462, %v1460
        %v1617 = vpack.c.b16 %v1463, %v1461
        %v1618 = vpack.c.b16 %v1466, %v1464
        %v1619 = vpack.c.b16 %v1467, %v1465
        %v1620 = vpack.c.b16 %v1470, %v1468
        %v1621 = vpack.c.b16 %v1471, %v1469
        %v1622 = vpack.c.b16 %v1474, %v1472
        %v1623 = vpack.c.b16 %v1475, %v1473
        %v1624 = vpack.c.b16 %v1478, %v1476
        %v1625 = vpack.c.b16 %v1479, %v1477
        %v1626 = vpack.c.b16 %v1482, %v1480
        %v1627 = vpack.c.b16 %v1483, %v1481
        %1772 = vmatprep.subr.bf16.mxu0 %v1485
        %1773 = vmatpush1.bf16.msra.mxu0 %v1484
        %1774 = vmatprep.subr.bf16.mxu0 %v1487
        %1775 = vmatpush1.bf16.msra.mxu0 %v1486
        %1776 = vmatprep.subr.bf16.mxu0 %v1489
        %1777 = vmatpush1.bf16.msra.mxu0 %v1488
        %1778 = vmatprep.subr.bf16.mxu0 %v1491
        %1779 = vmatpush1.bf16.msra.mxu0 %v1490
        %1780 = vmatprep.subr.bf16.mxu0 %v1493
        %1781 = vmatpush1.bf16.msra.mxu0 %v1492
        %1782 = vmatprep.subr.bf16.mxu0 %v1495
        %1783 = vmatpush1.bf16.msra.mxu0 %v1494
        %1784 = vmatprep.subr.bf16.mxu0 %v1497
        %1785 = vmatpush1.bf16.msra.mxu0 %v1496
        %1786 = vmatprep.subr.bf16.mxu0 %v1499
        %1787 = vmatpush1.bf16.msra.mxu0 %v1498
        %1788 = vmatprep.subr.bf16.mxu0 %v1501
        %1789 = vmatpush1.bf16.msra.mxu0 %v1500
        %1790 = vmatprep.subr.bf16.mxu0 %v1503
        %1791 = vmatpush1.bf16.msra.mxu0 %v1502
        %1792 = vmatprep.subr.bf16.mxu0 %v1505
        %1793 = vmatpush1.bf16.msra.mxu0 %v1504
        %1794 = vmatprep.subr.bf16.mxu0 %v1507
        %1795 = vmatpush1.bf16.msra.mxu0 %v1506
        %1796 = vmatprep.subr.bf16.mxu0 %v1509
        %1797 = vmatpush1.bf16.msra.mxu0 %v1508
        %1798 = vmatprep.subr.bf16.mxu0 %v1511
        %1799 = vmatpush1.bf16.msra.mxu0 %v1510
        %1800 = vmatprep.subr.bf16.mxu0 %v1513
        %1801 = vmatpush1.bf16.msra.mxu0 %v1512
        %1802 = vmatprep.subr.bf16.mxu0 %v1515
        %1803 = vmatpush1.bf16.msra.mxu0 %v1514
        %1804 = vmatprep.mubr.bf16.mxu0 %v860
        %1805 = vmatmul.mubr.bf16.gmra.mrb[0].mxu0 %v859
        %v1806 = vpop.f32.mrb[0].mxu0
        %v1807 = vadd.f32 %v1045, %v1806
        %v1808 = vpop.f32.mrb[0].mxu0
        %v1809 = vadd.f32 %v1049, %v1808
        %v1810 = vpop.f32.mrb[0].mxu0
        %v1811 = vadd.f32 %v1045, %v1810
        %v1812 = vpop.f32.mrb[0].mxu0
        %v1813 = vadd.f32 %v1049, %v1812
        %1814 = vmatprep.mubr.bf16.mxu0 %v869
        %1815 = vmatmul.mubr.bf16.gmra.mrb[0].mxu0 %v868
        %v1816 = vpop.f32.mrb[0].mxu0
        %v1817 = vadd.f32 %v1045, %v1816
        %v1818 = vpop.f32.mrb[0].mxu0
        %v1819 = vadd.f32 %v1049, %v1818
        %v1820 = vpop.f32.mrb[0].mxu0
        %v1821 = vadd.f32 %v1045, %v1820
        %v1822 = vpop.f32.mrb[0].mxu0
        %v1823 = vadd.f32 %v1049, %v1822
        %1824 = vmatprep.mubr.bf16.mxu0 %v878
        %1825 = vmatmul.mubr.bf16.gmra.mrb[0].mxu0 %v877
        %v1826 = vpop.f32.mrb[0].mxu0
        %v1827 = vadd.f32 %v1045, %v1826
        %v1828 = vpop.f32.mrb[0].mxu0
        %v1829 = vadd.f32 %v1049, %v1828
        %v1830 = vpop.f32.mrb[0].mxu0
        %v1831 = vadd.f32 %v1045, %v1830
        %v1832 = vpop.f32.mrb[0].mxu0
        %v1833 = vadd.f32 %v1049, %v1832
        %1834 = vmatprep.mubr.bf16.mxu0 %v887
        %1835 = vmatmul.mubr.bf16.gmra.mrb[0].mxu0 %v886
        %v1836 = vpop.f32.mrb[0].mxu0
        %v1837 = vadd.f32 %v1045, %v1836
        %v1838 = vpop.f32.mrb[0].mxu0
        %v1839 = vadd.f32 %v1049, %v1838
        %v1840 = vpop.f32.mrb[0].mxu0
        %v1841 = vadd.f32 %v1045, %v1840
        %v1842 = vpop.f32.mrb[0].mxu0
        %v1843 = vadd.f32 %v1049, %v1842
        %1844 = vdwg.mxu0
        %1845 = vmatprep.subr.bf16.mxu0 %v1517
        %1846 = vmatpush1.bf16.msra.mxu0 %v1516
        %1847 = vmatprep.subr.bf16.mxu0 %v1519
        %1848 = vmatpush1.bf16.msra.mxu0 %v1518
        %1849 = vmatprep.subr.bf16.mxu0 %v1521
        %1850 = vmatpush1.bf16.msra.mxu0 %v1520
        %1851 = vmatprep.subr.bf16.mxu0 %v1523
        %1852 = vmatpush1.bf16.msra.mxu0 %v1522
        %1853 = vmatprep.subr.bf16.mxu0 %v1525
        %1854 = vmatpush1.bf16.msra.mxu0 %v1524
        %1855 = vmatprep.subr.bf16.mxu0 %v1527
        %1856 = vmatpush1.bf16.msra.mxu0 %v1526
        %1857 = vmatprep.subr.bf16.mxu0 %v1529
        %1858 = vmatpush1.bf16.msra.mxu0 %v1528
        %1859 = vmatprep.subr.bf16.mxu0 %v1531
        %1860 = vmatpush1.bf16.msra.mxu0 %v1530
        %1861 = vmatprep.subr.bf16.mxu0 %v1533
        %1862 = vmatpush1.bf16.msra.mxu0 %v1532
        %1863 = vmatprep.subr.bf16.mxu0 %v1535
        %1864 = vmatpush1.bf16.msra.mxu0 %v1534
        %1865 = vmatprep.subr.bf16.mxu0 %v1537
        %1866 = vmatpush1.bf16.msra.mxu0 %v1536
        %1867 = vmatprep.subr.bf16.mxu0 %v1539
        %1868 = vmatpush1.bf16.msra.mxu0 %v1538
        %1869 = vmatprep.subr.bf16.mxu0 %v1541
        %1870 = vmatpush1.bf16.msra.mxu0 %v1540
        %1871 = vmatprep.subr.bf16.mxu0 %v1543
        %1872 = vmatpush1.bf16.msra.mxu0 %v1542
        %1873 = vmatprep.subr.bf16.mxu0 %v1545
        %1874 = vmatpush1.bf16.msra.mxu0 %v1544
        %1875 = vmatprep.subr.bf16.mxu0 %v1547
        %1876 = vmatpush1.bf16.msra.mxu0 %v1546
        %1877 = vmatprep.mubr.bf16.mxu0 %v862
        %1878 = vmatmul.mubr.bf16.gmra.mrb[0].mxu0 %v861
        %v1879 = vpop.f32.mrb[0].mxu0
        %v1880 = vadd.f32 %v1807, %v1879
        %v1881 = vpop.f32.mrb[0].mxu0
        %v1882 = vadd.f32 %v1809, %v1881
        %v1883 = vpop.f32.mrb[0].mxu0
        %v1884 = vadd.f32 %v1811, %v1883
        %v1885 = vpop.f32.mrb[0].mxu0
        %v1886 = vadd.f32 %v1813, %v1885
        %1887 = vmatprep.mubr.bf16.mxu0 %v871
        %1888 = vmatmul.mubr.bf16.gmra.mrb[0].mxu0 %v870
        %v1889 = vpop.f32.mrb[0].mxu0
        %v1890 = vadd.f32 %v1817, %v1889
        %v1891 = vpop.f32.mrb[0].mxu0
        %v1892 = vadd.f32 %v1819, %v1891
        %v1893 = vpop.f32.mrb[0].mxu0
        %v1894 = vadd.f32 %v1821, %v1893
        %v1895 = vpop.f32.mrb[0].mxu0
        %v1896 = vadd.f32 %v1823, %v1895
        %1897 = vmatprep.mubr.bf16.mxu0 %v880
        %1898 = vmatmul.mubr.bf16.gmra.mrb[0].mxu0 %v879
        %v1899 = vpop.f32.mrb[0].mxu0
        %v1900 = vadd.f32 %v1827, %v1899
        %v1901 = vpop.f32.mrb[0].mxu0
        %v1902 = vadd.f32 %v1829, %v1901
        %v1903 = vpop.f32.mrb[0].mxu0
        %v1904 = vadd.f32 %v1831, %v1903
        %v1905 = vpop.f32.mrb[0].mxu0
        %v1906 = vadd.f32 %v1833, %v1905
        %1907 = vmatprep.mubr.bf16.mxu0 %v889
        %1908 = vmatmul.mubr.bf16.gmra.mrb[0].mxu0 %v888
        %v1909 = vpop.f32.mrb[0].mxu0
        %v1910 = vadd.f32 %v1837, %v1909
        %v1911 = vpop.f32.mrb[0].mxu0
        %v1912 = vadd.f32 %v1839, %v1911
        %v1913 = vpop.f32.mrb[0].mxu0
        %v1914 = vadd.f32 %v1841, %v1913
        %v1915 = vpop.f32.mrb[0].mxu0
        %v1916 = vadd.f32 %v1843, %v1915
        %1917 = vdwg.mxu0
        %1918 = vmatprep.subr.bf16.mxu0 %v1549
        %1919 = vmatpush1.bf16.msra.mxu0 %v1548
        %1920 = vmatprep.subr.bf16.mxu0 %v1551
        %1921 = vmatpush1.bf16.msra.mxu0 %v1550
        %1922 = vmatprep.subr.bf16.mxu0 %v1553
        %1923 = vmatpush1.bf16.msra.mxu0 %v1552
        %1924 = vmatprep.subr.bf16.mxu0 %v1555
        %1925 = vmatpush1.bf16.msra.mxu0 %v1554
        %1926 = vmatprep.subr.bf16.mxu0 %v1557
        %1927 = vmatpush1.bf16.msra.mxu0 %v1556
        %1928 = vmatprep.subr.bf16.mxu0 %v1559
        %1929 = vmatpush1.bf16.msra.mxu0 %v1558
        %1930 = vmatprep.subr.bf16.mxu0 %v1561
        %1931 = vmatpush1.bf16.msra.mxu0 %v1560
        %1932 = vmatprep.subr.bf16.mxu0 %v1563
        %1933 = vmatpush1.bf16.msra.mxu0 %v1562
        %1934 = vmatprep.subr.bf16.mxu0 %v1565
        %1935 = vmatpush1.bf16.msra.mxu0 %v1564
        %1936 = vmatprep.subr.bf16.mxu0 %v1567
        %1937 = vmatpush1.bf16.msra.mxu0 %v1566
        %1938 = vmatprep.subr.bf16.mxu0 %v1569
        %1939 = vmatpush1.bf16.msra.mxu0 %v1568
        %1940 = vmatprep.subr.bf16.mxu0 %v1571
        %1941 = vmatpush1.bf16.msra.mxu0 %v1570
        %1942 = vmatprep.subr.bf16.mxu0 %v1573
        %1943 = vmatpush1.bf16.msra.mxu0 %v1572
        %1944 = vmatprep.subr.bf16.mxu0 %v1575
        %1945 = vmatpush1.bf16.msra.mxu0 %v1574
        %1946 = vmatprep.subr.bf16.mxu0 %v1577
        %1947 = vmatpush1.bf16.msra.mxu0 %v1576
        %1948 = vmatprep.subr.bf16.mxu0 %v1579
        %1949 = vmatpush1.bf16.msra.mxu0 %v1578
        %1950 = vmatprep.mubr.bf16.mxu0 %v864
        %1951 = vmatmul.mubr.bf16.gmra.mrb[0].mxu0 %v863
        %v1952 = vpop.f32.mrb[0].mxu0
        %v1953 = vadd.f32 %v1880, %v1952
        %v1954 = vpop.f32.mrb[0].mxu0
        %v1955 = vadd.f32 %v1882, %v1954
        %v1956 = vpop.f32.mrb[0].mxu0
        %v1957 = vadd.f32 %v1884, %v1956
        %v1958 = vpop.f32.mrb[0].mxu0
        %v1959 = vadd.f32 %v1886, %v1958
        %1960 = vmatprep.mubr.bf16.mxu0 %v873
        %1961 = vmatmul.mubr.bf16.gmra.mrb[0].mxu0 %v872
        %v1962 = vpop.f32.mrb[0].mxu0
        %v1963 = vadd.f32 %v1890, %v1962
        %v1964 = vpop.f32.mrb[0].mxu0
        %v1965 = vadd.f32 %v1892, %v1964
        %v1966 = vpop.f32.mrb[0].mxu0
        %v1967 = vadd.f32 %v1894, %v1966
        %v1968 = vpop.f32.mrb[0].mxu0
        %v1969 = vadd.f32 %v1896, %v1968
        %1970 = vmatprep.mubr.bf16.mxu0 %v882
        %1971 = vmatmul.mubr.bf16.gmra.mrb[0].mxu0 %v881
        %v1972 = vpop.f32.mrb[0].mxu0
        %v1973 = vadd.f32 %v1900, %v1972
        %v1974 = vpop.f32.mrb[0].mxu0
        %v1975 = vadd.f32 %v1902, %v1974
        %v1976 = vpop.f32.mrb[0].mxu0
        %v1977 = vadd.f32 %v1904, %v1976
        %v1978 = vpop.f32.mrb[0].mxu0
        %v1979 = vadd.f32 %v1906, %v1978
        %1980 = vmatprep.mubr.bf16.mxu0 %v891
        %1981 = vmatmul.mubr.bf16.gmra.mrb[0].mxu0 %v890
        %v1982 = vpop.f32.mrb[0].mxu0
        %v1983 = vadd.f32 %v1910, %v1982
        %v1984 = vpop.f32.mrb[0].mxu0
        %v1985 = vadd.f32 %v1912, %v1984
        %v1986 = vpop.f32.mrb[0].mxu0
        %v1987 = vadd.f32 %v1914, %v1986
        %v1988 = vpop.f32.mrb[0].mxu0
        %v1989 = vadd.f32 %v1916, %v1988
        %1990 = vdwg.mxu0
        %1991 = vmatprep.subr.bf16.mxu0 %v1581
        %1992 = vmatpush1.bf16.msra.mxu0 %v1580
        %1993 = vmatprep.subr.bf16.mxu0 %v1583
        %1994 = vmatpush1.bf16.msra.mxu0 %v1582
        %1995 = vmatprep.subr.bf16.mxu0 %v1585
        %1996 = vmatpush1.bf16.msra.mxu0 %v1584
        %1997 = vmatprep.subr.bf16.mxu0 %v1587
        %1998 = vmatpush1.bf16.msra.mxu0 %v1586
        %1999 = vmatprep.subr.bf16.mxu0 %v1589
        %2000 = vmatpush1.bf16.msra.mxu0 %v1588
        %2001 = vmatprep.subr.bf16.mxu0 %v1591
        %2002 = vmatpush1.bf16.msra.mxu0 %v1590
        %2003 = vmatprep.subr.bf16.mxu0 %v1593
        %2004 = vmatpush1.bf16.msra.mxu0 %v1592
        %2005 = vmatprep.subr.bf16.mxu0 %v1595
        %2006 = vmatpush1.bf16.msra.mxu0 %v1594
        %2007 = vmatprep.subr.bf16.mxu0 %v1597
        %2008 = vmatpush1.bf16.msra.mxu0 %v1596
        %2009 = vmatprep.subr.bf16.mxu0 %v1599
        %2010 = vmatpush1.bf16.msra.mxu0 %v1598
        %2011 = vmatprep.subr.bf16.mxu0 %v1601
        %2012 = vmatpush1.bf16.msra.mxu0 %v1600
        %2013 = vmatprep.subr.bf16.mxu0 %v1603
        %2014 = vmatpush1.bf16.msra.mxu0 %v1602
        %2015 = vmatprep.subr.bf16.mxu0 %v1605
        %2016 = vmatpush1.bf16.msra.mxu0 %v1604
        %2017 = vmatprep.subr.bf16.mxu0 %v1607
        %2018 = vmatpush1.bf16.msra.mxu0 %v1606
        %2019 = vmatprep.subr.bf16.mxu0 %v1609
        %2020 = vmatpush1.bf16.msra.mxu0 %v1608
        %2021 = vmatprep.subr.bf16.mxu0 %v1611
        %2022 = vmatpush1.bf16.msra.mxu0 %v1610
        %2023 = vmatprep.mubr.bf16.mxu0 %v866
        %2024 = vmatmul.mubr.bf16.gmra.mrb[0].mxu0 %v865
        %v2025 = vpop.f32.mrb[0].mxu0
        %v2026 = vadd.f32 %v1953, %v2025
        %v2027 = vpop.f32.mrb[0].mxu0
        %v2028 = vadd.f32 %v1955, %v2027
        %v2029 = vpop.f32.mrb[0].mxu0
        %v2030 = vadd.f32 %v1957, %v2029
        %v2031 = vpop.f32.mrb[0].mxu0
        %v2032 = vadd.f32 %v1959, %v2031
        %2033 = vmatprep.mubr.bf16.mxu0 %v875
        %2034 = vmatmul.mubr.bf16.gmra.mrb[0].mxu0 %v874
        %v2035 = vpop.f32.mrb[0].mxu0
        %v2036 = vadd.f32 %v1963, %v2035
        %v2037 = vpop.f32.mrb[0].mxu0
        %v2038 = vadd.f32 %v1965, %v2037
        %v2039 = vpop.f32.mrb[0].mxu0
        %v2040 = vadd.f32 %v1967, %v2039
        %v2041 = vpop.f32.mrb[0].mxu0
        %v2042 = vadd.f32 %v1969, %v2041
        %2043 = vmatprep.mubr.bf16.mxu0 %v884
        %2044 = vmatmul.mubr.bf16.gmra.mrb[0].mxu0 %v883
        %v2045 = vpop.f32.mrb[0].mxu0
        %v2046 = vadd.f32 %v1973, %v2045
        %v2047 = vpop.f32.mrb[0].mxu0
        %v2048 = vadd.f32 %v1975, %v2047
        %v2049 = vpop.f32.mrb[0].mxu0
        %v2050 = vadd.f32 %v1977, %v2049
        %v2051 = vpop.f32.mrb[0].mxu0
        %v2052 = vadd.f32 %v1979, %v2051
        %2053 = vmatprep.mubr.bf16.mxu0 %v893
        %2054 = vmatmul.mubr.bf16.gmra.mrb[0].mxu0 %v892
        %v2055 = vpop.f32.mrb[0].mxu0
        %v2056 = vadd.f32 %v1983, %v2055
        %v2057 = vpop.f32.mrb[0].mxu0
        %v2058 = vadd.f32 %v1985, %v2057
        %v2059 = vpop.f32.mrb[0].mxu0
        %v2060 = vadd.f32 %v1987, %v2059
        %v2061 = vpop.f32.mrb[0].mxu0
        %v2062 = vadd.f32 %v1989, %v2061
        %2063 = vdwg.mxu0
        %2064 = vmatprep.subr.bf16.mxu0 %v1613
        %2065 = vmatpush1.bf16.msra.mxu0 %v1612
        %2066 = vmatprep.subr.bf16.mxu0 %v1615
        %2067 = vmatpush1.bf16.msra.mxu0 %v1614
        %2068 = vmatprep.subr.bf16.mxu0 %v1617
        %2069 = vmatpush1.bf16.msra.mxu0 %v1616
        %2070 = vmatprep.subr.bf16.mxu0 %v1619
        %2071 = vmatpush1.bf16.msra.mxu0 %v1618
        %2072 = vmatprep.subr.bf16.mxu0 %v1621
        %2073 = vmatpush1.bf16.msra.mxu0 %v1620
        %2074 = vmatprep.subr.bf16.mxu0 %v1623
        %2075 = vmatpush1.bf16.msra.mxu0 %v1622
        %2076 = vmatprep.subr.bf16.mxu0 %v1625
        %2077 = vmatpush1.bf16.msra.mxu0 %v1624
        %2078 = vmatprep.subr.bf16.mxu0 %v1627
        %2079 = vmatpush1.bf16.msra.mxu0 %v1626
        %2080 = vmatprep.subr.bf16.mxu0 0
        %2081 = vmatpush1.bf16.msra.mxu0 0
        %2082 = vmatprep.subr.bf16.mxu0 0
        %2083 = vmatpush1.bf16.msra.mxu0 0
        %2084 = vmatprep.subr.bf16.mxu0 0
        %2085 = vmatpush1.bf16.msra.mxu0 0
        %2086 = vmatprep.subr.bf16.mxu0 0
        %2087 = vmatpush1.bf16.msra.mxu0 0
        %2088 = vmatprep.subr.bf16.mxu0 0
        %2089 = vmatpush1.bf16.msra.mxu0 0
        %2090 = vmatprep.subr.bf16.mxu0 0
        %2091 = vmatpush1.bf16.msra.mxu0 0
        %2092 = vmatprep.subr.bf16.mxu0 0
        %2093 = vmatpush1.bf16.msra.mxu0 0
        %2094 = vmatprep.subr.bf16.mxu0 0
        %2095 = vmatpush1.bf16.msra.mxu0 0
        %2096 = vmatprep.mubr.bf16.mxu0 0
        %2097 = vmatmul.mubr.bf16.gmra.mrb[0].mxu0 %v867
        %v2098 = vpop.f32.mrb[0].mxu0
        %v2099 = vadd.f32 %v2026, %v2098
        %v2100 = vpop.f32.mrb[0].mxu0
        %v2101 = vadd.f32 %v2028, %v2100
        %v2102 = vpop.f32.mrb[0].mxu0
        %v2103 = vadd.f32 %v2030, %v2102
        %v2104 = vpop.f32.mrb[0].mxu0
        %v2105 = vadd.f32 %v2032, %v2104
        %2106 = vmatprep.mubr.bf16.mxu0 0
        %2107 = vmatmul.mubr.bf16.gmra.mrb[0].mxu0 %v876
        %v2108 = vpop.f32.mrb[0].mxu0
        %v2109 = vadd.f32 %v2036, %v2108
        %v2110 = vpop.f32.mrb[0].mxu0
        %v2111 = vadd.f32 %v2038, %v2110
        %v2112 = vpop.f32.mrb[0].mxu0
        %v2113 = vadd.f32 %v2040, %v2112
        %v2114 = vpop.f32.mrb[0].mxu0
        %v2115 = vadd.f32 %v2042, %v2114
        %2116 = vmatprep.mubr.bf16.mxu0 0
        %2117 = vmatmul.mubr.bf16.gmra.mrb[0].mxu0 %v885
        %v2118 = vpop.f32.mrb[0].mxu0
        %v2119 = vadd.f32 %v2046, %v2118
        %v2120 = vpop.f32.mrb[0].mxu0
        %v2121 = vadd.f32 %v2048, %v2120
        %v2122 = vpop.f32.mrb[0].mxu0
        %v2123 = vadd.f32 %v2050, %v2122
        %v2124 = vpop.f32.mrb[0].mxu0
        %v2125 = vadd.f32 %v2052, %v2124
        %2126 = vmatprep.mubr.bf16.mxu0 0
        %2127 = vmatmul.mubr.bf16.gmra.mrb[0].mxu0 %v894
        %v2128 = vpop.f32.mrb[0].mxu0
        %v2129 = vadd.f32 %v2056, %v2128
        %v2130 = vpop.f32.mrb[0].mxu0
        %v2131 = vadd.f32 %v2058, %v2130
        %v2132 = vpop.f32.mrb[0].mxu0
        %v2133 = vadd.f32 %v2060, %v2132
        %v2134 = vpop.f32.mrb[0].mxu0
        %v2135 = vadd.f32 %v2062, %v2134
        %2136 = vdwg.mxu0
        %v2137 = vmax.f32 %v2099, 0.0
        %v2138 = vmax.f32 %v2101, 0.0
        %v2139 = vmax.f32 %v2103, 0.0
        %v2140 = vmax.f32 %v2105, 0.0
        %v2141 = vmax.f32 %v2109, 0.0
        %v2142 = vmax.f32 %v2111, 0.0
        %v2143 = vmax.f32 %v2113, 0.0
        %v2144 = vmax.f32 %v2115, 0.0
        %v2145 = vmax.f32 %v2119, 0.0
        %v2146 = vmax.f32 %v2121, 0.0
        %v2147 = vmax.f32 %v2123, 0.0
        %v2148 = vmax.f32 %v2125, 0.0
        %v2149 = vmax.f32 %v2129, 0.0
        %v2150 = vmax.f32 %v2131, 0.0
        %v2151 = vmax.f32 %v2133, 0.0
        %v2152 = vmax.f32 %v2135, 0.0
        %v2153 = vpack.c.bf16 %v2139, %v2137
        %v2154 = vpack.c.bf16 %v2140, %v2138
        %v2155 = vpack.c.bf16 %v2143, %v2141
        %v2156 = vpack.c.bf16 %v2144, %v2142
        %v2157 = vpack.c.bf16 %v2147, %v2145
        %v2158 = vpack.c.bf16 %v2148, %v2146
        %v2159 = vpack.c.bf16 %v2151, %v2149
        %v2160 = vpack.c.bf16 %v2152, %v2150
        %s2161 = scalar_lea.vmem [#allocation12], 256
        %v2162 = vld [vmem:[%s2161] sm:$0xff]
        %v2163 = vld [vmem:[%s2161 + $0x8] sm:$0xff]
        %v2164 = vld [vmem:[%s2161 + $0x10] sm:$0xff]
        %v2165 = vld [vmem:[%s2161 + $0x18] sm:$0xff]
        %v2166 = vld [vmem:[%s2161 + $0x20] sm:$0xff]
        %v2167 = vld [vmem:[%s2161 + $0x28] sm:$0xff]
        %v2168 = vld [vmem:[%s2161 + $0x30] sm:$0xff]
        %v2169 = vld [vmem:[%s2161 + $0x38] sm:$0xff]
        %v2170 = vld [vmem:[%s2161 + $0x40] sm:$0xff]
        %v2171 = vld [vmem:[%s2161 + $0x48] sm:$0xff]
        %v2172 = vld [vmem:[%s2161 + $0x50] sm:$0xff]
        %v2173 = vld [vmem:[%s2161 + $0x58] sm:$0xff]
        %v2174 = vld [vmem:[%s2161 + $0x60] sm:$0xff]
        %v2175 = vld [vmem:[%s2161 + $0x68] sm:$0xff]
        %v2176 = vld [vmem:[%s2161 + $0x70] sm:$0xff]
        %v2177 = vld [vmem:[%s2161 + $0x78] sm:$0xff]
        %v2178 = vld [vmem:[%s2161 + $0x80] sm:$0xff]
        %v2179 = vld [vmem:[%s2161 + $0x88] sm:$0xff]
        %v2180 = vld [vmem:[%s2161 + $0x90] sm:$0xff]
        %v2181 = vld [vmem:[%s2161 + $0x98] sm:$0xff]
        %v2182 = vld [vmem:[%s2161 + $0xa0] sm:$0xff]
        %v2183 = vld [vmem:[%s2161 + $0xa8] sm:$0xff]
        %v2184 = vld [vmem:[%s2161 + $0xb0] sm:$0xff]
        %v2185 = vld [vmem:[%s2161 + $0xb8] sm:$0xff]
        %v2186 = vld [vmem:[%s2161 + $0xc0] sm:$0xff]
        %v2187 = vld [vmem:[%s2161 + $0xc8] sm:$0xff]
        %v2188 = vld [vmem:[%s2161 + $0xd0] sm:$0xff]
        %v2189 = vld [vmem:[%s2161 + $0xd8] sm:$0xff]
        %v2190 = vld [vmem:[%s2161 + $0xe0] sm:$0xff]
        %v2191 = vld [vmem:[%s2161 + $0xe8] sm:$0xff]
        %v2192 = vld [vmem:[%s2161 + $0xf0] sm:$0xff]
        %v2193 = vld [vmem:[%s2161 + $0xf8] sm:$0xff]
        %v2226 = vunpack.c.l.b16 %v2162
        %v2227 = vunpack.c.h.b16 %v2162
        %v2228 = vunpack.c.l.b16 %v2163
        %v2229 = vunpack.c.h.b16 %v2163
        %v2230 = vunpack.c.l.b16 %v2164
        %v2231 = vunpack.c.h.b16 %v2164
        %v2232 = vunpack.c.l.b16 %v2165
        %v2233 = vunpack.c.h.b16 %v2165
        %v2234 = vunpack.c.l.b16 %v2166
        %v2235 = vunpack.c.h.b16 %v2166
        %v2236 = vunpack.c.l.b16 %v2167
        %v2237 = vunpack.c.h.b16 %v2167
        %v2238 = vunpack.c.l.b16 %v2168
        %v2239 = vunpack.c.h.b16 %v2168
        %v2240 = vunpack.c.l.b16 %v2169
        %v2241 = vunpack.c.h.b16 %v2169
        %v2242 = vunpack.c.l.b16 %v2170
        %v2243 = vunpack.c.h.b16 %v2170
        %v2244 = vunpack.c.l.b16 %v2171
        %v2245 = vunpack.c.h.b16 %v2171
        %v2246 = vunpack.c.l.b16 %v2172
        %v2247 = vunpack.c.h.b16 %v2172
        %v2248 = vunpack.c.l.b16 %v2173
        %v2249 = vunpack.c.h.b16 %v2173
        %v2250 = vunpack.c.l.b16 %v2174
        %v2251 = vunpack.c.h.b16 %v2174
        %v2252 = vunpack.c.l.b16 %v2175
        %v2253 = vunpack.c.h.b16 %v2175
        %v2254 = vunpack.c.l.b16 %v2176
        %v2255 = vunpack.c.h.b16 %v2176
        %v2256 = vunpack.c.l.b16 %v2177
        %v2257 = vunpack.c.h.b16 %v2177
        %v2258 = vunpack.c.l.b16 %v2178
        %v2259 = vunpack.c.h.b16 %v2178
        %v2260 = vunpack.c.l.b16 %v2179
        %v2261 = vunpack.c.h.b16 %v2179
        %v2262 = vunpack.c.l.b16 %v2180
        %v2263 = vunpack.c.h.b16 %v2180
        %v2264 = vunpack.c.l.b16 %v2181
        %v2265 = vunpack.c.h.b16 %v2181
        %v2266 = vunpack.c.l.b16 %v2182
        %v2267 = vunpack.c.h.b16 %v2182
        %v2268 = vunpack.c.l.b16 %v2183
        %v2269 = vunpack.c.h.b16 %v2183
        %v2270 = vunpack.c.l.b16 %v2184
        %v2271 = vunpack.c.h.b16 %v2184
        %v2272 = vunpack.c.l.b16 %v2185
        %v2273 = vunpack.c.h.b16 %v2185
        %v2274 = vunpack.c.l.b16 %v2186
        %v2275 = vunpack.c.h.b16 %v2186
        %v2276 = vunpack.c.l.b16 %v2187
        %v2277 = vunpack.c.h.b16 %v2187
        %v2278 = vunpack.c.l.b16 %v2188
        %v2279 = vunpack.c.h.b16 %v2188
        %v2280 = vunpack.c.l.b16 %v2189
        %v2281 = vunpack.c.h.b16 %v2189
        %v2282 = vunpack.c.l.b16 %v2190
        %v2283 = vunpack.c.h.b16 %v2190
        %v2284 = vunpack.c.l.b16 %v2191
        %v2285 = vunpack.c.h.b16 %v2191
        %v2286 = vunpack.c.l.b16 %v2192
        %v2287 = vunpack.c.h.b16 %v2192
        %v2288 = vunpack.c.l.b16 %v2193
        %v2289 = vunpack.c.h.b16 %v2193
        %v2290 = vpack.c.b16 %v2228, %v2226
        %v2291 = vpack.c.b16 %v2229, %v2227
        %v2292 = vpack.c.b16 %v2232, %v2230
        %v2293 = vpack.c.b16 %v2233, %v2231
        %v2294 = vpack.c.b16 %v2236, %v2234
        %v2295 = vpack.c.b16 %v2237, %v2235
        %v2296 = vpack.c.b16 %v2240, %v2238
        %v2297 = vpack.c.b16 %v2241, %v2239
        %v2298 = vpack.c.b16 %v2244, %v2242
        %v2299 = vpack.c.b16 %v2245, %v2243
        %v2300 = vpack.c.b16 %v2248, %v2246
        %v2301 = vpack.c.b16 %v2249, %v2247
        %v2302 = vpack.c.b16 %v2252, %v2250
        %v2303 = vpack.c.b16 %v2253, %v2251
        %v2304 = vpack.c.b16 %v2256, %v2254
        %v2305 = vpack.c.b16 %v2257, %v2255
        %v2306 = vpack.c.b16 %v2260, %v2258
        %v2307 = vpack.c.b16 %v2261, %v2259
        %v2308 = vpack.c.b16 %v2264, %v2262
        %v2309 = vpack.c.b16 %v2265, %v2263
        %v2310 = vpack.c.b16 %v2268, %v2266
        %v2311 = vpack.c.b16 %v2269, %v2267
        %v2312 = vpack.c.b16 %v2272, %v2270
        %v2313 = vpack.c.b16 %v2273, %v2271
        %v2314 = vpack.c.b16 %v2276, %v2274
        %v2315 = vpack.c.b16 %v2277, %v2275
        %v2316 = vpack.c.b16 %v2280, %v2278
        %v2317 = vpack.c.b16 %v2281, %v2279
        %v2318 = vpack.c.b16 %v2284, %v2282
        %v2319 = vpack.c.b16 %v2285, %v2283
        %v2320 = vpack.c.b16 %v2288, %v2286
        %v2321 = vpack.c.b16 %v2289, %v2287
        %2354 = vmatprep.subr.bf16.mxu0 %v2291
        %2355 = vmatpush1.bf16.msra.mxu0 %v2290
        %2356 = vmatprep.subr.bf16.mxu0 %v2293
        %2357 = vmatpush1.bf16.msra.mxu0 %v2292
        %2358 = vmatprep.subr.bf16.mxu0 %v2295
        %2359 = vmatpush1.bf16.msra.mxu0 %v2294
        %2360 = vmatprep.subr.bf16.mxu0 %v2297
        %2361 = vmatpush1.bf16.msra.mxu0 %v2296
        %2362 = vmatprep.subr.bf16.mxu0 %v2299
        %2363 = vmatpush1.bf16.msra.mxu0 %v2298
        %2364 = vmatprep.subr.bf16.mxu0 %v2301
        %2365 = vmatpush1.bf16.msra.mxu0 %v2300
        %2366 = vmatprep.subr.bf16.mxu0 %v2303
        %2367 = vmatpush1.bf16.msra.mxu0 %v2302
        %2368 = vmatprep.subr.bf16.mxu0 %v2305
        %2369 = vmatpush1.bf16.msra.mxu0 %v2304
        %2370 = vmatprep.subr.bf16.mxu0 %v2307
        %2371 = vmatpush1.bf16.msra.mxu0 %v2306
        %2372 = vmatprep.subr.bf16.mxu0 %v2309
        %2373 = vmatpush1.bf16.msra.mxu0 %v2308
        %2374 = vmatprep.subr.bf16.mxu0 %v2311
        %2375 = vmatpush1.bf16.msra.mxu0 %v2310
        %2376 = vmatprep.subr.bf16.mxu0 %v2313
        %2377 = vmatpush1.bf16.msra.mxu0 %v2312
        %2378 = vmatprep.subr.bf16.mxu0 %v2315
        %2379 = vmatpush1.bf16.msra.mxu0 %v2314
        %2380 = vmatprep.subr.bf16.mxu0 %v2317
        %2381 = vmatpush1.bf16.msra.mxu0 %v2316
        %2382 = vmatprep.subr.bf16.mxu0 %v2319
        %2383 = vmatpush1.bf16.msra.mxu0 %v2318
        %2384 = vmatprep.subr.bf16.mxu0 %v2321
        %2385 = vmatpush1.bf16.msra.mxu0 %v2320
        %2386 = vmatprep.mubr.bf16.mxu0 %v2154
        %2387 = vmatmul.mubr.bf16.gmra.mrb[0].mxu0 %v2153
        %v2388 = vpop.f32.mrb[0].mxu0
        %v2389 = vadd.f32 0.0, %v2388
        %v2390 = vpop.f32.mrb[0].mxu0
        %v2391 = vadd.f32 0.0, %v2390
        %v2392 = vpop.f32.mrb[0].mxu0
        %v2393 = vadd.f32 0.0, %v2392
        %v2394 = vpop.f32.mrb[0].mxu0
        %v2395 = vadd.f32 0.0, %v2394
        %2396 = vmatprep.mubr.bf16.mxu0 %v2156
        %2397 = vmatmul.mubr.bf16.gmra.mrb[0].mxu0 %v2155
        %v2398 = vpop.f32.mrb[0].mxu0
        %v2399 = vadd.f32 0.0, %v2398
        %v2400 = vpop.f32.mrb[0].mxu0
        %v2401 = vadd.f32 0.0, %v2400
        %v2402 = vpop.f32.mrb[0].mxu0
        %v2403 = vadd.f32 0.0, %v2402
        %v2404 = vpop.f32.mrb[0].mxu0
        %v2405 = vadd.f32 0.0, %v2404
        %2406 = vmatprep.mubr.bf16.mxu0 %v2158
        %2407 = vmatmul.mubr.bf16.gmra.mrb[0].mxu0 %v2157
        %v2408 = vpop.f32.mrb[0].mxu0
        %v2409 = vadd.f32 0.0, %v2408
        %v2410 = vpop.f32.mrb[0].mxu0
        %v2411 = vadd.f32 0.0, %v2410
        %v2412 = vpop.f32.mrb[0].mxu0
        %v2413 = vadd.f32 0.0, %v2412
        %v2414 = vpop.f32.mrb[0].mxu0
        %v2415 = vadd.f32 0.0, %v2414
        %2416 = vmatprep.mubr.bf16.mxu0 %v2160
        %2417 = vmatmul.mubr.bf16.gmra.mrb[0].mxu0 %v2159
        %v2418 = vpop.f32.mrb[0].mxu0
        %v2419 = vadd.f32 0.0, %v2418
        %v2420 = vpop.f32.mrb[0].mxu0
        %v2421 = vadd.f32 0.0, %v2420
        %v2422 = vpop.f32.mrb[0].mxu0
        %v2423 = vadd.f32 0.0, %v2422
        %v2424 = vpop.f32.mrb[0].mxu0
        %v2425 = vadd.f32 0.0, %v2424
        %2426 = vdwg.mxu0
        %v2459 = vunpack.c.l.b16 %v609
        %v2460 = vunpack.c.h.b16 %v609
        %v2461 = vunpack.c.l.b16 %v610
        %v2462 = vunpack.c.h.b16 %v610
        %v2463 = vunpack.c.l.b16 %v611
        %v2464 = vunpack.c.h.b16 %v611
        %v2465 = vunpack.c.l.b16 %v612
        %v2466 = vunpack.c.h.b16 %v612
        %v2467 = vunpack.c.l.b16 %v613
        %v2468 = vunpack.c.h.b16 %v613
        %v2469 = vunpack.c.l.b16 %v614
        %v2470 = vunpack.c.h.b16 %v614
        %v2471 = vunpack.c.l.b16 %v615
        %v2472 = vunpack.c.h.b16 %v615
        %v2473 = vunpack.c.l.b16 %v616
        %v2474 = vunpack.c.h.b16 %v616
        %v2475 = vunpack.c.l.b16 %v617
        %v2476 = vunpack.c.h.b16 %v617
        %v2477 = vunpack.c.l.b16 %v618
        %v2478 = vunpack.c.h.b16 %v618
        %v2479 = vunpack.c.l.b16 %v619
        %v2480 = vunpack.c.h.b16 %v619
        %v2481 = vunpack.c.l.b16 %v620
        %v2482 = vunpack.c.h.b16 %v620
        %v2483 = vunpack.c.l.b16 %v621
        %v2484 = vunpack.c.h.b16 %v621
        %v2485 = vunpack.c.l.b16 %v622
        %v2486 = vunpack.c.h.b16 %v622
        %v2487 = vunpack.c.l.b16 %v623
        %v2488 = vunpack.c.h.b16 %v623
        %v2489 = vunpack.c.l.b16 %v624
        %v2490 = vunpack.c.h.b16 %v624
        %v2491 = vunpack.c.l.b16 %v625
        %v2492 = vunpack.c.h.b16 %v625
        %v2493 = vunpack.c.l.b16 %v626
        %v2494 = vunpack.c.h.b16 %v626
        %v2495 = vunpack.c.l.b16 %v627
        %v2496 = vunpack.c.h.b16 %v627
        %v2497 = vunpack.c.l.b16 %v628
        %v2498 = vunpack.c.h.b16 %v628
        %v2499 = vunpack.c.l.b16 %v629
        %v2500 = vunpack.c.h.b16 %v629
        %v2501 = vunpack.c.l.b16 %v630
        %v2502 = vunpack.c.h.b16 %v630
        %v2503 = vunpack.c.l.b16 %v631
        %v2504 = vunpack.c.h.b16 %v631
        %v2505 = vunpack.c.l.b16 %v632
        %v2506 = vunpack.c.h.b16 %v632
        %v2507 = vunpack.c.l.b16 %v633
        %v2508 = vunpack.c.h.b16 %v633
        %v2509 = vunpack.c.l.b16 %v634
        %v2510 = vunpack.c.h.b16 %v634
        %v2511 = vunpack.c.l.b16 %v635
        %v2512 = vunpack.c.h.b16 %v635
        %v2513 = vunpack.c.l.b16 %v636
        %v2514 = vunpack.c.h.b16 %v636
        %v2515 = vunpack.c.l.b16 %v637
        %v2516 = vunpack.c.h.b16 %v637
        %v2517 = vunpack.c.l.b16 %v638
        %v2518 = vunpack.c.h.b16 %v638
        %v2519 = vunpack.c.l.b16 %v639
        %v2520 = vunpack.c.h.b16 %v639
        %v2521 = vunpack.c.l.b16 %v640
        %v2522 = vunpack.c.h.b16 %v640
        %v2523 = vpack.c.b16 %v2461, %v2459
        %v2524 = vpack.c.b16 %v2462, %v2460
        %v2525 = vpack.c.b16 %v2465, %v2463
        %v2526 = vpack.c.b16 %v2466, %v2464
        %v2527 = vpack.c.b16 %v2469, %v2467
        %v2528 = vpack.c.b16 %v2470, %v2468
        %v2529 = vpack.c.b16 %v2473, %v2471
        %v2530 = vpack.c.b16 %v2474, %v2472
        %v2531 = vpack.c.b16 %v2477, %v2475
        %v2532 = vpack.c.b16 %v2478, %v2476
        %v2533 = vpack.c.b16 %v2481, %v2479
        %v2534 = vpack.c.b16 %v2482, %v2480
        %v2535 = vpack.c.b16 %v2485, %v2483
        %v2536 = vpack.c.b16 %v2486, %v2484
        %v2537 = vpack.c.b16 %v2489, %v2487
        %v2538 = vpack.c.b16 %v2490, %v2488
        %v2539 = vpack.c.b16 %v2493, %v2491
        %v2540 = vpack.c.b16 %v2494, %v2492
        %v2541 = vpack.c.b16 %v2497, %v2495
        %v2542 = vpack.c.b16 %v2498, %v2496
        %v2543 = vpack.c.b16 %v2501, %v2499
        %v2544 = vpack.c.b16 %v2502, %v2500
        %v2545 = vpack.c.b16 %v2505, %v2503
        %v2546 = vpack.c.b16 %v2506, %v2504
        %v2547 = vpack.c.b16 %v2509, %v2507
        %v2548 = vpack.c.b16 %v2510, %v2508
        %v2549 = vpack.c.b16 %v2513, %v2511
        %v2550 = vpack.c.b16 %v2514, %v2512
        %v2551 = vpack.c.b16 %v2517, %v2515
        %v2552 = vpack.c.b16 %v2518, %v2516
        %v2553 = vpack.c.b16 %v2521, %v2519
        %v2554 = vpack.c.b16 %v2522, %v2520
        %2587 = vmatprep.subr.bf16.mxu0 %v2524
        %2588 = vmatpush1.bf16.msra.mxu0 %v2523
        %2589 = vmatprep.subr.bf16.mxu0 %v2526
        %2590 = vmatpush1.bf16.msra.mxu0 %v2525
        %2591 = vmatprep.subr.bf16.mxu0 %v2528
        %2592 = vmatpush1.bf16.msra.mxu0 %v2527
        %2593 = vmatprep.subr.bf16.mxu0 %v2530
        %2594 = vmatpush1.bf16.msra.mxu0 %v2529
        %2595 = vmatprep.subr.bf16.mxu0 %v2532
        %2596 = vmatpush1.bf16.msra.mxu0 %v2531
        %2597 = vmatprep.subr.bf16.mxu0 %v2534
        %2598 = vmatpush1.bf16.msra.mxu0 %v2533
        %2599 = vmatprep.subr.bf16.mxu0 %v2536
        %2600 = vmatpush1.bf16.msra.mxu0 %v2535
        %2601 = vmatprep.subr.bf16.mxu0 %v2538
        %2602 = vmatpush1.bf16.msra.mxu0 %v2537
        %2603 = vmatprep.subr.bf16.mxu0 %v2540
        %2604 = vmatpush1.bf16.msra.mxu0 %v2539
        %2605 = vmatprep.subr.bf16.mxu0 %v2542
        %2606 = vmatpush1.bf16.msra.mxu0 %v2541
        %2607 = vmatprep.subr.bf16.mxu0 %v2544
        %2608 = vmatpush1.bf16.msra.mxu0 %v2543
        %2609 = vmatprep.subr.bf16.mxu0 %v2546
        %2610 = vmatpush1.bf16.msra.mxu0 %v2545
        %2611 = vmatprep.subr.bf16.mxu0 %v2548
        %2612 = vmatpush1.bf16.msra.mxu0 %v2547
        %2613 = vmatprep.subr.bf16.mxu0 %v2550
        %2614 = vmatpush1.bf16.msra.mxu0 %v2549
        %2615 = vmatprep.subr.bf16.mxu0 %v2552
        %2616 = vmatpush1.bf16.msra.mxu0 %v2551
        %2617 = vmatprep.subr.bf16.mxu0 %v2554
        %2618 = vmatpush1.bf16.msra.mxu0 %v2553
        %2619 = vmatprep.mubr.bf16.mxu0 %v602
        %2620 = vmatmul.mubr.bf16.gmra.mrb[0].mxu0 %v601
        %v2621 = vpop.f32.mrb[0].mxu0
        %v2622 = vadd.f32 %v2389, %v2621
        %v2623 = vpop.f32.mrb[0].mxu0
        %v2624 = vadd.f32 %v2391, %v2623
        %v2625 = vpop.f32.mrb[0].mxu0
        %v2626 = vadd.f32 %v2393, %v2625
        %v2627 = vpop.f32.mrb[0].mxu0
        %v2628 = vadd.f32 %v2395, %v2627
        %2629 = vmatprep.mubr.bf16.mxu0 %v604
        %2630 = vmatmul.mubr.bf16.gmra.mrb[0].mxu0 %v603
        %v2631 = vpop.f32.mrb[0].mxu0
        %v2632 = vadd.f32 %v2399, %v2631
        %v2633 = vpop.f32.mrb[0].mxu0
        %v2634 = vadd.f32 %v2401, %v2633
        %v2635 = vpop.f32.mrb[0].mxu0
        %v2636 = vadd.f32 %v2403, %v2635
        %v2637 = vpop.f32.mrb[0].mxu0
        %v2638 = vadd.f32 %v2405, %v2637
        %2639 = vmatprep.mubr.bf16.mxu0 %v606
        %2640 = vmatmul.mubr.bf16.gmra.mrb[0].mxu0 %v605
        %v2641 = vpop.f32.mrb[0].mxu0
        %v2642 = vadd.f32 %v2409, %v2641
        %v2643 = vpop.f32.mrb[0].mxu0
        %v2644 = vadd.f32 %v2411, %v2643
        %v2645 = vpop.f32.mrb[0].mxu0
        %v2646 = vadd.f32 %v2413, %v2645
        %v2647 = vpop.f32.mrb[0].mxu0
        %v2648 = vadd.f32 %v2415, %v2647
        %2649 = vmatprep.mubr.bf16.mxu0 %v608
        %2650 = vmatmul.mubr.bf16.gmra.mrb[0].mxu0 %v607
        %v2651 = vpop.f32.mrb[0].mxu0
        %v2652 = vadd.f32 %v2419, %v2651
        %v2653 = vpop.f32.mrb[0].mxu0
        %v2654 = vadd.f32 %v2421, %v2653
        %v2655 = vpop.f32.mrb[0].mxu0
        %v2656 = vadd.f32 %v2423, %v2655
        %v2657 = vpop.f32.mrb[0].mxu0
        %v2658 = vadd.f32 %v2425, %v2657
        %2659 = vdwg.mxu0
        %s2660 = scalar_lea.vmem [#allocation2], 16
        %v2661 = vld [vmem:[%s2660 + $0x1] sm:$0xff]
        %v2662 = vld [vmem:[%s2660 + $0x11] sm:$0xff]
        %v2663 = vld [vmem:[%s2660 + $0x21] sm:$0xff]
        %v2664 = vld [vmem:[%s2660 + $0x31] sm:$0xff]
        %v2665 = vld [vmem:[%s2660 + $0x41] sm:$0xff]
        %v2666 = vld [vmem:[%s2660 + $0x51] sm:$0xff]
        %v2667 = vld [vmem:[%s2660 + $0x61] sm:$0xff]
        %v2668 = vld [vmem:[%s2660 + $0x71] sm:$0xff]
        %2669 = vst [vmem:[#allocation3] sm:$0xff] %v2661
        %2670 = vst [vmem:[#allocation3 + $0x48] sm:$0xff] %v2662
        %2671 = vst [vmem:[#allocation3 + $0x90] sm:$0xff] %v2663
        %2672 = vst [vmem:[#allocation3 + $0xd8] sm:$0xff] %v2664
        %2673 = vst [vmem:[#allocation3 + $0x120] sm:$0xff] %v2665
        %2674 = vst [vmem:[#allocation3 + $0x168] sm:$0xff] %v2666
        %2675 = vst [vmem:[#allocation3 + $0x1b0] sm:$0xff] %v2667
        %2676 = vst [vmem:[#allocation3 + $0x1f8] sm:$0xff] %v2668
        %v2677 = vld [vmem:[%s2660 + $0x3] sm:$0xff]
        %v2678 = vld [vmem:[%s2660 + $0x13] sm:$0xff]
        %v2679 = vld [vmem:[%s2660 + $0x23] sm:$0xff]
        %v2680 = vld [vmem:[%s2660 + $0x33] sm:$0xff]
        %v2681 = vld [vmem:[%s2660 + $0x43] sm:$0xff]
        %v2682 = vld [vmem:[%s2660 + $0x53] sm:$0xff]
        %v2683 = vld [vmem:[%s2660 + $0x63] sm:$0xff]
        %v2684 = vld [vmem:[%s2660 + $0x73] sm:$0xff]
        %2685 = vst [vmem:[#allocation3 + $0x8] sm:$0xff] %v2677
        %2686 = vst [vmem:[#allocation3 + $0x50] sm:$0xff] %v2678
        %2687 = vst [vmem:[#allocation3 + $0x98] sm:$0xff] %v2679
        %2688 = vst [vmem:[#allocation3 + $0xe0] sm:$0xff] %v2680
        %2689 = vst [vmem:[#allocation3 + $0x128] sm:$0xff] %v2681
        %2690 = vst [vmem:[#allocation3 + $0x170] sm:$0xff] %v2682
        %2691 = vst [vmem:[#allocation3 + $0x1b8] sm:$0xff] %v2683
        %2692 = vst [vmem:[#allocation3 + $0x200] sm:$0xff] %v2684
        %v2693 = vld [vmem:[%s2660 + $0x5] sm:$0xff]
        %v2694 = vld [vmem:[%s2660 + $0x15] sm:$0xff]
        %v2695 = vld [vmem:[%s2660 + $0x25] sm:$0xff]
        %v2696 = vld [vmem:[%s2660 + $0x35] sm:$0xff]
        %v2697 = vld [vmem:[%s2660 + $0x45] sm:$0xff]
        %v2698 = vld [vmem:[%s2660 + $0x55] sm:$0xff]
        %v2699 = vld [vmem:[%s2660 + $0x65] sm:$0xff]
        %v2700 = vld [vmem:[%s2660 + $0x75] sm:$0xff]
        %2701 = vst [vmem:[#allocation3 + $0x10] sm:$0xff] %v2693
        %2702 = vst [vmem:[#allocation3 + $0x58] sm:$0xff] %v2694
        %2703 = vst [vmem:[#allocation3 + $0xa0] sm:$0xff] %v2695
        %2704 = vst [vmem:[#allocation3 + $0xe8] sm:$0xff] %v2696
        %2705 = vst [vmem:[#allocation3 + $0x130] sm:$0xff] %v2697
        %2706 = vst [vmem:[#allocation3 + $0x178] sm:$0xff] %v2698
        %2707 = vst [vmem:[#allocation3 + $0x1c0] sm:$0xff] %v2699
        %2708 = vst [vmem:[#allocation3 + $0x208] sm:$0xff] %v2700
        %v2709 = vld [vmem:[%s391 + $0x1] sm:$0xff]
        %v2710 = vld [vmem:[%s391 + $0x11] sm:$0xff]
        %v2711 = vld [vmem:[%s391 + $0x21] sm:$0xff]
        %v2712 = vld [vmem:[%s391 + $0x31] sm:$0xff]
        %v2713 = vld [vmem:[%s391 + $0x41] sm:$0xff]
        %v2714 = vld [vmem:[%s391 + $0x51] sm:$0xff]
        %v2715 = vld [vmem:[%s391 + $0x61] sm:$0xff]
        %v2716 = vld [vmem:[%s391 + $0x71] sm:$0xff]
        %2717 = vst [vmem:[#allocation3 + $0x18] sm:$0xff] %v2709
        %2718 = vst [vmem:[#allocation3 + $0x60] sm:$0xff] %v2710
        %2719 = vst [vmem:[#allocation3 + $0xa8] sm:$0xff] %v2711
        %2720 = vst [vmem:[#allocation3 + $0xf0] sm:$0xff] %v2712
        %2721 = vst [vmem:[#allocation3 + $0x138] sm:$0xff] %v2713
        %2722 = vst [vmem:[#allocation3 + $0x180] sm:$0xff] %v2714
        %2723 = vst [vmem:[#allocation3 + $0x1c8] sm:$0xff] %v2715
        %2724 = vst [vmem:[#allocation3 + $0x210] sm:$0xff] %v2716
        %v2725 = vld [vmem:[%s391 + $0x3] sm:$0xff]
        %v2726 = vld [vmem:[%s391 + $0x13] sm:$0xff]
        %v2727 = vld [vmem:[%s391 + $0x23] sm:$0xff]
        %v2728 = vld [vmem:[%s391 + $0x33] sm:$0xff]
        %v2729 = vld [vmem:[%s391 + $0x43] sm:$0xff]
        %v2730 = vld [vmem:[%s391 + $0x53] sm:$0xff]
        %v2731 = vld [vmem:[%s391 + $0x63] sm:$0xff]
        %v2732 = vld [vmem:[%s391 + $0x73] sm:$0xff]
        %2733 = vst [vmem:[#allocation3 + $0x20] sm:$0xff] %v2725
        %2734 = vst [vmem:[#allocation3 + $0x68] sm:$0xff] %v2726
        %2735 = vst [vmem:[#allocation3 + $0xb0] sm:$0xff] %v2727
        %2736 = vst [vmem:[#allocation3 + $0xf8] sm:$0xff] %v2728
        %2737 = vst [vmem:[#allocation3 + $0x140] sm:$0xff] %v2729
        %2738 = vst [vmem:[#allocation3 + $0x188] sm:$0xff] %v2730
        %2739 = vst [vmem:[#allocation3 + $0x1d0] sm:$0xff] %v2731
        %2740 = vst [vmem:[#allocation3 + $0x218] sm:$0xff] %v2732
        %v2741 = vld [vmem:[%s391 + $0x5] sm:$0xff]
        %v2742 = vld [vmem:[%s391 + $0x15] sm:$0xff]
        %v2743 = vld [vmem:[%s391 + $0x25] sm:$0xff]
        %v2744 = vld [vmem:[%s391 + $0x35] sm:$0xff]
        %v2745 = vld [vmem:[%s391 + $0x45] sm:$0xff]
        %v2746 = vld [vmem:[%s391 + $0x55] sm:$0xff]
        %v2747 = vld [vmem:[%s391 + $0x65] sm:$0xff]
        %v2748 = vld [vmem:[%s391 + $0x75] sm:$0xff]
        %2749 = vst [vmem:[#allocation3 + $0x28] sm:$0xff] %v2741
        %2750 = vst [vmem:[#allocation3 + $0x70] sm:$0xff] %v2742
        %2751 = vst [vmem:[#allocation3 + $0xb8] sm:$0xff] %v2743
        %2752 = vst [vmem:[#allocation3 + $0x100] sm:$0xff] %v2744
        %2753 = vst [vmem:[#allocation3 + $0x148] sm:$0xff] %v2745
        %2754 = vst [vmem:[#allocation3 + $0x190] sm:$0xff] %v2746
        %2755 = vst [vmem:[#allocation3 + $0x1d8] sm:$0xff] %v2747
        %2756 = vst [vmem:[#allocation3 + $0x220] sm:$0xff] %v2748
        %s2757 = scalar_lea.vmem [#allocation2], 80
        %v2758 = vld [vmem:[%s2757 + $0x1] sm:$0xff]
        %v2759 = vld [vmem:[%s2757 + $0x11] sm:$0xff]
        %v2760 = vld [vmem:[%s2757 + $0x21] sm:$0xff]
        %v2761 = vld [vmem:[%s2757 + $0x31] sm:$0xff]
        %v2762 = vld [vmem:[%s2757 + $0x41] sm:$0xff]
        %v2763 = vld [vmem:[%s2757 + $0x51] sm:$0xff]
        %v2764 = vld [vmem:[%s2757 + $0x61] sm:$0xff]
        %v2765 = vld [vmem:[%s2757 + $0x71] sm:$0xff]
        %2766 = vst [vmem:[#allocation3 + $0x30] sm:$0xff] %v2758
        %2767 = vst [vmem:[#allocation3 + $0x78] sm:$0xff] %v2759
        %2768 = vst [vmem:[#allocation3 + $0xc0] sm:$0xff] %v2760
        %2769 = vst [vmem:[#allocation3 + $0x108] sm:$0xff] %v2761
        %2770 = vst [vmem:[#allocation3 + $0x150] sm:$0xff] %v2762
        %2771 = vst [vmem:[#allocation3 + $0x198] sm:$0xff] %v2763
        %2772 = vst [vmem:[#allocation3 + $0x1e0] sm:$0xff] %v2764
        %2773 = vst [vmem:[#allocation3 + $0x228] sm:$0xff] %v2765
        %v2774 = vld [vmem:[%s2757 + $0x3] sm:$0xff]
        %v2775 = vld [vmem:[%s2757 + $0x13] sm:$0xff]
        %v2776 = vld [vmem:[%s2757 + $0x23] sm:$0xff]
        %v2777 = vld [vmem:[%s2757 + $0x33] sm:$0xff]
        %v2778 = vld [vmem:[%s2757 + $0x43] sm:$0xff]
        %v2779 = vld [vmem:[%s2757 + $0x53] sm:$0xff]
        %v2780 = vld [vmem:[%s2757 + $0x63] sm:$0xff]
        %v2781 = vld [vmem:[%s2757 + $0x73] sm:$0xff]
        %2782 = vst [vmem:[#allocation3 + $0x38] sm:$0xff] %v2774
        %2783 = vst [vmem:[#allocation3 + $0x80] sm:$0xff] %v2775
        %2784 = vst [vmem:[#allocation3 + $0xc8] sm:$0xff] %v2776
        %2785 = vst [vmem:[#allocation3 + $0x110] sm:$0xff] %v2777
        %2786 = vst [vmem:[#allocation3 + $0x158] sm:$0xff] %v2778
        %2787 = vst [vmem:[#allocation3 + $0x1a0] sm:$0xff] %v2779
        %2788 = vst [vmem:[#allocation3 + $0x1e8] sm:$0xff] %v2780
        %2789 = vst [vmem:[#allocation3 + $0x230] sm:$0xff] %v2781
        %v2790 = vld [vmem:[%s2757 + $0x5] sm:$0xff]
        %v2791 = vld [vmem:[%s2757 + $0x15] sm:$0xff]
        %v2792 = vld [vmem:[%s2757 + $0x25] sm:$0xff]
        %v2793 = vld [vmem:[%s2757 + $0x35] sm:$0xff]
        %v2794 = vld [vmem:[%s2757 + $0x45] sm:$0xff]
        %v2795 = vld [vmem:[%s2757 + $0x55] sm:$0xff]
        %v2796 = vld [vmem:[%s2757 + $0x65] sm:$0xff]
        %v2797 = vld [vmem:[%s2757 + $0x75] sm:$0xff]
        %2798 = vst [vmem:[#allocation3 + $0x40] sm:$0xff] %v2790
        %2799 = vst [vmem:[#allocation3 + $0x88] sm:$0xff] %v2791
        %2800 = vst [vmem:[#allocation3 + $0xd0] sm:$0xff] %v2792
        %2801 = vst [vmem:[#allocation3 + $0x118] sm:$0xff] %v2793
        %2802 = vst [vmem:[#allocation3 + $0x160] sm:$0xff] %v2794
        %2803 = vst [vmem:[#allocation3 + $0x1a8] sm:$0xff] %v2795
        %2804 = vst [vmem:[#allocation3 + $0x1f0] sm:$0xff] %v2796
        %2805 = vst [vmem:[#allocation3 + $0x238] sm:$0xff] %v2797
        %v2806 = vld [vmem:[#allocation3] sm:$0xff]
        %v2807 = vld [vmem:[#allocation3 + $0x8] sm:$0xff]
        %v2808 = vld [vmem:[#allocation3 + $0x10] sm:$0xff]
        %v2809 = vld [vmem:[#allocation3 + $0x18] sm:$0xff]
        %v2810 = vld [vmem:[#allocation3 + $0x20] sm:$0xff]
        %v2811 = vld [vmem:[#allocation3 + $0x28] sm:$0xff]
        %v2812 = vld [vmem:[#allocation3 + $0x30] sm:$0xff]
        %v2813 = vld [vmem:[#allocation3 + $0x38] sm:$0xff]
        %v2814 = vld [vmem:[#allocation3 + $0x40] sm:$0xff]
        %v2815 = vld [vmem:[#allocation3 + $0x48] sm:$0xff]
        %v2816 = vld [vmem:[#allocation3 + $0x50] sm:$0xff]
        %v2817 = vld [vmem:[#allocation3 + $0x58] sm:$0xff]
        %v2818 = vld [vmem:[#allocation3 + $0x60] sm:$0xff]
        %v2819 = vld [vmem:[#allocation3 + $0x68] sm:$0xff]
        %v2820 = vld [vmem:[#allocation3 + $0x70] sm:$0xff]
        %v2821 = vld [vmem:[#allocation3 + $0x78] sm:$0xff]
        %v2822 = vld [vmem:[#allocation3 + $0x80] sm:$0xff]
        %v2823 = vld [vmem:[#allocation3 + $0x88] sm:$0xff]
        %v2824 = vld [vmem:[#allocation3 + $0x90] sm:$0xff]
        %v2825 = vld [vmem:[#allocation3 + $0x98] sm:$0xff]
        %v2826 = vld [vmem:[#allocation3 + $0xa0] sm:$0xff]
        %v2827 = vld [vmem:[#allocation3 + $0xa8] sm:$0xff]
        %v2828 = vld [vmem:[#allocation3 + $0xb0] sm:$0xff]
        %v2829 = vld [vmem:[#allocation3 + $0xb8] sm:$0xff]
        %v2830 = vld [vmem:[#allocation3 + $0xc0] sm:$0xff]
        %v2831 = vld [vmem:[#allocation3 + $0xc8] sm:$0xff]
        %v2832 = vld [vmem:[#allocation3 + $0xd0] sm:$0xff]
        %v2833 = vld [vmem:[#allocation3 + $0xd8] sm:$0xff]
        %v2834 = vld [vmem:[#allocation3 + $0xe0] sm:$0xff]
        %v2835 = vld [vmem:[#allocation3 + $0xe8] sm:$0xff]
        %v2836 = vld [vmem:[#allocation3 + $0xf0] sm:$0xff]
        %v2837 = vld [vmem:[#allocation3 + $0xf8] sm:$0xff]
        %v2838 = vld [vmem:[#allocation3 + $0x100] sm:$0xff]
        %v2839 = vld [vmem:[#allocation3 + $0x108] sm:$0xff]
        %v2840 = vld [vmem:[#allocation3 + $0x110] sm:$0xff]
        %v2841 = vld [vmem:[#allocation3 + $0x118] sm:$0xff]
        %v2842 = vld [vmem:[#allocation3 + $0x120] sm:$0xff]
        %v2843 = vld [vmem:[#allocation3 + $0x128] sm:$0xff]
        %v2844 = vld [vmem:[#allocation3 + $0x130] sm:$0xff]
        %v2845 = vld [vmem:[#allocation3 + $0x138] sm:$0xff]
        %v2846 = vld [vmem:[#allocation3 + $0x140] sm:$0xff]
        %v2847 = vld [vmem:[#allocation3 + $0x148] sm:$0xff]
        %v2848 = vld [vmem:[#allocation3 + $0x150] sm:$0xff]
        %v2849 = vld [vmem:[#allocation3 + $0x158] sm:$0xff]
        %v2850 = vld [vmem:[#allocation3 + $0x160] sm:$0xff]
        %v2851 = vld [vmem:[#allocation3 + $0x168] sm:$0xff]
        %v2852 = vld [vmem:[#allocation3 + $0x170] sm:$0xff]
        %v2853 = vld [vmem:[#allocation3 + $0x178] sm:$0xff]
        %v2854 = vld [vmem:[#allocation3 + $0x180] sm:$0xff]
        %v2855 = vld [vmem:[#allocation3 + $0x188] sm:$0xff]
        %v2856 = vld [vmem:[#allocation3 + $0x190] sm:$0xff]
        %v2857 = vld [vmem:[#allocation3 + $0x198] sm:$0xff]
        %v2858 = vld [vmem:[#allocation3 + $0x1a0] sm:$0xff]
        %v2859 = vld [vmem:[#allocation3 + $0x1a8] sm:$0xff]
        %v2860 = vld [vmem:[#allocation3 + $0x1b0] sm:$0xff]
        %v2861 = vld [vmem:[#allocation3 + $0x1b8] sm:$0xff]
        %v2862 = vld [vmem:[#allocation3 + $0x1c0] sm:$0xff]
        %v2863 = vld [vmem:[#allocation3 + $0x1c8] sm:$0xff]
        %v2864 = vld [vmem:[#allocation3 + $0x1d0] sm:$0xff]
        %v2865 = vld [vmem:[#allocation3 + $0x1d8] sm:$0xff]
        %v2866 = vld [vmem:[#allocation3 + $0x1e0] sm:$0xff]
        %v2867 = vld [vmem:[#allocation3 + $0x1e8] sm:$0xff]
        %v2868 = vld [vmem:[#allocation3 + $0x1f0] sm:$0xff]
        %v2869 = vld [vmem:[#allocation3 + $0x1f8] sm:$0xff]
        %v2870 = vld [vmem:[#allocation3 + $0x200] sm:$0xff]
        %v2871 = vld [vmem:[#allocation3 + $0x208] sm:$0xff]
        %v2872 = vld [vmem:[#allocation3 + $0x210] sm:$0xff]
        %v2873 = vld [vmem:[#allocation3 + $0x218] sm:$0xff]
        %v2874 = vld [vmem:[#allocation3 + $0x220] sm:$0xff]
        %v2875 = vld [vmem:[#allocation3 + $0x228] sm:$0xff]
        %v2876 = vld [vmem:[#allocation3 + $0x230] sm:$0xff]
        %v2877 = vld [vmem:[#allocation3 + $0x238] sm:$0xff]
        %v2878 = vpack.c.bf16 %v2815, %v2806
        %v2879 = vpack.c.bf16 %v2816, %v2807
        %v2880 = vpack.c.bf16 %v2817, %v2808
        %v2881 = vpack.c.bf16 %v2818, %v2809
        %v2882 = vpack.c.bf16 %v2819, %v2810
        %v2883 = vpack.c.bf16 %v2820, %v2811
        %v2884 = vpack.c.bf16 %v2821, %v2812
        %v2885 = vpack.c.bf16 %v2822, %v2813
        %v2886 = vpack.c.bf16 %v2823, %v2814
        %v2887 = vpack.c.bf16 %v2833, %v2824
        %v2888 = vpack.c.bf16 %v2834, %v2825
        %v2889 = vpack.c.bf16 %v2835, %v2826
        %v2890 = vpack.c.bf16 %v2836, %v2827
        %v2891 = vpack.c.bf16 %v2837, %v2828
        %v2892 = vpack.c.bf16 %v2838, %v2829
        %v2893 = vpack.c.bf16 %v2839, %v2830
        %v2894 = vpack.c.bf16 %v2840, %v2831
        %v2895 = vpack.c.bf16 %v2841, %v2832
        %v2896 = vpack.c.bf16 %v2851, %v2842
        %v2897 = vpack.c.bf16 %v2852, %v2843
        %v2898 = vpack.c.bf16 %v2853, %v2844
        %v2899 = vpack.c.bf16 %v2854, %v2845
        %v2900 = vpack.c.bf16 %v2855, %v2846
        %v2901 = vpack.c.bf16 %v2856, %v2847
        %v2902 = vpack.c.bf16 %v2857, %v2848
        %v2903 = vpack.c.bf16 %v2858, %v2849
        %v2904 = vpack.c.bf16 %v2859, %v2850
        %v2905 = vpack.c.bf16 %v2869, %v2860
        %v2906 = vpack.c.bf16 %v2870, %v2861
        %v2907 = vpack.c.bf16 %v2871, %v2862
        %v2908 = vpack.c.bf16 %v2872, %v2863
        %v2909 = vpack.c.bf16 %v2873, %v2864
        %v2910 = vpack.c.bf16 %v2874, %v2865
        %v2911 = vpack.c.bf16 %v2875, %v2866
        %v2912 = vpack.c.bf16 %v2876, %v2867
        %v2913 = vpack.c.bf16 %v2877, %v2868
        %s2914 = scalar_lea.vmem [#allocation9], 1152
        %v2915 = vld [vmem:[%s2914] sm:$0xff]
        %v2916 = vld [vmem:[%s2914 + $0x8] sm:$0xff]
        %v2917 = vld [vmem:[%s2914 + $0x10] sm:$0xff]
        %v2918 = vld [vmem:[%s2914 + $0x18] sm:$0xff]
        %v2919 = vld [vmem:[%s2914 + $0x20] sm:$0xff]
        %v2920 = vld [vmem:[%s2914 + $0x28] sm:$0xff]
        %v2921 = vld [vmem:[%s2914 + $0x30] sm:$0xff]
        %v2922 = vld [vmem:[%s2914 + $0x38] sm:$0xff]
        %v2923 = vld [vmem:[%s2914 + $0x40] sm:$0xff]
        %v2924 = vld [vmem:[%s2914 + $0x48] sm:$0xff]
        %v2925 = vld [vmem:[%s2914 + $0x50] sm:$0xff]
        %v2926 = vld [vmem:[%s2914 + $0x58] sm:$0xff]
        %v2927 = vld [vmem:[%s2914 + $0x60] sm:$0xff]
        %v2928 = vld [vmem:[%s2914 + $0x68] sm:$0xff]
        %v2929 = vld [vmem:[%s2914 + $0x70] sm:$0xff]
        %v2930 = vld [vmem:[%s2914 + $0x78] sm:$0xff]
        %v2931 = vld [vmem:[%s2914 + $0x80] sm:$0xff]
        %v2932 = vld [vmem:[%s2914 + $0x88] sm:$0xff]
        %v2933 = vld [vmem:[%s2914 + $0x90] sm:$0xff]
        %v2934 = vld [vmem:[%s2914 + $0x98] sm:$0xff]
        %v2935 = vld [vmem:[%s2914 + $0xa0] sm:$0xff]
        %v2936 = vld [vmem:[%s2914 + $0xa8] sm:$0xff]
        %v2937 = vld [vmem:[%s2914 + $0xb0] sm:$0xff]
        %v2938 = vld [vmem:[%s2914 + $0xb8] sm:$0xff]
        %v2939 = vld [vmem:[%s2914 + $0xc0] sm:$0xff]
        %v2940 = vld [vmem:[%s2914 + $0xc8] sm:$0xff]
        %v2941 = vld [vmem:[%s2914 + $0xd0] sm:$0xff]
        %v2942 = vld [vmem:[%s2914 + $0xd8] sm:$0xff]
        %v2943 = vld [vmem:[%s2914 + $0xe0] sm:$0xff]
        %v2944 = vld [vmem:[%s2914 + $0xe8] sm:$0xff]
        %v2945 = vld [vmem:[%s2914 + $0xf0] sm:$0xff]
        %v2946 = vld [vmem:[%s2914 + $0xf8] sm:$0xff]
        %v2947 = vld [vmem:[%s2914 + $0x100] sm:$0xff]
        %v2948 = vld [vmem:[%s2914 + $0x108] sm:$0xff]
        %v2949 = vld [vmem:[%s2914 + $0x110] sm:$0xff]
        %v2950 = vld [vmem:[%s2914 + $0x118] sm:$0xff]
        %v2951 = vld [vmem:[%s2914 + $0x120] sm:$0xff]
        %v2952 = vld [vmem:[%s2914 + $0x128] sm:$0xff]
        %v2953 = vld [vmem:[%s2914 + $0x130] sm:$0xff]
        %v2954 = vld [vmem:[%s2914 + $0x138] sm:$0xff]
        %v2955 = vld [vmem:[%s2914 + $0x140] sm:$0xff]
        %v2956 = vld [vmem:[%s2914 + $0x148] sm:$0xff]
        %v2957 = vld [vmem:[%s2914 + $0x150] sm:$0xff]
        %v2958 = vld [vmem:[%s2914 + $0x158] sm:$0xff]
        %v2959 = vld [vmem:[%s2914 + $0x160] sm:$0xff]
        %v2960 = vld [vmem:[%s2914 + $0x168] sm:$0xff]
        %v2961 = vld [vmem:[%s2914 + $0x170] sm:$0xff]
        %v2962 = vld [vmem:[%s2914 + $0x178] sm:$0xff]
        %v2963 = vld [vmem:[%s2914 + $0x180] sm:$0xff]
        %v2964 = vld [vmem:[%s2914 + $0x188] sm:$0xff]
        %v2965 = vld [vmem:[%s2914 + $0x190] sm:$0xff]
        %v2966 = vld [vmem:[%s2914 + $0x198] sm:$0xff]
        %v2967 = vld [vmem:[%s2914 + $0x1a0] sm:$0xff]
        %v2968 = vld [vmem:[%s2914 + $0x1a8] sm:$0xff]
        %v2969 = vld [vmem:[%s2914 + $0x1b0] sm:$0xff]
        %v2970 = vld [vmem:[%s2914 + $0x1b8] sm:$0xff]
        %v2971 = vld [vmem:[%s2914 + $0x1c0] sm:$0xff]
        %v2972 = vld [vmem:[%s2914 + $0x1c8] sm:$0xff]
        %v2973 = vld [vmem:[%s2914 + $0x1d0] sm:$0xff]
        %v2974 = vld [vmem:[%s2914 + $0x1d8] sm:$0xff]
        %v2975 = vld [vmem:[%s2914 + $0x1e0] sm:$0xff]
        %v2976 = vld [vmem:[%s2914 + $0x1e8] sm:$0xff]
        %v2977 = vld [vmem:[%s2914 + $0x1f0] sm:$0xff]
        %v2978 = vld [vmem:[%s2914 + $0x1f8] sm:$0xff]
        %v2979 = vld [vmem:[%s2914 + $0x200] sm:$0xff]
        %v2980 = vld [vmem:[%s2914 + $0x208] sm:$0xff]
        %v2981 = vld [vmem:[%s2914 + $0x210] sm:$0xff]
        %v2982 = vld [vmem:[%s2914 + $0x218] sm:$0xff]
        %v2983 = vld [vmem:[%s2914 + $0x220] sm:$0xff]
        %v2984 = vld [vmem:[%s2914 + $0x228] sm:$0xff]
        %v2985 = vld [vmem:[%s2914 + $0x230] sm:$0xff]
        %v2986 = vld [vmem:[%s2914 + $0x238] sm:$0xff]
        %v2987 = vld [vmem:[%s2914 + $0x240] sm:$0xff]
        %v2988 = vld [vmem:[%s2914 + $0x248] sm:$0xff]
        %v2989 = vld [vmem:[%s2914 + $0x250] sm:$0xff]
        %v2990 = vld [vmem:[%s2914 + $0x258] sm:$0xff]
        %v2991 = vld [vmem:[%s2914 + $0x260] sm:$0xff]
        %v2992 = vld [vmem:[%s2914 + $0x268] sm:$0xff]
        %v2993 = vld [vmem:[%s2914 + $0x270] sm:$0xff]
        %v2994 = vld [vmem:[%s2914 + $0x278] sm:$0xff]
        %v2995 = vld [vmem:[%s2914 + $0x280] sm:$0xff]
        %v2996 = vld [vmem:[%s2914 + $0x288] sm:$0xff]
        %v2997 = vld [vmem:[%s2914 + $0x290] sm:$0xff]
        %v2998 = vld [vmem:[%s2914 + $0x298] sm:$0xff]
        %v2999 = vld [vmem:[%s2914 + $0x2a0] sm:$0xff]
        %v3000 = vld [vmem:[%s2914 + $0x2a8] sm:$0xff]
        %v3001 = vld [vmem:[%s2914 + $0x2b0] sm:$0xff]
        %v3002 = vld [vmem:[%s2914 + $0x2b8] sm:$0xff]
        %v3003 = vld [vmem:[%s2914 + $0x2c0] sm:$0xff]
        %v3004 = vld [vmem:[%s2914 + $0x2c8] sm:$0xff]
        %v3005 = vld [vmem:[%s2914 + $0x2d0] sm:$0xff]
        %v3006 = vld [vmem:[%s2914 + $0x2d8] sm:$0xff]
        %v3007 = vld [vmem:[%s2914 + $0x2e0] sm:$0xff]
        %v3008 = vld [vmem:[%s2914 + $0x2e8] sm:$0xff]
        %v3009 = vld [vmem:[%s2914 + $0x2f0] sm:$0xff]
        %v3010 = vld [vmem:[%s2914 + $0x2f8] sm:$0xff]
        %v3011 = vld [vmem:[%s2914 + $0x300] sm:$0xff]
        %v3012 = vld [vmem:[%s2914 + $0x308] sm:$0xff]
        %v3013 = vld [vmem:[%s2914 + $0x310] sm:$0xff]
        %v3014 = vld [vmem:[%s2914 + $0x318] sm:$0xff]
        %v3015 = vld [vmem:[%s2914 + $0x320] sm:$0xff]
        %v3016 = vld [vmem:[%s2914 + $0x328] sm:$0xff]
        %v3017 = vld [vmem:[%s2914 + $0x330] sm:$0xff]
        %v3018 = vld [vmem:[%s2914 + $0x338] sm:$0xff]
        %v3019 = vld [vmem:[%s2914 + $0x340] sm:$0xff]
        %v3020 = vld [vmem:[%s2914 + $0x348] sm:$0xff]
        %v3021 = vld [vmem:[%s2914 + $0x350] sm:$0xff]
        %v3022 = vld [vmem:[%s2914 + $0x358] sm:$0xff]
        %v3023 = vld [vmem:[%s2914 + $0x360] sm:$0xff]
        %v3024 = vld [vmem:[%s2914 + $0x368] sm:$0xff]
        %v3025 = vld [vmem:[%s2914 + $0x370] sm:$0xff]
        %v3026 = vld [vmem:[%s2914 + $0x378] sm:$0xff]
        %v3027 = vld [vmem:[%s2914 + $0x380] sm:$0xff]
        %v3028 = vld [vmem:[%s2914 + $0x388] sm:$0xff]
        %v3029 = vld [vmem:[%s2914 + $0x390] sm:$0xff]
        %v3030 = vld [vmem:[%s2914 + $0x398] sm:$0xff]
        %v3031 = vld [vmem:[%s2914 + $0x3a0] sm:$0xff]
        %v3032 = vld [vmem:[%s2914 + $0x3a8] sm:$0xff]
        %v3033 = vld [vmem:[%s2914 + $0x3b0] sm:$0xff]
        %v3034 = vld [vmem:[%s2914 + $0x3b8] sm:$0xff]
        %v3035 = vld [vmem:[%s2914 + $0x3c0] sm:$0xff]
        %v3036 = vld [vmem:[%s2914 + $0x3c8] sm:$0xff]
        %v3037 = vld [vmem:[%s2914 + $0x3d0] sm:$0xff]
        %v3038 = vld [vmem:[%s2914 + $0x3d8] sm:$0xff]
        %v3039 = vld [vmem:[%s2914 + $0x3e0] sm:$0xff]
        %v3040 = vld [vmem:[%s2914 + $0x3e8] sm:$0xff]
        %v3041 = vld [vmem:[%s2914 + $0x3f0] sm:$0xff]
        %v3042 = vld [vmem:[%s2914 + $0x3f8] sm:$0xff]
        %v3043 = vld [vmem:[%s2914 + $0x400] sm:$0xff]
        %v3044 = vld [vmem:[%s2914 + $0x408] sm:$0xff]
        %v3045 = vld [vmem:[%s2914 + $0x410] sm:$0xff]
        %v3046 = vld [vmem:[%s2914 + $0x418] sm:$0xff]
        %v3047 = vld [vmem:[%s2914 + $0x420] sm:$0xff]
        %v3048 = vld [vmem:[%s2914 + $0x428] sm:$0xff]
        %v3049 = vld [vmem:[%s2914 + $0x430] sm:$0xff]
        %v3050 = vld [vmem:[%s2914 + $0x438] sm:$0xff]
        %v3051 = vld [vmem:[%s2914 + $0x440] sm:$0xff]
        %v3052 = vld [vmem:[%s2914 + $0x448] sm:$0xff]
        %v3053 = vld [vmem:[%s2914 + $0x450] sm:$0xff]
        %v3054 = vld [vmem:[%s2914 + $0x458] sm:$0xff]
        %v3055 = vld [vmem:[%s2914 + $0x460] sm:$0xff]
        %v3056 = vld [vmem:[%s2914 + $0x468] sm:$0xff]
        %v3057 = vld [vmem:[%s2914 + $0x470] sm:$0xff]
        %v3058 = vld [vmem:[%s2914 + $0x478] sm:$0xff]
        %s3059 = scalar_lea.vmem [#allocation13], 2
        %v3060 = vld [vmem:[%s3059] ss:$8 sm:$0x3]
        %v3062 = vlaneseq
        %v3063 = vshrl.u32 %v3062, 7
        %v3064 = vsub.s32 0, %v3063
        %v3065 = vrot.slane %v3060, %v3064
        %v3066 = vlaneseq
        %v3067 = vshrl.u32 %v3066, 7
        %v3068 = vsub.s32 1, %v3067
        %v3069 = vrot.slane %v3060, %v3068
        %v3216 = vunpack.c.l.b16 %v2915
        %v3217 = vunpack.c.h.b16 %v2915
        %v3218 = vunpack.c.l.b16 %v2916
        %v3219 = vunpack.c.h.b16 %v2916
        %v3220 = vunpack.c.l.b16 %v2917
        %v3221 = vunpack.c.h.b16 %v2917
        %v3222 = vunpack.c.l.b16 %v2918
        %v3223 = vunpack.c.h.b16 %v2918
        %v3224 = vunpack.c.l.b16 %v2919
        %v3225 = vunpack.c.h.b16 %v2919
        %v3226 = vunpack.c.l.b16 %v2920
        %v3227 = vunpack.c.h.b16 %v2920
        %v3228 = vunpack.c.l.b16 %v2921
        %v3229 = vunpack.c.h.b16 %v2921
        %v3230 = vunpack.c.l.b16 %v2922
        %v3231 = vunpack.c.h.b16 %v2922
        %v3232 = vunpack.c.l.b16 %v2923
        %v3233 = vunpack.c.h.b16 %v2923
        %v3234 = vunpack.c.l.b16 %v2924
        %v3235 = vunpack.c.h.b16 %v2924
        %v3236 = vunpack.c.l.b16 %v2925
        %v3237 = vunpack.c.h.b16 %v2925
        %v3238 = vunpack.c.l.b16 %v2926
        %v3239 = vunpack.c.h.b16 %v2926
        %v3240 = vunpack.c.l.b16 %v2927
        %v3241 = vunpack.c.h.b16 %v2927
        %v3242 = vunpack.c.l.b16 %v2928
        %v3243 = vunpack.c.h.b16 %v2928
        %v3244 = vunpack.c.l.b16 %v2929
        %v3245 = vunpack.c.h.b16 %v2929
        %v3246 = vunpack.c.l.b16 %v2930
        %v3247 = vunpack.c.h.b16 %v2930
        %v3248 = vunpack.c.l.b16 %v2931
        %v3249 = vunpack.c.h.b16 %v2931
        %v3250 = vunpack.c.l.b16 %v2932
        %v3251 = vunpack.c.h.b16 %v2932
        %v3252 = vunpack.c.l.b16 %v2933
        %v3253 = vunpack.c.h.b16 %v2933
        %v3254 = vunpack.c.l.b16 %v2934
        %v3255 = vunpack.c.h.b16 %v2934
        %v3256 = vunpack.c.l.b16 %v2935
        %v3257 = vunpack.c.h.b16 %v2935
        %v3258 = vunpack.c.l.b16 %v2936
        %v3259 = vunpack.c.h.b16 %v2936
        %v3260 = vunpack.c.l.b16 %v2937
        %v3261 = vunpack.c.h.b16 %v2937
        %v3262 = vunpack.c.l.b16 %v2938
        %v3263 = vunpack.c.h.b16 %v2938
        %v3264 = vunpack.c.l.b16 %v2939
        %v3265 = vunpack.c.h.b16 %v2939
        %v3266 = vunpack.c.l.b16 %v2940
        %v3267 = vunpack.c.h.b16 %v2940
        %v3268 = vunpack.c.l.b16 %v2941
        %v3269 = vunpack.c.h.b16 %v2941
        %v3270 = vunpack.c.l.b16 %v2942
        %v3271 = vunpack.c.h.b16 %v2942
        %v3272 = vunpack.c.l.b16 %v2943
        %v3273 = vunpack.c.h.b16 %v2943
        %v3274 = vunpack.c.l.b16 %v2944
        %v3275 = vunpack.c.h.b16 %v2944
        %v3276 = vunpack.c.l.b16 %v2945
        %v3277 = vunpack.c.h.b16 %v2945
        %v3278 = vunpack.c.l.b16 %v2946
        %v3279 = vunpack.c.h.b16 %v2946
        %v3280 = vunpack.c.l.b16 %v2947
        %v3281 = vunpack.c.h.b16 %v2947
        %v3282 = vunpack.c.l.b16 %v2948
        %v3283 = vunpack.c.h.b16 %v2948
        %v3284 = vunpack.c.l.b16 %v2949
        %v3285 = vunpack.c.h.b16 %v2949
        %v3286 = vunpack.c.l.b16 %v2950
        %v3287 = vunpack.c.h.b16 %v2950
        %v3288 = vunpack.c.l.b16 %v2951
        %v3289 = vunpack.c.h.b16 %v2951
        %v3290 = vunpack.c.l.b16 %v2952
        %v3291 = vunpack.c.h.b16 %v2952
        %v3292 = vunpack.c.l.b16 %v2953
        %v3293 = vunpack.c.h.b16 %v2953
        %v3294 = vunpack.c.l.b16 %v2954
        %v3295 = vunpack.c.h.b16 %v2954
        %v3296 = vunpack.c.l.b16 %v2955
        %v3297 = vunpack.c.h.b16 %v2955
        %v3298 = vunpack.c.l.b16 %v2956
        %v3299 = vunpack.c.h.b16 %v2956
        %v3300 = vunpack.c.l.b16 %v2957
        %v3301 = vunpack.c.h.b16 %v2957
        %v3302 = vunpack.c.l.b16 %v2958
        %v3303 = vunpack.c.h.b16 %v2958
        %v3304 = vunpack.c.l.b16 %v2959
        %v3305 = vunpack.c.h.b16 %v2959
        %v3306 = vunpack.c.l.b16 %v2960
        %v3307 = vunpack.c.h.b16 %v2960
        %v3308 = vunpack.c.l.b16 %v2961
        %v3309 = vunpack.c.h.b16 %v2961
        %v3310 = vunpack.c.l.b16 %v2962
        %v3311 = vunpack.c.h.b16 %v2962
        %v3312 = vunpack.c.l.b16 %v2963
        %v3313 = vunpack.c.h.b16 %v2963
        %v3314 = vunpack.c.l.b16 %v2964
        %v3315 = vunpack.c.h.b16 %v2964
        %v3316 = vunpack.c.l.b16 %v2965
        %v3317 = vunpack.c.h.b16 %v2965
        %v3318 = vunpack.c.l.b16 %v2966
        %v3319 = vunpack.c.h.b16 %v2966
        %v3320 = vunpack.c.l.b16 %v2967
        %v3321 = vunpack.c.h.b16 %v2967
        %v3322 = vunpack.c.l.b16 %v2968
        %v3323 = vunpack.c.h.b16 %v2968
        %v3324 = vunpack.c.l.b16 %v2969
        %v3325 = vunpack.c.h.b16 %v2969
        %v3326 = vunpack.c.l.b16 %v2970
        %v3327 = vunpack.c.h.b16 %v2970
        %v3328 = vunpack.c.l.b16 %v2971
        %v3329 = vunpack.c.h.b16 %v2971
        %v3330 = vunpack.c.l.b16 %v2972
        %v3331 = vunpack.c.h.b16 %v2972
        %v3332 = vunpack.c.l.b16 %v2973
        %v3333 = vunpack.c.h.b16 %v2973
        %v3334 = vunpack.c.l.b16 %v2974
        %v3335 = vunpack.c.h.b16 %v2974
        %v3336 = vunpack.c.l.b16 %v2975
        %v3337 = vunpack.c.h.b16 %v2975
        %v3338 = vunpack.c.l.b16 %v2976
        %v3339 = vunpack.c.h.b16 %v2976
        %v3340 = vunpack.c.l.b16 %v2977
        %v3341 = vunpack.c.h.b16 %v2977
        %v3342 = vunpack.c.l.b16 %v2978
        %v3343 = vunpack.c.h.b16 %v2978
        %v3344 = vunpack.c.l.b16 %v2979
        %v3345 = vunpack.c.h.b16 %v2979
        %v3346 = vunpack.c.l.b16 %v2980
        %v3347 = vunpack.c.h.b16 %v2980
        %v3348 = vunpack.c.l.b16 %v2981
        %v3349 = vunpack.c.h.b16 %v2981
        %v3350 = vunpack.c.l.b16 %v2982
        %v3351 = vunpack.c.h.b16 %v2982
        %v3352 = vunpack.c.l.b16 %v2983
        %v3353 = vunpack.c.h.b16 %v2983
        %v3354 = vunpack.c.l.b16 %v2984
        %v3355 = vunpack.c.h.b16 %v2984
        %v3356 = vunpack.c.l.b16 %v2985
        %v3357 = vunpack.c.h.b16 %v2985
        %v3358 = vunpack.c.l.b16 %v2986
        %v3359 = vunpack.c.h.b16 %v2986
        %v3360 = vunpack.c.l.b16 %v2987
        %v3361 = vunpack.c.h.b16 %v2987
        %v3362 = vunpack.c.l.b16 %v2988
        %v3363 = vunpack.c.h.b16 %v2988
        %v3364 = vunpack.c.l.b16 %v2989
        %v3365 = vunpack.c.h.b16 %v2989
        %v3366 = vunpack.c.l.b16 %v2990
        %v3367 = vunpack.c.h.b16 %v2990
        %v3368 = vunpack.c.l.b16 %v2991
        %v3369 = vunpack.c.h.b16 %v2991
        %v3370 = vunpack.c.l.b16 %v2992
        %v3371 = vunpack.c.h.b16 %v2992
        %v3372 = vunpack.c.l.b16 %v2993
        %v3373 = vunpack.c.h.b16 %v2993
        %v3374 = vunpack.c.l.b16 %v2994
        %v3375 = vunpack.c.h.b16 %v2994
        %v3376 = vunpack.c.l.b16 %v2995
        %v3377 = vunpack.c.h.b16 %v2995
        %v3378 = vunpack.c.l.b16 %v2996
        %v3379 = vunpack.c.h.b16 %v2996
        %v3380 = vunpack.c.l.b16 %v2997
        %v3381 = vunpack.c.h.b16 %v2997
        %v3382 = vunpack.c.l.b16 %v2998
        %v3383 = vunpack.c.h.b16 %v2998
        %v3384 = vunpack.c.l.b16 %v2999
        %v3385 = vunpack.c.h.b16 %v2999
        %v3386 = vunpack.c.l.b16 %v3000
        %v3387 = vunpack.c.h.b16 %v3000
        %v3388 = vunpack.c.l.b16 %v3001
        %v3389 = vunpack.c.h.b16 %v3001
        %v3390 = vunpack.c.l.b16 %v3002
        %v3391 = vunpack.c.h.b16 %v3002
        %v3392 = vunpack.c.l.b16 %v3003
        %v3393 = vunpack.c.h.b16 %v3003
        %v3394 = vunpack.c.l.b16 %v3004
        %v3395 = vunpack.c.h.b16 %v3004
        %v3396 = vunpack.c.l.b16 %v3005
        %v3397 = vunpack.c.h.b16 %v3005
        %v3398 = vunpack.c.l.b16 %v3006
        %v3399 = vunpack.c.h.b16 %v3006
        %v3400 = vunpack.c.l.b16 %v3007
        %v3401 = vunpack.c.h.b16 %v3007
        %v3402 = vunpack.c.l.b16 %v3008
        %v3403 = vunpack.c.h.b16 %v3008
        %v3404 = vunpack.c.l.b16 %v3009
        %v3405 = vunpack.c.h.b16 %v3009
        %v3406 = vunpack.c.l.b16 %v3010
        %v3407 = vunpack.c.h.b16 %v3010
        %v3408 = vunpack.c.l.b16 %v3011
        %v3409 = vunpack.c.h.b16 %v3011
        %v3410 = vunpack.c.l.b16 %v3012
        %v3411 = vunpack.c.h.b16 %v3012
        %v3412 = vunpack.c.l.b16 %v3013
        %v3413 = vunpack.c.h.b16 %v3013
        %v3414 = vunpack.c.l.b16 %v3014
        %v3415 = vunpack.c.h.b16 %v3014
        %v3416 = vunpack.c.l.b16 %v3015
        %v3417 = vunpack.c.h.b16 %v3015
        %v3418 = vunpack.c.l.b16 %v3016
        %v3419 = vunpack.c.h.b16 %v3016
        %v3420 = vunpack.c.l.b16 %v3017
        %v3421 = vunpack.c.h.b16 %v3017
        %v3422 = vunpack.c.l.b16 %v3018
        %v3423 = vunpack.c.h.b16 %v3018
        %v3424 = vunpack.c.l.b16 %v3019
        %v3425 = vunpack.c.h.b16 %v3019
        %v3426 = vunpack.c.l.b16 %v3020
        %v3427 = vunpack.c.h.b16 %v3020
        %v3428 = vunpack.c.l.b16 %v3021
        %v3429 = vunpack.c.h.b16 %v3021
        %v3430 = vunpack.c.l.b16 %v3022
        %v3431 = vunpack.c.h.b16 %v3022
        %v3432 = vunpack.c.l.b16 %v3023
        %v3433 = vunpack.c.h.b16 %v3023
        %v3434 = vunpack.c.l.b16 %v3024
        %v3435 = vunpack.c.h.b16 %v3024
        %v3436 = vunpack.c.l.b16 %v3025
        %v3437 = vunpack.c.h.b16 %v3025
        %v3438 = vunpack.c.l.b16 %v3026
        %v3439 = vunpack.c.h.b16 %v3026
        %v3440 = vunpack.c.l.b16 %v3027
        %v3441 = vunpack.c.h.b16 %v3027
        %v3442 = vunpack.c.l.b16 %v3028
        %v3443 = vunpack.c.h.b16 %v3028
        %v3444 = vunpack.c.l.b16 %v3029
        %v3445 = vunpack.c.h.b16 %v3029
        %v3446 = vunpack.c.l.b16 %v3030
        %v3447 = vunpack.c.h.b16 %v3030
        %v3448 = vunpack.c.l.b16 %v3031
        %v3449 = vunpack.c.h.b16 %v3031
        %v3450 = vunpack.c.l.b16 %v3032
        %v3451 = vunpack.c.h.b16 %v3032
        %v3452 = vunpack.c.l.b16 %v3033
        %v3453 = vunpack.c.h.b16 %v3033
        %v3454 = vunpack.c.l.b16 %v3034
        %v3455 = vunpack.c.h.b16 %v3034
        %v3456 = vunpack.c.l.b16 %v3035
        %v3457 = vunpack.c.h.b16 %v3035
        %v3458 = vunpack.c.l.b16 %v3036
        %v3459 = vunpack.c.h.b16 %v3036
        %v3460 = vunpack.c.l.b16 %v3037
        %v3461 = vunpack.c.h.b16 %v3037
        %v3462 = vunpack.c.l.b16 %v3038
        %v3463 = vunpack.c.h.b16 %v3038
        %v3464 = vunpack.c.l.b16 %v3039
        %v3465 = vunpack.c.h.b16 %v3039
        %v3466 = vunpack.c.l.b16 %v3040
        %v3467 = vunpack.c.h.b16 %v3040
        %v3468 = vunpack.c.l.b16 %v3041
        %v3469 = vunpack.c.h.b16 %v3041
        %v3470 = vunpack.c.l.b16 %v3042
        %v3471 = vunpack.c.h.b16 %v3042
        %v3472 = vunpack.c.l.b16 %v3043
        %v3473 = vunpack.c.h.b16 %v3043
        %v3474 = vunpack.c.l.b16 %v3044
        %v3475 = vunpack.c.h.b16 %v3044
        %v3476 = vunpack.c.l.b16 %v3045
        %v3477 = vunpack.c.h.b16 %v3045
        %v3478 = vunpack.c.l.b16 %v3046
        %v3479 = vunpack.c.h.b16 %v3046
        %v3480 = vunpack.c.l.b16 %v3047
        %v3481 = vunpack.c.h.b16 %v3047
        %v3482 = vunpack.c.l.b16 %v3048
        %v3483 = vunpack.c.h.b16 %v3048
        %v3484 = vunpack.c.l.b16 %v3049
        %v3485 = vunpack.c.h.b16 %v3049
        %v3486 = vunpack.c.l.b16 %v3050
        %v3487 = vunpack.c.h.b16 %v3050
        %v3488 = vunpack.c.l.b16 %v3051
        %v3489 = vunpack.c.h.b16 %v3051
        %v3490 = vunpack.c.l.b16 %v3052
        %v3491 = vunpack.c.h.b16 %v3052
        %v3492 = vunpack.c.l.b16 %v3053
        %v3493 = vunpack.c.h.b16 %v3053
        %v3494 = vunpack.c.l.b16 %v3054
        %v3495 = vunpack.c.h.b16 %v3054
        %v3496 = vunpack.c.l.b16 %v3055
        %v3497 = vunpack.c.h.b16 %v3055
        %v3498 = vunpack.c.l.b16 %v3056
        %v3499 = vunpack.c.h.b16 %v3056
        %v3500 = vunpack.c.l.b16 %v3057
        %v3501 = vunpack.c.h.b16 %v3057
        %v3502 = vunpack.c.l.b16 %v3058
        %v3503 = vunpack.c.h.b16 %v3058
        %v3504 = vpack.c.b16 %v3218, %v3216
        %v3505 = vpack.c.b16 %v3219, %v3217
        %v3506 = vpack.c.b16 %v3222, %v3220
        %v3507 = vpack.c.b16 %v3223, %v3221
        %v3508 = vpack.c.b16 %v3226, %v3224
        %v3509 = vpack.c.b16 %v3227, %v3225
        %v3510 = vpack.c.b16 %v3230, %v3228
        %v3511 = vpack.c.b16 %v3231, %v3229
        %v3512 = vpack.c.b16 %v3234, %v3232
        %v3513 = vpack.c.b16 %v3235, %v3233
        %v3514 = vpack.c.b16 %v3238, %v3236
        %v3515 = vpack.c.b16 %v3239, %v3237
        %v3516 = vpack.c.b16 %v3242, %v3240
        %v3517 = vpack.c.b16 %v3243, %v3241
        %v3518 = vpack.c.b16 %v3246, %v3244
        %v3519 = vpack.c.b16 %v3247, %v3245
        %v3520 = vpack.c.b16 %v3250, %v3248
        %v3521 = vpack.c.b16 %v3251, %v3249
        %v3522 = vpack.c.b16 %v3254, %v3252
        %v3523 = vpack.c.b16 %v3255, %v3253
        %v3524 = vpack.c.b16 %v3258, %v3256
        %v3525 = vpack.c.b16 %v3259, %v3257
        %v3526 = vpack.c.b16 %v3262, %v3260
        %v3527 = vpack.c.b16 %v3263, %v3261
        %v3528 = vpack.c.b16 %v3266, %v3264
        %v3529 = vpack.c.b16 %v3267, %v3265
        %v3530 = vpack.c.b16 %v3270, %v3268
        %v3531 = vpack.c.b16 %v3271, %v3269
        %v3532 = vpack.c.b16 %v3274, %v3272
        %v3533 = vpack.c.b16 %v3275, %v3273
        %v3534 = vpack.c.b16 %v3278, %v3276
        %v3535 = vpack.c.b16 %v3279, %v3277
        %v3536 = vpack.c.b16 %v3282, %v3280
        %v3537 = vpack.c.b16 %v3283, %v3281
        %v3538 = vpack.c.b16 %v3286, %v3284
        %v3539 = vpack.c.b16 %v3287, %v3285
        %v3540 = vpack.c.b16 %v3290, %v3288
        %v3541 = vpack.c.b16 %v3291, %v3289
        %v3542 = vpack.c.b16 %v3294, %v3292
        %v3543 = vpack.c.b16 %v3295, %v3293
        %v3544 = vpack.c.b16 %v3298, %v3296
        %v3545 = vpack.c.b16 %v3299, %v3297
        %v3546 = vpack.c.b16 %v3302, %v3300
        %v3547 = vpack.c.b16 %v3303, %v3301
        %v3548 = vpack.c.b16 %v3306, %v3304
        %v3549 = vpack.c.b16 %v3307, %v3305
        %v3550 = vpack.c.b16 %v3310, %v3308
        %v3551 = vpack.c.b16 %v3311, %v3309
        %v3552 = vpack.c.b16 %v3314, %v3312
        %v3553 = vpack.c.b16 %v3315, %v3313
        %v3554 = vpack.c.b16 %v3318, %v3316
        %v3555 = vpack.c.b16 %v3319, %v3317
        %v3556 = vpack.c.b16 %v3322, %v3320
        %v3557 = vpack.c.b16 %v3323, %v3321
        %v3558 = vpack.c.b16 %v3326, %v3324
        %v3559 = vpack.c.b16 %v3327, %v3325
        %v3560 = vpack.c.b16 %v3330, %v3328
        %v3561 = vpack.c.b16 %v3331, %v3329
        %v3562 = vpack.c.b16 %v3334, %v3332
        %v3563 = vpack.c.b16 %v3335, %v3333
        %v3564 = vpack.c.b16 %v3338, %v3336
        %v3565 = vpack.c.b16 %v3339, %v3337
        %v3566 = vpack.c.b16 %v3342, %v3340
        %v3567 = vpack.c.b16 %v3343, %v3341
        %v3568 = vpack.c.b16 %v3346, %v3344
        %v3569 = vpack.c.b16 %v3347, %v3345
        %v3570 = vpack.c.b16 %v3350, %v3348
        %v3571 = vpack.c.b16 %v3351, %v3349
        %v3572 = vpack.c.b16 %v3354, %v3352
        %v3573 = vpack.c.b16 %v3355, %v3353
        %v3574 = vpack.c.b16 %v3358, %v3356
        %v3575 = vpack.c.b16 %v3359, %v3357
        %v3576 = vpack.c.b16 %v3362, %v3360
        %v3577 = vpack.c.b16 %v3363, %v3361
        %v3578 = vpack.c.b16 %v3366, %v3364
        %v3579 = vpack.c.b16 %v3367, %v3365
        %v3580 = vpack.c.b16 %v3370, %v3368
        %v3581 = vpack.c.b16 %v3371, %v3369
        %v3582 = vpack.c.b16 %v3374, %v3372
        %v3583 = vpack.c.b16 %v3375, %v3373
        %v3584 = vpack.c.b16 %v3378, %v3376
        %v3585 = vpack.c.b16 %v3379, %v3377
        %v3586 = vpack.c.b16 %v3382, %v3380
        %v3587 = vpack.c.b16 %v3383, %v3381
        %v3588 = vpack.c.b16 %v3386, %v3384
        %v3589 = vpack.c.b16 %v3387, %v3385
        %v3590 = vpack.c.b16 %v3390, %v3388
        %v3591 = vpack.c.b16 %v3391, %v3389
        %v3592 = vpack.c.b16 %v3394, %v3392
        %v3593 = vpack.c.b16 %v3395, %v3393
        %v3594 = vpack.c.b16 %v3398, %v3396
        %v3595 = vpack.c.b16 %v3399, %v3397
        %v3596 = vpack.c.b16 %v3402, %v3400
        %v3597 = vpack.c.b16 %v3403, %v3401
        %v3598 = vpack.c.b16 %v3406, %v3404
        %v3599 = vpack.c.b16 %v3407, %v3405
        %v3600 = vpack.c.b16 %v3410, %v3408
        %v3601 = vpack.c.b16 %v3411, %v3409
        %v3602 = vpack.c.b16 %v3414, %v3412
        %v3603 = vpack.c.b16 %v3415, %v3413
        %v3604 = vpack.c.b16 %v3418, %v3416
        %v3605 = vpack.c.b16 %v3419, %v3417
        %v3606 = vpack.c.b16 %v3422, %v3420
        %v3607 = vpack.c.b16 %v3423, %v3421
        %v3608 = vpack.c.b16 %v3426, %v3424
        %v3609 = vpack.c.b16 %v3427, %v3425
        %v3610 = vpack.c.b16 %v3430, %v3428
        %v3611 = vpack.c.b16 %v3431, %v3429
        %v3612 = vpack.c.b16 %v3434, %v3432
        %v3613 = vpack.c.b16 %v3435, %v3433
        %v3614 = vpack.c.b16 %v3438, %v3436
        %v3615 = vpack.c.b16 %v3439, %v3437
        %v3616 = vpack.c.b16 %v3442, %v3440
        %v3617 = vpack.c.b16 %v3443, %v3441
        %v3618 = vpack.c.b16 %v3446, %v3444
        %v3619 = vpack.c.b16 %v3447, %v3445
        %v3620 = vpack.c.b16 %v3450, %v3448
        %v3621 = vpack.c.b16 %v3451, %v3449
        %v3622 = vpack.c.b16 %v3454, %v3452
        %v3623 = vpack.c.b16 %v3455, %v3453
        %v3624 = vpack.c.b16 %v3458, %v3456
        %v3625 = vpack.c.b16 %v3459, %v3457
        %v3626 = vpack.c.b16 %v3462, %v3460
        %v3627 = vpack.c.b16 %v3463, %v3461
        %v3628 = vpack.c.b16 %v3466, %v3464
        %v3629 = vpack.c.b16 %v3467, %v3465
        %v3630 = vpack.c.b16 %v3470, %v3468
        %v3631 = vpack.c.b16 %v3471, %v3469
        %v3632 = vpack.c.b16 %v3474, %v3472
        %v3633 = vpack.c.b16 %v3475, %v3473
        %v3634 = vpack.c.b16 %v3478, %v3476
        %v3635 = vpack.c.b16 %v3479, %v3477
        %v3636 = vpack.c.b16 %v3482, %v3480
        %v3637 = vpack.c.b16 %v3483, %v3481
        %v3638 = vpack.c.b16 %v3486, %v3484
        %v3639 = vpack.c.b16 %v3487, %v3485
        %v3640 = vpack.c.b16 %v3490, %v3488
        %v3641 = vpack.c.b16 %v3491, %v3489
        %v3642 = vpack.c.b16 %v3494, %v3492
        %v3643 = vpack.c.b16 %v3495, %v3493
        %v3644 = vpack.c.b16 %v3498, %v3496
        %v3645 = vpack.c.b16 %v3499, %v3497
        %v3646 = vpack.c.b16 %v3502, %v3500
        %v3647 = vpack.c.b16 %v3503, %v3501
        %3792 = vmatprep.subr.bf16.mxu0 %v3505
        %3793 = vmatpush1.bf16.msra.mxu0 %v3504
        %3794 = vmatprep.subr.bf16.mxu0 %v3507
        %3795 = vmatpush1.bf16.msra.mxu0 %v3506
        %3796 = vmatprep.subr.bf16.mxu0 %v3509
        %3797 = vmatpush1.bf16.msra.mxu0 %v3508
        %3798 = vmatprep.subr.bf16.mxu0 %v3511
        %3799 = vmatpush1.bf16.msra.mxu0 %v3510
        %3800 = vmatprep.subr.bf16.mxu0 %v3513
        %3801 = vmatpush1.bf16.msra.mxu0 %v3512
        %3802 = vmatprep.subr.bf16.mxu0 %v3515
        %3803 = vmatpush1.bf16.msra.mxu0 %v3514
        %3804 = vmatprep.subr.bf16.mxu0 %v3517
        %3805 = vmatpush1.bf16.msra.mxu0 %v3516
        %3806 = vmatprep.subr.bf16.mxu0 %v3519
        %3807 = vmatpush1.bf16.msra.mxu0 %v3518
        %3808 = vmatprep.subr.bf16.mxu0 %v3521
        %3809 = vmatpush1.bf16.msra.mxu0 %v3520
        %3810 = vmatprep.subr.bf16.mxu0 %v3523
        %3811 = vmatpush1.bf16.msra.mxu0 %v3522
        %3812 = vmatprep.subr.bf16.mxu0 %v3525
        %3813 = vmatpush1.bf16.msra.mxu0 %v3524
        %3814 = vmatprep.subr.bf16.mxu0 %v3527
        %3815 = vmatpush1.bf16.msra.mxu0 %v3526
        %3816 = vmatprep.subr.bf16.mxu0 %v3529
        %3817 = vmatpush1.bf16.msra.mxu0 %v3528
        %3818 = vmatprep.subr.bf16.mxu0 %v3531
        %3819 = vmatpush1.bf16.msra.mxu0 %v3530
        %3820 = vmatprep.subr.bf16.mxu0 %v3533
        %3821 = vmatpush1.bf16.msra.mxu0 %v3532
        %3822 = vmatprep.subr.bf16.mxu0 %v3535
        %3823 = vmatpush1.bf16.msra.mxu0 %v3534
        %3824 = vmatprep.mubr.bf16.mxu0 %v2879
        %3825 = vmatmul.mubr.bf16.gmra.mrb[0].mxu0 %v2878
        %v3826 = vpop.f32.mrb[0].mxu0
        %v3827 = vadd.f32 %v3065, %v3826
        %v3828 = vpop.f32.mrb[0].mxu0
        %v3829 = vadd.f32 %v3069, %v3828
        %v3830 = vpop.f32.mrb[0].mxu0
        %v3831 = vadd.f32 %v3065, %v3830
        %v3832 = vpop.f32.mrb[0].mxu0
        %v3833 = vadd.f32 %v3069, %v3832
        %3834 = vmatprep.mubr.bf16.mxu0 %v2888
        %3835 = vmatmul.mubr.bf16.gmra.mrb[0].mxu0 %v2887
        %v3836 = vpop.f32.mrb[0].mxu0
        %v3837 = vadd.f32 %v3065, %v3836
        %v3838 = vpop.f32.mrb[0].mxu0
        %v3839 = vadd.f32 %v3069, %v3838
        %v3840 = vpop.f32.mrb[0].mxu0
        %v3841 = vadd.f32 %v3065, %v3840
        %v3842 = vpop.f32.mrb[0].mxu0
        %v3843 = vadd.f32 %v3069, %v3842
        %3844 = vmatprep.mubr.bf16.mxu0 %v2897
        %3845 = vmatmul.mubr.bf16.gmra.mrb[0].mxu0 %v2896
        %v3846 = vpop.f32.mrb[0].mxu0
        %v3847 = vadd.f32 %v3065, %v3846
        %v3848 = vpop.f32.mrb[0].mxu0
        %v3849 = vadd.f32 %v3069, %v3848
        %v3850 = vpop.f32.mrb[0].mxu0
        %v3851 = vadd.f32 %v3065, %v3850
        %v3852 = vpop.f32.mrb[0].mxu0
        %v3853 = vadd.f32 %v3069, %v3852
        %3854 = vmatprep.mubr.bf16.mxu0 %v2906
        %3855 = vmatmul.mubr.bf16.gmra.mrb[0].mxu0 %v2905
        %v3856 = vpop.f32.mrb[0].mxu0
        %v3857 = vadd.f32 %v3065, %v3856
        %v3858 = vpop.f32.mrb[0].mxu0
        %v3859 = vadd.f32 %v3069, %v3858
        %v3860 = vpop.f32.mrb[0].mxu0
        %v3861 = vadd.f32 %v3065, %v3860
        %v3862 = vpop.f32.mrb[0].mxu0
        %v3863 = vadd.f32 %v3069, %v3862
        %3864 = vdwg.mxu0
        %3865 = vmatprep.subr.bf16.mxu0 %v3537
        %3866 = vmatpush1.bf16.msra.mxu0 %v3536
        %3867 = vmatprep.subr.bf16.mxu0 %v3539
        %3868 = vmatpush1.bf16.msra.mxu0 %v3538
        %3869 = vmatprep.subr.bf16.mxu0 %v3541
        %3870 = vmatpush1.bf16.msra.mxu0 %v3540
        %3871 = vmatprep.subr.bf16.mxu0 %v3543
        %3872 = vmatpush1.bf16.msra.mxu0 %v3542
        %3873 = vmatprep.subr.bf16.mxu0 %v3545
        %3874 = vmatpush1.bf16.msra.mxu0 %v3544
        %3875 = vmatprep.subr.bf16.mxu0 %v3547
        %3876 = vmatpush1.bf16.msra.mxu0 %v3546
        %3877 = vmatprep.subr.bf16.mxu0 %v3549
        %3878 = vmatpush1.bf16.msra.mxu0 %v3548
        %3879 = vmatprep.subr.bf16.mxu0 %v3551
        %3880 = vmatpush1.bf16.msra.mxu0 %v3550
        %3881 = vmatprep.subr.bf16.mxu0 %v3553
        %3882 = vmatpush1.bf16.msra.mxu0 %v3552
        %3883 = vmatprep.subr.bf16.mxu0 %v3555
        %3884 = vmatpush1.bf16.msra.mxu0 %v3554
        %3885 = vmatprep.subr.bf16.mxu0 %v3557
        %3886 = vmatpush1.bf16.msra.mxu0 %v3556
        %3887 = vmatprep.subr.bf16.mxu0 %v3559
        %3888 = vmatpush1.bf16.msra.mxu0 %v3558
        %3889 = vmatprep.subr.bf16.mxu0 %v3561
        %3890 = vmatpush1.bf16.msra.mxu0 %v3560
        %3891 = vmatprep.subr.bf16.mxu0 %v3563
        %3892 = vmatpush1.bf16.msra.mxu0 %v3562
        %3893 = vmatprep.subr.bf16.mxu0 %v3565
        %3894 = vmatpush1.bf16.msra.mxu0 %v3564
        %3895 = vmatprep.subr.bf16.mxu0 %v3567
        %3896 = vmatpush1.bf16.msra.mxu0 %v3566
        %3897 = vmatprep.mubr.bf16.mxu0 %v2881
        %3898 = vmatmul.mubr.bf16.gmra.mrb[0].mxu0 %v2880
        %v3899 = vpop.f32.mrb[0].mxu0
        %v3900 = vadd.f32 %v3827, %v3899
        %v3901 = vpop.f32.mrb[0].mxu0
        %v3902 = vadd.f32 %v3829, %v3901
        %v3903 = vpop.f32.mrb[0].mxu0
        %v3904 = vadd.f32 %v3831, %v3903
        %v3905 = vpop.f32.mrb[0].mxu0
        %v3906 = vadd.f32 %v3833, %v3905
        %3907 = vmatprep.mubr.bf16.mxu0 %v2890
        %3908 = vmatmul.mubr.bf16.gmra.mrb[0].mxu0 %v2889
        %v3909 = vpop.f32.mrb[0].mxu0
        %v3910 = vadd.f32 %v3837, %v3909
        %v3911 = vpop.f32.mrb[0].mxu0
        %v3912 = vadd.f32 %v3839, %v3911
        %v3913 = vpop.f32.mrb[0].mxu0
        %v3914 = vadd.f32 %v3841, %v3913
        %v3915 = vpop.f32.mrb[0].mxu0
        %v3916 = vadd.f32 %v3843, %v3915
        %3917 = vmatprep.mubr.bf16.mxu0 %v2899
        %3918 = vmatmul.mubr.bf16.gmra.mrb[0].mxu0 %v2898
        %v3919 = vpop.f32.mrb[0].mxu0
        %v3920 = vadd.f32 %v3847, %v3919
        %v3921 = vpop.f32.mrb[0].mxu0
        %v3922 = vadd.f32 %v3849, %v3921
        %v3923 = vpop.f32.mrb[0].mxu0
        %v3924 = vadd.f32 %v3851, %v3923
        %v3925 = vpop.f32.mrb[0].mxu0
        %v3926 = vadd.f32 %v3853, %v3925
        %3927 = vmatprep.mubr.bf16.mxu0 %v2908
        %3928 = vmatmul.mubr.bf16.gmra.mrb[0].mxu0 %v2907
        %v3929 = vpop.f32.mrb[0].mxu0
        %v3930 = vadd.f32 %v3857, %v3929
        %v3931 = vpop.f32.mrb[0].mxu0
        %v3932 = vadd.f32 %v3859, %v3931
        %v3933 = vpop.f32.mrb[0].mxu0
        %v3934 = vadd.f32 %v3861, %v3933
        %v3935 = vpop.f32.mrb[0].mxu0
        %v3936 = vadd.f32 %v3863, %v3935
        %3937 = vdwg.mxu0
        %3938 = vmatprep.subr.bf16.mxu0 %v3569
        %3939 = vmatpush1.bf16.msra.mxu0 %v3568
        %3940 = vmatprep.subr.bf16.mxu0 %v3571
        %3941 = vmatpush1.bf16.msra.mxu0 %v3570
        %3942 = vmatprep.subr.bf16.mxu0 %v3573
        %3943 = vmatpush1.bf16.msra.mxu0 %v3572
        %3944 = vmatprep.subr.bf16.mxu0 %v3575
        %3945 = vmatpush1.bf16.msra.mxu0 %v3574
        %3946 = vmatprep.subr.bf16.mxu0 %v3577
        %3947 = vmatpush1.bf16.msra.mxu0 %v3576
        %3948 = vmatprep.subr.bf16.mxu0 %v3579
        %3949 = vmatpush1.bf16.msra.mxu0 %v3578
        %3950 = vmatprep.subr.bf16.mxu0 %v3581
        %3951 = vmatpush1.bf16.msra.mxu0 %v3580
        %3952 = vmatprep.subr.bf16.mxu0 %v3583
        %3953 = vmatpush1.bf16.msra.mxu0 %v3582
        %3954 = vmatprep.subr.bf16.mxu0 %v3585
        %3955 = vmatpush1.bf16.msra.mxu0 %v3584
        %3956 = vmatprep.subr.bf16.mxu0 %v3587
        %3957 = vmatpush1.bf16.msra.mxu0 %v3586
        %3958 = vmatprep.subr.bf16.mxu0 %v3589
        %3959 = vmatpush1.bf16.msra.mxu0 %v3588
        %3960 = vmatprep.subr.bf16.mxu0 %v3591
        %3961 = vmatpush1.bf16.msra.mxu0 %v3590
        %3962 = vmatprep.subr.bf16.mxu0 %v3593
        %3963 = vmatpush1.bf16.msra.mxu0 %v3592
        %3964 = vmatprep.subr.bf16.mxu0 %v3595
        %3965 = vmatpush1.bf16.msra.mxu0 %v3594
        %3966 = vmatprep.subr.bf16.mxu0 %v3597
        %3967 = vmatpush1.bf16.msra.mxu0 %v3596
        %3968 = vmatprep.subr.bf16.mxu0 %v3599
        %3969 = vmatpush1.bf16.msra.mxu0 %v3598
        %3970 = vmatprep.mubr.bf16.mxu0 %v2883
        %3971 = vmatmul.mubr.bf16.gmra.mrb[0].mxu0 %v2882
        %v3972 = vpop.f32.mrb[0].mxu0
        %v3973 = vadd.f32 %v3900, %v3972
        %v3974 = vpop.f32.mrb[0].mxu0
        %v3975 = vadd.f32 %v3902, %v3974
        %v3976 = vpop.f32.mrb[0].mxu0
        %v3977 = vadd.f32 %v3904, %v3976
        %v3978 = vpop.f32.mrb[0].mxu0
        %v3979 = vadd.f32 %v3906, %v3978
        %3980 = vmatprep.mubr.bf16.mxu0 %v2892
        %3981 = vmatmul.mubr.bf16.gmra.mrb[0].mxu0 %v2891
        %v3982 = vpop.f32.mrb[0].mxu0
        %v3983 = vadd.f32 %v3910, %v3982
        %v3984 = vpop.f32.mrb[0].mxu0
        %v3985 = vadd.f32 %v3912, %v3984
        %v3986 = vpop.f32.mrb[0].mxu0
        %v3987 = vadd.f32 %v3914, %v3986
        %v3988 = vpop.f32.mrb[0].mxu0
        %v3989 = vadd.f32 %v3916, %v3988
        %3990 = vmatprep.mubr.bf16.mxu0 %v2901
        %3991 = vmatmul.mubr.bf16.gmra.mrb[0].mxu0 %v2900
        %v3992 = vpop.f32.mrb[0].mxu0
        %v3993 = vadd.f32 %v3920, %v3992
        %v3994 = vpop.f32.mrb[0].mxu0
        %v3995 = vadd.f32 %v3922, %v3994
        %v3996 = vpop.f32.mrb[0].mxu0
        %v3997 = vadd.f32 %v3924, %v3996
        %v3998 = vpop.f32.mrb[0].mxu0
        %v3999 = vadd.f32 %v3926, %v3998
        %4000 = vmatprep.mubr.bf16.mxu0 %v2910
        %4001 = vmatmul.mubr.bf16.gmra.mrb[0].mxu0 %v2909
        %v4002 = vpop.f32.mrb[0].mxu0
        %v4003 = vadd.f32 %v3930, %v4002
        %v4004 = vpop.f32.mrb[0].mxu0
        %v4005 = vadd.f32 %v3932, %v4004
        %v4006 = vpop.f32.mrb[0].mxu0
        %v4007 = vadd.f32 %v3934, %v4006
        %v4008 = vpop.f32.mrb[0].mxu0
        %v4009 = vadd.f32 %v3936, %v4008
        %4010 = vdwg.mxu0
        %4011 = vmatprep.subr.bf16.mxu0 %v3601
        %4012 = vmatpush1.bf16.msra.mxu0 %v3600
        %4013 = vmatprep.subr.bf16.mxu0 %v3603
        %4014 = vmatpush1.bf16.msra.mxu0 %v3602
        %4015 = vmatprep.subr.bf16.mxu0 %v3605
        %4016 = vmatpush1.bf16.msra.mxu0 %v3604
        %4017 = vmatprep.subr.bf16.mxu0 %v3607
        %4018 = vmatpush1.bf16.msra.mxu0 %v3606
        %4019 = vmatprep.subr.bf16.mxu0 %v3609
        %4020 = vmatpush1.bf16.msra.mxu0 %v3608
        %4021 = vmatprep.subr.bf16.mxu0 %v3611
        %4022 = vmatpush1.bf16.msra.mxu0 %v3610
        %4023 = vmatprep.subr.bf16.mxu0 %v3613
        %4024 = vmatpush1.bf16.msra.mxu0 %v3612
        %4025 = vmatprep.subr.bf16.mxu0 %v3615
        %4026 = vmatpush1.bf16.msra.mxu0 %v3614
        %4027 = vmatprep.subr.bf16.mxu0 %v3617
        %4028 = vmatpush1.bf16.msra.mxu0 %v3616
        %4029 = vmatprep.subr.bf16.mxu0 %v3619
        %4030 = vmatpush1.bf16.msra.mxu0 %v3618
        %4031 = vmatprep.subr.bf16.mxu0 %v3621
        %4032 = vmatpush1.bf16.msra.mxu0 %v3620
        %4033 = vmatprep.subr.bf16.mxu0 %v3623
        %4034 = vmatpush1.bf16.msra.mxu0 %v3622
        %4035 = vmatprep.subr.bf16.mxu0 %v3625
        %4036 = vmatpush1.bf16.msra.mxu0 %v3624
        %4037 = vmatprep.subr.bf16.mxu0 %v3627
        %4038 = vmatpush1.bf16.msra.mxu0 %v3626
        %4039 = vmatprep.subr.bf16.mxu0 %v3629
        %4040 = vmatpush1.bf16.msra.mxu0 %v3628
        %4041 = vmatprep.subr.bf16.mxu0 %v3631
        %4042 = vmatpush1.bf16.msra.mxu0 %v3630
        %4043 = vmatprep.mubr.bf16.mxu0 %v2885
        %4044 = vmatmul.mubr.bf16.gmra.mrb[0].mxu0 %v2884
        %v4045 = vpop.f32.mrb[0].mxu0
        %v4046 = vadd.f32 %v3973, %v4045
        %v4047 = vpop.f32.mrb[0].mxu0
        %v4048 = vadd.f32 %v3975, %v4047
        %v4049 = vpop.f32.mrb[0].mxu0
        %v4050 = vadd.f32 %v3977, %v4049
        %v4051 = vpop.f32.mrb[0].mxu0
        %v4052 = vadd.f32 %v3979, %v4051
        %4053 = vmatprep.mubr.bf16.mxu0 %v2894
        %4054 = vmatmul.mubr.bf16.gmra.mrb[0].mxu0 %v2893
        %v4055 = vpop.f32.mrb[0].mxu0
        %v4056 = vadd.f32 %v3983, %v4055
        %v4057 = vpop.f32.mrb[0].mxu0
        %v4058 = vadd.f32 %v3985, %v4057
        %v4059 = vpop.f32.mrb[0].mxu0
        %v4060 = vadd.f32 %v3987, %v4059
        %v4061 = vpop.f32.mrb[0].mxu0
        %v4062 = vadd.f32 %v3989, %v4061
        %4063 = vmatprep.mubr.bf16.mxu0 %v2903
        %4064 = vmatmul.mubr.bf16.gmra.mrb[0].mxu0 %v2902
        %v4065 = vpop.f32.mrb[0].mxu0
        %v4066 = vadd.f32 %v3993, %v4065
        %v4067 = vpop.f32.mrb[0].mxu0
        %v4068 = vadd.f32 %v3995, %v4067
        %v4069 = vpop.f32.mrb[0].mxu0
        %v4070 = vadd.f32 %v3997, %v4069
        %v4071 = vpop.f32.mrb[0].mxu0
        %v4072 = vadd.f32 %v3999, %v4071
        %4073 = vmatprep.mubr.bf16.mxu0 %v2912
        %4074 = vmatmul.mubr.bf16.gmra.mrb[0].mxu0 %v2911
        %v4075 = vpop.f32.mrb[0].mxu0
        %v4076 = vadd.f32 %v4003, %v4075
        %v4077 = vpop.f32.mrb[0].mxu0
        %v4078 = vadd.f32 %v4005, %v4077
        %v4079 = vpop.f32.mrb[0].mxu0
        %v4080 = vadd.f32 %v4007, %v4079
        %v4081 = vpop.f32.mrb[0].mxu0
        %v4082 = vadd.f32 %v4009, %v4081
        %4083 = vdwg.mxu0
        %4084 = vmatprep.subr.bf16.mxu0 %v3633
        %4085 = vmatpush1.bf16.msra.mxu0 %v3632
        %4086 = vmatprep.subr.bf16.mxu0 %v3635
        %4087 = vmatpush1.bf16.msra.mxu0 %v3634
        %4088 = vmatprep.subr.bf16.mxu0 %v3637
        %4089 = vmatpush1.bf16.msra.mxu0 %v3636
        %4090 = vmatprep.subr.bf16.mxu0 %v3639
        %4091 = vmatpush1.bf16.msra.mxu0 %v3638
        %4092 = vmatprep.subr.bf16.mxu0 %v3641
        %4093 = vmatpush1.bf16.msra.mxu0 %v3640
        %4094 = vmatprep.subr.bf16.mxu0 %v3643
        %4095 = vmatpush1.bf16.msra.mxu0 %v3642
        %4096 = vmatprep.subr.bf16.mxu0 %v3645
        %4097 = vmatpush1.bf16.msra.mxu0 %v3644
        %4098 = vmatprep.subr.bf16.mxu0 %v3647
        %4099 = vmatpush1.bf16.msra.mxu0 %v3646
        %4100 = vmatprep.subr.bf16.mxu0 0
        %4101 = vmatpush1.bf16.msra.mxu0 0
        %4102 = vmatprep.subr.bf16.mxu0 0
        %4103 = vmatpush1.bf16.msra.mxu0 0
        %4104 = vmatprep.subr.bf16.mxu0 0
        %4105 = vmatpush1.bf16.msra.mxu0 0
        %4106 = vmatprep.subr.bf16.mxu0 0
        %4107 = vmatpush1.bf16.msra.mxu0 0
        %4108 = vmatprep.subr.bf16.mxu0 0
        %4109 = vmatpush1.bf16.msra.mxu0 0
        %4110 = vmatprep.subr.bf16.mxu0 0
        %4111 = vmatpush1.bf16.msra.mxu0 0
        %4112 = vmatprep.subr.bf16.mxu0 0
        %4113 = vmatpush1.bf16.msra.mxu0 0
        %4114 = vmatprep.subr.bf16.mxu0 0
        %4115 = vmatpush1.bf16.msra.mxu0 0
        %4116 = vmatprep.mubr.bf16.mxu0 0
        %4117 = vmatmul.mubr.bf16.gmra.mrb[0].mxu0 %v2886
        %v4118 = vpop.f32.mrb[0].mxu0
        %v4119 = vadd.f32 %v4046, %v4118
        %v4120 = vpop.f32.mrb[0].mxu0
        %v4121 = vadd.f32 %v4048, %v4120
        %v4122 = vpop.f32.mrb[0].mxu0
        %v4123 = vadd.f32 %v4050, %v4122
        %v4124 = vpop.f32.mrb[0].mxu0
        %v4125 = vadd.f32 %v4052, %v4124
        %4126 = vmatprep.mubr.bf16.mxu0 0
        %4127 = vmatmul.mubr.bf16.gmra.mrb[0].mxu0 %v2895
        %v4128 = vpop.f32.mrb[0].mxu0
        %v4129 = vadd.f32 %v4056, %v4128
        %v4130 = vpop.f32.mrb[0].mxu0
        %v4131 = vadd.f32 %v4058, %v4130
        %v4132 = vpop.f32.mrb[0].mxu0
        %v4133 = vadd.f32 %v4060, %v4132
        %v4134 = vpop.f32.mrb[0].mxu0
        %v4135 = vadd.f32 %v4062, %v4134
        %4136 = vmatprep.mubr.bf16.mxu0 0
        %4137 = vmatmul.mubr.bf16.gmra.mrb[0].mxu0 %v2904
        %v4138 = vpop.f32.mrb[0].mxu0
        %v4139 = vadd.f32 %v4066, %v4138
        %v4140 = vpop.f32.mrb[0].mxu0
        %v4141 = vadd.f32 %v4068, %v4140
        %v4142 = vpop.f32.mrb[0].mxu0
        %v4143 = vadd.f32 %v4070, %v4142
        %v4144 = vpop.f32.mrb[0].mxu0
        %v4145 = vadd.f32 %v4072, %v4144
        %4146 = vmatprep.mubr.bf16.mxu0 0
        %4147 = vmatmul.mubr.bf16.gmra.mrb[0].mxu0 %v2913
        %v4148 = vpop.f32.mrb[0].mxu0
        %v4149 = vadd.f32 %v4076, %v4148
        %v4150 = vpop.f32.mrb[0].mxu0
        %v4151 = vadd.f32 %v4078, %v4150
        %v4152 = vpop.f32.mrb[0].mxu0
        %v4153 = vadd.f32 %v4080, %v4152
        %v4154 = vpop.f32.mrb[0].mxu0
        %v4155 = vadd.f32 %v4082, %v4154
        %4156 = vdwg.mxu0
        %v4157 = vmax.f32 %v4119, 0.0
        %v4158 = vmax.f32 %v4121, 0.0
        %v4159 = vmax.f32 %v4123, 0.0
        %v4160 = vmax.f32 %v4125, 0.0
        %v4161 = vmax.f32 %v4129, 0.0
        %v4162 = vmax.f32 %v4131, 0.0
        %v4163 = vmax.f32 %v4133, 0.0
        %v4164 = vmax.f32 %v4135, 0.0
        %v4165 = vmax.f32 %v4139, 0.0
        %v4166 = vmax.f32 %v4141, 0.0
        %v4167 = vmax.f32 %v4143, 0.0
        %v4168 = vmax.f32 %v4145, 0.0
        %v4169 = vmax.f32 %v4149, 0.0
        %v4170 = vmax.f32 %v4151, 0.0
        %v4171 = vmax.f32 %v4153, 0.0
        %v4172 = vmax.f32 %v4155, 0.0
        %v4173 = vpack.c.bf16 %v4159, %v4157
        %v4174 = vpack.c.bf16 %v4160, %v4158
        %v4175 = vpack.c.bf16 %v4163, %v4161
        %v4176 = vpack.c.bf16 %v4164, %v4162
        %v4177 = vpack.c.bf16 %v4167, %v4165
        %v4178 = vpack.c.bf16 %v4168, %v4166
        %v4179 = vpack.c.bf16 %v4171, %v4169
        %v4180 = vpack.c.bf16 %v4172, %v4170
        %s4181 = scalar_lea.vmem [#allocation12], 512
        %v4182 = vld [vmem:[%s4181] sm:$0xff]
        %v4183 = vld [vmem:[%s4181 + $0x8] sm:$0xff]
        %v4184 = vld [vmem:[%s4181 + $0x10] sm:$0xff]
        %v4185 = vld [vmem:[%s4181 + $0x18] sm:$0xff]
        %v4186 = vld [vmem:[%s4181 + $0x20] sm:$0xff]
        %v4187 = vld [vmem:[%s4181 + $0x28] sm:$0xff]
        %v4188 = vld [vmem:[%s4181 + $0x30] sm:$0xff]
        %v4189 = vld [vmem:[%s4181 + $0x38] sm:$0xff]
        %v4190 = vld [vmem:[%s4181 + $0x40] sm:$0xff]
        %v4191 = vld [vmem:[%s4181 + $0x48] sm:$0xff]
        %v4192 = vld [vmem:[%s4181 + $0x50] sm:$0xff]
        %v4193 = vld [vmem:[%s4181 + $0x58] sm:$0xff]
        %v4194 = vld [vmem:[%s4181 + $0x60] sm:$0xff]
        %v4195 = vld [vmem:[%s4181 + $0x68] sm:$0xff]
        %v4196 = vld [vmem:[%s4181 + $0x70] sm:$0xff]
        %v4197 = vld [vmem:[%s4181 + $0x78] sm:$0xff]
        %v4198 = vld [vmem:[%s4181 + $0x80] sm:$0xff]
        %v4199 = vld [vmem:[%s4181 + $0x88] sm:$0xff]
        %v4200 = vld [vmem:[%s4181 + $0x90] sm:$0xff]
        %v4201 = vld [vmem:[%s4181 + $0x98] sm:$0xff]
        %v4202 = vld [vmem:[%s4181 + $0xa0] sm:$0xff]
        %v4203 = vld [vmem:[%s4181 + $0xa8] sm:$0xff]
        %v4204 = vld [vmem:[%s4181 + $0xb0] sm:$0xff]
        %v4205 = vld [vmem:[%s4181 + $0xb8] sm:$0xff]
        %v4206 = vld [vmem:[%s4181 + $0xc0] sm:$0xff]
        %v4207 = vld [vmem:[%s4181 + $0xc8] sm:$0xff]
        %v4208 = vld [vmem:[%s4181 + $0xd0] sm:$0xff]
        %v4209 = vld [vmem:[%s4181 + $0xd8] sm:$0xff]
        %v4210 = vld [vmem:[%s4181 + $0xe0] sm:$0xff]
        %v4211 = vld [vmem:[%s4181 + $0xe8] sm:$0xff]
        %v4212 = vld [vmem:[%s4181 + $0xf0] sm:$0xff]
        %v4213 = vld [vmem:[%s4181 + $0xf8] sm:$0xff]
        %v4246 = vunpack.c.l.b16 %v4182
        %v4247 = vunpack.c.h.b16 %v4182
        %v4248 = vunpack.c.l.b16 %v4183
        %v4249 = vunpack.c.h.b16 %v4183
        %v4250 = vunpack.c.l.b16 %v4184
        %v4251 = vunpack.c.h.b16 %v4184
        %v4252 = vunpack.c.l.b16 %v4185
        %v4253 = vunpack.c.h.b16 %v4185
        %v4254 = vunpack.c.l.b16 %v4186
        %v4255 = vunpack.c.h.b16 %v4186
        %v4256 = vunpack.c.l.b16 %v4187
        %v4257 = vunpack.c.h.b16 %v4187
        %v4258 = vunpack.c.l.b16 %v4188
        %v4259 = vunpack.c.h.b16 %v4188
        %v4260 = vunpack.c.l.b16 %v4189
        %v4261 = vunpack.c.h.b16 %v4189
        %v4262 = vunpack.c.l.b16 %v4190
        %v4263 = vunpack.c.h.b16 %v4190
        %v4264 = vunpack.c.l.b16 %v4191
        %v4265 = vunpack.c.h.b16 %v4191
        %v4266 = vunpack.c.l.b16 %v4192
        %v4267 = vunpack.c.h.b16 %v4192
        %v4268 = vunpack.c.l.b16 %v4193
        %v4269 = vunpack.c.h.b16 %v4193
        %v4270 = vunpack.c.l.b16 %v4194
        %v4271 = vunpack.c.h.b16 %v4194
        %v4272 = vunpack.c.l.b16 %v4195
        %v4273 = vunpack.c.h.b16 %v4195
        %v4274 = vunpack.c.l.b16 %v4196
        %v4275 = vunpack.c.h.b16 %v4196
        %v4276 = vunpack.c.l.b16 %v4197
        %v4277 = vunpack.c.h.b16 %v4197
        %v4278 = vunpack.c.l.b16 %v4198
        %v4279 = vunpack.c.h.b16 %v4198
        %v4280 = vunpack.c.l.b16 %v4199
        %v4281 = vunpack.c.h.b16 %v4199
        %v4282 = vunpack.c.l.b16 %v4200
        %v4283 = vunpack.c.h.b16 %v4200
        %v4284 = vunpack.c.l.b16 %v4201
        %v4285 = vunpack.c.h.b16 %v4201
        %v4286 = vunpack.c.l.b16 %v4202
        %v4287 = vunpack.c.h.b16 %v4202
        %v4288 = vunpack.c.l.b16 %v4203
        %v4289 = vunpack.c.h.b16 %v4203
        %v4290 = vunpack.c.l.b16 %v4204
        %v4291 = vunpack.c.h.b16 %v4204
        %v4292 = vunpack.c.l.b16 %v4205
        %v4293 = vunpack.c.h.b16 %v4205
        %v4294 = vunpack.c.l.b16 %v4206
        %v4295 = vunpack.c.h.b16 %v4206
        %v4296 = vunpack.c.l.b16 %v4207
        %v4297 = vunpack.c.h.b16 %v4207
        %v4298 = vunpack.c.l.b16 %v4208
        %v4299 = vunpack.c.h.b16 %v4208
        %v4300 = vunpack.c.l.b16 %v4209
        %v4301 = vunpack.c.h.b16 %v4209
        %v4302 = vunpack.c.l.b16 %v4210
        %v4303 = vunpack.c.h.b16 %v4210
        %v4304 = vunpack.c.l.b16 %v4211
        %v4305 = vunpack.c.h.b16 %v4211
        %v4306 = vunpack.c.l.b16 %v4212
        %v4307 = vunpack.c.h.b16 %v4212
        %v4308 = vunpack.c.l.b16 %v4213
        %v4309 = vunpack.c.h.b16 %v4213
        %v4310 = vpack.c.b16 %v4248, %v4246
        %v4311 = vpack.c.b16 %v4249, %v4247
        %v4312 = vpack.c.b16 %v4252, %v4250
        %v4313 = vpack.c.b16 %v4253, %v4251
        %v4314 = vpack.c.b16 %v4256, %v4254
        %v4315 = vpack.c.b16 %v4257, %v4255
        %v4316 = vpack.c.b16 %v4260, %v4258
        %v4317 = vpack.c.b16 %v4261, %v4259
        %v4318 = vpack.c.b16 %v4264, %v4262
        %v4319 = vpack.c.b16 %v4265, %v4263
        %v4320 = vpack.c.b16 %v4268, %v4266
        %v4321 = vpack.c.b16 %v4269, %v4267
        %v4322 = vpack.c.b16 %v4272, %v4270
        %v4323 = vpack.c.b16 %v4273, %v4271
        %v4324 = vpack.c.b16 %v4276, %v4274
        %v4325 = vpack.c.b16 %v4277, %v4275
        %v4326 = vpack.c.b16 %v4280, %v4278
        %v4327 = vpack.c.b16 %v4281, %v4279
        %v4328 = vpack.c.b16 %v4284, %v4282
        %v4329 = vpack.c.b16 %v4285, %v4283
        %v4330 = vpack.c.b16 %v4288, %v4286
        %v4331 = vpack.c.b16 %v4289, %v4287
        %v4332 = vpack.c.b16 %v4292, %v4290
        %v4333 = vpack.c.b16 %v4293, %v4291
        %v4334 = vpack.c.b16 %v4296, %v4294
        %v4335 = vpack.c.b16 %v4297, %v4295
        %v4336 = vpack.c.b16 %v4300, %v4298
        %v4337 = vpack.c.b16 %v4301, %v4299
        %v4338 = vpack.c.b16 %v4304, %v4302
        %v4339 = vpack.c.b16 %v4305, %v4303
        %v4340 = vpack.c.b16 %v4308, %v4306
        %v4341 = vpack.c.b16 %v4309, %v4307
        %4374 = vmatprep.subr.bf16.mxu0 %v4311
        %4375 = vmatpush1.bf16.msra.mxu0 %v4310
        %4376 = vmatprep.subr.bf16.mxu0 %v4313
        %4377 = vmatpush1.bf16.msra.mxu0 %v4312
        %4378 = vmatprep.subr.bf16.mxu0 %v4315
        %4379 = vmatpush1.bf16.msra.mxu0 %v4314
        %4380 = vmatprep.subr.bf16.mxu0 %v4317
        %4381 = vmatpush1.bf16.msra.mxu0 %v4316
        %4382 = vmatprep.subr.bf16.mxu0 %v4319
        %4383 = vmatpush1.bf16.msra.mxu0 %v4318
        %4384 = vmatprep.subr.bf16.mxu0 %v4321
        %4385 = vmatpush1.bf16.msra.mxu0 %v4320
        %4386 = vmatprep.subr.bf16.mxu0 %v4323
        %4387 = vmatpush1.bf16.msra.mxu0 %v4322
        %4388 = vmatprep.subr.bf16.mxu0 %v4325
        %4389 = vmatpush1.bf16.msra.mxu0 %v4324
        %4390 = vmatprep.subr.bf16.mxu0 %v4327
        %4391 = vmatpush1.bf16.msra.mxu0 %v4326
        %4392 = vmatprep.subr.bf16.mxu0 %v4329
        %4393 = vmatpush1.bf16.msra.mxu0 %v4328
        %4394 = vmatprep.subr.bf16.mxu0 %v4331
        %4395 = vmatpush1.bf16.msra.mxu0 %v4330
        %4396 = vmatprep.subr.bf16.mxu0 %v4333
        %4397 = vmatpush1.bf16.msra.mxu0 %v4332
        %4398 = vmatprep.subr.bf16.mxu0 %v4335
        %4399 = vmatpush1.bf16.msra.mxu0 %v4334
        %4400 = vmatprep.subr.bf16.mxu0 %v4337
        %4401 = vmatpush1.bf16.msra.mxu0 %v4336
        %4402 = vmatprep.subr.bf16.mxu0 %v4339
        %4403 = vmatpush1.bf16.msra.mxu0 %v4338
        %4404 = vmatprep.subr.bf16.mxu0 %v4341
        %4405 = vmatpush1.bf16.msra.mxu0 %v4340
        %4406 = vmatprep.mubr.bf16.mxu0 %v4174
        %4407 = vmatmul.mubr.bf16.gmra.mrb[0].mxu0 %v4173
        %v4408 = vpop.f32.mrb[0].mxu0
        %v4409 = vadd.f32 0.0, %v4408
        %v4410 = vpop.f32.mrb[0].mxu0
        %v4411 = vadd.f32 0.0, %v4410
        %v4412 = vpop.f32.mrb[0].mxu0
        %v4413 = vadd.f32 0.0, %v4412
        %v4414 = vpop.f32.mrb[0].mxu0
        %v4415 = vadd.f32 0.0, %v4414
        %4416 = vmatprep.mubr.bf16.mxu0 %v4176
        %4417 = vmatmul.mubr.bf16.gmra.mrb[0].mxu0 %v4175
        %v4418 = vpop.f32.mrb[0].mxu0
        %v4419 = vadd.f32 0.0, %v4418
        %v4420 = vpop.f32.mrb[0].mxu0
        %v4421 = vadd.f32 0.0, %v4420
        %v4422 = vpop.f32.mrb[0].mxu0
        %v4423 = vadd.f32 0.0, %v4422
        %v4424 = vpop.f32.mrb[0].mxu0
        %v4425 = vadd.f32 0.0, %v4424
        %4426 = vmatprep.mubr.bf16.mxu0 %v4178
        %4427 = vmatmul.mubr.bf16.gmra.mrb[0].mxu0 %v4177
        %v4428 = vpop.f32.mrb[0].mxu0
        %v4429 = vadd.f32 0.0, %v4428
        %v4430 = vpop.f32.mrb[0].mxu0
        %v4431 = vadd.f32 0.0, %v4430
        %v4432 = vpop.f32.mrb[0].mxu0
        %v4433 = vadd.f32 0.0, %v4432
        %v4434 = vpop.f32.mrb[0].mxu0
        %v4435 = vadd.f32 0.0, %v4434
        %4436 = vmatprep.mubr.bf16.mxu0 %v4180
        %4437 = vmatmul.mubr.bf16.gmra.mrb[0].mxu0 %v4179
        %v4438 = vpop.f32.mrb[0].mxu0
        %v4439 = vadd.f32 0.0, %v4438
        %v4440 = vpop.f32.mrb[0].mxu0
        %v4441 = vadd.f32 0.0, %v4440
        %v4442 = vpop.f32.mrb[0].mxu0
        %v4443 = vadd.f32 0.0, %v4442
        %v4444 = vpop.f32.mrb[0].mxu0
        %v4445 = vadd.f32 0.0, %v4444
        %4446 = vdwg.mxu0
        %v4447 = vadd.f32 %v2622, %v4409
        %v4448 = vadd.f32 %v2624, %v4411
        %v4449 = vadd.f32 %v2626, %v4413
        %v4450 = vadd.f32 %v2628, %v4415
        %v4451 = vadd.f32 %v2632, %v4419
        %v4452 = vadd.f32 %v2634, %v4421
        %v4453 = vadd.f32 %v2636, %v4423
        %v4454 = vadd.f32 %v2638, %v4425
        %v4455 = vadd.f32 %v2642, %v4429
        %v4456 = vadd.f32 %v2644, %v4431
        %v4457 = vadd.f32 %v2646, %v4433
        %v4458 = vadd.f32 %v2648, %v4435
        %v4459 = vadd.f32 %v2652, %v4439
        %v4460 = vadd.f32 %v2654, %v4441
        %v4461 = vadd.f32 %v2656, %v4443
        %v4462 = vadd.f32 %v2658, %v4445
        %v4463 = vld [vmem:[#allocation2] sm:$0xff]
        %v4464 = vld [vmem:[#allocation2 + $0x10] sm:$0xff]
        %v4465 = vld [vmem:[#allocation2 + $0x20] sm:$0xff]
        %v4466 = vld [vmem:[#allocation2 + $0x30] sm:$0xff]
        %v4467 = vld [vmem:[#allocation2 + $0x40] sm:$0xff]
        %v4468 = vld [vmem:[#allocation2 + $0x50] sm:$0xff]
        %v4469 = vld [vmem:[#allocation2 + $0x60] sm:$0xff]
        %v4470 = vld [vmem:[#allocation2 + $0x70] sm:$0xff]
        %4471 = vst [vmem:[#allocation3] sm:$0xff] %v4463
        %4472 = vst [vmem:[#allocation3 + $0x48] sm:$0xff] %v4464
        %4473 = vst [vmem:[#allocation3 + $0x90] sm:$0xff] %v4465
        %4474 = vst [vmem:[#allocation3 + $0xd8] sm:$0xff] %v4466
        %4475 = vst [vmem:[#allocation3 + $0x120] sm:$0xff] %v4467
        %4476 = vst [vmem:[#allocation3 + $0x168] sm:$0xff] %v4468
        %4477 = vst [vmem:[#allocation3 + $0x1b0] sm:$0xff] %v4469
        %4478 = vst [vmem:[#allocation3 + $0x1f8] sm:$0xff] %v4470
        %v4479 = vld [vmem:[#allocation2 + $0x3] sm:$0xff]
        %v4480 = vld [vmem:[#allocation2 + $0x13] sm:$0xff]
        %v4481 = vld [vmem:[#allocation2 + $0x23] sm:$0xff]
        %v4482 = vld [vmem:[#allocation2 + $0x33] sm:$0xff]
        %v4483 = vld [vmem:[#allocation2 + $0x43] sm:$0xff]
        %v4484 = vld [vmem:[#allocation2 + $0x53] sm:$0xff]
        %v4485 = vld [vmem:[#allocation2 + $0x63] sm:$0xff]
        %v4486 = vld [vmem:[#allocation2 + $0x73] sm:$0xff]
        %4487 = vst [vmem:[#allocation3 + $0x8] sm:$0xff] %v4479
        %4488 = vst [vmem:[#allocation3 + $0x50] sm:$0xff] %v4480
        %4489 = vst [vmem:[#allocation3 + $0x98] sm:$0xff] %v4481
        %4490 = vst [vmem:[#allocation3 + $0xe0] sm:$0xff] %v4482
        %4491 = vst [vmem:[#allocation3 + $0x128] sm:$0xff] %v4483
        %4492 = vst [vmem:[#allocation3 + $0x170] sm:$0xff] %v4484
        %4493 = vst [vmem:[#allocation3 + $0x1b8] sm:$0xff] %v4485
        %4494 = vst [vmem:[#allocation3 + $0x200] sm:$0xff] %v4486
        %v4495 = vld [vmem:[#allocation2 + $0x6] sm:$0xff]
        %v4496 = vld [vmem:[#allocation2 + $0x16] sm:$0xff]
        %v4497 = vld [vmem:[#allocation2 + $0x26] sm:$0xff]
        %v4498 = vld [vmem:[#allocation2 + $0x36] sm:$0xff]
        %v4499 = vld [vmem:[#allocation2 + $0x46] sm:$0xff]
        %v4500 = vld [vmem:[#allocation2 + $0x56] sm:$0xff]
        %v4501 = vld [vmem:[#allocation2 + $0x66] sm:$0xff]
        %v4502 = vld [vmem:[#allocation2 + $0x76] sm:$0xff]
        %4503 = vst [vmem:[#allocation3 + $0x10] sm:$0xff] %v4495
        %4504 = vst [vmem:[#allocation3 + $0x58] sm:$0xff] %v4496
        %4505 = vst [vmem:[#allocation3 + $0xa0] sm:$0xff] %v4497
        %4506 = vst [vmem:[#allocation3 + $0xe8] sm:$0xff] %v4498
        %4507 = vst [vmem:[#allocation3 + $0x130] sm:$0xff] %v4499
        %4508 = vst [vmem:[#allocation3 + $0x178] sm:$0xff] %v4500
        %4509 = vst [vmem:[#allocation3 + $0x1c0] sm:$0xff] %v4501
        %4510 = vst [vmem:[#allocation3 + $0x208] sm:$0xff] %v4502
        %v4511 = vld [vmem:[%s391] sm:$0xff]
        %v4512 = vld [vmem:[%s391 + $0x10] sm:$0xff]
        %v4513 = vld [vmem:[%s391 + $0x20] sm:$0xff]
        %v4514 = vld [vmem:[%s391 + $0x30] sm:$0xff]
        %v4515 = vld [vmem:[%s391 + $0x40] sm:$0xff]
        %v4516 = vld [vmem:[%s391 + $0x50] sm:$0xff]
        %v4517 = vld [vmem:[%s391 + $0x60] sm:$0xff]
        %v4518 = vld [vmem:[%s391 + $0x70] sm:$0xff]
        %4519 = vst [vmem:[#allocation3 + $0x18] sm:$0xff] %v4511
        %4520 = vst [vmem:[#allocation3 + $0x60] sm:$0xff] %v4512
        %4521 = vst [vmem:[#allocation3 + $0xa8] sm:$0xff] %v4513
        %4522 = vst [vmem:[#allocation3 + $0xf0] sm:$0xff] %v4514
        %4523 = vst [vmem:[#allocation3 + $0x138] sm:$0xff] %v4515
        %4524 = vst [vmem:[#allocation3 + $0x180] sm:$0xff] %v4516
        %4525 = vst [vmem:[#allocation3 + $0x1c8] sm:$0xff] %v4517
        %4526 = vst [vmem:[#allocation3 + $0x210] sm:$0xff] %v4518
        %v4527 = vld [vmem:[%s391 + $0x3] sm:$0xff]
        %v4528 = vld [vmem:[%s391 + $0x13] sm:$0xff]
        %v4529 = vld [vmem:[%s391 + $0x23] sm:$0xff]
        %v4530 = vld [vmem:[%s391 + $0x33] sm:$0xff]
        %v4531 = vld [vmem:[%s391 + $0x43] sm:$0xff]
        %v4532 = vld [vmem:[%s391 + $0x53] sm:$0xff]
        %v4533 = vld [vmem:[%s391 + $0x63] sm:$0xff]
        %v4534 = vld [vmem:[%s391 + $0x73] sm:$0xff]
        %4535 = vst [vmem:[#allocation3 + $0x20] sm:$0xff] %v4527
        %4536 = vst [vmem:[#allocation3 + $0x68] sm:$0xff] %v4528
        %4537 = vst [vmem:[#allocation3 + $0xb0] sm:$0xff] %v4529
        %4538 = vst [vmem:[#allocation3 + $0xf8] sm:$0xff] %v4530
        %4539 = vst [vmem:[#allocation3 + $0x140] sm:$0xff] %v4531
        %4540 = vst [vmem:[#allocation3 + $0x188] sm:$0xff] %v4532
        %4541 = vst [vmem:[#allocation3 + $0x1d0] sm:$0xff] %v4533
        %4542 = vst [vmem:[#allocation3 + $0x218] sm:$0xff] %v4534
        %v4543 = vld [vmem:[%s391 + $0x6] sm:$0xff]
        %v4544 = vld [vmem:[%s391 + $0x16] sm:$0xff]
        %v4545 = vld [vmem:[%s391 + $0x26] sm:$0xff]
        %v4546 = vld [vmem:[%s391 + $0x36] sm:$0xff]
        %v4547 = vld [vmem:[%s391 + $0x46] sm:$0xff]
        %v4548 = vld [vmem:[%s391 + $0x56] sm:$0xff]
        %v4549 = vld [vmem:[%s391 + $0x66] sm:$0xff]
        %v4550 = vld [vmem:[%s391 + $0x76] sm:$0xff]
        %4551 = vst [vmem:[#allocation3 + $0x28] sm:$0xff] %v4543
        %4552 = vst [vmem:[#allocation3 + $0x70] sm:$0xff] %v4544
        %4553 = vst [vmem:[#allocation3 + $0xb8] sm:$0xff] %v4545
        %4554 = vst [vmem:[#allocation3 + $0x100] sm:$0xff] %v4546
        %4555 = vst [vmem:[#allocation3 + $0x148] sm:$0xff] %v4547
        %4556 = vst [vmem:[#allocation3 + $0x190] sm:$0xff] %v4548
        %4557 = vst [vmem:[#allocation3 + $0x1d8] sm:$0xff] %v4549
        %4558 = vst [vmem:[#allocation3 + $0x220] sm:$0xff] %v4550
        %s4559 = scalar_lea.vmem [#allocation2], 96
        %v4560 = vld [vmem:[%s4559] sm:$0xff]
        %v4561 = vld [vmem:[%s4559 + $0x10] sm:$0xff]
        %v4562 = vld [vmem:[%s4559 + $0x20] sm:$0xff]
        %v4563 = vld [vmem:[%s4559 + $0x30] sm:$0xff]
        %v4564 = vld [vmem:[%s4559 + $0x40] sm:$0xff]
        %v4565 = vld [vmem:[%s4559 + $0x50] sm:$0xff]
        %v4566 = vld [vmem:[%s4559 + $0x60] sm:$0xff]
        %v4567 = vld [vmem:[%s4559 + $0x70] sm:$0xff]
        %4568 = vst [vmem:[#allocation3 + $0x30] sm:$0xff] %v4560
        %4569 = vst [vmem:[#allocation3 + $0x78] sm:$0xff] %v4561
        %4570 = vst [vmem:[#allocation3 + $0xc0] sm:$0xff] %v4562
        %4571 = vst [vmem:[#allocation3 + $0x108] sm:$0xff] %v4563
        %4572 = vst [vmem:[#allocation3 + $0x150] sm:$0xff] %v4564
        %4573 = vst [vmem:[#allocation3 + $0x198] sm:$0xff] %v4565
        %4574 = vst [vmem:[#allocation3 + $0x1e0] sm:$0xff] %v4566
        %4575 = vst [vmem:[#allocation3 + $0x228] sm:$0xff] %v4567
        %v4576 = vld [vmem:[%s4559 + $0x3] sm:$0xff]
        %v4577 = vld [vmem:[%s4559 + $0x13] sm:$0xff]
        %v4578 = vld [vmem:[%s4559 + $0x23] sm:$0xff]
        %v4579 = vld [vmem:[%s4559 + $0x33] sm:$0xff]
        %v4580 = vld [vmem:[%s4559 + $0x43] sm:$0xff]
        %v4581 = vld [vmem:[%s4559 + $0x53] sm:$0xff]
        %v4582 = vld [vmem:[%s4559 + $0x63] sm:$0xff]
        %v4583 = vld [vmem:[%s4559 + $0x73] sm:$0xff]
        %4584 = vst [vmem:[#allocation3 + $0x38] sm:$0xff] %v4576
        %4585 = vst [vmem:[#allocation3 + $0x80] sm:$0xff] %v4577
        %4586 = vst [vmem:[#allocation3 + $0xc8] sm:$0xff] %v4578
        %4587 = vst [vmem:[#allocation3 + $0x110] sm:$0xff] %v4579
        %4588 = vst [vmem:[#allocation3 + $0x158] sm:$0xff] %v4580
        %4589 = vst [vmem:[#allocation3 + $0x1a0] sm:$0xff] %v4581
        %4590 = vst [vmem:[#allocation3 + $0x1e8] sm:$0xff] %v4582
        %4591 = vst [vmem:[#allocation3 + $0x230] sm:$0xff] %v4583
        %v4592 = vld [vmem:[%s4559 + $0x6] sm:$0xff]
        %v4593 = vld [vmem:[%s4559 + $0x16] sm:$0xff]
        %v4594 = vld [vmem:[%s4559 + $0x26] sm:$0xff]
        %v4595 = vld [vmem:[%s4559 + $0x36] sm:$0xff]
        %v4596 = vld [vmem:[%s4559 + $0x46] sm:$0xff]
        %v4597 = vld [vmem:[%s4559 + $0x56] sm:$0xff]
        %v4598 = vld [vmem:[%s4559 + $0x66] sm:$0xff]
        %v4599 = vld [vmem:[%s4559 + $0x76] sm:$0xff]
        %4600 = vst [vmem:[#allocation3 + $0x40] sm:$0xff] %v4592
        %4601 = vst [vmem:[#allocation3 + $0x88] sm:$0xff] %v4593
        %4602 = vst [vmem:[#allocation3 + $0xd0] sm:$0xff] %v4594
        %4603 = vst [vmem:[#allocation3 + $0x118] sm:$0xff] %v4595
        %4604 = vst [vmem:[#allocation3 + $0x160] sm:$0xff] %v4596
        %4605 = vst [vmem:[#allocation3 + $0x1a8] sm:$0xff] %v4597
        %4606 = vst [vmem:[#allocation3 + $0x1f0] sm:$0xff] %v4598
        %4607 = vst [vmem:[#allocation3 + $0x238] sm:$0xff] %v4599
        %v4608 = vld [vmem:[#allocation3] sm:$0xff]
        %v4609 = vld [vmem:[#allocation3 + $0x8] sm:$0xff]
        %v4610 = vld [vmem:[#allocation3 + $0x10] sm:$0xff]
        %v4611 = vld [vmem:[#allocation3 + $0x18] sm:$0xff]
        %v4612 = vld [vmem:[#allocation3 + $0x20] sm:$0xff]
        %v4613 = vld [vmem:[#allocation3 + $0x28] sm:$0xff]
        %v4614 = vld [vmem:[#allocation3 + $0x30] sm:$0xff]
        %v4615 = vld [vmem:[#allocation3 + $0x38] sm:$0xff]
        %v4616 = vld [vmem:[#allocation3 + $0x40] sm:$0xff]
        %v4617 = vld [vmem:[#allocation3 + $0x48] sm:$0xff]
        %v4618 = vld [vmem:[#allocation3 + $0x50] sm:$0xff]
        %v4619 = vld [vmem:[#allocation3 + $0x58] sm:$0xff]
        %v4620 = vld [vmem:[#allocation3 + $0x60] sm:$0xff]
        %v4621 = vld [vmem:[#allocation3 + $0x68] sm:$0xff]
        %v4622 = vld [vmem:[#allocation3 + $0x70] sm:$0xff]
        %v4623 = vld [vmem:[#allocation3 + $0x78] sm:$0xff]
        %v4624 = vld [vmem:[#allocation3 + $0x80] sm:$0xff]
        %v4625 = vld [vmem:[#allocation3 + $0x88] sm:$0xff]
        %v4626 = vld [vmem:[#allocation3 + $0x90] sm:$0xff]
        %v4627 = vld [vmem:[#allocation3 + $0x98] sm:$0xff]
        %v4628 = vld [vmem:[#allocation3 + $0xa0] sm:$0xff]
        %v4629 = vld [vmem:[#allocation3 + $0xa8] sm:$0xff]
        %v4630 = vld [vmem:[#allocation3 + $0xb0] sm:$0xff]
        %v4631 = vld [vmem:[#allocation3 + $0xb8] sm:$0xff]
        %v4632 = vld [vmem:[#allocation3 + $0xc0] sm:$0xff]
        %v4633 = vld [vmem:[#allocation3 + $0xc8] sm:$0xff]
        %v4634 = vld [vmem:[#allocation3 + $0xd0] sm:$0xff]
        %v4635 = vld [vmem:[#allocation3 + $0xd8] sm:$0xff]
        %v4636 = vld [vmem:[#allocation3 + $0xe0] sm:$0xff]
        %v4637 = vld [vmem:[#allocation3 + $0xe8] sm:$0xff]
        %v4638 = vld [vmem:[#allocation3 + $0xf0] sm:$0xff]
        %v4639 = vld [vmem:[#allocation3 + $0xf8] sm:$0xff]
        %v4640 = vld [vmem:[#allocation3 + $0x100] sm:$0xff]
        %v4641 = vld [vmem:[#allocation3 + $0x108] sm:$0xff]
        %v4642 = vld [vmem:[#allocation3 + $0x110] sm:$0xff]
        %v4643 = vld [vmem:[#allocation3 + $0x118] sm:$0xff]
        %v4644 = vld [vmem:[#allocation3 + $0x120] sm:$0xff]
        %v4645 = vld [vmem:[#allocation3 + $0x128] sm:$0xff]
        %v4646 = vld [vmem:[#allocation3 + $0x130] sm:$0xff]
        %v4647 = vld [vmem:[#allocation3 + $0x138] sm:$0xff]
        %v4648 = vld [vmem:[#allocation3 + $0x140] sm:$0xff]
        %v4649 = vld [vmem:[#allocation3 + $0x148] sm:$0xff]
        %v4650 = vld [vmem:[#allocation3 + $0x150] sm:$0xff]
        %v4651 = vld [vmem:[#allocation3 + $0x158] sm:$0xff]
        %v4652 = vld [vmem:[#allocation3 + $0x160] sm:$0xff]
        %v4653 = vld [vmem:[#allocation3 + $0x168] sm:$0xff]
        %v4654 = vld [vmem:[#allocation3 + $0x170] sm:$0xff]
        %v4655 = vld [vmem:[#allocation3 + $0x178] sm:$0xff]
        %v4656 = vld [vmem:[#allocation3 + $0x180] sm:$0xff]
        %v4657 = vld [vmem:[#allocation3 + $0x188] sm:$0xff]
        %v4658 = vld [vmem:[#allocation3 + $0x190] sm:$0xff]
        %v4659 = vld [vmem:[#allocation3 + $0x198] sm:$0xff]
        %v4660 = vld [vmem:[#allocation3 + $0x1a0] sm:$0xff]
        %v4661 = vld [vmem:[#allocation3 + $0x1a8] sm:$0xff]
        %v4662 = vld [vmem:[#allocation3 + $0x1b0] sm:$0xff]
        %v4663 = vld [vmem:[#allocation3 + $0x1b8] sm:$0xff]
        %v4664 = vld [vmem:[#allocation3 + $0x1c0] sm:$0xff]
        %v4665 = vld [vmem:[#allocation3 + $0x1c8] sm:$0xff]
        %v4666 = vld [vmem:[#allocation3 + $0x1d0] sm:$0xff]
        %v4667 = vld [vmem:[#allocation3 + $0x1d8] sm:$0xff]
        %v4668 = vld [vmem:[#allocation3 + $0x1e0] sm:$0xff]
        %v4669 = vld [vmem:[#allocation3 + $0x1e8] sm:$0xff]
        %v4670 = vld [vmem:[#allocation3 + $0x1f0] sm:$0xff]
        %v4671 = vld [vmem:[#allocation3 + $0x1f8] sm:$0xff]
        %v4672 = vld [vmem:[#allocation3 + $0x200] sm:$0xff]
        %v4673 = vld [vmem:[#allocation3 + $0x208] sm:$0xff]
        %v4674 = vld [vmem:[#allocation3 + $0x210] sm:$0xff]
        %v4675 = vld [vmem:[#allocation3 + $0x218] sm:$0xff]
        %v4676 = vld [vmem:[#allocation3 + $0x220] sm:$0xff]
        %v4677 = vld [vmem:[#allocation3 + $0x228] sm:$0xff]
        %v4678 = vld [vmem:[#allocation3 + $0x230] sm:$0xff]
        %v4679 = vld [vmem:[#allocation3 + $0x238] sm:$0xff]
        %v4680 = vpack.c.bf16 %v4617, %v4608
        %v4681 = vpack.c.bf16 %v4618, %v4609
        %v4682 = vpack.c.bf16 %v4619, %v4610
        %v4683 = vpack.c.bf16 %v4620, %v4611
        %v4684 = vpack.c.bf16 %v4621, %v4612
        %v4685 = vpack.c.bf16 %v4622, %v4613
        %v4686 = vpack.c.bf16 %v4623, %v4614
        %v4687 = vpack.c.bf16 %v4624, %v4615
        %v4688 = vpack.c.bf16 %v4625, %v4616
        %v4689 = vpack.c.bf16 %v4635, %v4626
        %v4690 = vpack.c.bf16 %v4636, %v4627
        %v4691 = vpack.c.bf16 %v4637, %v4628
        %v4692 = vpack.c.bf16 %v4638, %v4629
        %v4693 = vpack.c.bf16 %v4639, %v4630
        %v4694 = vpack.c.bf16 %v4640, %v4631
        %v4695 = vpack.c.bf16 %v4641, %v4632
        %v4696 = vpack.c.bf16 %v4642, %v4633
        %v4697 = vpack.c.bf16 %v4643, %v4634
        %v4698 = vpack.c.bf16 %v4653, %v4644
        %v4699 = vpack.c.bf16 %v4654, %v4645
        %v4700 = vpack.c.bf16 %v4655, %v4646
        %v4701 = vpack.c.bf16 %v4656, %v4647
        %v4702 = vpack.c.bf16 %v4657, %v4648
        %v4703 = vpack.c.bf16 %v4658, %v4649
        %v4704 = vpack.c.bf16 %v4659, %v4650
        %v4705 = vpack.c.bf16 %v4660, %v4651
        %v4706 = vpack.c.bf16 %v4661, %v4652
        %v4707 = vpack.c.bf16 %v4671, %v4662
        %v4708 = vpack.c.bf16 %v4672, %v4663
        %v4709 = vpack.c.bf16 %v4673, %v4664
        %v4710 = vpack.c.bf16 %v4674, %v4665
        %v4711 = vpack.c.bf16 %v4675, %v4666
        %v4712 = vpack.c.bf16 %v4676, %v4667
        %v4713 = vpack.c.bf16 %v4677, %v4668
        %v4714 = vpack.c.bf16 %v4678, %v4669
        %v4715 = vpack.c.bf16 %v4679, %v4670
        %s4716 = scalar_lea.vmem [#allocation9], 2304
        %v4717 = vld [vmem:[%s4716] sm:$0xff]
        %v4718 = vld [vmem:[%s4716 + $0x8] sm:$0xff]
        %v4719 = vld [vmem:[%s4716 + $0x10] sm:$0xff]
        %v4720 = vld [vmem:[%s4716 + $0x18] sm:$0xff]
        %v4721 = vld [vmem:[%s4716 + $0x20] sm:$0xff]
        %v4722 = vld [vmem:[%s4716 + $0x28] sm:$0xff]
        %v4723 = vld [vmem:[%s4716 + $0x30] sm:$0xff]
        %v4724 = vld [vmem:[%s4716 + $0x38] sm:$0xff]
        %v4725 = vld [vmem:[%s4716 + $0x40] sm:$0xff]
        %v4726 = vld [vmem:[%s4716 + $0x48] sm:$0xff]
        %v4727 = vld [vmem:[%s4716 + $0x50] sm:$0xff]
        %v4728 = vld [vmem:[%s4716 + $0x58] sm:$0xff]
        %v4729 = vld [vmem:[%s4716 + $0x60] sm:$0xff]
        %v4730 = vld [vmem:[%s4716 + $0x68] sm:$0xff]
        %v4731 = vld [vmem:[%s4716 + $0x70] sm:$0xff]
        %v4732 = vld [vmem:[%s4716 + $0x78] sm:$0xff]
        %v4733 = vld [vmem:[%s4716 + $0x80] sm:$0xff]
        %v4734 = vld [vmem:[%s4716 + $0x88] sm:$0xff]
        %v4735 = vld [vmem:[%s4716 + $0x90] sm:$0xff]
        %v4736 = vld [vmem:[%s4716 + $0x98] sm:$0xff]
        %v4737 = vld [vmem:[%s4716 + $0xa0] sm:$0xff]
        %v4738 = vld [vmem:[%s4716 + $0xa8] sm:$0xff]
        %v4739 = vld [vmem:[%s4716 + $0xb0] sm:$0xff]
        %v4740 = vld [vmem:[%s4716 + $0xb8] sm:$0xff]
        %v4741 = vld [vmem:[%s4716 + $0xc0] sm:$0xff]
        %v4742 = vld [vmem:[%s4716 + $0xc8] sm:$0xff]
        %v4743 = vld [vmem:[%s4716 + $0xd0] sm:$0xff]
        %v4744 = vld [vmem:[%s4716 + $0xd8] sm:$0xff]
        %v4745 = vld [vmem:[%s4716 + $0xe0] sm:$0xff]
        %v4746 = vld [vmem:[%s4716 + $0xe8] sm:$0xff]
        %v4747 = vld [vmem:[%s4716 + $0xf0] sm:$0xff]
        %v4748 = vld [vmem:[%s4716 + $0xf8] sm:$0xff]
        %v4749 = vld [vmem:[%s4716 + $0x100] sm:$0xff]
        %v4750 = vld [vmem:[%s4716 + $0x108] sm:$0xff]
        %v4751 = vld [vmem:[%s4716 + $0x110] sm:$0xff]
        %v4752 = vld [vmem:[%s4716 + $0x118] sm:$0xff]
        %v4753 = vld [vmem:[%s4716 + $0x120] sm:$0xff]
        %v4754 = vld [vmem:[%s4716 + $0x128] sm:$0xff]
        %v4755 = vld [vmem:[%s4716 + $0x130] sm:$0xff]
        %v4756 = vld [vmem:[%s4716 + $0x138] sm:$0xff]
        %v4757 = vld [vmem:[%s4716 + $0x140] sm:$0xff]
        %v4758 = vld [vmem:[%s4716 + $0x148] sm:$0xff]
        %v4759 = vld [vmem:[%s4716 + $0x150] sm:$0xff]
        %v4760 = vld [vmem:[%s4716 + $0x158] sm:$0xff]
        %v4761 = vld [vmem:[%s4716 + $0x160] sm:$0xff]
        %v4762 = vld [vmem:[%s4716 + $0x168] sm:$0xff]
        %v4763 = vld [vmem:[%s4716 + $0x170] sm:$0xff]
        %v4764 = vld [vmem:[%s4716 + $0x178] sm:$0xff]
        %v4765 = vld [vmem:[%s4716 + $0x180] sm:$0xff]
        %v4766 = vld [vmem:[%s4716 + $0x188] sm:$0xff]
        %v4767 = vld [vmem:[%s4716 + $0x190] sm:$0xff]
        %v4768 = vld [vmem:[%s4716 + $0x198] sm:$0xff]
        %v4769 = vld [vmem:[%s4716 + $0x1a0] sm:$0xff]
        %v4770 = vld [vmem:[%s4716 + $0x1a8] sm:$0xff]
        %v4771 = vld [vmem:[%s4716 + $0x1b0] sm:$0xff]
        %v4772 = vld [vmem:[%s4716 + $0x1b8] sm:$0xff]
        %v4773 = vld [vmem:[%s4716 + $0x1c0] sm:$0xff]
        %v4774 = vld [vmem:[%s4716 + $0x1c8] sm:$0xff]
        %v4775 = vld [vmem:[%s4716 + $0x1d0] sm:$0xff]
        %v4776 = vld [vmem:[%s4716 + $0x1d8] sm:$0xff]
        %v4777 = vld [vmem:[%s4716 + $0x1e0] sm:$0xff]
        %v4778 = vld [vmem:[%s4716 + $0x1e8] sm:$0xff]
        %v4779 = vld [vmem:[%s4716 + $0x1f0] sm:$0xff]
        %v4780 = vld [vmem:[%s4716 + $0x1f8] sm:$0xff]
        %v4781 = vld [vmem:[%s4716 + $0x200] sm:$0xff]
        %v4782 = vld [vmem:[%s4716 + $0x208] sm:$0xff]
        %v4783 = vld [vmem:[%s4716 + $0x210] sm:$0xff]
        %v4784 = vld [vmem:[%s4716 + $0x218] sm:$0xff]
        %v4785 = vld [vmem:[%s4716 + $0x220] sm:$0xff]
        %v4786 = vld [vmem:[%s4716 + $0x228] sm:$0xff]
        %v4787 = vld [vmem:[%s4716 + $0x230] sm:$0xff]
        %v4788 = vld [vmem:[%s4716 + $0x238] sm:$0xff]
        %v4789 = vld [vmem:[%s4716 + $0x240] sm:$0xff]
        %v4790 = vld [vmem:[%s4716 + $0x248] sm:$0xff]
        %v4791 = vld [vmem:[%s4716 + $0x250] sm:$0xff]
        %v4792 = vld [vmem:[%s4716 + $0x258] sm:$0xff]
        %v4793 = vld [vmem:[%s4716 + $0x260] sm:$0xff]
        %v4794 = vld [vmem:[%s4716 + $0x268] sm:$0xff]
        %v4795 = vld [vmem:[%s4716 + $0x270] sm:$0xff]
        %v4796 = vld [vmem:[%s4716 + $0x278] sm:$0xff]
        %v4797 = vld [vmem:[%s4716 + $0x280] sm:$0xff]
        %v4798 = vld [vmem:[%s4716 + $0x288] sm:$0xff]
        %v4799 = vld [vmem:[%s4716 + $0x290] sm:$0xff]
        %v4800 = vld [vmem:[%s4716 + $0x298] sm:$0xff]
        %v4801 = vld [vmem:[%s4716 + $0x2a0] sm:$0xff]
        %v4802 = vld [vmem:[%s4716 + $0x2a8] sm:$0xff]
        %v4803 = vld [vmem:[%s4716 + $0x2b0] sm:$0xff]
        %v4804 = vld [vmem:[%s4716 + $0x2b8] sm:$0xff]
        %v4805 = vld [vmem:[%s4716 + $0x2c0] sm:$0xff]
        %v4806 = vld [vmem:[%s4716 + $0x2c8] sm:$0xff]
        %v4807 = vld [vmem:[%s4716 + $0x2d0] sm:$0xff]
        %v4808 = vld [vmem:[%s4716 + $0x2d8] sm:$0xff]
        %v4809 = vld [vmem:[%s4716 + $0x2e0] sm:$0xff]
        %v4810 = vld [vmem:[%s4716 + $0x2e8] sm:$0xff]
        %v4811 = vld [vmem:[%s4716 + $0x2f0] sm:$0xff]
        %v4812 = vld [vmem:[%s4716 + $0x2f8] sm:$0xff]
        %v4813 = vld [vmem:[%s4716 + $0x300] sm:$0xff]
        %v4814 = vld [vmem:[%s4716 + $0x308] sm:$0xff]
        %v4815 = vld [vmem:[%s4716 + $0x310] sm:$0xff]
        %v4816 = vld [vmem:[%s4716 + $0x318] sm:$0xff]
        %v4817 = vld [vmem:[%s4716 + $0x320] sm:$0xff]
        %v4818 = vld [vmem:[%s4716 + $0x328] sm:$0xff]
        %v4819 = vld [vmem:[%s4716 + $0x330] sm:$0xff]
        %v4820 = vld [vmem:[%s4716 + $0x338] sm:$0xff]
        %v4821 = vld [vmem:[%s4716 + $0x340] sm:$0xff]
        %v4822 = vld [vmem:[%s4716 + $0x348] sm:$0xff]
        %v4823 = vld [vmem:[%s4716 + $0x350] sm:$0xff]
        %v4824 = vld [vmem:[%s4716 + $0x358] sm:$0xff]
        %v4825 = vld [vmem:[%s4716 + $0x360] sm:$0xff]
        %v4826 = vld [vmem:[%s4716 + $0x368] sm:$0xff]
        %v4827 = vld [vmem:[%s4716 + $0x370] sm:$0xff]
        %v4828 = vld [vmem:[%s4716 + $0x378] sm:$0xff]
        %v4829 = vld [vmem:[%s4716 + $0x380] sm:$0xff]
        %v4830 = vld [vmem:[%s4716 + $0x388] sm:$0xff]
        %v4831 = vld [vmem:[%s4716 + $0x390] sm:$0xff]
        %v4832 = vld [vmem:[%s4716 + $0x398] sm:$0xff]
        %v4833 = vld [vmem:[%s4716 + $0x3a0] sm:$0xff]
        %v4834 = vld [vmem:[%s4716 + $0x3a8] sm:$0xff]
        %v4835 = vld [vmem:[%s4716 + $0x3b0] sm:$0xff]
        %v4836 = vld [vmem:[%s4716 + $0x3b8] sm:$0xff]
        %v4837 = vld [vmem:[%s4716 + $0x3c0] sm:$0xff]
        %v4838 = vld [vmem:[%s4716 + $0x3c8] sm:$0xff]
        %v4839 = vld [vmem:[%s4716 + $0x3d0] sm:$0xff]
        %v4840 = vld [vmem:[%s4716 + $0x3d8] sm:$0xff]
        %v4841 = vld [vmem:[%s4716 + $0x3e0] sm:$0xff]
        %v4842 = vld [vmem:[%s4716 + $0x3e8] sm:$0xff]
        %v4843 = vld [vmem:[%s4716 + $0x3f0] sm:$0xff]
        %v4844 = vld [vmem:[%s4716 + $0x3f8] sm:$0xff]
        %v4845 = vld [vmem:[%s4716 + $0x400] sm:$0xff]
        %v4846 = vld [vmem:[%s4716 + $0x408] sm:$0xff]
        %v4847 = vld [vmem:[%s4716 + $0x410] sm:$0xff]
        %v4848 = vld [vmem:[%s4716 + $0x418] sm:$0xff]
        %v4849 = vld [vmem:[%s4716 + $0x420] sm:$0xff]
        %v4850 = vld [vmem:[%s4716 + $0x428] sm:$0xff]
        %v4851 = vld [vmem:[%s4716 + $0x430] sm:$0xff]
        %v4852 = vld [vmem:[%s4716 + $0x438] sm:$0xff]
        %v4853 = vld [vmem:[%s4716 + $0x440] sm:$0xff]
        %v4854 = vld [vmem:[%s4716 + $0x448] sm:$0xff]
        %v4855 = vld [vmem:[%s4716 + $0x450] sm:$0xff]
        %v4856 = vld [vmem:[%s4716 + $0x458] sm:$0xff]
        %v4857 = vld [vmem:[%s4716 + $0x460] sm:$0xff]
        %v4858 = vld [vmem:[%s4716 + $0x468] sm:$0xff]
        %v4859 = vld [vmem:[%s4716 + $0x470] sm:$0xff]
        %v4860 = vld [vmem:[%s4716 + $0x478] sm:$0xff]
        %s4861 = scalar_lea.vmem [#allocation13], 3
        %v4862 = vld [vmem:[%s4861] ss:$8 sm:$0x3]
        %v4864 = vlaneseq
        %v4865 = vshrl.u32 %v4864, 7
        %v4866 = vsub.s32 0, %v4865
        %v4867 = vrot.slane %v4862, %v4866
        %v4868 = vlaneseq
        %v4869 = vshrl.u32 %v4868, 7
        %v4870 = vsub.s32 1, %v4869
        %v4871 = vrot.slane %v4862, %v4870
        %v5018 = vunpack.c.l.b16 %v4717
        %v5019 = vunpack.c.h.b16 %v4717
        %v5020 = vunpack.c.l.b16 %v4718
        %v5021 = vunpack.c.h.b16 %v4718
        %v5022 = vunpack.c.l.b16 %v4719
        %v5023 = vunpack.c.h.b16 %v4719
        %v5024 = vunpack.c.l.b16 %v4720
        %v5025 = vunpack.c.h.b16 %v4720
        %v5026 = vunpack.c.l.b16 %v4721
        %v5027 = vunpack.c.h.b16 %v4721
        %v5028 = vunpack.c.l.b16 %v4722
        %v5029 = vunpack.c.h.b16 %v4722
        %v5030 = vunpack.c.l.b16 %v4723
        %v5031 = vunpack.c.h.b16 %v4723
        %v5032 = vunpack.c.l.b16 %v4724
        %v5033 = vunpack.c.h.b16 %v4724
        %v5034 = vunpack.c.l.b16 %v4725
        %v5035 = vunpack.c.h.b16 %v4725
        %v5036 = vunpack.c.l.b16 %v4726
        %v5037 = vunpack.c.h.b16 %v4726
        %v5038 = vunpack.c.l.b16 %v4727
        %v5039 = vunpack.c.h.b16 %v4727
        %v5040 = vunpack.c.l.b16 %v4728
        %v5041 = vunpack.c.h.b16 %v4728
        %v5042 = vunpack.c.l.b16 %v4729
        %v5043 = vunpack.c.h.b16 %v4729
        %v5044 = vunpack.c.l.b16 %v4730
        %v5045 = vunpack.c.h.b16 %v4730
        %v5046 = vunpack.c.l.b16 %v4731
        %v5047 = vunpack.c.h.b16 %v4731
        %v5048 = vunpack.c.l.b16 %v4732
        %v5049 = vunpack.c.h.b16 %v4732
        %v5050 = vunpack.c.l.b16 %v4733
        %v5051 = vunpack.c.h.b16 %v4733
        %v5052 = vunpack.c.l.b16 %v4734
        %v5053 = vunpack.c.h.b16 %v4734
        %v5054 = vunpack.c.l.b16 %v4735
        %v5055 = vunpack.c.h.b16 %v4735
        %v5056 = vunpack.c.l.b16 %v4736
        %v5057 = vunpack.c.h.b16 %v4736
        %v5058 = vunpack.c.l.b16 %v4737
        %v5059 = vunpack.c.h.b16 %v4737
        %v5060 = vunpack.c.l.b16 %v4738
        %v5061 = vunpack.c.h.b16 %v4738
        %v5062 = vunpack.c.l.b16 %v4739
        %v5063 = vunpack.c.h.b16 %v4739
        %v5064 = vunpack.c.l.b16 %v4740
        %v5065 = vunpack.c.h.b16 %v4740
        %v5066 = vunpack.c.l.b16 %v4741
        %v5067 = vunpack.c.h.b16 %v4741
        %v5068 = vunpack.c.l.b16 %v4742
        %v5069 = vunpack.c.h.b16 %v4742
        %v5070 = vunpack.c.l.b16 %v4743
        %v5071 = vunpack.c.h.b16 %v4743
        %v5072 = vunpack.c.l.b16 %v4744
        %v5073 = vunpack.c.h.b16 %v4744
        %v5074 = vunpack.c.l.b16 %v4745
        %v5075 = vunpack.c.h.b16 %v4745
        %v5076 = vunpack.c.l.b16 %v4746
        %v5077 = vunpack.c.h.b16 %v4746
        %v5078 = vunpack.c.l.b16 %v4747
        %v5079 = vunpack.c.h.b16 %v4747
        %v5080 = vunpack.c.l.b16 %v4748
        %v5081 = vunpack.c.h.b16 %v4748
        %v5082 = vunpack.c.l.b16 %v4749
        %v5083 = vunpack.c.h.b16 %v4749
        %v5084 = vunpack.c.l.b16 %v4750
        %v5085 = vunpack.c.h.b16 %v4750
        %v5086 = vunpack.c.l.b16 %v4751
        %v5087 = vunpack.c.h.b16 %v4751
        %v5088 = vunpack.c.l.b16 %v4752
        %v5089 = vunpack.c.h.b16 %v4752
        %v5090 = vunpack.c.l.b16 %v4753
        %v5091 = vunpack.c.h.b16 %v4753
        %v5092 = vunpack.c.l.b16 %v4754
        %v5093 = vunpack.c.h.b16 %v4754
        %v5094 = vunpack.c.l.b16 %v4755
        %v5095 = vunpack.c.h.b16 %v4755
        %v5096 = vunpack.c.l.b16 %v4756
        %v5097 = vunpack.c.h.b16 %v4756
        %v5098 = vunpack.c.l.b16 %v4757
        %v5099 = vunpack.c.h.b16 %v4757
        %v5100 = vunpack.c.l.b16 %v4758
        %v5101 = vunpack.c.h.b16 %v4758
        %v5102 = vunpack.c.l.b16 %v4759
        %v5103 = vunpack.c.h.b16 %v4759
        %v5104 = vunpack.c.l.b16 %v4760
        %v5105 = vunpack.c.h.b16 %v4760
        %v5106 = vunpack.c.l.b16 %v4761
        %v5107 = vunpack.c.h.b16 %v4761
        %v5108 = vunpack.c.l.b16 %v4762
        %v5109 = vunpack.c.h.b16 %v4762
        %v5110 = vunpack.c.l.b16 %v4763
        %v5111 = vunpack.c.h.b16 %v4763
        %v5112 = vunpack.c.l.b16 %v4764
        %v5113 = vunpack.c.h.b16 %v4764
        %v5114 = vunpack.c.l.b16 %v4765
        %v5115 = vunpack.c.h.b16 %v4765
        %v5116 = vunpack.c.l.b16 %v4766
        %v5117 = vunpack.c.h.b16 %v4766
        %v5118 = vunpack.c.l.b16 %v4767
        %v5119 = vunpack.c.h.b16 %v4767
        %v5120 = vunpack.c.l.b16 %v4768
        %v5121 = vunpack.c.h.b16 %v4768
        %v5122 = vunpack.c.l.b16 %v4769
        %v5123 = vunpack.c.h.b16 %v4769
        %v5124 = vunpack.c.l.b16 %v4770
        %v5125 = vunpack.c.h.b16 %v4770
        %v5126 = vunpack.c.l.b16 %v4771
        %v5127 = vunpack.c.h.b16 %v4771
        %v5128 = vunpack.c.l.b16 %v4772
        %v5129 = vunpack.c.h.b16 %v4772
        %v5130 = vunpack.c.l.b16 %v4773
        %v5131 = vunpack.c.h.b16 %v4773
        %v5132 = vunpack.c.l.b16 %v4774
        %v5133 = vunpack.c.h.b16 %v4774
        %v5134 = vunpack.c.l.b16 %v4775
        %v5135 = vunpack.c.h.b16 %v4775
        %v5136 = vunpack.c.l.b16 %v4776
        %v5137 = vunpack.c.h.b16 %v4776
        %v5138 = vunpack.c.l.b16 %v4777
        %v5139 = vunpack.c.h.b16 %v4777
        %v5140 = vunpack.c.l.b16 %v4778
        %v5141 = vunpack.c.h.b16 %v4778
        %v5142 = vunpack.c.l.b16 %v4779
        %v5143 = vunpack.c.h.b16 %v4779
        %v5144 = vunpack.c.l.b16 %v4780
        %v5145 = vunpack.c.h.b16 %v4780
        %v5146 = vunpack.c.l.b16 %v4781
        %v5147 = vunpack.c.h.b16 %v4781
        %v5148 = vunpack.c.l.b16 %v4782
        %v5149 = vunpack.c.h.b16 %v4782
        %v5150 = vunpack.c.l.b16 %v4783
        %v5151 = vunpack.c.h.b16 %v4783
        %v5152 = vunpack.c.l.b16 %v4784
        %v5153 = vunpack.c.h.b16 %v4784
        %v5154 = vunpack.c.l.b16 %v4785
        %v5155 = vunpack.c.h.b16 %v4785
        %v5156 = vunpack.c.l.b16 %v4786
        %v5157 = vunpack.c.h.b16 %v4786
        %v5158 = vunpack.c.l.b16 %v4787
        %v5159 = vunpack.c.h.b16 %v4787
        %v5160 = vunpack.c.l.b16 %v4788
        %v5161 = vunpack.c.h.b16 %v4788
        %v5162 = vunpack.c.l.b16 %v4789
        %v5163 = vunpack.c.h.b16 %v4789
        %v5164 = vunpack.c.l.b16 %v4790
        %v5165 = vunpack.c.h.b16 %v4790
        %v5166 = vunpack.c.l.b16 %v4791
        %v5167 = vunpack.c.h.b16 %v4791
        %v5168 = vunpack.c.l.b16 %v4792
        %v5169 = vunpack.c.h.b16 %v4792
        %v5170 = vunpack.c.l.b16 %v4793
        %v5171 = vunpack.c.h.b16 %v4793
        %v5172 = vunpack.c.l.b16 %v4794
        %v5173 = vunpack.c.h.b16 %v4794
        %v5174 = vunpack.c.l.b16 %v4795
        %v5175 = vunpack.c.h.b16 %v4795
        %v5176 = vunpack.c.l.b16 %v4796
        %v5177 = vunpack.c.h.b16 %v4796
        %v5178 = vunpack.c.l.b16 %v4797
        %v5179 = vunpack.c.h.b16 %v4797
        %v5180 = vunpack.c.l.b16 %v4798
        %v5181 = vunpack.c.h.b16 %v4798
        %v5182 = vunpack.c.l.b16 %v4799
        %v5183 = vunpack.c.h.b16 %v4799
        %v5184 = vunpack.c.l.b16 %v4800
        %v5185 = vunpack.c.h.b16 %v4800
        %v5186 = vunpack.c.l.b16 %v4801
        %v5187 = vunpack.c.h.b16 %v4801
        %v5188 = vunpack.c.l.b16 %v4802
        %v5189 = vunpack.c.h.b16 %v4802
        %v5190 = vunpack.c.l.b16 %v4803
        %v5191 = vunpack.c.h.b16 %v4803
        %v5192 = vunpack.c.l.b16 %v4804
        %v5193 = vunpack.c.h.b16 %v4804
        %v5194 = vunpack.c.l.b16 %v4805
        %v5195 = vunpack.c.h.b16 %v4805
        %v5196 = vunpack.c.l.b16 %v4806
        %v5197 = vunpack.c.h.b16 %v4806
        %v5198 = vunpack.c.l.b16 %v4807
        %v5199 = vunpack.c.h.b16 %v4807
        %v5200 = vunpack.c.l.b16 %v4808
        %v5201 = vunpack.c.h.b16 %v4808
        %v5202 = vunpack.c.l.b16 %v4809
        %v5203 = vunpack.c.h.b16 %v4809
        %v5204 = vunpack.c.l.b16 %v4810
        %v5205 = vunpack.c.h.b16 %v4810
        %v5206 = vunpack.c.l.b16 %v4811
        %v5207 = vunpack.c.h.b16 %v4811
        %v5208 = vunpack.c.l.b16 %v4812
        %v5209 = vunpack.c.h.b16 %v4812
        %v5210 = vunpack.c.l.b16 %v4813
        %v5211 = vunpack.c.h.b16 %v4813
        %v5212 = vunpack.c.l.b16 %v4814
        %v5213 = vunpack.c.h.b16 %v4814
        %v5214 = vunpack.c.l.b16 %v4815
        %v5215 = vunpack.c.h.b16 %v4815
        %v5216 = vunpack.c.l.b16 %v4816
        %v5217 = vunpack.c.h.b16 %v4816
        %v5218 = vunpack.c.l.b16 %v4817
        %v5219 = vunpack.c.h.b16 %v4817
        %v5220 = vunpack.c.l.b16 %v4818
        %v5221 = vunpack.c.h.b16 %v4818
        %v5222 = vunpack.c.l.b16 %v4819
        %v5223 = vunpack.c.h.b16 %v4819
        %v5224 = vunpack.c.l.b16 %v4820
        %v5225 = vunpack.c.h.b16 %v4820
        %v5226 = vunpack.c.l.b16 %v4821
        %v5227 = vunpack.c.h.b16 %v4821
        %v5228 = vunpack.c.l.b16 %v4822
        %v5229 = vunpack.c.h.b16 %v4822
        %v5230 = vunpack.c.l.b16 %v4823
        %v5231 = vunpack.c.h.b16 %v4823
        %v5232 = vunpack.c.l.b16 %v4824
        %v5233 = vunpack.c.h.b16 %v4824
        %v5234 = vunpack.c.l.b16 %v4825
        %v5235 = vunpack.c.h.b16 %v4825
        %v5236 = vunpack.c.l.b16 %v4826
        %v5237 = vunpack.c.h.b16 %v4826
        %v5238 = vunpack.c.l.b16 %v4827
        %v5239 = vunpack.c.h.b16 %v4827
        %v5240 = vunpack.c.l.b16 %v4828
        %v5241 = vunpack.c.h.b16 %v4828
        %v5242 = vunpack.c.l.b16 %v4829
        %v5243 = vunpack.c.h.b16 %v4829
        %v5244 = vunpack.c.l.b16 %v4830
        %v5245 = vunpack.c.h.b16 %v4830
        %v5246 = vunpack.c.l.b16 %v4831
        %v5247 = vunpack.c.h.b16 %v4831
        %v5248 = vunpack.c.l.b16 %v4832
        %v5249 = vunpack.c.h.b16 %v4832
        %v5250 = vunpack.c.l.b16 %v4833
        %v5251 = vunpack.c.h.b16 %v4833
        %v5252 = vunpack.c.l.b16 %v4834
        %v5253 = vunpack.c.h.b16 %v4834
        %v5254 = vunpack.c.l.b16 %v4835
        %v5255 = vunpack.c.h.b16 %v4835
        %v5256 = vunpack.c.l.b16 %v4836
        %v5257 = vunpack.c.h.b16 %v4836
        %v5258 = vunpack.c.l.b16 %v4837
        %v5259 = vunpack.c.h.b16 %v4837
        %v5260 = vunpack.c.l.b16 %v4838
        %v5261 = vunpack.c.h.b16 %v4838
        %v5262 = vunpack.c.l.b16 %v4839
        %v5263 = vunpack.c.h.b16 %v4839
        %v5264 = vunpack.c.l.b16 %v4840
        %v5265 = vunpack.c.h.b16 %v4840
        %v5266 = vunpack.c.l.b16 %v4841
        %v5267 = vunpack.c.h.b16 %v4841
        %v5268 = vunpack.c.l.b16 %v4842
        %v5269 = vunpack.c.h.b16 %v4842
        %v5270 = vunpack.c.l.b16 %v4843
        %v5271 = vunpack.c.h.b16 %v4843
        %v5272 = vunpack.c.l.b16 %v4844
        %v5273 = vunpack.c.h.b16 %v4844
        %v5274 = vunpack.c.l.b16 %v4845
        %v5275 = vunpack.c.h.b16 %v4845
        %v5276 = vunpack.c.l.b16 %v4846
        %v5277 = vunpack.c.h.b16 %v4846
        %v5278 = vunpack.c.l.b16 %v4847
        %v5279 = vunpack.c.h.b16 %v4847
        %v5280 = vunpack.c.l.b16 %v4848
        %v5281 = vunpack.c.h.b16 %v4848
        %v5282 = vunpack.c.l.b16 %v4849
        %v5283 = vunpack.c.h.b16 %v4849
        %v5284 = vunpack.c.l.b16 %v4850
        %v5285 = vunpack.c.h.b16 %v4850
        %v5286 = vunpack.c.l.b16 %v4851
        %v5287 = vunpack.c.h.b16 %v4851
        %v5288 = vunpack.c.l.b16 %v4852
        %v5289 = vunpack.c.h.b16 %v4852
        %v5290 = vunpack.c.l.b16 %v4853
        %v5291 = vunpack.c.h.b16 %v4853
        %v5292 = vunpack.c.l.b16 %v4854
        %v5293 = vunpack.c.h.b16 %v4854
        %v5294 = vunpack.c.l.b16 %v4855
        %v5295 = vunpack.c.h.b16 %v4855
        %v5296 = vunpack.c.l.b16 %v4856
        %v5297 = vunpack.c.h.b16 %v4856
        %v5298 = vunpack.c.l.b16 %v4857
        %v5299 = vunpack.c.h.b16 %v4857
        %v5300 = vunpack.c.l.b16 %v4858
        %v5301 = vunpack.c.h.b16 %v4858
        %v5302 = vunpack.c.l.b16 %v4859
        %v5303 = vunpack.c.h.b16 %v4859
        %v5304 = vunpack.c.l.b16 %v4860
        %v5305 = vunpack.c.h.b16 %v4860
        %v5306 = vpack.c.b16 %v5020, %v5018
        %v5307 = vpack.c.b16 %v5021, %v5019
        %v5308 = vpack.c.b16 %v5024, %v5022
        %v5309 = vpack.c.b16 %v5025, %v5023
        %v5310 = vpack.c.b16 %v5028, %v5026
        %v5311 = vpack.c.b16 %v5029, %v5027
        %v5312 = vpack.c.b16 %v5032, %v5030
        %v5313 = vpack.c.b16 %v5033, %v5031
        %v5314 = vpack.c.b16 %v5036, %v5034
        %v5315 = vpack.c.b16 %v5037, %v5035
        %v5316 = vpack.c.b16 %v5040, %v5038
        %v5317 = vpack.c.b16 %v5041, %v5039
        %v5318 = vpack.c.b16 %v5044, %v5042
        %v5319 = vpack.c.b16 %v5045, %v5043
        %v5320 = vpack.c.b16 %v5048, %v5046
        %v5321 = vpack.c.b16 %v5049, %v5047
        %v5322 = vpack.c.b16 %v5052, %v5050
        %v5323 = vpack.c.b16 %v5053, %v5051
        %v5324 = vpack.c.b16 %v5056, %v5054
        %v5325 = vpack.c.b16 %v5057, %v5055
        %v5326 = vpack.c.b16 %v5060, %v5058
        %v5327 = vpack.c.b16 %v5061, %v5059
        %v5328 = vpack.c.b16 %v5064, %v5062
        %v5329 = vpack.c.b16 %v5065, %v5063
        %v5330 = vpack.c.b16 %v5068, %v5066
        %v5331 = vpack.c.b16 %v5069, %v5067
        %v5332 = vpack.c.b16 %v5072, %v5070
        %v5333 = vpack.c.b16 %v5073, %v5071
        %v5334 = vpack.c.b16 %v5076, %v5074
        %v5335 = vpack.c.b16 %v5077, %v5075
        %v5336 = vpack.c.b16 %v5080, %v5078
        %v5337 = vpack.c.b16 %v5081, %v5079
        %v5338 = vpack.c.b16 %v5084, %v5082
        %v5339 = vpack.c.b16 %v5085, %v5083
        %v5340 = vpack.c.b16 %v5088, %v5086
        %v5341 = vpack.c.b16 %v5089, %v5087
        %v5342 = vpack.c.b16 %v5092, %v5090
        %v5343 = vpack.c.b16 %v5093, %v5091
        %v5344 = vpack.c.b16 %v5096, %v5094
        %v5345 = vpack.c.b16 %v5097, %v5095
        %v5346 = vpack.c.b16 %v5100, %v5098
        %v5347 = vpack.c.b16 %v5101, %v5099
        %v5348 = vpack.c.b16 %v5104, %v5102
        %v5349 = vpack.c.b16 %v5105, %v5103
        %v5350 = vpack.c.b16 %v5108, %v5106
        %v5351 = vpack.c.b16 %v5109, %v5107
        %v5352 = vpack.c.b16 %v5112, %v5110
        %v5353 = vpack.c.b16 %v5113, %v5111
        %v5354 = vpack.c.b16 %v5116, %v5114
        %v5355 = vpack.c.b16 %v5117, %v5115
        %v5356 = vpack.c.b16 %v5120, %v5118
        %v5357 = vpack.c.b16 %v5121, %v5119
        %v5358 = vpack.c.b16 %v5124, %v5122
        %v5359 = vpack.c.b16 %v5125, %v5123
        %v5360 = vpack.c.b16 %v5128, %v5126
        %v5361 = vpack.c.b16 %v5129, %v5127
        %v5362 = vpack.c.b16 %v5132, %v5130
        %v5363 = vpack.c.b16 %v5133, %v5131
        %v5364 = vpack.c.b16 %v5136, %v5134
        %v5365 = vpack.c.b16 %v5137, %v5135
        %v5366 = vpack.c.b16 %v5140, %v5138
        %v5367 = vpack.c.b16 %v5141, %v5139
        %v5368 = vpack.c.b16 %v5144, %v5142
        %v5369 = vpack.c.b16 %v5145, %v5143
        %v5370 = vpack.c.b16 %v5148, %v5146
        %v5371 = vpack.c.b16 %v5149, %v5147
        %v5372 = vpack.c.b16 %v5152, %v5150
        %v5373 = vpack.c.b16 %v5153, %v5151
        %v5374 = vpack.c.b16 %v5156, %v5154
        %v5375 = vpack.c.b16 %v5157, %v5155
        %v5376 = vpack.c.b16 %v5160, %v5158
        %v5377 = vpack.c.b16 %v5161, %v5159
        %v5378 = vpack.c.b16 %v5164, %v5162
        %v5379 = vpack.c.b16 %v5165, %v5163
        %v5380 = vpack.c.b16 %v5168, %v5166
        %v5381 = vpack.c.b16 %v5169, %v5167
        %v5382 = vpack.c.b16 %v5172, %v5170
        %v5383 = vpack.c.b16 %v5173, %v5171
        %v5384 = vpack.c.b16 %v5176, %v5174
        %v5385 = vpack.c.b16 %v5177, %v5175
        %v5386 = vpack.c.b16 %v5180, %v5178
        %v5387 = vpack.c.b16 %v5181, %v5179
        %v5388 = vpack.c.b16 %v5184, %v5182
        %v5389 = vpack.c.b16 %v5185, %v5183
        %v5390 = vpack.c.b16 %v5188, %v5186
        %v5391 = vpack.c.b16 %v5189, %v5187
        %v5392 = vpack.c.b16 %v5192, %v5190
        %v5393 = vpack.c.b16 %v5193, %v5191
        %v5394 = vpack.c.b16 %v5196, %v5194
        %v5395 = vpack.c.b16 %v5197, %v5195
        %v5396 = vpack.c.b16 %v5200, %v5198
        %v5397 = vpack.c.b16 %v5201, %v5199
        %v5398 = vpack.c.b16 %v5204, %v5202
        %v5399 = vpack.c.b16 %v5205, %v5203
        %v5400 = vpack.c.b16 %v5208, %v5206
        %v5401 = vpack.c.b16 %v5209, %v5207
        %v5402 = vpack.c.b16 %v5212, %v5210
        %v5403 = vpack.c.b16 %v5213, %v5211
        %v5404 = vpack.c.b16 %v5216, %v5214
        %v5405 = vpack.c.b16 %v5217, %v5215
        %v5406 = vpack.c.b16 %v5220, %v5218
        %v5407 = vpack.c.b16 %v5221, %v5219
        %v5408 = vpack.c.b16 %v5224, %v5222
        %v5409 = vpack.c.b16 %v5225, %v5223
        %v5410 = vpack.c.b16 %v5228, %v5226
        %v5411 = vpack.c.b16 %v5229, %v5227
        %v5412 = vpack.c.b16 %v5232, %v5230
        %v5413 = vpack.c.b16 %v5233, %v5231
        %v5414 = vpack.c.b16 %v5236, %v5234
        %v5415 = vpack.c.b16 %v5237, %v5235
        %v5416 = vpack.c.b16 %v5240, %v5238
        %v5417 = vpack.c.b16 %v5241, %v5239
        %v5418 = vpack.c.b16 %v5244, %v5242
        %v5419 = vpack.c.b16 %v5245, %v5243
        %v5420 = vpack.c.b16 %v5248, %v5246
        %v5421 = vpack.c.b16 %v5249, %v5247
        %v5422 = vpack.c.b16 %v5252, %v5250
        %v5423 = vpack.c.b16 %v5253, %v5251
        %v5424 = vpack.c.b16 %v5256, %v5254
        %v5425 = vpack.c.b16 %v5257, %v5255
        %v5426 = vpack.c.b16 %v5260, %v5258
        %v5427 = vpack.c.b16 %v5261, %v5259
        %v5428 = vpack.c.b16 %v5264, %v5262
        %v5429 = vpack.c.b16 %v5265, %v5263
        %v5430 = vpack.c.b16 %v5268, %v5266
        %v5431 = vpack.c.b16 %v5269, %v5267
        %v5432 = vpack.c.b16 %v5272, %v5270
        %v5433 = vpack.c.b16 %v5273, %v5271
        %v5434 = vpack.c.b16 %v5276, %v5274
        %v5435 = vpack.c.b16 %v5277, %v5275
        %v5436 = vpack.c.b16 %v5280, %v5278
        %v5437 = vpack.c.b16 %v5281, %v5279
        %v5438 = vpack.c.b16 %v5284, %v5282
        %v5439 = vpack.c.b16 %v5285, %v5283
        %v5440 = vpack.c.b16 %v5288, %v5286
        %v5441 = vpack.c.b16 %v5289, %v5287
        %v5442 = vpack.c.b16 %v5292, %v5290
        %v5443 = vpack.c.b16 %v5293, %v5291
        %v5444 = vpack.c.b16 %v5296, %v5294
        %v5445 = vpack.c.b16 %v5297, %v5295
        %v5446 = vpack.c.b16 %v5300, %v5298
        %v5447 = vpack.c.b16 %v5301, %v5299
        %v5448 = vpack.c.b16 %v5304, %v5302
        %v5449 = vpack.c.b16 %v5305, %v5303
        %5594 = vmatprep.subr.bf16.mxu0 %v5307
        %5595 = vmatpush1.bf16.msra.mxu0 %v5306
        %5596 = vmatprep.subr.bf16.mxu0 %v5309
        %5597 = vmatpush1.bf16.msra.mxu0 %v5308
        %5598 = vmatprep.subr.bf16.mxu0 %v5311
        %5599 = vmatpush1.bf16.msra.mxu0 %v5310
        %5600 = vmatprep.subr.bf16.mxu0 %v5313
        %5601 = vmatpush1.bf16.msra.mxu0 %v5312
        %5602 = vmatprep.subr.bf16.mxu0 %v5315
        %5603 = vmatpush1.bf16.msra.mxu0 %v5314
        %5604 = vmatprep.subr.bf16.mxu0 %v5317
        %5605 = vmatpush1.bf16.msra.mxu0 %v5316
        %5606 = vmatprep.subr.bf16.mxu0 %v5319
        %5607 = vmatpush1.bf16.msra.mxu0 %v5318
        %5608 = vmatprep.subr.bf16.mxu0 %v5321
        %5609 = vmatpush1.bf16.msra.mxu0 %v5320
        %5610 = vmatprep.subr.bf16.mxu0 %v5323
        %5611 = vmatpush1.bf16.msra.mxu0 %v5322
        %5612 = vmatprep.subr.bf16.mxu0 %v5325
        %5613 = vmatpush1.bf16.msra.mxu0 %v5324
        %5614 = vmatprep.subr.bf16.mxu0 %v5327
        %5615 = vmatpush1.bf16.msra.mxu0 %v5326
        %5616 = vmatprep.subr.bf16.mxu0 %v5329
        %5617 = vmatpush1.bf16.msra.mxu0 %v5328
        %5618 = vmatprep.subr.bf16.mxu0 %v5331
        %5619 = vmatpush1.bf16.msra.mxu0 %v5330
        %5620 = vmatprep.subr.bf16.mxu0 %v5333
        %5621 = vmatpush1.bf16.msra.mxu0 %v5332
        %5622 = vmatprep.subr.bf16.mxu0 %v5335
        %5623 = vmatpush1.bf16.msra.mxu0 %v5334
        %5624 = vmatprep.subr.bf16.mxu0 %v5337
        %5625 = vmatpush1.bf16.msra.mxu0 %v5336
        %5626 = vmatprep.mubr.bf16.mxu0 %v4681
        %5627 = vmatmul.mubr.bf16.gmra.mrb[0].mxu0 %v4680
        %v5628 = vpop.f32.mrb[0].mxu0
        %v5629 = vadd.f32 %v4867, %v5628
        %v5630 = vpop.f32.mrb[0].mxu0
        %v5631 = vadd.f32 %v4871, %v5630
        %v5632 = vpop.f32.mrb[0].mxu0
        %v5633 = vadd.f32 %v4867, %v5632
        %v5634 = vpop.f32.mrb[0].mxu0
        %v5635 = vadd.f32 %v4871, %v5634
        %5636 = vmatprep.mubr.bf16.mxu0 %v4690
        %5637 = vmatmul.mubr.bf16.gmra.mrb[0].mxu0 %v4689
        %v5638 = vpop.f32.mrb[0].mxu0
        %v5639 = vadd.f32 %v4867, %v5638
        %v5640 = vpop.f32.mrb[0].mxu0
        %v5641 = vadd.f32 %v4871, %v5640
        %v5642 = vpop.f32.mrb[0].mxu0
        %v5643 = vadd.f32 %v4867, %v5642
        %v5644 = vpop.f32.mrb[0].mxu0
        %v5645 = vadd.f32 %v4871, %v5644
        %5646 = vmatprep.mubr.bf16.mxu0 %v4699
        %5647 = vmatmul.mubr.bf16.gmra.mrb[0].mxu0 %v4698
        %v5648 = vpop.f32.mrb[0].mxu0
        %v5649 = vadd.f32 %v4867, %v5648
        %v5650 = vpop.f32.mrb[0].mxu0
        %v5651 = vadd.f32 %v4871, %v5650
        %v5652 = vpop.f32.mrb[0].mxu0
        %v5653 = vadd.f32 %v4867, %v5652
        %v5654 = vpop.f32.mrb[0].mxu0
        %v5655 = vadd.f32 %v4871, %v5654
        %5656 = vmatprep.mubr.bf16.mxu0 %v4708
        %5657 = vmatmul.mubr.bf16.gmra.mrb[0].mxu0 %v4707
        %v5658 = vpop.f32.mrb[0].mxu0
        %v5659 = vadd.f32 %v4867, %v5658
        %v5660 = vpop.f32.mrb[0].mxu0
        %v5661 = vadd.f32 %v4871, %v5660
        %v5662 = vpop.f32.mrb[0].mxu0
        %v5663 = vadd.f32 %v4867, %v5662
        %v5664 = vpop.f32.mrb[0].mxu0
        %v5665 = vadd.f32 %v4871, %v5664
        %5666 = vdwg.mxu0
        %5667 = vmatprep.subr.bf16.mxu0 %v5339
        %5668 = vmatpush1.bf16.msra.mxu0 %v5338
        %5669 = vmatprep.subr.bf16.mxu0 %v5341
        %5670 = vmatpush1.bf16.msra.mxu0 %v5340
        %5671 = vmatprep.subr.bf16.mxu0 %v5343
        %5672 = vmatpush1.bf16.msra.mxu0 %v5342
        %5673 = vmatprep.subr.bf16.mxu0 %v5345
        %5674 = vmatpush1.bf16.msra.mxu0 %v5344
        %5675 = vmatprep.subr.bf16.mxu0 %v5347
        %5676 = vmatpush1.bf16.msra.mxu0 %v5346
        %5677 = vmatprep.subr.bf16.mxu0 %v5349
        %5678 = vmatpush1.bf16.msra.mxu0 %v5348
        %5679 = vmatprep.subr.bf16.mxu0 %v5351
        %5680 = vmatpush1.bf16.msra.mxu0 %v5350
        %5681 = vmatprep.subr.bf16.mxu0 %v5353
        %5682 = vmatpush1.bf16.msra.mxu0 %v5352
        %5683 = vmatprep.subr.bf16.mxu0 %v5355
        %5684 = vmatpush1.bf16.msra.mxu0 %v5354
        %5685 = vmatprep.subr.bf16.mxu0 %v5357
        %5686 = vmatpush1.bf16.msra.mxu0 %v5356
        %5687 = vmatprep.subr.bf16.mxu0 %v5359
        %5688 = vmatpush1.bf16.msra.mxu0 %v5358
        %5689 = vmatprep.subr.bf16.mxu0 %v5361
        %5690 = vmatpush1.bf16.msra.mxu0 %v5360
        %5691 = vmatprep.subr.bf16.mxu0 %v5363
        %5692 = vmatpush1.bf16.msra.mxu0 %v5362
        %5693 = vmatprep.subr.bf16.mxu0 %v5365
        %5694 = vmatpush1.bf16.msra.mxu0 %v5364
        %5695 = vmatprep.subr.bf16.mxu0 %v5367
        %5696 = vmatpush1.bf16.msra.mxu0 %v5366
        %5697 = vmatprep.subr.bf16.mxu0 %v5369
        %5698 = vmatpush1.bf16.msra.mxu0 %v5368
        %5699 = vmatprep.mubr.bf16.mxu0 %v4683
        %5700 = vmatmul.mubr.bf16.gmra.mrb[0].mxu0 %v4682
        %v5701 = vpop.f32.mrb[0].mxu0
        %v5702 = vadd.f32 %v5629, %v5701
        %v5703 = vpop.f32.mrb[0].mxu0
        %v5704 = vadd.f32 %v5631, %v5703
        %v5705 = vpop.f32.mrb[0].mxu0
        %v5706 = vadd.f32 %v5633, %v5705
        %v5707 = vpop.f32.mrb[0].mxu0
        %v5708 = vadd.f32 %v5635, %v5707
        %5709 = vmatprep.mubr.bf16.mxu0 %v4692
        %5710 = vmatmul.mubr.bf16.gmra.mrb[0].mxu0 %v4691
        %v5711 = vpop.f32.mrb[0].mxu0
        %v5712 = vadd.f32 %v5639, %v5711
        %v5713 = vpop.f32.mrb[0].mxu0
        %v5714 = vadd.f32 %v5641, %v5713
        %v5715 = vpop.f32.mrb[0].mxu0
        %v5716 = vadd.f32 %v5643, %v5715
        %v5717 = vpop.f32.mrb[0].mxu0
        %v5718 = vadd.f32 %v5645, %v5717
        %5719 = vmatprep.mubr.bf16.mxu0 %v4701
        %5720 = vmatmul.mubr.bf16.gmra.mrb[0].mxu0 %v4700
        %v5721 = vpop.f32.mrb[0].mxu0
        %v5722 = vadd.f32 %v5649, %v5721
        %v5723 = vpop.f32.mrb[0].mxu0
        %v5724 = vadd.f32 %v5651, %v5723
        %v5725 = vpop.f32.mrb[0].mxu0
        %v5726 = vadd.f32 %v5653, %v5725
        %v5727 = vpop.f32.mrb[0].mxu0
        %v5728 = vadd.f32 %v5655, %v5727
        %5729 = vmatprep.mubr.bf16.mxu0 %v4710
        %5730 = vmatmul.mubr.bf16.gmra.mrb[0].mxu0 %v4709
        %v5731 = vpop.f32.mrb[0].mxu0
        %v5732 = vadd.f32 %v5659, %v5731
        %v5733 = vpop.f32.mrb[0].mxu0
        %v5734 = vadd.f32 %v5661, %v5733
        %v5735 = vpop.f32.mrb[0].mxu0
        %v5736 = vadd.f32 %v5663, %v5735
        %v5737 = vpop.f32.mrb[0].mxu0
        %v5738 = vadd.f32 %v5665, %v5737
        %5739 = vdwg.mxu0
        %5740 = vmatprep.subr.bf16.mxu0 %v5371
        %5741 = vmatpush1.bf16.msra.mxu0 %v5370
        %5742 = vmatprep.subr.bf16.mxu0 %v5373
        %5743 = vmatpush1.bf16.msra.mxu0 %v5372
        %5744 = vmatprep.subr.bf16.mxu0 %v5375
        %5745 = vmatpush1.bf16.msra.mxu0 %v5374
        %5746 = vmatprep.subr.bf16.mxu0 %v5377
        %5747 = vmatpush1.bf16.msra.mxu0 %v5376
        %5748 = vmatprep.subr.bf16.mxu0 %v5379
        %5749 = vmatpush1.bf16.msra.mxu0 %v5378
        %5750 = vmatprep.subr.bf16.mxu0 %v5381
        %5751 = vmatpush1.bf16.msra.mxu0 %v5380
        %5752 = vmatprep.subr.bf16.mxu0 %v5383
        %5753 = vmatpush1.bf16.msra.mxu0 %v5382
        %5754 = vmatprep.subr.bf16.mxu0 %v5385
        %5755 = vmatpush1.bf16.msra.mxu0 %v5384
        %5756 = vmatprep.subr.bf16.mxu0 %v5387
        %5757 = vmatpush1.bf16.msra.mxu0 %v5386
        %5758 = vmatprep.subr.bf16.mxu0 %v5389
        %5759 = vmatpush1.bf16.msra.mxu0 %v5388
        %5760 = vmatprep.subr.bf16.mxu0 %v5391
        %5761 = vmatpush1.bf16.msra.mxu0 %v5390
        %5762 = vmatprep.subr.bf16.mxu0 %v5393
        %5763 = vmatpush1.bf16.msra.mxu0 %v5392
        %5764 = vmatprep.subr.bf16.mxu0 %v5395
        %5765 = vmatpush1.bf16.msra.mxu0 %v5394
        %5766 = vmatprep.subr.bf16.mxu0 %v5397
        %5767 = vmatpush1.bf16.msra.mxu0 %v5396
        %5768 = vmatprep.subr.bf16.mxu0 %v5399
        %5769 = vmatpush1.bf16.msra.mxu0 %v5398
        %5770 = vmatprep.subr.bf16.mxu0 %v5401
        %5771 = vmatpush1.bf16.msra.mxu0 %v5400
        %5772 = vmatprep.mubr.bf16.mxu0 %v4685
        %5773 = vmatmul.mubr.bf16.gmra.mrb[0].mxu0 %v4684
        %v5774 = vpop.f32.mrb[0].mxu0
        %v5775 = vadd.f32 %v5702, %v5774
        %v5776 = vpop.f32.mrb[0].mxu0
        %v5777 = vadd.f32 %v5704, %v5776
        %v5778 = vpop.f32.mrb[0].mxu0
        %v5779 = vadd.f32 %v5706, %v5778
        %v5780 = vpop.f32.mrb[0].mxu0
        %v5781 = vadd.f32 %v5708, %v5780
        %5782 = vmatprep.mubr.bf16.mxu0 %v4694
        %5783 = vmatmul.mubr.bf16.gmra.mrb[0].mxu0 %v4693
        %v5784 = vpop.f32.mrb[0].mxu0
        %v5785 = vadd.f32 %v5712, %v5784
        %v5786 = vpop.f32.mrb[0].mxu0
        %v5787 = vadd.f32 %v5714, %v5786
        %v5788 = vpop.f32.mrb[0].mxu0
        %v5789 = vadd.f32 %v5716, %v5788
        %v5790 = vpop.f32.mrb[0].mxu0
        %v5791 = vadd.f32 %v5718, %v5790
        %5792 = vmatprep.mubr.bf16.mxu0 %v4703
        %5793 = vmatmul.mubr.bf16.gmra.mrb[0].mxu0 %v4702
        %v5794 = vpop.f32.mrb[0].mxu0
        %v5795 = vadd.f32 %v5722, %v5794
        %v5796 = vpop.f32.mrb[0].mxu0
        %v5797 = vadd.f32 %v5724, %v5796
        %v5798 = vpop.f32.mrb[0].mxu0
        %v5799 = vadd.f32 %v5726, %v5798
        %v5800 = vpop.f32.mrb[0].mxu0
        %v5801 = vadd.f32 %v5728, %v5800
        %5802 = vmatprep.mubr.bf16.mxu0 %v4712
        %5803 = vmatmul.mubr.bf16.gmra.mrb[0].mxu0 %v4711
        %v5804 = vpop.f32.mrb[0].mxu0
        %v5805 = vadd.f32 %v5732, %v5804
        %v5806 = vpop.f32.mrb[0].mxu0
        %v5807 = vadd.f32 %v5734, %v5806
        %v5808 = vpop.f32.mrb[0].mxu0
        %v5809 = vadd.f32 %v5736, %v5808
        %v5810 = vpop.f32.mrb[0].mxu0
        %v5811 = vadd.f32 %v5738, %v5810
        %5812 = vdwg.mxu0
        %5813 = vmatprep.subr.bf16.mxu0 %v5403
        %5814 = vmatpush1.bf16.msra.mxu0 %v5402
        %5815 = vmatprep.subr.bf16.mxu0 %v5405
        %5816 = vmatpush1.bf16.msra.mxu0 %v5404
        %5817 = vmatprep.subr.bf16.mxu0 %v5407
        %5818 = vmatpush1.bf16.msra.mxu0 %v5406
        %5819 = vmatprep.subr.bf16.mxu0 %v5409
        %5820 = vmatpush1.bf16.msra.mxu0 %v5408
        %5821 = vmatprep.subr.bf16.mxu0 %v5411
        %5822 = vmatpush1.bf16.msra.mxu0 %v5410
        %5823 = vmatprep.subr.bf16.mxu0 %v5413
        %5824 = vmatpush1.bf16.msra.mxu0 %v5412
        %5825 = vmatprep.subr.bf16.mxu0 %v5415
        %5826 = vmatpush1.bf16.msra.mxu0 %v5414
        %5827 = vmatprep.subr.bf16.mxu0 %v5417
        %5828 = vmatpush1.bf16.msra.mxu0 %v5416
        %5829 = vmatprep.subr.bf16.mxu0 %v5419
        %5830 = vmatpush1.bf16.msra.mxu0 %v5418
        %5831 = vmatprep.subr.bf16.mxu0 %v5421
        %5832 = vmatpush1.bf16.msra.mxu0 %v5420
        %5833 = vmatprep.subr.bf16.mxu0 %v5423
        %5834 = vmatpush1.bf16.msra.mxu0 %v5422
        %5835 = vmatprep.subr.bf16.mxu0 %v5425
        %5836 = vmatpush1.bf16.msra.mxu0 %v5424
        %5837 = vmatprep.subr.bf16.mxu0 %v5427
        %5838 = vmatpush1.bf16.msra.mxu0 %v5426
        %5839 = vmatprep.subr.bf16.mxu0 %v5429
        %5840 = vmatpush1.bf16.msra.mxu0 %v5428
        %5841 = vmatprep.subr.bf16.mxu0 %v5431
        %5842 = vmatpush1.bf16.msra.mxu0 %v5430
        %5843 = vmatprep.subr.bf16.mxu0 %v5433
        %5844 = vmatpush1.bf16.msra.mxu0 %v5432
        %5845 = vmatprep.mubr.bf16.mxu0 %v4687
        %5846 = vmatmul.mubr.bf16.gmra.mrb[0].mxu0 %v4686
        %v5847 = vpop.f32.mrb[0].mxu0
        %v5848 = vadd.f32 %v5775, %v5847
        %v5849 = vpop.f32.mrb[0].mxu0
        %v5850 = vadd.f32 %v5777, %v5849
        %v5851 = vpop.f32.mrb[0].mxu0
        %v5852 = vadd.f32 %v5779, %v5851
        %v5853 = vpop.f32.mrb[0].mxu0
        %v5854 = vadd.f32 %v5781, %v5853
        %5855 = vmatprep.mubr.bf16.mxu0 %v4696
        %5856 = vmatmul.mubr.bf16.gmra.mrb[0].mxu0 %v4695
        %v5857 = vpop.f32.mrb[0].mxu0
        %v5858 = vadd.f32 %v5785, %v5857
        %v5859 = vpop.f32.mrb[0].mxu0
        %v5860 = vadd.f32 %v5787, %v5859
        %v5861 = vpop.f32.mrb[0].mxu0
        %v5862 = vadd.f32 %v5789, %v5861
        %v5863 = vpop.f32.mrb[0].mxu0
        %v5864 = vadd.f32 %v5791, %v5863
        %5865 = vmatprep.mubr.bf16.mxu0 %v4705
        %5866 = vmatmul.mubr.bf16.gmra.mrb[0].mxu0 %v4704
        %v5867 = vpop.f32.mrb[0].mxu0
        %v5868 = vadd.f32 %v5795, %v5867
        %v5869 = vpop.f32.mrb[0].mxu0
        %v5870 = vadd.f32 %v5797, %v5869
        %v5871 = vpop.f32.mrb[0].mxu0
        %v5872 = vadd.f32 %v5799, %v5871
        %v5873 = vpop.f32.mrb[0].mxu0
        %v5874 = vadd.f32 %v5801, %v5873
        %5875 = vmatprep.mubr.bf16.mxu0 %v4714
        %5876 = vmatmul.mubr.bf16.gmra.mrb[0].mxu0 %v4713
        %v5877 = vpop.f32.mrb[0].mxu0
        %v5878 = vadd.f32 %v5805, %v5877
        %v5879 = vpop.f32.mrb[0].mxu0
        %v5880 = vadd.f32 %v5807, %v5879
        %v5881 = vpop.f32.mrb[0].mxu0
        %v5882 = vadd.f32 %v5809, %v5881
        %v5883 = vpop.f32.mrb[0].mxu0
        %v5884 = vadd.f32 %v5811, %v5883
        %5885 = vdwg.mxu0
        %5886 = vmatprep.subr.bf16.mxu0 %v5435
        %5887 = vmatpush1.bf16.msra.mxu0 %v5434
        %5888 = vmatprep.subr.bf16.mxu0 %v5437
        %5889 = vmatpush1.bf16.msra.mxu0 %v5436
        %5890 = vmatprep.subr.bf16.mxu0 %v5439
        %5891 = vmatpush1.bf16.msra.mxu0 %v5438
        %5892 = vmatprep.subr.bf16.mxu0 %v5441
        %5893 = vmatpush1.bf16.msra.mxu0 %v5440
        %5894 = vmatprep.subr.bf16.mxu0 %v5443
        %5895 = vmatpush1.bf16.msra.mxu0 %v5442
        %5896 = vmatprep.subr.bf16.mxu0 %v5445
        %5897 = vmatpush1.bf16.msra.mxu0 %v5444
        %5898 = vmatprep.subr.bf16.mxu0 %v5447
        %5899 = vmatpush1.bf16.msra.mxu0 %v5446
        %5900 = vmatprep.subr.bf16.mxu0 %v5449
        %5901 = vmatpush1.bf16.msra.mxu0 %v5448
        %5902 = vmatprep.subr.bf16.mxu0 0
        %5903 = vmatpush1.bf16.msra.mxu0 0
        %5904 = vmatprep.subr.bf16.mxu0 0
        %5905 = vmatpush1.bf16.msra.mxu0 0
        %5906 = vmatprep.subr.bf16.mxu0 0
        %5907 = vmatpush1.bf16.msra.mxu0 0
        %5908 = vmatprep.subr.bf16.mxu0 0
        %5909 = vmatpush1.bf16.msra.mxu0 0
        %5910 = vmatprep.subr.bf16.mxu0 0
        %5911 = vmatpush1.bf16.msra.mxu0 0
        %5912 = vmatprep.subr.bf16.mxu0 0
        %5913 = vmatpush1.bf16.msra.mxu0 0
        %5914 = vmatprep.subr.bf16.mxu0 0
        %5915 = vmatpush1.bf16.msra.mxu0 0
        %5916 = vmatprep.subr.bf16.mxu0 0
        %5917 = vmatpush1.bf16.msra.mxu0 0
        %5918 = vmatprep.mubr.bf16.mxu0 0
        %5919 = vmatmul.mubr.bf16.gmra.mrb[0].mxu0 %v4688
        %v5920 = vpop.f32.mrb[0].mxu0
        %v5921 = vadd.f32 %v5848, %v5920
        %v5922 = vpop.f32.mrb[0].mxu0
        %v5923 = vadd.f32 %v5850, %v5922
        %v5924 = vpop.f32.mrb[0].mxu0
        %v5925 = vadd.f32 %v5852, %v5924
        %v5926 = vpop.f32.mrb[0].mxu0
        %v5927 = vadd.f32 %v5854, %v5926
        %5928 = vmatprep.mubr.bf16.mxu0 0
        %5929 = vmatmul.mubr.bf16.gmra.mrb[0].mxu0 %v4697
        %v5930 = vpop.f32.mrb[0].mxu0
        %v5931 = vadd.f32 %v5858, %v5930
        %v5932 = vpop.f32.mrb[0].mxu0
        %v5933 = vadd.f32 %v5860, %v5932
        %v5934 = vpop.f32.mrb[0].mxu0
        %v5935 = vadd.f32 %v5862, %v5934
        %v5936 = vpop.f32.mrb[0].mxu0
        %v5937 = vadd.f32 %v5864, %v5936
        %5938 = vmatprep.mubr.bf16.mxu0 0
        %5939 = vmatmul.mubr.bf16.gmra.mrb[0].mxu0 %v4706
        %v5940 = vpop.f32.mrb[0].mxu0
        %v5941 = vadd.f32 %v5868, %v5940
        %v5942 = vpop.f32.mrb[0].mxu0
        %v5943 = vadd.f32 %v5870, %v5942
        %v5944 = vpop.f32.mrb[0].mxu0
        %v5945 = vadd.f32 %v5872, %v5944
        %v5946 = vpop.f32.mrb[0].mxu0
        %v5947 = vadd.f32 %v5874, %v5946
        %5948 = vmatprep.mubr.bf16.mxu0 0
        %5949 = vmatmul.mubr.bf16.gmra.mrb[0].mxu0 %v4715
        %v5950 = vpop.f32.mrb[0].mxu0
        %v5951 = vadd.f32 %v5878, %v5950
        %v5952 = vpop.f32.mrb[0].mxu0
        %v5953 = vadd.f32 %v5880, %v5952
        %v5954 = vpop.f32.mrb[0].mxu0
        %v5955 = vadd.f32 %v5882, %v5954
        %v5956 = vpop.f32.mrb[0].mxu0
        %v5957 = vadd.f32 %v5884, %v5956
        %5958 = vdwg.mxu0
        %v5959 = vmax.f32 %v5921, 0.0
        %v5960 = vmax.f32 %v5923, 0.0
        %v5961 = vmax.f32 %v5925, 0.0
        %v5962 = vmax.f32 %v5927, 0.0
        %v5963 = vmax.f32 %v5931, 0.0
        %v5964 = vmax.f32 %v5933, 0.0
        %v5965 = vmax.f32 %v5935, 0.0
        %v5966 = vmax.f32 %v5937, 0.0
        %v5967 = vmax.f32 %v5941, 0.0
        %v5968 = vmax.f32 %v5943, 0.0
        %v5969 = vmax.f32 %v5945, 0.0
        %v5970 = vmax.f32 %v5947, 0.0
        %v5971 = vmax.f32 %v5951, 0.0
        %v5972 = vmax.f32 %v5953, 0.0
        %v5973 = vmax.f32 %v5955, 0.0
        %v5974 = vmax.f32 %v5957, 0.0
        %v5975 = vpack.c.bf16 %v5961, %v5959
        %v5976 = vpack.c.bf16 %v5962, %v5960
        %v5977 = vpack.c.bf16 %v5965, %v5963
        %v5978 = vpack.c.bf16 %v5966, %v5964
        %v5979 = vpack.c.bf16 %v5969, %v5967
        %v5980 = vpack.c.bf16 %v5970, %v5968
        %v5981 = vpack.c.bf16 %v5973, %v5971
        %v5982 = vpack.c.bf16 %v5974, %v5972
        %s5983 = scalar_lea.vmem [#allocation12], 768
        %v5984 = vld [vmem:[%s5983] sm:$0xff]
        %v5985 = vld [vmem:[%s5983 + $0x8] sm:$0xff]
        %v5986 = vld [vmem:[%s5983 + $0x10] sm:$0xff]
        %v5987 = vld [vmem:[%s5983 + $0x18] sm:$0xff]
        %v5988 = vld [vmem:[%s5983 + $0x20] sm:$0xff]
        %v5989 = vld [vmem:[%s5983 + $0x28] sm:$0xff]
        %v5990 = vld [vmem:[%s5983 + $0x30] sm:$0xff]
        %v5991 = vld [vmem:[%s5983 + $0x38] sm:$0xff]
        %v5992 = vld [vmem:[%s5983 + $0x40] sm:$0xff]
        %v5993 = vld [vmem:[%s5983 + $0x48] sm:$0xff]
        %v5994 = vld [vmem:[%s5983 + $0x50] sm:$0xff]
        %v5995 = vld [vmem:[%s5983 + $0x58] sm:$0xff]
        %v5996 = vld [vmem:[%s5983 + $0x60] sm:$0xff]
        %v5997 = vld [vmem:[%s5983 + $0x68] sm:$0xff]
        %v5998 = vld [vmem:[%s5983 + $0x70] sm:$0xff]
        %v5999 = vld [vmem:[%s5983 + $0x78] sm:$0xff]
        %v6000 = vld [vmem:[%s5983 + $0x80] sm:$0xff]
        %v6001 = vld [vmem:[%s5983 + $0x88] sm:$0xff]
        %v6002 = vld [vmem:[%s5983 + $0x90] sm:$0xff]
        %v6003 = vld [vmem:[%s5983 + $0x98] sm:$0xff]
        %v6004 = vld [vmem:[%s5983 + $0xa0] sm:$0xff]
        %v6005 = vld [vmem:[%s5983 + $0xa8] sm:$0xff]
        %v6006 = vld [vmem:[%s5983 + $0xb0] sm:$0xff]
        %v6007 = vld [vmem:[%s5983 + $0xb8] sm:$0xff]
        %v6008 = vld [vmem:[%s5983 + $0xc0] sm:$0xff]
        %v6009 = vld [vmem:[%s5983 + $0xc8] sm:$0xff]
        %v6010 = vld [vmem:[%s5983 + $0xd0] sm:$0xff]
        %v6011 = vld [vmem:[%s5983 + $0xd8] sm:$0xff]
        %v6012 = vld [vmem:[%s5983 + $0xe0] sm:$0xff]
        %v6013 = vld [vmem:[%s5983 + $0xe8] sm:$0xff]
        %v6014 = vld [vmem:[%s5983 + $0xf0] sm:$0xff]
        %v6015 = vld [vmem:[%s5983 + $0xf8] sm:$0xff]
        %v6048 = vunpack.c.l.b16 %v5984
        %v6049 = vunpack.c.h.b16 %v5984
        %v6050 = vunpack.c.l.b16 %v5985
        %v6051 = vunpack.c.h.b16 %v5985
        %v6052 = vunpack.c.l.b16 %v5986
        %v6053 = vunpack.c.h.b16 %v5986
        %v6054 = vunpack.c.l.b16 %v5987
        %v6055 = vunpack.c.h.b16 %v5987
        %v6056 = vunpack.c.l.b16 %v5988
        %v6057 = vunpack.c.h.b16 %v5988
        %v6058 = vunpack.c.l.b16 %v5989
        %v6059 = vunpack.c.h.b16 %v5989
        %v6060 = vunpack.c.l.b16 %v5990
        %v6061 = vunpack.c.h.b16 %v5990
        %v6062 = vunpack.c.l.b16 %v5991
        %v6063 = vunpack.c.h.b16 %v5991
        %v6064 = vunpack.c.l.b16 %v5992
        %v6065 = vunpack.c.h.b16 %v5992
        %v6066 = vunpack.c.l.b16 %v5993
        %v6067 = vunpack.c.h.b16 %v5993
        %v6068 = vunpack.c.l.b16 %v5994
        %v6069 = vunpack.c.h.b16 %v5994
        %v6070 = vunpack.c.l.b16 %v5995
        %v6071 = vunpack.c.h.b16 %v5995
        %v6072 = vunpack.c.l.b16 %v5996
        %v6073 = vunpack.c.h.b16 %v5996
        %v6074 = vunpack.c.l.b16 %v5997
        %v6075 = vunpack.c.h.b16 %v5997
        %v6076 = vunpack.c.l.b16 %v5998
        %v6077 = vunpack.c.h.b16 %v5998
        %v6078 = vunpack.c.l.b16 %v5999
        %v6079 = vunpack.c.h.b16 %v5999
        %v6080 = vunpack.c.l.b16 %v6000
        %v6081 = vunpack.c.h.b16 %v6000
        %v6082 = vunpack.c.l.b16 %v6001
        %v6083 = vunpack.c.h.b16 %v6001
        %v6084 = vunpack.c.l.b16 %v6002
        %v6085 = vunpack.c.h.b16 %v6002
        %v6086 = vunpack.c.l.b16 %v6003
        %v6087 = vunpack.c.h.b16 %v6003
        %v6088 = vunpack.c.l.b16 %v6004
        %v6089 = vunpack.c.h.b16 %v6004
        %v6090 = vunpack.c.l.b16 %v6005
        %v6091 = vunpack.c.h.b16 %v6005
        %v6092 = vunpack.c.l.b16 %v6006
        %v6093 = vunpack.c.h.b16 %v6006
        %v6094 = vunpack.c.l.b16 %v6007
        %v6095 = vunpack.c.h.b16 %v6007
        %v6096 = vunpack.c.l.b16 %v6008
        %v6097 = vunpack.c.h.b16 %v6008
        %v6098 = vunpack.c.l.b16 %v6009
        %v6099 = vunpack.c.h.b16 %v6009
        %v6100 = vunpack.c.l.b16 %v6010
        %v6101 = vunpack.c.h.b16 %v6010
        %v6102 = vunpack.c.l.b16 %v6011
        %v6103 = vunpack.c.h.b16 %v6011
        %v6104 = vunpack.c.l.b16 %v6012
        %v6105 = vunpack.c.h.b16 %v6012
        %v6106 = vunpack.c.l.b16 %v6013
        %v6107 = vunpack.c.h.b16 %v6013
        %v6108 = vunpack.c.l.b16 %v6014
        %v6109 = vunpack.c.h.b16 %v6014
        %v6110 = vunpack.c.l.b16 %v6015
        %v6111 = vunpack.c.h.b16 %v6015
        %v6112 = vpack.c.b16 %v6050, %v6048
        %v6113 = vpack.c.b16 %v6051, %v6049
        %v6114 = vpack.c.b16 %v6054, %v6052
        %v6115 = vpack.c.b16 %v6055, %v6053
        %v6116 = vpack.c.b16 %v6058, %v6056
        %v6117 = vpack.c.b16 %v6059, %v6057
        %v6118 = vpack.c.b16 %v6062, %v6060
        %v6119 = vpack.c.b16 %v6063, %v6061
        %v6120 = vpack.c.b16 %v6066, %v6064
        %v6121 = vpack.c.b16 %v6067, %v6065
        %v6122 = vpack.c.b16 %v6070, %v6068
        %v6123 = vpack.c.b16 %v6071, %v6069
        %v6124 = vpack.c.b16 %v6074, %v6072
        %v6125 = vpack.c.b16 %v6075, %v6073
        %v6126 = vpack.c.b16 %v6078, %v6076
        %v6127 = vpack.c.b16 %v6079, %v6077
        %v6128 = vpack.c.b16 %v6082, %v6080
        %v6129 = vpack.c.b16 %v6083, %v6081
        %v6130 = vpack.c.b16 %v6086, %v6084
        %v6131 = vpack.c.b16 %v6087, %v6085
        %v6132 = vpack.c.b16 %v6090, %v6088
        %v6133 = vpack.c.b16 %v6091, %v6089
        %v6134 = vpack.c.b16 %v6094, %v6092
        %v6135 = vpack.c.b16 %v6095, %v6093
        %v6136 = vpack.c.b16 %v6098, %v6096
        %v6137 = vpack.c.b16 %v6099, %v6097
        %v6138 = vpack.c.b16 %v6102, %v6100
        %v6139 = vpack.c.b16 %v6103, %v6101
        %v6140 = vpack.c.b16 %v6106, %v6104
        %v6141 = vpack.c.b16 %v6107, %v6105
        %v6142 = vpack.c.b16 %v6110, %v6108
        %v6143 = vpack.c.b16 %v6111, %v6109
        %6176 = vmatprep.subr.bf16.mxu0 %v6113
        %6177 = vmatpush1.bf16.msra.mxu0 %v6112
        %6178 = vmatprep.subr.bf16.mxu0 %v6115
        %6179 = vmatpush1.bf16.msra.mxu0 %v6114
        %6180 = vmatprep.subr.bf16.mxu0 %v6117
        %6181 = vmatpush1.bf16.msra.mxu0 %v6116
        %6182 = vmatprep.subr.bf16.mxu0 %v6119
        %6183 = vmatpush1.bf16.msra.mxu0 %v6118
        %6184 = vmatprep.subr.bf16.mxu0 %v6121
        %6185 = vmatpush1.bf16.msra.mxu0 %v6120
        %6186 = vmatprep.subr.bf16.mxu0 %v6123
        %6187 = vmatpush1.bf16.msra.mxu0 %v6122
        %6188 = vmatprep.subr.bf16.mxu0 %v6125
        %6189 = vmatpush1.bf16.msra.mxu0 %v6124
        %6190 = vmatprep.subr.bf16.mxu0 %v6127
        %6191 = vmatpush1.bf16.msra.mxu0 %v6126
        %6192 = vmatprep.subr.bf16.mxu0 %v6129
        %6193 = vmatpush1.bf16.msra.mxu0 %v6128
        %6194 = vmatprep.subr.bf16.mxu0 %v6131
        %6195 = vmatpush1.bf16.msra.mxu0 %v6130
        %6196 = vmatprep.subr.bf16.mxu0 %v6133
        %6197 = vmatpush1.bf16.msra.mxu0 %v6132
        %6198 = vmatprep.subr.bf16.mxu0 %v6135
        %6199 = vmatpush1.bf16.msra.mxu0 %v6134
        %6200 = vmatprep.subr.bf16.mxu0 %v6137
        %6201 = vmatpush1.bf16.msra.mxu0 %v6136
        %6202 = vmatprep.subr.bf16.mxu0 %v6139
        %6203 = vmatpush1.bf16.msra.mxu0 %v6138
        %6204 = vmatprep.subr.bf16.mxu0 %v6141
        %6205 = vmatpush1.bf16.msra.mxu0 %v6140
        %6206 = vmatprep.subr.bf16.mxu0 %v6143
        %6207 = vmatpush1.bf16.msra.mxu0 %v6142
        %6208 = vmatprep.mubr.bf16.mxu0 %v5976
        %6209 = vmatmul.mubr.bf16.gmra.mrb[0].mxu0 %v5975
        %v6210 = vpop.f32.mrb[0].mxu0
        %v6211 = vadd.f32 0.0, %v6210
        %v6212 = vpop.f32.mrb[0].mxu0
        %v6213 = vadd.f32 0.0, %v6212
        %v6214 = vpop.f32.mrb[0].mxu0
        %v6215 = vadd.f32 0.0, %v6214
        %v6216 = vpop.f32.mrb[0].mxu0
        %v6217 = vadd.f32 0.0, %v6216
        %6218 = vmatprep.mubr.bf16.mxu0 %v5978
        %6219 = vmatmul.mubr.bf16.gmra.mrb[0].mxu0 %v5977
        %v6220 = vpop.f32.mrb[0].mxu0
        %v6221 = vadd.f32 0.0, %v6220
        %v6222 = vpop.f32.mrb[0].mxu0
        %v6223 = vadd.f32 0.0, %v6222
        %v6224 = vpop.f32.mrb[0].mxu0
        %v6225 = vadd.f32 0.0, %v6224
        %v6226 = vpop.f32.mrb[0].mxu0
        %v6227 = vadd.f32 0.0, %v6226
        %6228 = vmatprep.mubr.bf16.mxu0 %v5980
        %6229 = vmatmul.mubr.bf16.gmra.mrb[0].mxu0 %v5979
        %v6230 = vpop.f32.mrb[0].mxu0
        %v6231 = vadd.f32 0.0, %v6230
        %v6232 = vpop.f32.mrb[0].mxu0
        %v6233 = vadd.f32 0.0, %v6232
        %v6234 = vpop.f32.mrb[0].mxu0
        %v6235 = vadd.f32 0.0, %v6234
        %v6236 = vpop.f32.mrb[0].mxu0
        %v6237 = vadd.f32 0.0, %v6236
        %6238 = vmatprep.mubr.bf16.mxu0 %v5982
        %6239 = vmatmul.mubr.bf16.gmra.mrb[0].mxu0 %v5981
        %v6240 = vpop.f32.mrb[0].mxu0
        %v6241 = vadd.f32 0.0, %v6240
        %v6242 = vpop.f32.mrb[0].mxu0
        %v6243 = vadd.f32 0.0, %v6242
        %v6244 = vpop.f32.mrb[0].mxu0
        %v6245 = vadd.f32 0.0, %v6244
        %v6246 = vpop.f32.mrb[0].mxu0
        %v6247 = vadd.f32 0.0, %v6246
        %6248 = vdwg.mxu0
        %v6249 = vadd.f32 %v4447, %v6211
        %v6250 = vadd.f32 %v4448, %v6213
        %v6251 = vadd.f32 %v4449, %v6215
        %v6252 = vadd.f32 %v4450, %v6217
        %v6253 = vadd.f32 %v4451, %v6221
        %v6254 = vadd.f32 %v4452, %v6223
        %v6255 = vadd.f32 %v4453, %v6225
        %v6256 = vadd.f32 %v4454, %v6227
        %v6257 = vadd.f32 %v4455, %v6231
        %v6258 = vadd.f32 %v4456, %v6233
        %v6259 = vadd.f32 %v4457, %v6235
        %v6260 = vadd.f32 %v4458, %v6237
        %v6261 = vadd.f32 %v4459, %v6241
        %v6262 = vadd.f32 %v4460, %v6243
        %v6263 = vadd.f32 %v4461, %v6245
        %v6264 = vadd.f32 %v4462, %v6247
        %v6265 = vadd.f32 %v342, %v343
        %v6266 = vadd.f32 %v6265, %v344
        %v6267 = vadd.f32 %v6266, %v345
        %v6268 = vadd.f32 %v6267, %v346
        %v6269 = vadd.f32 %v6268, %v347
        %v6270 = vadd.f32 %v6269, %v348
        %v6271 = vadd.f32 %v6270, %v349
        %v6272 = vrot.slane %v6271, 4
        %v6273 = vadd.f32 %v6271, %v6272
        %v6274 = vrot.slane %v6273, 2
        %v6275 = vadd.f32 %v6273, %v6274
        %v6276 = vrot.slane %v6275, 1
        %v6277 = vadd.f32 %v6275, %v6276
        %v6278 = vrcp.pop 64.0
        %v6279 = vmul.f32 %v6277, %v6278
        %v6280 = vpack.c.bf16 %v6279, %v6279
        %v6281 = vld [vmem:[#allocation10] sm:$0xff]
        %v6282 = vld [vmem:[#allocation10 + $0x8] sm:$0xff]
        %v6283 = vld [vmem:[#allocation10 + $0x10] sm:$0xff]
        %v6284 = vld [vmem:[#allocation10 + $0x18] sm:$0xff]
        %v6285 = vld [vmem:[#allocation10 + $0x20] sm:$0xff]
        %v6286 = vld [vmem:[#allocation10 + $0x28] sm:$0xff]
        %v6287 = vld [vmem:[#allocation10 + $0x30] sm:$0xff]
        %v6288 = vld [vmem:[#allocation10 + $0x38] sm:$0xff]
        %v6289 = vld [vmem:[#allocation10 + $0x40] sm:$0xff]
        %v6290 = vld [vmem:[#allocation10 + $0x48] sm:$0xff]
        %v6291 = vld [vmem:[#allocation10 + $0x50] sm:$0xff]
        %v6292 = vld [vmem:[#allocation10 + $0x58] sm:$0xff]
        %v6293 = vld [vmem:[#allocation10 + $0x60] sm:$0xff]
        %v6294 = vld [vmem:[#allocation10 + $0x68] sm:$0xff]
        %v6295 = vld [vmem:[#allocation10 + $0x70] sm:$0xff]
        %v6296 = vld [vmem:[#allocation10 + $0x78] sm:$0xff]
        %s6297 = scalar_lea.vmem [#allocation13], 4
        %v6298 = vld [vmem:[%s6297] ss:$8 sm:$0x3]
        %v6300 = vlaneseq
        %v6301 = vshrl.u32 %v6300, 7
        %v6302 = vsub.s32 0, %v6301
        %v6303 = vrot.slane %v6298, %v6302
        %v6304 = vlaneseq
        %v6305 = vshrl.u32 %v6304, 7
        %v6306 = vsub.s32 1, %v6305
        %v6307 = vrot.slane %v6298, %v6306
        %v6326 = vunpack.c.l.b16 %v6281
        %v6327 = vunpack.c.h.b16 %v6281
        %v6328 = vunpack.c.l.b16 %v6282
        %v6329 = vunpack.c.h.b16 %v6282
        %v6330 = vunpack.c.l.b16 %v6283
        %v6331 = vunpack.c.h.b16 %v6283
        %v6332 = vunpack.c.l.b16 %v6284
        %v6333 = vunpack.c.h.b16 %v6284
        %v6334 = vunpack.c.l.b16 %v6285
        %v6335 = vunpack.c.h.b16 %v6285
        %v6336 = vunpack.c.l.b16 %v6286
        %v6337 = vunpack.c.h.b16 %v6286
        %v6338 = vunpack.c.l.b16 %v6287
        %v6339 = vunpack.c.h.b16 %v6287
        %v6340 = vunpack.c.l.b16 %v6288
        %v6341 = vunpack.c.h.b16 %v6288
        %v6342 = vunpack.c.l.b16 %v6289
        %v6343 = vunpack.c.h.b16 %v6289
        %v6344 = vunpack.c.l.b16 %v6290
        %v6345 = vunpack.c.h.b16 %v6290
        %v6346 = vunpack.c.l.b16 %v6291
        %v6347 = vunpack.c.h.b16 %v6291
        %v6348 = vunpack.c.l.b16 %v6292
        %v6349 = vunpack.c.h.b16 %v6292
        %v6350 = vunpack.c.l.b16 %v6293
        %v6351 = vunpack.c.h.b16 %v6293
        %v6352 = vunpack.c.l.b16 %v6294
        %v6353 = vunpack.c.h.b16 %v6294
        %v6354 = vunpack.c.l.b16 %v6295
        %v6355 = vunpack.c.h.b16 %v6295
        %v6356 = vunpack.c.l.b16 %v6296
        %v6357 = vunpack.c.h.b16 %v6296
        %v6358 = vpack.c.b16 %v6328, %v6326
        %v6359 = vpack.c.b16 %v6329, %v6327
        %v6360 = vpack.c.b16 %v6332, %v6330
        %v6361 = vpack.c.b16 %v6333, %v6331
        %v6362 = vpack.c.b16 %v6336, %v6334
        %v6363 = vpack.c.b16 %v6337, %v6335
        %v6364 = vpack.c.b16 %v6340, %v6338
        %v6365 = vpack.c.b16 %v6341, %v6339
        %v6366 = vpack.c.b16 %v6344, %v6342
        %v6367 = vpack.c.b16 %v6345, %v6343
        %v6368 = vpack.c.b16 %v6348, %v6346
        %v6369 = vpack.c.b16 %v6349, %v6347
        %v6370 = vpack.c.b16 %v6352, %v6350
        %v6371 = vpack.c.b16 %v6353, %v6351
        %v6372 = vpack.c.b16 %v6356, %v6354
        %v6373 = vpack.c.b16 %v6357, %v6355
        %6390 = vmatprep.subr.bf16.mxu0 %v6359
        %6391 = vmatpush1.bf16.msra.mxu0 %v6358
        %6392 = vmatprep.subr.bf16.mxu0 %v6361
        %6393 = vmatpush1.bf16.msra.mxu0 %v6360
        %6394 = vmatprep.subr.bf16.mxu0 %v6363
        %6395 = vmatpush1.bf16.msra.mxu0 %v6362
        %6396 = vmatprep.subr.bf16.mxu0 %v6365
        %6397 = vmatpush1.bf16.msra.mxu0 %v6364
        %6398 = vmatprep.subr.bf16.mxu0 %v6367
        %6399 = vmatpush1.bf16.msra.mxu0 %v6366
        %6400 = vmatprep.subr.bf16.mxu0 %v6369
        %6401 = vmatpush1.bf16.msra.mxu0 %v6368
        %6402 = vmatprep.subr.bf16.mxu0 %v6371
        %6403 = vmatpush1.bf16.msra.mxu0 %v6370
        %6404 = vmatprep.subr.bf16.mxu0 %v6373
        %6405 = vmatpush1.bf16.msra.mxu0 %v6372
        %6406 = vmatprep.subr.bf16.mxu0 0
        %6407 = vmatpush1.bf16.msra.mxu0 0
        %6408 = vmatprep.subr.bf16.mxu0 0
        %6409 = vmatpush1.bf16.msra.mxu0 0
        %6410 = vmatprep.subr.bf16.mxu0 0
        %6411 = vmatpush1.bf16.msra.mxu0 0
        %6412 = vmatprep.subr.bf16.mxu0 0
        %6413 = vmatpush1.bf16.msra.mxu0 0
        %6414 = vmatprep.subr.bf16.mxu0 0
        %6415 = vmatpush1.bf16.msra.mxu0 0
        %6416 = vmatprep.subr.bf16.mxu0 0
        %6417 = vmatpush1.bf16.msra.mxu0 0
        %6418 = vmatprep.subr.bf16.mxu0 0
        %6419 = vmatpush1.bf16.msra.mxu0 0
        %6420 = vmatprep.subr.bf16.mxu0 0
        %6421 = vmatpush1.bf16.msra.mxu0 0
        %6422 = vmatprep.mubr.bf16.mxu0 0
        %6423 = vmatmul.mubr.bf16.gmra.mrb[0].mxu0 %v6280
        %v6424 = vpop.f32.mrb[0].mxu0
        %v6425 = vadd.f32 %v6303, %v6424
        %v6426 = vpop.f32.mrb[0].mxu0
        %v6427 = vadd.f32 %v6307, %v6426
        %v6428 = vpop.f32.mrb[0].mxu0
        %v6429 = vpop.f32.mrb[0].mxu0
        %6430 = vdwg.mxu0
        %v6431 = vmax.f32 %v6425, 0.0
        %v6432 = vmax.f32 %v6427, 0.0
        %v6433 = vpack.c.bf16 %v6431, %v6431
        %v6434 = vpack.c.bf16 %v6432, %v6432
        %s6435 = scalar_lea.vmem [#allocation12], 1024
        %v6436 = vld [vmem:[%s6435] sm:$0xff]
        %v6437 = vld [vmem:[%s6435 + $0x8] sm:$0xff]
        %v6438 = vld [vmem:[%s6435 + $0x10] sm:$0xff]
        %v6439 = vld [vmem:[%s6435 + $0x18] sm:$0xff]
        %v6440 = vld [vmem:[%s6435 + $0x20] sm:$0xff]
        %v6441 = vld [vmem:[%s6435 + $0x28] sm:$0xff]
        %v6442 = vld [vmem:[%s6435 + $0x30] sm:$0xff]
        %v6443 = vld [vmem:[%s6435 + $0x38] sm:$0xff]
        %v6444 = vld [vmem:[%s6435 + $0x40] sm:$0xff]
        %v6445 = vld [vmem:[%s6435 + $0x48] sm:$0xff]
        %v6446 = vld [vmem:[%s6435 + $0x50] sm:$0xff]
        %v6447 = vld [vmem:[%s6435 + $0x58] sm:$0xff]
        %v6448 = vld [vmem:[%s6435 + $0x60] sm:$0xff]
        %v6449 = vld [vmem:[%s6435 + $0x68] sm:$0xff]
        %v6450 = vld [vmem:[%s6435 + $0x70] sm:$0xff]
        %v6451 = vld [vmem:[%s6435 + $0x78] sm:$0xff]
        %v6452 = vld [vmem:[%s6435 + $0x80] sm:$0xff]
        %v6453 = vld [vmem:[%s6435 + $0x88] sm:$0xff]
        %v6454 = vld [vmem:[%s6435 + $0x90] sm:$0xff]
        %v6455 = vld [vmem:[%s6435 + $0x98] sm:$0xff]
        %v6456 = vld [vmem:[%s6435 + $0xa0] sm:$0xff]
        %v6457 = vld [vmem:[%s6435 + $0xa8] sm:$0xff]
        %v6458 = vld [vmem:[%s6435 + $0xb0] sm:$0xff]
        %v6459 = vld [vmem:[%s6435 + $0xb8] sm:$0xff]
        %v6460 = vld [vmem:[%s6435 + $0xc0] sm:$0xff]
        %v6461 = vld [vmem:[%s6435 + $0xc8] sm:$0xff]
        %v6462 = vld [vmem:[%s6435 + $0xd0] sm:$0xff]
        %v6463 = vld [vmem:[%s6435 + $0xd8] sm:$0xff]
        %v6464 = vld [vmem:[%s6435 + $0xe0] sm:$0xff]
        %v6465 = vld [vmem:[%s6435 + $0xe8] sm:$0xff]
        %v6466 = vld [vmem:[%s6435 + $0xf0] sm:$0xff]
        %v6467 = vld [vmem:[%s6435 + $0xf8] sm:$0xff]
        %v6500 = vunpack.c.l.b16 %v6436
        %v6501 = vunpack.c.h.b16 %v6436
        %v6502 = vunpack.c.l.b16 %v6437
        %v6503 = vunpack.c.h.b16 %v6437
        %v6504 = vunpack.c.l.b16 %v6438
        %v6505 = vunpack.c.h.b16 %v6438
        %v6506 = vunpack.c.l.b16 %v6439
        %v6507 = vunpack.c.h.b16 %v6439
        %v6508 = vunpack.c.l.b16 %v6440
        %v6509 = vunpack.c.h.b16 %v6440
        %v6510 = vunpack.c.l.b16 %v6441
        %v6511 = vunpack.c.h.b16 %v6441
        %v6512 = vunpack.c.l.b16 %v6442
        %v6513 = vunpack.c.h.b16 %v6442
        %v6514 = vunpack.c.l.b16 %v6443
        %v6515 = vunpack.c.h.b16 %v6443
        %v6516 = vunpack.c.l.b16 %v6444
        %v6517 = vunpack.c.h.b16 %v6444
        %v6518 = vunpack.c.l.b16 %v6445
        %v6519 = vunpack.c.h.b16 %v6445
        %v6520 = vunpack.c.l.b16 %v6446
        %v6521 = vunpack.c.h.b16 %v6446
        %v6522 = vunpack.c.l.b16 %v6447
        %v6523 = vunpack.c.h.b16 %v6447
        %v6524 = vunpack.c.l.b16 %v6448
        %v6525 = vunpack.c.h.b16 %v6448
        %v6526 = vunpack.c.l.b16 %v6449
        %v6527 = vunpack.c.h.b16 %v6449
        %v6528 = vunpack.c.l.b16 %v6450
        %v6529 = vunpack.c.h.b16 %v6450
        %v6530 = vunpack.c.l.b16 %v6451
        %v6531 = vunpack.c.h.b16 %v6451
        %v6532 = vunpack.c.l.b16 %v6452
        %v6533 = vunpack.c.h.b16 %v6452
        %v6534 = vunpack.c.l.b16 %v6453
        %v6535 = vunpack.c.h.b16 %v6453
        %v6536 = vunpack.c.l.b16 %v6454
        %v6537 = vunpack.c.h.b16 %v6454
        %v6538 = vunpack.c.l.b16 %v6455
        %v6539 = vunpack.c.h.b16 %v6455
        %v6540 = vunpack.c.l.b16 %v6456
        %v6541 = vunpack.c.h.b16 %v6456
        %v6542 = vunpack.c.l.b16 %v6457
        %v6543 = vunpack.c.h.b16 %v6457
        %v6544 = vunpack.c.l.b16 %v6458
        %v6545 = vunpack.c.h.b16 %v6458
        %v6546 = vunpack.c.l.b16 %v6459
        %v6547 = vunpack.c.h.b16 %v6459
        %v6548 = vunpack.c.l.b16 %v6460
        %v6549 = vunpack.c.h.b16 %v6460
        %v6550 = vunpack.c.l.b16 %v6461
        %v6551 = vunpack.c.h.b16 %v6461
        %v6552 = vunpack.c.l.b16 %v6462
        %v6553 = vunpack.c.h.b16 %v6462
        %v6554 = vunpack.c.l.b16 %v6463
        %v6555 = vunpack.c.h.b16 %v6463
        %v6556 = vunpack.c.l.b16 %v6464
        %v6557 = vunpack.c.h.b16 %v6464
        %v6558 = vunpack.c.l.b16 %v6465
        %v6559 = vunpack.c.h.b16 %v6465
        %v6560 = vunpack.c.l.b16 %v6466
        %v6561 = vunpack.c.h.b16 %v6466
        %v6562 = vunpack.c.l.b16 %v6467
        %v6563 = vunpack.c.h.b16 %v6467
        %v6564 = vpack.c.b16 %v6502, %v6500
        %v6565 = vpack.c.b16 %v6503, %v6501
        %v6566 = vpack.c.b16 %v6506, %v6504
        %v6567 = vpack.c.b16 %v6507, %v6505
        %v6568 = vpack.c.b16 %v6510, %v6508
        %v6569 = vpack.c.b16 %v6511, %v6509
        %v6570 = vpack.c.b16 %v6514, %v6512
        %v6571 = vpack.c.b16 %v6515, %v6513
        %v6572 = vpack.c.b16 %v6518, %v6516
        %v6573 = vpack.c.b16 %v6519, %v6517
        %v6574 = vpack.c.b16 %v6522, %v6520
        %v6575 = vpack.c.b16 %v6523, %v6521
        %v6576 = vpack.c.b16 %v6526, %v6524
        %v6577 = vpack.c.b16 %v6527, %v6525
        %v6578 = vpack.c.b16 %v6530, %v6528
        %v6579 = vpack.c.b16 %v6531, %v6529
        %v6580 = vpack.c.b16 %v6534, %v6532
        %v6581 = vpack.c.b16 %v6535, %v6533
        %v6582 = vpack.c.b16 %v6538, %v6536
        %v6583 = vpack.c.b16 %v6539, %v6537
        %v6584 = vpack.c.b16 %v6542, %v6540
        %v6585 = vpack.c.b16 %v6543, %v6541
        %v6586 = vpack.c.b16 %v6546, %v6544
        %v6587 = vpack.c.b16 %v6547, %v6545
        %v6588 = vpack.c.b16 %v6550, %v6548
        %v6589 = vpack.c.b16 %v6551, %v6549
        %v6590 = vpack.c.b16 %v6554, %v6552
        %v6591 = vpack.c.b16 %v6555, %v6553
        %v6592 = vpack.c.b16 %v6558, %v6556
        %v6593 = vpack.c.b16 %v6559, %v6557
        %v6594 = vpack.c.b16 %v6562, %v6560
        %v6595 = vpack.c.b16 %v6563, %v6561
        %6628 = vmatprep.subr.bf16.mxu0 %v6565
        %6629 = vmatpush1.bf16.msra.mxu0 %v6564
        %6630 = vmatprep.subr.bf16.mxu0 %v6567
        %6631 = vmatpush1.bf16.msra.mxu0 %v6566
        %6632 = vmatprep.subr.bf16.mxu0 %v6569
        %6633 = vmatpush1.bf16.msra.mxu0 %v6568
        %6634 = vmatprep.subr.bf16.mxu0 %v6571
        %6635 = vmatpush1.bf16.msra.mxu0 %v6570
        %6636 = vmatprep.subr.bf16.mxu0 %v6573
        %6637 = vmatpush1.bf16.msra.mxu0 %v6572
        %6638 = vmatprep.subr.bf16.mxu0 %v6575
        %6639 = vmatpush1.bf16.msra.mxu0 %v6574
        %6640 = vmatprep.subr.bf16.mxu0 %v6577
        %6641 = vmatpush1.bf16.msra.mxu0 %v6576
        %6642 = vmatprep.subr.bf16.mxu0 %v6579
        %6643 = vmatpush1.bf16.msra.mxu0 %v6578
        %6644 = vmatprep.subr.bf16.mxu0 %v6581
        %6645 = vmatpush1.bf16.msra.mxu0 %v6580
        %6646 = vmatprep.subr.bf16.mxu0 %v6583
        %6647 = vmatpush1.bf16.msra.mxu0 %v6582
        %6648 = vmatprep.subr.bf16.mxu0 %v6585
        %6649 = vmatpush1.bf16.msra.mxu0 %v6584
        %6650 = vmatprep.subr.bf16.mxu0 %v6587
        %6651 = vmatpush1.bf16.msra.mxu0 %v6586
        %6652 = vmatprep.subr.bf16.mxu0 %v6589
        %6653 = vmatpush1.bf16.msra.mxu0 %v6588
        %6654 = vmatprep.subr.bf16.mxu0 %v6591
        %6655 = vmatpush1.bf16.msra.mxu0 %v6590
        %6656 = vmatprep.subr.bf16.mxu0 %v6593
        %6657 = vmatpush1.bf16.msra.mxu0 %v6592
        %6658 = vmatprep.subr.bf16.mxu0 %v6595
        %6659 = vmatpush1.bf16.msra.mxu0 %v6594
        %6660 = vmatprep.mubr.bf16.mxu0 %v6434
        %6661 = vmatmul.mubr.bf16.gmra.mrb[0].mxu0 %v6433
        %v6662 = vpop.f32.mrb[0].mxu0
        %v6663 = vadd.f32 0.0, %v6662
        %v6664 = vpop.f32.mrb[0].mxu0
        %v6665 = vadd.f32 0.0, %v6664
        %v6666 = vpop.f32.mrb[0].mxu0
        %v6667 = vpop.f32.mrb[0].mxu0
        %6668 = vdwg.mxu0
        %v6669 = vlaneseq
        %v6670 = vshrl.u32 %v6669, 7
        %v6671 = vsub.s32 0, %v6670
        %v6672 = vrot.slane %v6663, %v6671
        %v6673 = vlaneseq
        %v6674 = vshrl.u32 %v6673, 7
        %v6675 = vsub.s32 0, %v6674
        %v6676 = vrot.slane %v6665, %v6675
        %v6677 = vadd.f32 %v6249, %v6672
        %v6678 = vadd.f32 %v6250, %v6676
        %v6679 = vadd.f32 %v6251, %v6672
        %v6680 = vadd.f32 %v6252, %v6676
        %v6681 = vadd.f32 %v6253, %v6672
        %v6682 = vadd.f32 %v6254, %v6676
        %v6683 = vadd.f32 %v6255, %v6672
        %v6684 = vadd.f32 %v6256, %v6676
        %v6685 = vadd.f32 %v6257, %v6672
        %v6686 = vadd.f32 %v6258, %v6676
        %v6687 = vadd.f32 %v6259, %v6672
        %v6688 = vadd.f32 %v6260, %v6676
        %v6689 = vadd.f32 %v6261, %v6672
        %v6690 = vadd.f32 %v6262, %v6676
        %v6691 = vadd.f32 %v6263, %v6672
        %v6692 = vadd.f32 %v6264, %v6676
        %s6693 = scalar_lea.vmem [#allocation13], 5
        %v6694 = vld [vmem:[%s6693] ss:$8 sm:$0x3]
        %v6696 = vlaneseq
        %v6697 = vshrl.u32 %v6696, 7
        %v6698 = vsub.s32 0, %v6697
        %v6699 = vrot.slane %v6694, %v6698
        %v6700 = vlaneseq
        %v6701 = vshrl.u32 %v6700, 7
        %v6702 = vsub.s32 1, %v6701
        %v6703 = vrot.slane %v6694, %v6702
        %v6706 = vadd.f32 %v6677, %v6699
        %v6707 = vadd.f32 %v6678, %v6703
        %v6708 = vadd.f32 %v6679, %v6699
        %v6709 = vadd.f32 %v6680, %v6703
        %v6710 = vadd.f32 %v6681, %v6699
        %v6711 = vadd.f32 %v6682, %v6703
        %v6712 = vadd.f32 %v6683, %v6699
        %v6713 = vadd.f32 %v6684, %v6703
        %v6714 = vadd.f32 %v6685, %v6699
        %v6715 = vadd.f32 %v6686, %v6703
        %v6716 = vadd.f32 %v6687, %v6699
        %v6717 = vadd.f32 %v6688, %v6703
        %v6718 = vadd.f32 %v6689, %v6699
        %v6719 = vadd.f32 %v6690, %v6703
        %v6720 = vadd.f32 %v6691, %v6699
        %v6721 = vadd.f32 %v6692, %v6703
        %v6722 = vmax.f32 %v6706, 0.0
        %v6723 = vmax.f32 %v6707, 0.0
        %v6724 = vmax.f32 %v6708, 0.0
        %v6725 = vmax.f32 %v6709, 0.0
        %v6726 = vmax.f32 %v6710, 0.0
        %v6727 = vmax.f32 %v6711, 0.0
        %v6728 = vmax.f32 %v6712, 0.0
        %v6729 = vmax.f32 %v6713, 0.0
        %v6730 = vmax.f32 %v6714, 0.0
        %v6731 = vmax.f32 %v6715, 0.0
        %v6732 = vmax.f32 %v6716, 0.0
        %v6733 = vmax.f32 %v6717, 0.0
        %v6734 = vmax.f32 %v6718, 0.0
        %v6735 = vmax.f32 %v6719, 0.0
        %v6736 = vmax.f32 %v6720, 0.0
        %v6737 = vmax.f32 %v6721, 0.0
        %6738 = vst [vmem:[%s340] sm:$0xff] %v6722
        %6739 = vst [vmem:[%s340 + $0x8] sm:$0xff] %v6723
        %6740 = vst [vmem:[%s340 + $0x10] sm:$0xff] %v6724
        %6741 = vst [vmem:[%s340 + $0x18] sm:$0xff] %v6725
        %6742 = vst [vmem:[%s340 + $0x20] sm:$0xff] %v6726
        %6743 = vst [vmem:[%s340 + $0x28] sm:$0xff] %v6727
        %6744 = vst [vmem:[%s340 + $0x30] sm:$0xff] %v6728
        %6745 = vst [vmem:[%s340 + $0x38] sm:$0xff] %v6729
        %6746 = vst [vmem:[%s340 + $0x40] sm:$0xff] %v6730
        %6747 = vst [vmem:[%s340 + $0x48] sm:$0xff] %v6731
        %6748 = vst [vmem:[%s340 + $0x50] sm:$0xff] %v6732
        %6749 = vst [vmem:[%s340 + $0x58] sm:$0xff] %v6733
        %6750 = vst [vmem:[%s340 + $0x60] sm:$0xff] %v6734
        %6751 = vst [vmem:[%s340 + $0x68] sm:$0xff] %v6735
        %6752 = vst [vmem:[%s340 + $0x70] sm:$0xff] %v6736
        %6753 = vst [vmem:[%s340 + $0x78] sm:$0xff] %v6737
        %s6754 = sand.u32 %s165, 1
        %s6755 = scalar_lea.sflag [#allocation6], %s6754
        %s6756 = sand.u32 %s165, 1
        %s6757 = smul.addr %s6756, 128
        %s6758 = scalar_lea.vmem [#allocation15], %s6757
        // Predicated region
        $region69: #{tpu_custom_call.1} parent=43 // pred_check
          %p6759 = pneg %p175
        $region70: #{tpu_custom_call.1} parent=43 // pred_check_branch
          %6761 = sbr.rel (%p6759) target = $region72
        $region71: #{tpu_custom_call.1} parent=43 // pred_region
          %s6763 = ssub.s32 2048, 2048
          %6764 = vsyncadd %s6755, %s6763
          %s6765 = smul.addr %s26, 16
          %s6766 = smul.addr %s6765, 128
          %s6767 = scalar_lea.hbm %s6, %s6766
          %s6768 = sshll.u32 %s6758, 4
          %s6769 = int_to_ptr.vmem [resolvable:$true] %s6768
          %6774 = dma.vmem_to_hbm [thread:$0]  %s6769, 2048, %s6767, %s6755, 256, 256, 16
        $region72: #{tpu_custom_call.1} parent=43 // pred_fallthru
          _
      $region44: #{tpu_custom_call.1} parent=5 // pred_fallthru
        _
      %p6775 = scmp.le.s32.totalorder 2, %s21
      // Predicated region
      $region73: #{tpu_custom_call.1} parent=5 // pred_check
        %p6776 = pneg %p6775
      $region74: #{tpu_custom_call.1} parent=5 // pred_check_branch
        %6778 = sbr.rel (%p6776) target = $region76
      $region75: #{tpu_custom_call.1} parent=5 // pred_region
        %s6779 = ssub.s32 %s21, 2
        // Predicated region
        $region77: #{tpu_custom_call.1} parent=75 // pred_check
          %p6780 = pneg %p181
        $region78: #{tpu_custom_call.1} parent=75 // pred_check_branch
          %6782 = sbr.rel (%p6780) target = $region80
        $region79: #{tpu_custom_call.1} parent=75 // pred_region
          %s6783 = sand.u32 %s166, 1
          %s6784 = scalar_lea.sflag [#allocation6], %s6783
          %s6785 = sand.u32 %s166, 1
          %s6786 = smul.addr %s6785, 128
          %s6787 = scalar_lea.vmem [#allocation15], %s6786
          %6788 = dma.done %s6784, 2048
        $region80: #{tpu_custom_call.1} parent=75 // pred_fallthru
          _
      $region76: #{tpu_custom_call.1} parent=5 // pred_fallthru
        _
    $region6: #{tpu_custom_call.1} parent=1 // loop_footer
      %s25 = sadd.s32 1, %s21
    $region7: #{tpu_custom_call.1} parent=1 // loop_footer_branch
      %20 = sbr.rel target = $region3
    $region8: #{tpu_custom_call.1} parent=1 // loop_exit
      _
    %6789 = vsyncpa [#allocation5], 1
    %s6790 = scalar_lea.sflag [#allocation5], 1
    %6791 = vsyncpa %s6790, 1
    %6792 = vsyncpa [#allocation8], 1
    %6793 = vsyncpa [#allocation11], 1
    %6794 = vsyncpa [#allocation14], 1
    %6795 = vsyncpa [#allocation6], 1
    %s6796 = scalar_lea.sflag [#allocation6], 1
    %6797 = vsyncpa %s6796, 1

</llo_original>
